<compile_context>
chip_gen: v6e
topology: v6e:2x2x1
jax: 0.10.0
libtpu: 0.0.40
codegen_flags: <defaults>
</compile_context>

<pallas_src>
import math
import numpy as np

import jax
import jax.numpy as jnp
from jax.experimental import pallas as pl
from jax.experimental.pallas import tpu as pltpu

EPS = 1e-5
PAD_L = 128  # lane-aligned zero halo on each side of the flattened spatial axis


def _tensorcores_per_chip():
    """Best-effort TensorCore count per JAX device (v5e/v6e: 1, v7x: 2)."""
    try:
        dev = jax.devices()[0]
        n = getattr(dev, "num_cores", None)
        if isinstance(n, int) and 1 <= n <= 8:
            return n
    except Exception:
        pass
    return 1


# ------------------------------ fused kernel --------------------------------

def _make_fused_kernel(H, W, width, scale, nums, ips):
    C = width
    M = H * W

    def kernel(x_ref, w1t_ref, b1_ref, wf_ref, bf_ref, wb_ref, bb_ref,
               w3t_ref, b3_ref, o_ref, buf_ref, cat_ref):
        # ---- in-kernel dx-validity masks (no HBM mask inputs) ---------------
        # column index via float floor-div (exact for these magnitudes; avoids
        # relying on vector integer mod support).
        colf = jax.lax.broadcasted_iota(jnp.int32, (C, M), 1).astype(jnp.float32)
        rowf = jnp.floor((colf + 0.5) * (1.0 / W))
        col = colf - rowf * W
        mask_l = (col >= 0.5).astype(jnp.float32)        # x - 1 >= 0
        mask_r = (col <= W - 1.5).astype(jnp.float32)    # x + 1 <= W - 1

        # ---- zero ONLY the halo strips; interior is rewritten every conv ----
        halo = jnp.zeros((ips, 3 * C, PAD_L), jnp.float32)
        buf_ref[:, :, 0:PAD_L] = halo
        buf_ref[:, :, PAD_L + M:2 * PAD_L + M] = halo

        w1t = w1t_ref[...]            # (width*scale, Cin)
        b1 = b1_ref[...]              # (width*scale, 1)
        w3t = w3t_ref[...]            # (Cout3, 2*width*scale)
        b3 = b3_ref[...]              # (Cout3, 1)

        def conv3x3(img, sp, w_ref, b_ref, idx):
            # Build three dx strips (masked) inside the zero-halo buffer; the
            # nine taps are then just dy*W lane slices of those strips, fed to
            # three accumulated K = 3*C MXU dots.
            buf_ref[img, C:2 * C, PAD_L:PAD_L + M] = sp
            buf_ref[img, 0:C, PAD_L:PAD_L + M] = (
                buf_ref[img, C:2 * C, PAD_L - 1:PAD_L - 1 + M] * mask_l)
            buf_ref[img, 2 * C:3 * C, PAD_L:PAD_L + M] = (
                buf_ref[img, C:2 * C, PAD_L + 1:PAD_L + 1 + M] * mask_r)
            acc = None
            for dyi in range(3):                          # dy = -1, 0, +1
                off = PAD_L + (dyi - 1) * W
                taps = buf_ref[img, :, off:off + M]       # (3*C, M)
                d = jnp.dot(w_ref[idx, dyi], taps,
                            preferred_element_type=jnp.float32)
                acc = d if acc is None else acc + d
            return jnp.maximum(acc + b_ref[idx], 0.0)

        for img in range(ips):
            x = x_ref[img]                                # (Cin, M), lane = H*W

            # ---- conv1 (1x1) + bn1(folded) + relu ----------------------------
            out1 = jnp.dot(w1t, x, preferred_element_type=jnp.float32)
            out1 = jnp.maximum(out1 + b1, 0.0)            # (width*scale, M)

            # ---- forward direction -------------------------------------------
            sp = None
            for i in range(nums):
                spx_i = out1[i * C:(i + 1) * C, :]
                sp_in = spx_i if i == 0 else sp + spx_i
                sp = conv3x3(img, sp_in, wf_ref, bf_ref, i)
                cat_ref[img, i * C:(i + 1) * C, :] = sp
            if scale != 1:
                cat_ref[img, nums * C:scale * C, :] = out1[nums * C:scale * C, :]

            # ---- backward direction ------------------------------------------
            # NOTE: `sp` intentionally carries over from the forward loop,
            # exactly as in the PyTorch reference (do not "fix" this).
            boff = scale * C
            for k in range(nums):
                i = nums - 1 - k
                spx_i = out1[i * C:(i + 1) * C, :]
                sp_in = spx_i if i == 0 else sp + spx_i
                sp = conv3x3(img, sp_in, wb_ref, bb_ref, i)
                cat_ref[img, boff + k * C:boff + (k + 1) * C, :] = sp
            if scale != 1:
                cat_ref[img, boff + nums * C:boff + scale * C, :] = out1[0:C, :]

            # ---- conv3 (1x1) + bn3(folded) + residual + relu ------------------
            out3 = jnp.dot(w3t, cat_ref[img], preferred_element_type=jnp.float32)
            o_ref[img] = jnp.maximum(out3 + b3 + x, 0.0)

    return kernel


def bottle2neck_bi_pallas(x_nchw, p, images_per_step=None):
    width, scale, nums = p['width'], p['scale'], p['nums']
    N, Cin, H, W = x_nchw.shape
    M = H * W
    cout3 = p['w3'].shape[1]
    assert Cin == cout3, "residual add requires inplanes == planes*expansion"
    assert M % 128 == 0, "H*W must be a multiple of 128 for lane-dense layout"
    assert W <= PAD_L, "halo must cover one spatial row"

    # ---- host-side prep: fold BN scale into weights, channel-major layouts --
    s1, b1 = p['bn1']
    w1t = (p['w1'] * s1[None, :]).T.astype(jnp.float32)          # (w*s, Cin)
    b1c = b1.reshape(-1, 1).astype(jnp.float32)

    def prep3x3(w_hwio, bn):
        s, b = bn
        wf = w_hwio * s[None, None, None, :]                      # fold BN scale
        # (ky, kx, ci, co) -> (ky, co, kx*C + ci): one (C, 3C) weight per dy row
        wdy = jnp.transpose(wf, (0, 3, 1, 2)).reshape(3, width, 3 * width)
        return wdy.astype(jnp.float32), b.reshape(-1, 1).astype(jnp.float32)

    wf_l, bf_l = zip(*[prep3x3(p['wf'][i], p['bnf'][i]) for i in range(nums)])
    wb_l, bb_l = zip(*[prep3x3(p['wb'][i], p['bnb'][i]) for i in range(nums)])
    wf9, bf9 = jnp.stack(wf_l), jnp.stack(bf_l)     # (nums,3,C,3C), (nums,C,1)
    wb9, bb9 = jnp.stack(wb_l), jnp.stack(bb_l)

    s3, b3 = p['bn3']
    w3t = (p['w3'] * s3[None, :]).T.astype(jnp.float32)           # (Cout3, 2*w*s)
    b3c = b3.reshape(-1, 1).astype(jnp.float32)

    x_cm = x_nchw.reshape(N, Cin, M)        # NCHW -> (N, C, H*W): reshape only

    # ---- batch folding: whole batch per step on 1-TC chips, 1 image per TC on
    #      multi-TC chips (grid sharded via "parallel") ------------------------
    if images_per_step is None:
        cores = _tensorcores_per_chip()
        gdiv = max(d for d in range(1, N + 1) if N % d == 0 and d <= max(1, cores))
        images_per_step = N // gdiv
    assert N % images_per_step == 0
    grid_n = N // images_per_step
    ips = images_per_step

    kernel = _make_fused_kernel(H, W, width, scale, nums, ips)

    def fullspec(a):
        nd = a.ndim
        return pl.BlockSpec(tuple(a.shape), lambda g, _nd=nd: (0,) * _nd)

    ws = width * scale
    out = pl.pallas_call(
        kernel,
        out_shape=jax.ShapeDtypeStruct((N, cout3, M), jnp.float32),
        grid=(grid_n,),
        in_specs=[
            pl.BlockSpec((ips, Cin, M), lambda g: (g, 0, 0)),
            fullspec(w1t), fullspec(b1c),
            fullspec(wf9), fullspec(bf9),
            fullspec(wb9), fullspec(bb9),
            fullspec(w3t), fullspec(b3c),
        ],
        out_specs=pl.BlockSpec((ips, cout3, M), lambda g: (g, 0, 0)),
        scratch_shapes=[
            pltpu.VMEM((ips, 3 * width, 2 * PAD_L + M), jnp.float32),  # 3-strip halo buf
            pltpu.VMEM((ips, 2 * ws, M), jnp.float32),                 # concat buffer
        ],
        compiler_params=pltpu.CompilerParams(
            dimension_semantics=("parallel",)),
    )(x_cm, w1t, b1c, wf9, bf9, wb9, bb9, w3t, b3c)

    return out.reshape(N, cout3, H, W)


# --------------------------- pure-JAX reference ------------------------------

def _ref_conv1x1(x, w, scale, shift, residual=None):
    y = jnp.einsum('nhwc,cd->nhwd', x, w)
    y = y * scale + shift
    if residual is not None:
        y = y + residual
    return jnp.maximum(y, 0.0)


def _ref_conv3x3(x, w, scale, shift):
    y = jax.lax.conv_general_dilated(
        x, w, window_strides=(1, 1), padding='SAME',
        dimension_numbers=('NHWC', 'HWIO', 'NHWC'))
    return jnp.maximum(y * scale + shift, 0.0)


def bottle2neck_bi_ref(x_nchw, p):
    x = jnp.transpose(x_nchw, (0, 2, 3, 1))            # NCHW -> NHWC
    width, scale, nums = p['width'], p['scale'], p['nums']
    residual = x
    out = _ref_conv1x1(x, p['w1'], *p['bn1'])
    spx = [out[..., i * width:(i + 1) * width] for i in range(scale)]

    outs_f, sp = [], None
    for i in range(nums):
        sp_in = spx[i] if i == 0 else sp + spx[i]
        sp = _ref_conv3x3(sp_in, p['wf'][i], *p['bnf'][i])
        outs_f.append(sp)
    if scale != 1:
        outs_f.append(spx[nums])
    out_f = jnp.concatenate(outs_f, axis=-1)

    outs_b = []
    for k in range(nums):                               # sp carries over (as in torch)
        i = nums - 1 - k
        sp_in = spx[i] if i == 0 else sp + spx[i]
        sp = _ref_conv3x3(sp_in, p['wb'][i], *p['bnb'][i])
        outs_b.append(sp)
    if scale != 1:
        outs_b.append(spx[0])
    out_b = jnp.concatenate(outs_b, axis=-1)

    out = jnp.concatenate([out_f, out_b], axis=-1)
    out = _ref_conv1x1(out, p['w3'], *p['bn3'], residual=residual)
    return jnp.transpose(out, (0, 3, 1, 2))             # back to NCHW


# ------------------------------ parameter init -------------------------------

def _bn_fold(gamma, beta, mean, var):
    s = gamma / jnp.sqrt(var + EPS)
    return s, beta - mean * s


def make_params(inplanes=32, planes=8, base_width=64, scale=4, seed=0):
    width = int(math.floor(planes * (base_width / 64.0)))
    expansion = 4
    nums = 1 if scale == 1 else scale - 1
    key = jax.random.PRNGKey(seed)

    def nxt():
        nonlocal key
        key, sub = jax.random.split(key)
        return sub

    def bn_params(c):
        gamma = 1.0 + 0.1 * jax.random.normal(nxt(), (c,), jnp.float32)
        beta = 0.1 * jax.random.normal(nxt(), (c,), jnp.float32)
        mean = 0.1 * jax.random.normal(nxt(), (c,), jnp.float32)
        var = 1.0 + 0.1 * jax.random.uniform(nxt(), (c,), jnp.float32)
        return _bn_fold(gamma, beta, mean, var)

    p = {}
    # conv1: torch (Cout, Cin, 1, 1) <-> matmul weight (Cin, Cout)
    p['w1'] = 0.1 * jax.random.normal(nxt(), (inplanes, width * scale), jnp.float32)
    p['bn1'] = bn_params(width * scale)
    # 3x3 convs: torch (Cout, Cin, 3, 3) <-> HWIO (3, 3, Cin, Cout)
    p['wf'] = [0.1 * jax.random.normal(nxt(), (3, 3, width, width), jnp.float32)
               for _ in range(nums)]
    p['bnf'] = [bn_params(width) for _ in range(nums)]
    p['wb'] = [0.1 * jax.random.normal(nxt(), (3, 3, width, width), jnp.float32)
               for _ in range(nums)]
    p['bnb'] = [bn_params(width) for _ in range(nums)]
    p['w3'] = 0.1 * jax.random.normal(
        nxt(), (width * scale * 2, planes * expansion), jnp.float32)
    p['bn3'] = bn_params(planes * expansion)
    p['width'], p['scale'], p['nums'] = width, scale, nums
    return p


# ----------------------------------- main ------------------------------------

if __name__ == "__main__":
    # Bottle2neck_bi(inplanes=32, planes=8, stride=1, downsample=None,
    #                baseWidth=64, scale=4, stype='normal', improve=0)
    N, inplanes, H, W = 2, 32, 16, 16
    planes = 8

    params = make_params(inplanes=inplanes, planes=planes,
                         base_width=64, scale=4, seed=0)
    x = jax.random.normal(jax.random.PRNGKey(0), (N, inplanes, H, W), jnp.float32)

    out = jax.block_until_ready(bottle2neck_bi_pallas(x, params))
    ref = jax.block_until_ready(bottle2neck_bi_ref(x, params))

    assert out.shape == (N, planes * 4, H, W), out.shape
    np.testing.assert_allclose(np.asarray(out), np.asarray(ref),
                               rtol=1e-3, atol=1e-3)
    print("KERNEL_OK")
</pallas_src>

<mosaic_0001>
module attributes {stable_mosaic.version = 11 : i64} {
  func.func @kernel(%arg0: i32, %arg1: memref<2x32x256xf32, #tpu.memory_space<vmem>>, %arg2: memref<32x32xf32, #tpu.memory_space<vmem>>, %arg3: memref<32x1xf32, #tpu.memory_space<vmem>>, %arg4: memref<3x3x8x24xf32, #tpu.memory_space<vmem>>, %arg5: memref<3x8x1xf32, #tpu.memory_space<vmem>>, %arg6: memref<3x3x8x24xf32, #tpu.memory_space<vmem>>, %arg7: memref<3x8x1xf32, #tpu.memory_space<vmem>>, %arg8: memref<32x64xf32, #tpu.memory_space<vmem>>, %arg9: memref<32x1xf32, #tpu.memory_space<vmem>>, %arg10: memref<2x32x256xf32, #tpu.memory_space<vmem>>, %arg11: memref<2x24x512xf32, #tpu.memory_space<vmem>>, %arg12: memref<2x64x256xf32, #tpu.memory_space<vmem>>) attributes {dimension_semantics = [#tpu.dimension_semantics<parallel>], iteration_bounds = array<i64: 1>, scalar_prefetch = 0 : i64, scratch_operands = 2 : i64, tpu.core_type = #tpu.core_type<tc>, window_params = [{transform_indices = @transform_0, window_bounds = array<i64: 2, 32, 256>}, {pipeline_mode = #tpu.pipeline_mode<synchronous>, transform_indices = @transform_1, window_bounds = array<i64: 32, 32>}, {pipeline_mode = #tpu.pipeline_mode<synchronous>, transform_indices = @transform_2, window_bounds = array<i64: 32, 1>}, {pipeline_mode = #tpu.pipeline_mode<synchronous>, transform_indices = @transform_3, window_bounds = array<i64: 3, 3, 8, 24>}, {pipeline_mode = #tpu.pipeline_mode<synchronous>, transform_indices = @transform_4, window_bounds = array<i64: 3, 8, 1>}, {pipeline_mode = #tpu.pipeline_mode<synchronous>, transform_indices = @transform_5, window_bounds = array<i64: 3, 3, 8, 24>}, {pipeline_mode = #tpu.pipeline_mode<synchronous>, transform_indices = @transform_6, window_bounds = array<i64: 3, 8, 1>}, {pipeline_mode = #tpu.pipeline_mode<synchronous>, transform_indices = @transform_7, window_bounds = array<i64: 32, 64>}, {pipeline_mode = #tpu.pipeline_mode<synchronous>, transform_indices = @transform_8, window_bounds = array<i64: 32, 1>}, {transform_indices = @transform_9, window_bounds = array<i64: 2, 32, 256>}]} {
    %0 = tpu.iota {dimensions = array<i32: 1>} : vector<8x256xi32>
    %1 = arith.sitofp %0 : vector<8x256xi32> to vector<8x256xf32>
    %cst = arith.constant 5.000000e-01 : f32
    %2 = vector.broadcast %cst : f32 to vector<8x256xf32>
    %3 = arith.addf %1, %2 : vector<8x256xf32>
    %cst_0 = arith.constant 6.250000e-02 : f32
    %4 = vector.broadcast %cst_0 : f32 to vector<8x256xf32>
    %5 = arith.mulf %3, %4 : vector<8x256xf32>
    %6 = math.floor %5 : vector<8x256xf32>
    %cst_1 = arith.constant 1.600000e+01 : f32
    %7 = vector.broadcast %cst_1 : f32 to vector<8x256xf32>
    %8 = arith.mulf %6, %7 : vector<8x256xf32>
    %9 = arith.subf %1, %8 : vector<8x256xf32>
    %cst_2 = arith.constant 5.000000e-01 : f32
    %10 = vector.broadcast %cst_2 : f32 to vector<8x256xf32>
    %11 = arith.cmpf oge, %9, %10 : vector<8x256xf32>
    %12 = arith.extui %11 : vector<8x256xi1> to vector<8x256xi32>
    %13 = arith.sitofp %12 : vector<8x256xi32> to vector<8x256xf32>
    %cst_3 = arith.constant 1.450000e+01 : f32
    %14 = vector.broadcast %cst_3 : f32 to vector<8x256xf32>
    %15 = arith.cmpf ole, %9, %14 : vector<8x256xf32>
    %16 = arith.extui %15 : vector<8x256xi1> to vector<8x256xi32>
    %17 = arith.sitofp %16 : vector<8x256xi32> to vector<8x256xf32>
    %cst_4 = arith.constant 0.000000e+00 : f32
    %18 = vector.broadcast %cst_4 : f32 to vector<2x24x128xf32>
    %c0 = arith.constant 0 : index
    %c0_5 = arith.constant 0 : index
    %c0_6 = arith.constant 0 : index
    %19 = vector.load %arg11[%c0, %c0_5, %c0_6] : memref<2x24x512xf32, #tpu.memory_space<vmem>>, vector<2x24x128xf32>
    tpu.vector_store %arg11[%c0, %c0_5, %c0_6], %18 {strides = array<i32>} : memref<2x24x512xf32, #tpu.memory_space<vmem>>, vector<2x24x128xf32>,
    %c0_7 = arith.constant 0 : index
    %c0_8 = arith.constant 0 : index
    %c384 = arith.constant 384 : index
    %20 = vector.load %arg11[%c0_7, %c0_8, %c384] : memref<2x24x512xf32, #tpu.memory_space<vmem>>, vector<2x24x128xf32>
    tpu.vector_store %arg11[%c0_7, %c0_8, %c384], %18 {strides = array<i32>} : memref<2x24x512xf32, #tpu.memory_space<vmem>>, vector<2x24x128xf32>,
    %c0_9 = arith.constant 0 : index
    %c0_10 = arith.constant 0 : index
    %21 = vector.load %arg2[%c0_9, %c0_10] : memref<32x32xf32, #tpu.memory_space<vmem>>, vector<32x32xf32>
    %c0_11 = arith.constant 0 : index
    %c0_12 = arith.constant 0 : index
    %22 = vector.load %arg3[%c0_11, %c0_12] : memref<32x1xf32, #tpu.memory_space<vmem>>, vector<32x1xf32>
    %c0_13 = arith.constant 0 : index
    %c0_14 = arith.constant 0 : index
    %23 = vector.load %arg8[%c0_13, %c0_14] : memref<32x64xf32, #tpu.memory_space<vmem>>, vector<32x64xf32>
    %c0_15 = arith.constant 0 : index
    %c0_16 = arith.constant 0 : index
    %24 = vector.load %arg9[%c0_15, %c0_16] : memref<32x1xf32, #tpu.memory_space<vmem>>, vector<32x1xf32>
    %c0_17 = arith.constant 0 : index
    %c0_18 = arith.constant 0 : index
    %c0_19 = arith.constant 0 : index
    %25 = vector.load %arg1[%c0_17, %c0_18, %c0_19] : memref<2x32x256xf32, #tpu.memory_space<vmem>>, vector<1x32x256xf32>
    %26 = vector.shape_cast %25 : vector<1x32x256xf32> to vector<32x256xf32>
    %cst_20 = arith.constant dense<0.000000e+00> : vector<32x256xf32>
    %27 = tpu.matmul %21, %26, %cst_20 {dimension_numbers = #tpu.dot_dimension_numbers<[1], [0], [0], [1], [0, 0, 1, 1], [], []>} : vector<32x32xf32>, vector<32x256xf32>, vector<32x256xf32> -> vector<32x256xf32>
    %28 = vector.broadcast %22 : vector<32x1xf32> to vector<32x256xf32>
    %29 = arith.addf %27, %28 : vector<32x256xf32>
    %cst_21 = arith.constant 0.000000e+00 : f32
    %30 = vector.broadcast %cst_21 : f32 to vector<32x256xf32>
    %31 = arith.maximumf %29, %30 : vector<32x256xf32>
    %32 = vector.extract_strided_slice %31 {offsets = [0, 0], sizes = [8, 256], strides = [1, 1]} : vector<32x256xf32> to vector<8x256xf32>
    %c0_22 = arith.constant 0 : index
    %c8 = arith.constant 8 : index
    %c128 = arith.constant 128 : index
    %33 = vector.load %arg11[%c0_22, %c8, %c128] : memref<2x24x512xf32, #tpu.memory_space<vmem>>, vector<1x8x256xf32>
    %34 = vector.shape_cast %33 : vector<1x8x256xf32> to vector<8x256xf32>
    %35 = vector.shape_cast %32 : vector<8x256xf32> to vector<1x8x256xf32>
    tpu.vector_store %arg11[%c0_22, %c8, %c128], %35 {strides = array<i32>} : memref<2x24x512xf32, #tpu.memory_space<vmem>>, vector<1x8x256xf32>,
    %c0_23 = arith.constant 0 : index
    %c8_24 = arith.constant 8 : index
    %c127 = arith.constant 127 : index
    %36 = vector.load %arg11[%c0_23, %c8_24, %c127] : memref<2x24x512xf32, #tpu.memory_space<vmem>>, vector<1x8x256xf32>
    %37 = vector.shape_cast %36 : vector<1x8x256xf32> to vector<8x256xf32>
    %38 = arith.mulf %37, %13 : vector<8x256xf32>
    %c0_25 = arith.constant 0 : index
    %c0_26 = arith.constant 0 : index
    %c128_27 = arith.constant 128 : index
    %39 = vector.load %arg11[%c0_25, %c0_26, %c128_27] : memref<2x24x512xf32, #tpu.memory_space<vmem>>, vector<1x8x256xf32>
    %40 = vector.shape_cast %39 : vector<1x8x256xf32> to vector<8x256xf32>
    %41 = vector.shape_cast %38 : vector<8x256xf32> to vector<1x8x256xf32>
    tpu.vector_store %arg11[%c0_25, %c0_26, %c128_27], %41 {strides = array<i32>} : memref<2x24x512xf32, #tpu.memory_space<vmem>>, vector<1x8x256xf32>,
    %c0_28 = arith.constant 0 : index
    %c8_29 = arith.constant 8 : index
    %c129 = arith.constant 129 : index
    %42 = vector.load %arg11[%c0_28, %c8_29, %c129] : memref<2x24x512xf32, #tpu.memory_space<vmem>>, vector<1x8x256xf32>
    %43 = vector.shape_cast %42 : vector<1x8x256xf32> to vector<8x256xf32>
    %44 = arith.mulf %43, %17 : vector<8x256xf32>
    %c0_30 = arith.constant 0 : index
    %c16 = arith.constant 16 : index
    %c128_31 = arith.constant 128 : index
    %45 = vector.load %arg11[%c0_30, %c16, %c128_31] : memref<2x24x512xf32, #tpu.memory_space<vmem>>, vector<1x8x256xf32>
    %46 = vector.shape_cast %45 : vector<1x8x256xf32> to vector<8x256xf32>
    %47 = vector.shape_cast %44 : vector<8x256xf32> to vector<1x8x256xf32>
    tpu.vector_store %arg11[%c0_30, %c16, %c128_31], %47 {strides = array<i32>} : memref<2x24x512xf32, #tpu.memory_space<vmem>>, vector<1x8x256xf32>,
    %c0_32 = arith.constant 0 : index
    %c0_33 = arith.constant 0 : index
    %c112 = arith.constant 112 : index
    %48 = vector.load %arg11[%c0_32, %c0_33, %c112] : memref<2x24x512xf32, #tpu.memory_space<vmem>>, vector<1x24x256xf32>
    %49 = vector.shape_cast %48 : vector<1x24x256xf32> to vector<24x256xf32>
    %c0_34 = arith.constant 0 : index
    %c0_35 = arith.constant 0 : index
    %c0_36 = arith.constant 0 : index
    %c0_37 = arith.constant 0 : index
    %50 = vector.load %arg4[%c0_34, %c0_35, %c0_36, %c0_37] : memref<3x3x8x24xf32, #tpu.memory_space<vmem>>, vector<1x1x8x24xf32>
    %51 = vector.shape_cast %50 : vector<1x1x8x24xf32> to vector<8x24xf32>
    %cst_38 = arith.constant dense<0.000000e+00> : vector<8x256xf32>
    %52 = tpu.matmul %51, %49, %cst_38 {dimension_numbers = #tpu.dot_dimension_numbers<[1], [0], [0], [1], [0, 0, 1, 1], [], []>} : vector<8x24xf32>, vector<24x256xf32>, vector<8x256xf32> -> vector<8x256xf32>
    %c0_39 = arith.constant 0 : index
    %c0_40 = arith.constant 0 : index
    %c128_41 = arith.constant 128 : index
    %53 = vector.load %arg11[%c0_39, %c0_40, %c128_41] : memref<2x24x512xf32, #tpu.memory_space<vmem>>, vector<1x24x256xf32>
    %54 = vector.shape_cast %53 : vector<1x24x256xf32> to vector<24x256xf32>
    %c0_42 = arith.constant 0 : index
    %c1 = arith.constant 1 : index
    %c0_43 = arith.constant 0 : index
    %c0_44 = arith.constant 0 : index
    %55 = vector.load %arg4[%c0_42, %c1, %c0_43, %c0_44] : memref<3x3x8x24xf32, #tpu.memory_space<vmem>>, vector<1x1x8x24xf32>
    %56 = vector.shape_cast %55 : vector<1x1x8x24xf32> to vector<8x24xf32>
    %cst_45 = arith.constant dense<0.000000e+00> : vector<8x256xf32>
    %57 = tpu.matmul %56, %54, %cst_45 {dimension_numbers = #tpu.dot_dimension_numbers<[1], [0], [0], [1], [0, 0, 1, 1], [], []>} : vector<8x24xf32>, vector<24x256xf32>, vector<8x256xf32> -> vector<8x256xf32>
    %58 = arith.addf %52, %57 : vector<8x256xf32>
    %c0_46 = arith.constant 0 : index
    %c0_47 = arith.constant 0 : index
    %c144 = arith.constant 144 : index
    %59 = vector.load %arg11[%c0_46, %c0_47, %c144] : memref<2x24x512xf32, #tpu.memory_space<vmem>>, vector<1x24x256xf32>
    %60 = vector.shape_cast %59 : vector<1x24x256xf32> to vector<24x256xf32>
    %c0_48 = arith.constant 0 : index
    %c2 = arith.constant 2 : index
    %c0_49 = arith.constant 0 : index
    %c0_50 = arith.constant 0 : index
    %61 = vector.load %arg4[%c0_48, %c2, %c0_49, %c0_50] : memref<3x3x8x24xf32, #tpu.memory_space<vmem>>, vector<1x1x8x24xf32>
    %62 = vector.shape_cast %61 : vector<1x1x8x24xf32> to vector<8x24xf32>
    %cst_51 = arith.constant dense<0.000000e+00> : vector<8x256xf32>
    %63 = tpu.matmul %62, %60, %cst_51 {dimension_numbers = #tpu.dot_dimension_numbers<[1], [0], [0], [1], [0, 0, 1, 1], [], []>} : vector<8x24xf32>, vector<24x256xf32>, vector<8x256xf32> -> vector<8x256xf32>
    %64 = arith.addf %58, %63 : vector<8x256xf32>
    %c0_52 = arith.constant 0 : index
    %c0_53 = arith.constant 0 : index
    %c0_54 = arith.constant 0 : index
    %65 = vector.load %arg5[%c0_52, %c0_53, %c0_54] : memref<3x8x1xf32, #tpu.memory_space<vmem>>, vector<1x8x1xf32>
    %66 = vector.shape_cast %65 : vector<1x8x1xf32> to vector<8x1xf32>
    %67 = vector.broadcast %66 : vector<8x1xf32> to vector<8x256xf32>
    %68 = arith.addf %64, %67 : vector<8x256xf32>
    %cst_55 = arith.constant 0.000000e+00 : f32
    %69 = vector.broadcast %cst_55 : f32 to vector<8x256xf32>
    %70 = arith.maximumf %68, %69 : vector<8x256xf32>
    %c0_56 = arith.constant 0 : index
    %c0_57 = arith.constant 0 : index
    %c0_58 = arith.constant 0 : index
    %71 = vector.load %arg12[%c0_56, %c0_57, %c0_58] : memref<2x64x256xf32, #tpu.memory_space<vmem>>, vector<1x8x256xf32>
    %72 = vector.shape_cast %71 : vector<1x8x256xf32> to vector<8x256xf32>
    %73 = vector.shape_cast %70 : vector<8x256xf32> to vector<1x8x256xf32>
    tpu.vector_store %arg12[%c0_56, %c0_57, %c0_58], %73 {strides = array<i32>} : memref<2x64x256xf32, #tpu.memory_space<vmem>>, vector<1x8x256xf32>,
    %74 = vector.extract_strided_slice %31 {offsets = [8, 0], sizes = [8, 256], strides = [1, 1]} : vector<32x256xf32> to vector<8x256xf32>
    %75 = arith.addf %70, %74 : vector<8x256xf32>
    %c0_59 = arith.constant 0 : index
    %c8_60 = arith.constant 8 : index
    %c128_61 = arith.constant 128 : index
    %76 = vector.load %arg11[%c0_59, %c8_60, %c128_61] : memref<2x24x512xf32, #tpu.memory_space<vmem>>, vector<1x8x256xf32>
    %77 = vector.shape_cast %76 : vector<1x8x256xf32> to vector<8x256xf32>
    %78 = vector.shape_cast %75 : vector<8x256xf32> to vector<1x8x256xf32>
    tpu.vector_store %arg11[%c0_59, %c8_60, %c128_61], %78 {strides = array<i32>} : memref<2x24x512xf32, #tpu.memory_space<vmem>>, vector<1x8x256xf32>,
    %c0_62 = arith.constant 0 : index
    %c8_63 = arith.constant 8 : index
    %c127_64 = arith.constant 127 : index
    %79 = vector.load %arg11[%c0_62, %c8_63, %c127_64] : memref<2x24x512xf32, #tpu.memory_space<vmem>>, vector<1x8x256xf32>
    %80 = vector.shape_cast %79 : vector<1x8x256xf32> to vector<8x256xf32>
    %81 = arith.mulf %80, %13 : vector<8x256xf32>
    %c0_65 = arith.constant 0 : index
    %c0_66 = arith.constant 0 : index
    %c128_67 = arith.constant 128 : index
    %82 = vector.load %arg11[%c0_65, %c0_66, %c128_67] : memref<2x24x512xf32, #tpu.memory_space<vmem>>, vector<1x8x256xf32>
    %83 = vector.shape_cast %82 : vector<1x8x256xf32> to vector<8x256xf32>
    %84 = vector.shape_cast %81 : vector<8x256xf32> to vector<1x8x256xf32>
    tpu.vector_store %arg11[%c0_65, %c0_66, %c128_67], %84 {strides = array<i32>} : memref<2x24x512xf32, #tpu.memory_space<vmem>>, vector<1x8x256xf32>,
    %c0_68 = arith.constant 0 : index
    %c8_69 = arith.constant 8 : index
    %c129_70 = arith.constant 129 : index
    %85 = vector.load %arg11[%c0_68, %c8_69, %c129_70] : memref<2x24x512xf32, #tpu.memory_space<vmem>>, vector<1x8x256xf32>
    %86 = vector.shape_cast %85 : vector<1x8x256xf32> to vector<8x256xf32>
    %87 = arith.mulf %86, %17 : vector<8x256xf32>
    %c0_71 = arith.constant 0 : index
    %c16_72 = arith.constant 16 : index
    %c128_73 = arith.constant 128 : index
    %88 = vector.load %arg11[%c0_71, %c16_72, %c128_73] : memref<2x24x512xf32, #tpu.memory_space<vmem>>, vector<1x8x256xf32>
    %89 = vector.shape_cast %88 : vector<1x8x256xf32> to vector<8x256xf32>
    %90 = vector.shape_cast %87 : vector<8x256xf32> to vector<1x8x256xf32>
    tpu.vector_store %arg11[%c0_71, %c16_72, %c128_73], %90 {strides = array<i32>} : memref<2x24x512xf32, #tpu.memory_space<vmem>>, vector<1x8x256xf32>,
    %c0_74 = arith.constant 0 : index
    %c0_75 = arith.constant 0 : index
    %c112_76 = arith.constant 112 : index
    %91 = vector.load %arg11[%c0_74, %c0_75, %c112_76] : memref<2x24x512xf32, #tpu.memory_space<vmem>>, vector<1x24x256xf32>
    %92 = vector.shape_cast %91 : vector<1x24x256xf32> to vector<24x256xf32>
    %c1_77 = arith.constant 1 : index
    %c0_78 = arith.constant 0 : index
    %c0_79 = arith.constant 0 : index
    %c0_80 = arith.constant 0 : index
    %93 = vector.load %arg4[%c1_77, %c0_78, %c0_79, %c0_80] : memref<3x3x8x24xf32, #tpu.memory_space<vmem>>, vector<1x1x8x24xf32>
    %94 = vector.shape_cast %93 : vector<1x1x8x24xf32> to vector<8x24xf32>
    %cst_81 = arith.constant dense<0.000000e+00> : vector<8x256xf32>
    %95 = tpu.matmul %94, %92, %cst_81 {dimension_numbers = #tpu.dot_dimension_numbers<[1], [0], [0], [1], [0, 0, 1, 1], [], []>} : vector<8x24xf32>, vector<24x256xf32>, vector<8x256xf32> -> vector<8x256xf32>
    %c0_82 = arith.constant 0 : index
    %c0_83 = arith.constant 0 : index
    %c128_84 = arith.constant 128 : index
    %96 = vector.load %arg11[%c0_82, %c0_83, %c128_84] : memref<2x24x512xf32, #tpu.memory_space<vmem>>, vector<1x24x256xf32>
    %97 = vector.shape_cast %96 : vector<1x24x256xf32> to vector<24x256xf32>
    %c1_85 = arith.constant 1 : index
    %c1_86 = arith.constant 1 : index
    %c0_87 = arith.constant 0 : index
    %c0_88 = arith.constant 0 : index
    %98 = vector.load %arg4[%c1_85, %c1_86, %c0_87, %c0_88] : memref<3x3x8x24xf32, #tpu.memory_space<vmem>>, vector<1x1x8x24xf32>
    %99 = vector.shape_cast %98 : vector<1x1x8x24xf32> to vector<8x24xf32>
    %cst_89 = arith.constant dense<0.000000e+00> : vector<8x256xf32>
    %100 = tpu.matmul %99, %97, %cst_89 {dimension_numbers = #tpu.dot_dimension_numbers<[1], [0], [0], [1], [0, 0, 1, 1], [], []>} : vector<8x24xf32>, vector<24x256xf32>, vector<8x256xf32> -> vector<8x256xf32>
    %101 = arith.addf %95, %100 : vector<8x256xf32>
    %c0_90 = arith.constant 0 : index
    %c0_91 = arith.constant 0 : index
    %c144_92 = arith.constant 144 : index
    %102 = vector.load %arg11[%c0_90, %c0_91, %c144_92] : memref<2x24x512xf32, #tpu.memory_space<vmem>>, vector<1x24x256xf32>
    %103 = vector.shape_cast %102 : vector<1x24x256xf32> to vector<24x256xf32>
    %c1_93 = arith.constant 1 : index
    %c2_94 = arith.constant 2 : index
    %c0_95 = arith.constant 0 : index
    %c0_96 = arith.constant 0 : index
    %104 = vector.load %arg4[%c1_93, %c2_94, %c0_95, %c0_96] : memref<3x3x8x24xf32, #tpu.memory_space<vmem>>, vector<1x1x8x24xf32>
    %105 = vector.shape_cast %104 : vector<1x1x8x24xf32> to vector<8x24xf32>
    %cst_97 = arith.constant dense<0.000000e+00> : vector<8x256xf32>
    %106 = tpu.matmul %105, %103, %cst_97 {dimension_numbers = #tpu.dot_dimension_numbers<[1], [0], [0], [1], [0, 0, 1, 1], [], []>} : vector<8x24xf32>, vector<24x256xf32>, vector<8x256xf32> -> vector<8x256xf32>
    %107 = arith.addf %101, %106 : vector<8x256xf32>
    %c1_98 = arith.constant 1 : index
    %c0_99 = arith.constant 0 : index
    %c0_100 = arith.constant 0 : index
    %108 = vector.load %arg5[%c1_98, %c0_99, %c0_100] : memref<3x8x1xf32, #tpu.memory_space<vmem>>, vector<1x8x1xf32>
    %109 = vector.shape_cast %108 : vector<1x8x1xf32> to vector<8x1xf32>
    %110 = vector.broadcast %109 : vector<8x1xf32> to vector<8x256xf32>
    %111 = arith.addf %107, %110 : vector<8x256xf32>
    %cst_101 = arith.constant 0.000000e+00 : f32
    %112 = vector.broadcast %cst_101 : f32 to vector<8x256xf32>
    %113 = arith.maximumf %111, %112 : vector<8x256xf32>
    %c0_102 = arith.constant 0 : index
    %c8_103 = arith.constant 8 : index
    %c0_104 = arith.constant 0 : index
    %114 = vector.load %arg12[%c0_102, %c8_103, %c0_104] : memref<2x64x256xf32, #tpu.memory_space<vmem>>, vector<1x8x256xf32>
    %115 = vector.shape_cast %114 : vector<1x8x256xf32> to vector<8x256xf32>
    %116 = vector.shape_cast %113 : vector<8x256xf32> to vector<1x8x256xf32>
    tpu.vector_store %arg12[%c0_102, %c8_103, %c0_104], %116 {strides = array<i32>} : memref<2x64x256xf32, #tpu.memory_space<vmem>>, vector<1x8x256xf32>,
    %117 = vector.extract_strided_slice %31 {offsets = [16, 0], sizes = [8, 256], strides = [1, 1]} : vector<32x256xf32> to vector<8x256xf32>
    %118 = arith.addf %113, %117 : vector<8x256xf32>
    %c0_105 = arith.constant 0 : index
    %c8_106 = arith.constant 8 : index
    %c128_107 = arith.constant 128 : index
    %119 = vector.load %arg11[%c0_105, %c8_106, %c128_107] : memref<2x24x512xf32, #tpu.memory_space<vmem>>, vector<1x8x256xf32>
    %120 = vector.shape_cast %119 : vector<1x8x256xf32> to vector<8x256xf32>
    %121 = vector.shape_cast %118 : vector<8x256xf32> to vector<1x8x256xf32>
    tpu.vector_store %arg11[%c0_105, %c8_106, %c128_107], %121 {strides = array<i32>} : memref<2x24x512xf32, #tpu.memory_space<vmem>>, vector<1x8x256xf32>,
    %c0_108 = arith.constant 0 : index
    %c8_109 = arith.constant 8 : index
    %c127_110 = arith.constant 127 : index
    %122 = vector.load %arg11[%c0_108, %c8_109, %c127_110] : memref<2x24x512xf32, #tpu.memory_space<vmem>>, vector<1x8x256xf32>
    %123 = vector.shape_cast %122 : vector<1x8x256xf32> to vector<8x256xf32>
    %124 = arith.mulf %123, %13 : vector<8x256xf32>
    %c0_111 = arith.constant 0 : index
    %c0_112 = arith.constant 0 : index
    %c128_113 = arith.constant 128 : index
    %125 = vector.load %arg11[%c0_111, %c0_112, %c128_113] : memref<2x24x512xf32, #tpu.memory_space<vmem>>, vector<1x8x256xf32>
    %126 = vector.shape_cast %125 : vector<1x8x256xf32> to vector<8x256xf32>
    %127 = vector.shape_cast %124 : vector<8x256xf32> to vector<1x8x256xf32>
    tpu.vector_store %arg11[%c0_111, %c0_112, %c128_113], %127 {strides = array<i32>} : memref<2x24x512xf32, #tpu.memory_space<vmem>>, vector<1x8x256xf32>,
    %c0_114 = arith.constant 0 : index
    %c8_115 = arith.constant 8 : index
    %c129_116 = arith.constant 129 : index
    %128 = vector.load %arg11[%c0_114, %c8_115, %c129_116] : memref<2x24x512xf32, #tpu.memory_space<vmem>>, vector<1x8x256xf32>
    %129 = vector.shape_cast %128 : vector<1x8x256xf32> to vector<8x256xf32>
    %130 = arith.mulf %129, %17 : vector<8x256xf32>
    %c0_117 = arith.constant 0 : index
    %c16_118 = arith.constant 16 : index
    %c128_119 = arith.constant 128 : index
    %131 = vector.load %arg11[%c0_117, %c16_118, %c128_119] : memref<2x24x512xf32, #tpu.memory_space<vmem>>, vector<1x8x256xf32>
    %132 = vector.shape_cast %131 : vector<1x8x256xf32> to vector<8x256xf32>
    %133 = vector.shape_cast %130 : vector<8x256xf32> to vector<1x8x256xf32>
    tpu.vector_store %arg11[%c0_117, %c16_118, %c128_119], %133 {strides = array<i32>} : memref<2x24x512xf32, #tpu.memory_space<vmem>>, vector<1x8x256xf32>,
    %c0_120 = arith.constant 0 : index
    %c0_121 = arith.constant 0 : index
    %c112_122 = arith.constant 112 : index
    %134 = vector.load %arg11[%c0_120, %c0_121, %c112_122] : memref<2x24x512xf32, #tpu.memory_space<vmem>>, vector<1x24x256xf32>
    %135 = vector.shape_cast %134 : vector<1x24x256xf32> to vector<24x256xf32>
    %c2_123 = arith.constant 2 : index
    %c0_124 = arith.constant 0 : index
    %c0_125 = arith.constant 0 : index
    %c0_126 = arith.constant 0 : index
    %136 = vector.load %arg4[%c2_123, %c0_124, %c0_125, %c0_126] : memref<3x3x8x24xf32, #tpu.memory_space<vmem>>, vector<1x1x8x24xf32>
    %137 = vector.shape_cast %136 : vector<1x1x8x24xf32> to vector<8x24xf32>
    %cst_127 = arith.constant dense<0.000000e+00> : vector<8x256xf32>
    %138 = tpu.matmul %137, %135, %cst_127 {dimension_numbers = #tpu.dot_dimension_numbers<[1], [0], [0], [1], [0, 0, 1, 1], [], []>} : vector<8x24xf32>, vector<24x256xf32>, vector<8x256xf32> -> vector<8x256xf32>
    %c0_128 = arith.constant 0 : index
    %c0_129 = arith.constant 0 : index
    %c128_130 = arith.constant 128 : index
    %139 = vector.load %arg11[%c0_128, %c0_129, %c128_130] : memref<2x24x512xf32, #tpu.memory_space<vmem>>, vector<1x24x256xf32>
    %140 = vector.shape_cast %139 : vector<1x24x256xf32> to vector<24x256xf32>
    %c2_131 = arith.constant 2 : index
    %c1_132 = arith.constant 1 : index
    %c0_133 = arith.constant 0 : index
    %c0_134 = arith.constant 0 : index
    %141 = vector.load %arg4[%c2_131, %c1_132, %c0_133, %c0_134] : memref<3x3x8x24xf32, #tpu.memory_space<vmem>>, vector<1x1x8x24xf32>
    %142 = vector.shape_cast %141 : vector<1x1x8x24xf32> to vector<8x24xf32>
    %cst_135 = arith.constant dense<0.000000e+00> : vector<8x256xf32>
    %143 = tpu.matmul %142, %140, %cst_135 {dimension_numbers = #tpu.dot_dimension_numbers<[1], [0], [0], [1], [0, 0, 1, 1], [], []>} : vector<8x24xf32>, vector<24x256xf32>, vector<8x256xf32> -> vector<8x256xf32>
    %144 = arith.addf %138, %143 : vector<8x256xf32>
    %c0_136 = arith.constant 0 : index
    %c0_137 = arith.constant 0 : index
    %c144_138 = arith.constant 144 : index
    %145 = vector.load %arg11[%c0_136, %c0_137, %c144_138] : memref<2x24x512xf32, #tpu.memory_space<vmem>>, vector<1x24x256xf32>
    %146 = vector.shape_cast %145 : vector<1x24x256xf32> to vector<24x256xf32>
    %c2_139 = arith.constant 2 : index
    %c2_140 = arith.constant 2 : index
    %c0_141 = arith.constant 0 : index
    %c0_142 = arith.constant 0 : index
    %147 = vector.load %arg4[%c2_139, %c2_140, %c0_141, %c0_142] : memref<3x3x8x24xf32, #tpu.memory_space<vmem>>, vector<1x1x8x24xf32>
    %148 = vector.shape_cast %147 : vector<1x1x8x24xf32> to vector<8x24xf32>
    %cst_143 = arith.constant dense<0.000000e+00> : vector<8x256xf32>
    %149 = tpu.matmul %148, %146, %cst_143 {dimension_numbers = #tpu.dot_dimension_numbers<[1], [0], [0], [1], [0, 0, 1, 1], [], []>} : vector<8x24xf32>, vector<24x256xf32>, vector<8x256xf32> -> vector<8x256xf32>
    %150 = arith.addf %144, %149 : vector<8x256xf32>
    %c2_144 = arith.constant 2 : index
    %c0_145 = arith.constant 0 : index
    %c0_146 = arith.constant 0 : index
    %151 = vector.load %arg5[%c2_144, %c0_145, %c0_146] : memref<3x8x1xf32, #tpu.memory_space<vmem>>, vector<1x8x1xf32>
    %152 = vector.shape_cast %151 : vector<1x8x1xf32> to vector<8x1xf32>
    %153 = vector.broadcast %152 : vector<8x1xf32> to vector<8x256xf32>
    %154 = arith.addf %150, %153 : vector<8x256xf32>
    %cst_147 = arith.constant 0.000000e+00 : f32
    %155 = vector.broadcast %cst_147 : f32 to vector<8x256xf32>
    %156 = arith.maximumf %154, %155 : vector<8x256xf32>
    %c0_148 = arith.constant 0 : index
    %c16_149 = arith.constant 16 : index
    %c0_150 = arith.constant 0 : index
    %157 = vector.load %arg12[%c0_148, %c16_149, %c0_150] : memref<2x64x256xf32, #tpu.memory_space<vmem>>, vector<1x8x256xf32>
    %158 = vector.shape_cast %157 : vector<1x8x256xf32> to vector<8x256xf32>
    %159 = vector.shape_cast %156 : vector<8x256xf32> to vector<1x8x256xf32>
    tpu.vector_store %arg12[%c0_148, %c16_149, %c0_150], %159 {strides = array<i32>} : memref<2x64x256xf32, #tpu.memory_space<vmem>>, vector<1x8x256xf32>,
    %160 = vector.extract_strided_slice %31 {offsets = [24, 0], sizes = [8, 256], strides = [1, 1]} : vector<32x256xf32> to vector<8x256xf32>
    %c0_151 = arith.constant 0 : index
    %c24 = arith.constant 24 : index
    %c0_152 = arith.constant 0 : index
    %161 = vector.load %arg12[%c0_151, %c24, %c0_152] : memref<2x64x256xf32, #tpu.memory_space<vmem>>, vector<1x8x256xf32>
    %162 = vector.shape_cast %161 : vector<1x8x256xf32> to vector<8x256xf32>
    %163 = vector.shape_cast %160 : vector<8x256xf32> to vector<1x8x256xf32>
    tpu.vector_store %arg12[%c0_151, %c24, %c0_152], %163 {strides = array<i32>} : memref<2x64x256xf32, #tpu.memory_space<vmem>>, vector<1x8x256xf32>,
    %164 = vector.extract_strided_slice %31 {offsets = [16, 0], sizes = [8, 256], strides = [1, 1]} : vector<32x256xf32> to vector<8x256xf32>
    %165 = arith.addf %156, %164 : vector<8x256xf32>
    %c0_153 = arith.constant 0 : index
    %c8_154 = arith.constant 8 : index
    %c128_155 = arith.constant 128 : index
    %166 = vector.load %arg11[%c0_153, %c8_154, %c128_155] : memref<2x24x512xf32, #tpu.memory_space<vmem>>, vector<1x8x256xf32>
    %167 = vector.shape_cast %166 : vector<1x8x256xf32> to vector<8x256xf32>
    %168 = vector.shape_cast %165 : vector<8x256xf32> to vector<1x8x256xf32>
    tpu.vector_store %arg11[%c0_153, %c8_154, %c128_155], %168 {strides = array<i32>} : memref<2x24x512xf32, #tpu.memory_space<vmem>>, vector<1x8x256xf32>,
    %c0_156 = arith.constant 0 : index
    %c8_157 = arith.constant 8 : index
    %c127_158 = arith.constant 127 : index
    %169 = vector.load %arg11[%c0_156, %c8_157, %c127_158] : memref<2x24x512xf32, #tpu.memory_space<vmem>>, vector<1x8x256xf32>
    %170 = vector.shape_cast %169 : vector<1x8x256xf32> to vector<8x256xf32>
    %171 = arith.mulf %170, %13 : vector<8x256xf32>
    %c0_159 = arith.constant 0 : index
    %c0_160 = arith.constant 0 : index
    %c128_161 = arith.constant 128 : index
    %172 = vector.load %arg11[%c0_159, %c0_160, %c128_161] : memref<2x24x512xf32, #tpu.memory_space<vmem>>, vector<1x8x256xf32>
    %173 = vector.shape_cast %172 : vector<1x8x256xf32> to vector<8x256xf32>
    %174 = vector.shape_cast %171 : vector<8x256xf32> to vector<1x8x256xf32>
    tpu.vector_store %arg11[%c0_159, %c0_160, %c128_161], %174 {strides = array<i32>} : memref<2x24x512xf32, #tpu.memory_space<vmem>>, vector<1x8x256xf32>,
    %c0_162 = arith.constant 0 : index
    %c8_163 = arith.constant 8 : index
    %c129_164 = arith.constant 129 : index
    %175 = vector.load %arg11[%c0_162, %c8_163, %c129_164] : memref<2x24x512xf32, #tpu.memory_space<vmem>>, vector<1x8x256xf32>
    %176 = vector.shape_cast %175 : vector<1x8x256xf32> to vector<8x256xf32>
    %177 = arith.mulf %176, %17 : vector<8x256xf32>
    %c0_165 = arith.constant 0 : index
    %c16_166 = arith.constant 16 : index
    %c128_167 = arith.constant 128 : index
    %178 = vector.load %arg11[%c0_165, %c16_166, %c128_167] : memref<2x24x512xf32, #tpu.memory_space<vmem>>, vector<1x8x256xf32>
    %179 = vector.shape_cast %178 : vector<1x8x256xf32> to vector<8x256xf32>
    %180 = vector.shape_cast %177 : vector<8x256xf32> to vector<1x8x256xf32>
    tpu.vector_store %arg11[%c0_165, %c16_166, %c128_167], %180 {strides = array<i32>} : memref<2x24x512xf32, #tpu.memory_space<vmem>>, vector<1x8x256xf32>,
    %c0_168 = arith.constant 0 : index
    %c0_169 = arith.constant 0 : index
    %c112_170 = arith.constant 112 : index
    %181 = vector.load %arg11[%c0_168, %c0_169, %c112_170] : memref<2x24x512xf32, #tpu.memory_space<vmem>>, vector<1x24x256xf32>
    %182 = vector.shape_cast %181 : vector<1x24x256xf32> to vector<24x256xf32>
    %c2_171 = arith.constant 2 : index
    %c0_172 = arith.constant 0 : index
    %c0_173 = arith.constant 0 : index
    %c0_174 = arith.constant 0 : index
    %183 = vector.load %arg6[%c2_171, %c0_172, %c0_173, %c0_174] : memref<3x3x8x24xf32, #tpu.memory_space<vmem>>, vector<1x1x8x24xf32>
    %184 = vector.shape_cast %183 : vector<1x1x8x24xf32> to vector<8x24xf32>
    %cst_175 = arith.constant dense<0.000000e+00> : vector<8x256xf32>
    %185 = tpu.matmul %184, %182, %cst_175 {dimension_numbers = #tpu.dot_dimension_numbers<[1], [0], [0], [1], [0, 0, 1, 1], [], []>} : vector<8x24xf32>, vector<24x256xf32>, vector<8x256xf32> -> vector<8x256xf32>
    %c0_176 = arith.constant 0 : index
    %c0_177 = arith.constant 0 : index
    %c128_178 = arith.constant 128 : index
    %186 = vector.load %arg11[%c0_176, %c0_177, %c128_178] : memref<2x24x512xf32, #tpu.memory_space<vmem>>, vector<1x24x256xf32>
    %187 = vector.shape_cast %186 : vector<1x24x256xf32> to vector<24x256xf32>
    %c2_179 = arith.constant 2 : index
    %c1_180 = arith.constant 1 : index
    %c0_181 = arith.constant 0 : index
    %c0_182 = arith.constant 0 : index
    %188 = vector.load %arg6[%c2_179, %c1_180, %c0_181, %c0_182] : memref<3x3x8x24xf32, #tpu.memory_space<vmem>>, vector<1x1x8x24xf32>
    %189 = vector.shape_cast %188 : vector<1x1x8x24xf32> to vector<8x24xf32>
    %cst_183 = arith.constant dense<0.000000e+00> : vector<8x256xf32>
    %190 = tpu.matmul %189, %187, %cst_183 {dimension_numbers = #tpu.dot_dimension_numbers<[1], [0], [0], [1], [0, 0, 1, 1], [], []>} : vector<8x24xf32>, vector<24x256xf32>, vector<8x256xf32> -> vector<8x256xf32>
    %191 = arith.addf %185, %190 : vector<8x256xf32>
    %c0_184 = arith.constant 0 : index
    %c0_185 = arith.constant 0 : index
    %c144_186 = arith.constant 144 : index
    %192 = vector.load %arg11[%c0_184, %c0_185, %c144_186] : memref<2x24x512xf32, #tpu.memory_space<vmem>>, vector<1x24x256xf32>
    %193 = vector.shape_cast %192 : vector<1x24x256xf32> to vector<24x256xf32>
    %c2_187 = arith.constant 2 : index
    %c2_188 = arith.constant 2 : index
    %c0_189 = arith.constant 0 : index
    %c0_190 = arith.constant 0 : index
    %194 = vector.load %arg6[%c2_187, %c2_188, %c0_189, %c0_190] : memref<3x3x8x24xf32, #tpu.memory_space<vmem>>, vector<1x1x8x24xf32>
    %195 = vector.shape_cast %194 : vector<1x1x8x24xf32> to vector<8x24xf32>
    %cst_191 = arith.constant dense<0.000000e+00> : vector<8x256xf32>
    %196 = tpu.matmul %195, %193, %cst_191 {dimension_numbers = #tpu.dot_dimension_numbers<[1], [0], [0], [1], [0, 0, 1, 1], [], []>} : vector<8x24xf32>, vector<24x256xf32>, vector<8x256xf32> -> vector<8x256xf32>
    %197 = arith.addf %191, %196 : vector<8x256xf32>
    %c2_192 = arith.constant 2 : index
    %c0_193 = arith.constant 0 : index
    %c0_194 = arith.constant 0 : index
    %198 = vector.load %arg7[%c2_192, %c0_193, %c0_194] : memref<3x8x1xf32, #tpu.memory_space<vmem>>, vector<1x8x1xf32>
    %199 = vector.shape_cast %198 : vector<1x8x1xf32> to vector<8x1xf32>
    %200 = vector.broadcast %199 : vector<8x1xf32> to vector<8x256xf32>
    %201 = arith.addf %197, %200 : vector<8x256xf32>
    %cst_195 = arith.constant 0.000000e+00 : f32
    %202 = vector.broadcast %cst_195 : f32 to vector<8x256xf32>
    %203 = arith.maximumf %201, %202 : vector<8x256xf32>
    %c0_196 = arith.constant 0 : index
    %c32 = arith.constant 32 : index
    %c0_197 = arith.constant 0 : index
    %204 = vector.load %arg12[%c0_196, %c32, %c0_197] : memref<2x64x256xf32, #tpu.memory_space<vmem>>, vector<1x8x256xf32>
    %205 = vector.shape_cast %204 : vector<1x8x256xf32> to vector<8x256xf32>
    %206 = vector.shape_cast %203 : vector<8x256xf32> to vector<1x8x256xf32>
    tpu.vector_store %arg12[%c0_196, %c32, %c0_197], %206 {strides = array<i32>} : memref<2x64x256xf32, #tpu.memory_space<vmem>>, vector<1x8x256xf32>,
    %207 = vector.extract_strided_slice %31 {offsets = [8, 0], sizes = [8, 256], strides = [1, 1]} : vector<32x256xf32> to vector<8x256xf32>
    %208 = arith.addf %203, %207 : vector<8x256xf32>
    %c0_198 = arith.constant 0 : index
    %c8_199 = arith.constant 8 : index
    %c128_200 = arith.constant 128 : index
    %209 = vector.load %arg11[%c0_198, %c8_199, %c128_200] : memref<2x24x512xf32, #tpu.memory_space<vmem>>, vector<1x8x256xf32>
    %210 = vector.shape_cast %209 : vector<1x8x256xf32> to vector<8x256xf32>
    %211 = vector.shape_cast %208 : vector<8x256xf32> to vector<1x8x256xf32>
    tpu.vector_store %arg11[%c0_198, %c8_199, %c128_200], %211 {strides = array<i32>} : memref<2x24x512xf32, #tpu.memory_space<vmem>>, vector<1x8x256xf32>,
    %c0_201 = arith.constant 0 : index
    %c8_202 = arith.constant 8 : index
    %c127_203 = arith.constant 127 : index
    %212 = vector.load %arg11[%c0_201, %c8_202, %c127_203] : memref<2x24x512xf32, #tpu.memory_space<vmem>>, vector<1x8x256xf32>
    %213 = vector.shape_cast %212 : vector<1x8x256xf32> to vector<8x256xf32>
    %214 = arith.mulf %213, %13 : vector<8x256xf32>
    %c0_204 = arith.constant 0 : index
    %c0_205 = arith.constant 0 : index
    %c128_206 = arith.constant 128 : index
    %215 = vector.load %arg11[%c0_204, %c0_205, %c128_206] : memref<2x24x512xf32, #tpu.memory_space<vmem>>, vector<1x8x256xf32>
    %216 = vector.shape_cast %215 : vector<1x8x256xf32> to vector<8x256xf32>
    %217 = vector.shape_cast %214 : vector<8x256xf32> to vector<1x8x256xf32>
    tpu.vector_store %arg11[%c0_204, %c0_205, %c128_206], %217 {strides = array<i32>} : memref<2x24x512xf32, #tpu.memory_space<vmem>>, vector<1x8x256xf32>,
    %c0_207 = arith.constant 0 : index
    %c8_208 = arith.constant 8 : index
    %c129_209 = arith.constant 129 : index
    %218 = vector.load %arg11[%c0_207, %c8_208, %c129_209] : memref<2x24x512xf32, #tpu.memory_space<vmem>>, vector<1x8x256xf32>
    %219 = vector.shape_cast %218 : vector<1x8x256xf32> to vector<8x256xf32>
    %220 = arith.mulf %219, %17 : vector<8x256xf32>
    %c0_210 = arith.constant 0 : index
    %c16_211 = arith.constant 16 : index
    %c128_212 = arith.constant 128 : index
    %221 = vector.load %arg11[%c0_210, %c16_211, %c128_212] : memref<2x24x512xf32, #tpu.memory_space<vmem>>, vector<1x8x256xf32>
    %222 = vector.shape_cast %221 : vector<1x8x256xf32> to vector<8x256xf32>
    %223 = vector.shape_cast %220 : vector<8x256xf32> to vector<1x8x256xf32>
    tpu.vector_store %arg11[%c0_210, %c16_211, %c128_212], %223 {strides = array<i32>} : memref<2x24x512xf32, #tpu.memory_space<vmem>>, vector<1x8x256xf32>,
    %c0_213 = arith.constant 0 : index
    %c0_214 = arith.constant 0 : index
    %c112_215 = arith.constant 112 : index
    %224 = vector.load %arg11[%c0_213, %c0_214, %c112_215] : memref<2x24x512xf32, #tpu.memory_space<vmem>>, vector<1x24x256xf32>
    %225 = vector.shape_cast %224 : vector<1x24x256xf32> to vector<24x256xf32>
    %c1_216 = arith.constant 1 : index
    %c0_217 = arith.constant 0 : index
    %c0_218 = arith.constant 0 : index
    %c0_219 = arith.constant 0 : index
    %226 = vector.load %arg6[%c1_216, %c0_217, %c0_218, %c0_219] : memref<3x3x8x24xf32, #tpu.memory_space<vmem>>, vector<1x1x8x24xf32>
    %227 = vector.shape_cast %226 : vector<1x1x8x24xf32> to vector<8x24xf32>
    %cst_220 = arith.constant dense<0.000000e+00> : vector<8x256xf32>
    %228 = tpu.matmul %227, %225, %cst_220 {dimension_numbers = #tpu.dot_dimension_numbers<[1], [0], [0], [1], [0, 0, 1, 1], [], []>} : vector<8x24xf32>, vector<24x256xf32>, vector<8x256xf32> -> vector<8x256xf32>
    %c0_221 = arith.constant 0 : index
    %c0_222 = arith.constant 0 : index
    %c128_223 = arith.constant 128 : index
    %229 = vector.load %arg11[%c0_221, %c0_222, %c128_223] : memref<2x24x512xf32, #tpu.memory_space<vmem>>, vector<1x24x256xf32>
    %230 = vector.shape_cast %229 : vector<1x24x256xf32> to vector<24x256xf32>
    %c1_224 = arith.constant 1 : index
    %c1_225 = arith.constant 1 : index
    %c0_226 = arith.constant 0 : index
    %c0_227 = arith.constant 0 : index
    %231 = vector.load %arg6[%c1_224, %c1_225, %c0_226, %c0_227] : memref<3x3x8x24xf32, #tpu.memory_space<vmem>>, vector<1x1x8x24xf32>
    %232 = vector.shape_cast %231 : vector<1x1x8x24xf32> to vector<8x24xf32>
    %cst_228 = arith.constant dense<0.000000e+00> : vector<8x256xf32>
    %233 = tpu.matmul %232, %230, %cst_228 {dimension_numbers = #tpu.dot_dimension_numbers<[1], [0], [0], [1], [0, 0, 1, 1], [], []>} : vector<8x24xf32>, vector<24x256xf32>, vector<8x256xf32> -> vector<8x256xf32>
    %234 = arith.addf %228, %233 : vector<8x256xf32>
    %c0_229 = arith.constant 0 : index
    %c0_230 = arith.constant 0 : index
    %c144_231 = arith.constant 144 : index
    %235 = vector.load %arg11[%c0_229, %c0_230, %c144_231] : memref<2x24x512xf32, #tpu.memory_space<vmem>>, vector<1x24x256xf32>
    %236 = vector.shape_cast %235 : vector<1x24x256xf32> to vector<24x256xf32>
    %c1_232 = arith.constant 1 : index
    %c2_233 = arith.constant 2 : index
    %c0_234 = arith.constant 0 : index
    %c0_235 = arith.constant 0 : index
    %237 = vector.load %arg6[%c1_232, %c2_233, %c0_234, %c0_235] : memref<3x3x8x24xf32, #tpu.memory_space<vmem>>, vector<1x1x8x24xf32>
    %238 = vector.shape_cast %237 : vector<1x1x8x24xf32> to vector<8x24xf32>
    %cst_236 = arith.constant dense<0.000000e+00> : vector<8x256xf32>
    %239 = tpu.matmul %238, %236, %cst_236 {dimension_numbers = #tpu.dot_dimension_numbers<[1], [0], [0], [1], [0, 0, 1, 1], [], []>} : vector<8x24xf32>, vector<24x256xf32>, vector<8x256xf32> -> vector<8x256xf32>
    %240 = arith.addf %234, %239 : vector<8x256xf32>
    %c1_237 = arith.constant 1 : index
    %c0_238 = arith.constant 0 : index
    %c0_239 = arith.constant 0 : index
    %241 = vector.load %arg7[%c1_237, %c0_238, %c0_239] : memref<3x8x1xf32, #tpu.memory_space<vmem>>, vector<1x8x1xf32>
    %242 = vector.shape_cast %241 : vector<1x8x1xf32> to vector<8x1xf32>
    %243 = vector.broadcast %242 : vector<8x1xf32> to vector<8x256xf32>
    %244 = arith.addf %240, %243 : vector<8x256xf32>
    %cst_240 = arith.constant 0.000000e+00 : f32
    %245 = vector.broadcast %cst_240 : f32 to vector<8x256xf32>
    %246 = arith.maximumf %244, %245 : vector<8x256xf32>
    %c0_241 = arith.constant 0 : index
    %c40 = arith.constant 40 : index
    %c0_242 = arith.constant 0 : index
    %247 = vector.load %arg12[%c0_241, %c40, %c0_242] : memref<2x64x256xf32, #tpu.memory_space<vmem>>, vector<1x8x256xf32>
    %248 = vector.shape_cast %247 : vector<1x8x256xf32> to vector<8x256xf32>
    %249 = vector.shape_cast %246 : vector<8x256xf32> to vector<1x8x256xf32>
    tpu.vector_store %arg12[%c0_241, %c40, %c0_242], %249 {strides = array<i32>} : memref<2x64x256xf32, #tpu.memory_space<vmem>>, vector<1x8x256xf32>,
    %250 = vector.extract_strided_slice %31 {offsets = [0, 0], sizes = [8, 256], strides = [1, 1]} : vector<32x256xf32> to vector<8x256xf32>
    %c0_243 = arith.constant 0 : index
    %c8_244 = arith.constant 8 : index
    %c128_245 = arith.constant 128 : index
    %251 = vector.load %arg11[%c0_243, %c8_244, %c128_245] : memref<2x24x512xf32, #tpu.memory_space<vmem>>, vector<1x8x256xf32>
    %252 = vector.shape_cast %251 : vector<1x8x256xf32> to vector<8x256xf32>
    %253 = vector.shape_cast %250 : vector<8x256xf32> to vector<1x8x256xf32>
    tpu.vector_store %arg11[%c0_243, %c8_244, %c128_245], %253 {strides = array<i32>} : memref<2x24x512xf32, #tpu.memory_space<vmem>>, vector<1x8x256xf32>,
    %c0_246 = arith.constant 0 : index
    %c8_247 = arith.constant 8 : index
    %c127_248 = arith.constant 127 : index
    %254 = vector.load %arg11[%c0_246, %c8_247, %c127_248] : memref<2x24x512xf32, #tpu.memory_space<vmem>>, vector<1x8x256xf32>
    %255 = vector.shape_cast %254 : vector<1x8x256xf32> to vector<8x256xf32>
    %256 = arith.mulf %255, %13 : vector<8x256xf32>
    %c0_249 = arith.constant 0 : index
    %c0_250 = arith.constant 0 : index
    %c128_251 = arith.constant 128 : index
    %257 = vector.load %arg11[%c0_249, %c0_250, %c128_251] : memref<2x24x512xf32, #tpu.memory_space<vmem>>, vector<1x8x256xf32>
    %258 = vector.shape_cast %257 : vector<1x8x256xf32> to vector<8x256xf32>
    %259 = vector.shape_cast %256 : vector<8x256xf32> to vector<1x8x256xf32>
    tpu.vector_store %arg11[%c0_249, %c0_250, %c128_251], %259 {strides = array<i32>} : memref<2x24x512xf32, #tpu.memory_space<vmem>>, vector<1x8x256xf32>,
    %c0_252 = arith.constant 0 : index
    %c8_253 = arith.constant 8 : index
    %c129_254 = arith.constant 129 : index
    %260 = vector.load %arg11[%c0_252, %c8_253, %c129_254] : memref<2x24x512xf32, #tpu.memory_space<vmem>>, vector<1x8x256xf32>
    %261 = vector.shape_cast %260 : vector<1x8x256xf32> to vector<8x256xf32>
    %262 = arith.mulf %261, %17 : vector<8x256xf32>
    %c0_255 = arith.constant 0 : index
    %c16_256 = arith.constant 16 : index
    %c128_257 = arith.constant 128 : index
    %263 = vector.load %arg11[%c0_255, %c16_256, %c128_257] : memref<2x24x512xf32, #tpu.memory_space<vmem>>, vector<1x8x256xf32>
    %264 = vector.shape_cast %263 : vector<1x8x256xf32> to vector<8x256xf32>
    %265 = vector.shape_cast %262 : vector<8x256xf32> to vector<1x8x256xf32>
    tpu.vector_store %arg11[%c0_255, %c16_256, %c128_257], %265 {strides = array<i32>} : memref<2x24x512xf32, #tpu.memory_space<vmem>>, vector<1x8x256xf32>,
    %c0_258 = arith.constant 0 : index
    %c0_259 = arith.constant 0 : index
    %c112_260 = arith.constant 112 : index
    %266 = vector.load %arg11[%c0_258, %c0_259, %c112_260] : memref<2x24x512xf32, #tpu.memory_space<vmem>>, vector<1x24x256xf32>
    %267 = vector.shape_cast %266 : vector<1x24x256xf32> to vector<24x256xf32>
    %c0_261 = arith.constant 0 : index
    %c0_262 = arith.constant 0 : index
    %c0_263 = arith.constant 0 : index
    %c0_264 = arith.constant 0 : index
    %268 = vector.load %arg6[%c0_261, %c0_262, %c0_263, %c0_264] : memref<3x3x8x24xf32, #tpu.memory_space<vmem>>, vector<1x1x8x24xf32>
    %269 = vector.shape_cast %268 : vector<1x1x8x24xf32> to vector<8x24xf32>
    %cst_265 = arith.constant dense<0.000000e+00> : vector<8x256xf32>
    %270 = tpu.matmul %269, %267, %cst_265 {dimension_numbers = #tpu.dot_dimension_numbers<[1], [0], [0], [1], [0, 0, 1, 1], [], []>} : vector<8x24xf32>, vector<24x256xf32>, vector<8x256xf32> -> vector<8x256xf32>
    %c0_266 = arith.constant 0 : index
    %c0_267 = arith.constant 0 : index
    %c128_268 = arith.constant 128 : index
    %271 = vector.load %arg11[%c0_266, %c0_267, %c128_268] : memref<2x24x512xf32, #tpu.memory_space<vmem>>, vector<1x24x256xf32>
    %272 = vector.shape_cast %271 : vector<1x24x256xf32> to vector<24x256xf32>
    %c0_269 = arith.constant 0 : index
    %c1_270 = arith.constant 1 : index
    %c0_271 = arith.constant 0 : index
    %c0_272 = arith.constant 0 : index
    %273 = vector.load %arg6[%c0_269, %c1_270, %c0_271, %c0_272] : memref<3x3x8x24xf32, #tpu.memory_space<vmem>>, vector<1x1x8x24xf32>
    %274 = vector.shape_cast %273 : vector<1x1x8x24xf32> to vector<8x24xf32>
    %cst_273 = arith.constant dense<0.000000e+00> : vector<8x256xf32>
    %275 = tpu.matmul %274, %272, %cst_273 {dimension_numbers = #tpu.dot_dimension_numbers<[1], [0], [0], [1], [0, 0, 1, 1], [], []>} : vector<8x24xf32>, vector<24x256xf32>, vector<8x256xf32> -> vector<8x256xf32>
    %276 = arith.addf %270, %275 : vector<8x256xf32>
    %c0_274 = arith.constant 0 : index
    %c0_275 = arith.constant 0 : index
    %c144_276 = arith.constant 144 : index
    %277 = vector.load %arg11[%c0_274, %c0_275, %c144_276] : memref<2x24x512xf32, #tpu.memory_space<vmem>>, vector<1x24x256xf32>
    %278 = vector.shape_cast %277 : vector<1x24x256xf32> to vector<24x256xf32>
    %c0_277 = arith.constant 0 : index
    %c2_278 = arith.constant 2 : index
    %c0_279 = arith.constant 0 : index
    %c0_280 = arith.constant 0 : index
    %279 = vector.load %arg6[%c0_277, %c2_278, %c0_279, %c0_280] : memref<3x3x8x24xf32, #tpu.memory_space<vmem>>, vector<1x1x8x24xf32>
    %280 = vector.shape_cast %279 : vector<1x1x8x24xf32> to vector<8x24xf32>
    %cst_281 = arith.constant dense<0.000000e+00> : vector<8x256xf32>
    %281 = tpu.matmul %280, %278, %cst_281 {dimension_numbers = #tpu.dot_dimension_numbers<[1], [0], [0], [1], [0, 0, 1, 1], [], []>} : vector<8x24xf32>, vector<24x256xf32>, vector<8x256xf32> -> vector<8x256xf32>
    %282 = arith.addf %276, %281 : vector<8x256xf32>
    %c0_282 = arith.constant 0 : index
    %c0_283 = arith.constant 0 : index
    %c0_284 = arith.constant 0 : index
    %283 = vector.load %arg7[%c0_282, %c0_283, %c0_284] : memref<3x8x1xf32, #tpu.memory_space<vmem>>, vector<1x8x1xf32>
    %284 = vector.shape_cast %283 : vector<1x8x1xf32> to vector<8x1xf32>
    %285 = vector.broadcast %284 : vector<8x1xf32> to vector<8x256xf32>
    %286 = arith.addf %282, %285 : vector<8x256xf32>
    %cst_285 = arith.constant 0.000000e+00 : f32
    %287 = vector.broadcast %cst_285 : f32 to vector<8x256xf32>
    %288 = arith.maximumf %286, %287 : vector<8x256xf32>
    %c0_286 = arith.constant 0 : index
    %c48 = arith.constant 48 : index
    %c0_287 = arith.constant 0 : index
    %289 = vector.load %arg12[%c0_286, %c48, %c0_287] : memref<2x64x256xf32, #tpu.memory_space<vmem>>, vector<1x8x256xf32>
    %290 = vector.shape_cast %289 : vector<1x8x256xf32> to vector<8x256xf32>
    %291 = vector.shape_cast %288 : vector<8x256xf32> to vector<1x8x256xf32>
    tpu.vector_store %arg12[%c0_286, %c48, %c0_287], %291 {strides = array<i32>} : memref<2x64x256xf32, #tpu.memory_space<vmem>>, vector<1x8x256xf32>,
    %292 = vector.extract_strided_slice %31 {offsets = [0, 0], sizes = [8, 256], strides = [1, 1]} : vector<32x256xf32> to vector<8x256xf32>
    %c0_288 = arith.constant 0 : index
    %c56 = arith.constant 56 : index
    %c0_289 = arith.constant 0 : index
    %293 = vector.load %arg12[%c0_288, %c56, %c0_289] : memref<2x64x256xf32, #tpu.memory_space<vmem>>, vector<1x8x256xf32>
    %294 = vector.shape_cast %293 : vector<1x8x256xf32> to vector<8x256xf32>
    %295 = vector.shape_cast %292 : vector<8x256xf32> to vector<1x8x256xf32>
    tpu.vector_store %arg12[%c0_288, %c56, %c0_289], %295 {strides = array<i32>} : memref<2x64x256xf32, #tpu.memory_space<vmem>>, vector<1x8x256xf32>,
    %c0_290 = arith.constant 0 : index
    %c0_291 = arith.constant 0 : index
    %c0_292 = arith.constant 0 : index
    %296 = vector.load %arg12[%c0_290, %c0_291, %c0_292] : memref<2x64x256xf32, #tpu.memory_space<vmem>>, vector<1x64x256xf32>
    %297 = vector.shape_cast %296 : vector<1x64x256xf32> to vector<64x256xf32>
    %cst_293 = arith.constant dense<0.000000e+00> : vector<32x256xf32>
    %298 = tpu.matmul %23, %297, %cst_293 {dimension_numbers = #tpu.dot_dimension_numbers<[1], [0], [0], [1], [0, 0, 1, 1], [], []>} : vector<32x64xf32>, vector<64x256xf32>, vector<32x256xf32> -> vector<32x256xf32>
    %299 = vector.broadcast %24 : vector<32x1xf32> to vector<32x256xf32>
    %300 = arith.addf %298, %299 : vector<32x256xf32>
    %301 = arith.addf %300, %26 : vector<32x256xf32>
    %cst_294 = arith.constant 0.000000e+00 : f32
    %302 = vector.broadcast %cst_294 : f32 to vector<32x256xf32>
    %303 = arith.maximumf %301, %302 : vector<32x256xf32>
    %c0_295 = arith.constant 0 : index
    %c0_296 = arith.constant 0 : index
    %c0_297 = arith.constant 0 : index
    %304 = vector.load %arg10[%c0_295, %c0_296, %c0_297] : memref<2x32x256xf32, #tpu.memory_space<vmem>>, vector<1x32x256xf32>
    %305 = vector.shape_cast %304 : vector<1x32x256xf32> to vector<32x256xf32>
    %306 = vector.shape_cast %303 : vector<32x256xf32> to vector<1x32x256xf32>
    tpu.vector_store %arg10[%c0_295, %c0_296, %c0_297], %306 {strides = array<i32>} : memref<2x32x256xf32, #tpu.memory_space<vmem>>, vector<1x32x256xf32>,
    %c1_298 = arith.constant 1 : index
    %c0_299 = arith.constant 0 : index
    %c0_300 = arith.constant 0 : index
    %307 = vector.load %arg1[%c1_298, %c0_299, %c0_300] : memref<2x32x256xf32, #tpu.memory_space<vmem>>, vector<1x32x256xf32>
    %308 = vector.shape_cast %307 : vector<1x32x256xf32> to vector<32x256xf32>
    %cst_301 = arith.constant dense<0.000000e+00> : vector<32x256xf32>
    %309 = tpu.matmul %21, %308, %cst_301 {dimension_numbers = #tpu.dot_dimension_numbers<[1], [0], [0], [1], [0, 0, 1, 1], [], []>} : vector<32x32xf32>, vector<32x256xf32>, vector<32x256xf32> -> vector<32x256xf32>
    %310 = vector.broadcast %22 : vector<32x1xf32> to vector<32x256xf32>
    %311 = arith.addf %309, %310 : vector<32x256xf32>
    %cst_302 = arith.constant 0.000000e+00 : f32
    %312 = vector.broadcast %cst_302 : f32 to vector<32x256xf32>
    %313 = arith.maximumf %311, %312 : vector<32x256xf32>
    %314 = vector.extract_strided_slice %313 {offsets = [0, 0], sizes = [8, 256], strides = [1, 1]} : vector<32x256xf32> to vector<8x256xf32>
    %c1_303 = arith.constant 1 : index
    %c8_304 = arith.constant 8 : index
    %c128_305 = arith.constant 128 : index
    %315 = vector.load %arg11[%c1_303, %c8_304, %c128_305] : memref<2x24x512xf32, #tpu.memory_space<vmem>>, vector<1x8x256xf32>
    %316 = vector.shape_cast %315 : vector<1x8x256xf32> to vector<8x256xf32>
    %317 = vector.shape_cast %314 : vector<8x256xf32> to vector<1x8x256xf32>
    tpu.vector_store %arg11[%c1_303, %c8_304, %c128_305], %317 {strides = array<i32>} : memref<2x24x512xf32, #tpu.memory_space<vmem>>, vector<1x8x256xf32>,
    %c1_306 = arith.constant 1 : index
    %c8_307 = arith.constant 8 : index
    %c127_308 = arith.constant 127 : index
    %318 = vector.load %arg11[%c1_306, %c8_307, %c127_308] : memref<2x24x512xf32, #tpu.memory_space<vmem>>, vector<1x8x256xf32>
    %319 = vector.shape_cast %318 : vector<1x8x256xf32> to vector<8x256xf32>
    %320 = arith.mulf %319, %13 : vector<8x256xf32>
    %c1_309 = arith.constant 1 : index
    %c0_310 = arith.constant 0 : index
    %c128_311 = arith.constant 128 : index
    %321 = vector.load %arg11[%c1_309, %c0_310, %c128_311] : memref<2x24x512xf32, #tpu.memory_space<vmem>>, vector<1x8x256xf32>
    %322 = vector.shape_cast %321 : vector<1x8x256xf32> to vector<8x256xf32>
    %323 = vector.shape_cast %320 : vector<8x256xf32> to vector<1x8x256xf32>
    tpu.vector_store %arg11[%c1_309, %c0_310, %c128_311], %323 {strides = array<i32>} : memref<2x24x512xf32, #tpu.memory_space<vmem>>, vector<1x8x256xf32>,
    %c1_312 = arith.constant 1 : index
    %c8_313 = arith.constant 8 : index
    %c129_314 = arith.constant 129 : index
    %324 = vector.load %arg11[%c1_312, %c8_313, %c129_314] : memref<2x24x512xf32, #tpu.memory_space<vmem>>, vector<1x8x256xf32>
    %325 = vector.shape_cast %324 : vector<1x8x256xf32> to vector<8x256xf32>
    %326 = arith.mulf %325, %17 : vector<8x256xf32>
    %c1_315 = arith.constant 1 : index
    %c16_316 = arith.constant 16 : index
    %c128_317 = arith.constant 128 : index
    %327 = vector.load %arg11[%c1_315, %c16_316, %c128_317] : memref<2x24x512xf32, #tpu.memory_space<vmem>>, vector<1x8x256xf32>
    %328 = vector.shape_cast %327 : vector<1x8x256xf32> to vector<8x256xf32>
    %329 = vector.shape_cast %326 : vector<8x256xf32> to vector<1x8x256xf32>
    tpu.vector_store %arg11[%c1_315, %c16_316, %c128_317], %329 {strides = array<i32>} : memref<2x24x512xf32, #tpu.memory_space<vmem>>, vector<1x8x256xf32>,
    %c1_318 = arith.constant 1 : index
    %c0_319 = arith.constant 0 : index
    %c112_320 = arith.constant 112 : index
    %330 = vector.load %arg11[%c1_318, %c0_319, %c112_320] : memref<2x24x512xf32, #tpu.memory_space<vmem>>, vector<1x24x256xf32>
    %331 = vector.shape_cast %330 : vector<1x24x256xf32> to vector<24x256xf32>
    %c0_321 = arith.constant 0 : index
    %c0_322 = arith.constant 0 : index
    %c0_323 = arith.constant 0 : index
    %c0_324 = arith.constant 0 : index
    %332 = vector.load %arg4[%c0_321, %c0_322, %c0_323, %c0_324] : memref<3x3x8x24xf32, #tpu.memory_space<vmem>>, vector<1x1x8x24xf32>
    %333 = vector.shape_cast %332 : vector<1x1x8x24xf32> to vector<8x24xf32>
    %cst_325 = arith.constant dense<0.000000e+00> : vector<8x256xf32>
    %334 = tpu.matmul %333, %331, %cst_325 {dimension_numbers = #tpu.dot_dimension_numbers<[1], [0], [0], [1], [0, 0, 1, 1], [], []>} : vector<8x24xf32>, vector<24x256xf32>, vector<8x256xf32> -> vector<8x256xf32>
    %c1_326 = arith.constant 1 : index
    %c0_327 = arith.constant 0 : index
    %c128_328 = arith.constant 128 : index
    %335 = vector.load %arg11[%c1_326, %c0_327, %c128_328] : memref<2x24x512xf32, #tpu.memory_space<vmem>>, vector<1x24x256xf32>
    %336 = vector.shape_cast %335 : vector<1x24x256xf32> to vector<24x256xf32>
    %c0_329 = arith.constant 0 : index
    %c1_330 = arith.constant 1 : index
    %c0_331 = arith.constant 0 : index
    %c0_332 = arith.constant 0 : index
    %337 = vector.load %arg4[%c0_329, %c1_330, %c0_331, %c0_332] : memref<3x3x8x24xf32, #tpu.memory_space<vmem>>, vector<1x1x8x24xf32>
    %338 = vector.shape_cast %337 : vector<1x1x8x24xf32> to vector<8x24xf32>
    %cst_333 = arith.constant dense<0.000000e+00> : vector<8x256xf32>
    %339 = tpu.matmul %338, %336, %cst_333 {dimension_numbers = #tpu.dot_dimension_numbers<[1], [0], [0], [1], [0, 0, 1, 1], [], []>} : vector<8x24xf32>, vector<24x256xf32>, vector<8x256xf32> -> vector<8x256xf32>
    %340 = arith.addf %334, %339 : vector<8x256xf32>
    %c1_334 = arith.constant 1 : index
    %c0_335 = arith.constant 0 : index
    %c144_336 = arith.constant 144 : index
    %341 = vector.load %arg11[%c1_334, %c0_335, %c144_336] : memref<2x24x512xf32, #tpu.memory_space<vmem>>, vector<1x24x256xf32>
    %342 = vector.shape_cast %341 : vector<1x24x256xf32> to vector<24x256xf32>
    %c0_337 = arith.constant 0 : index
    %c2_338 = arith.constant 2 : index
    %c0_339 = arith.constant 0 : index
    %c0_340 = arith.constant 0 : index
    %343 = vector.load %arg4[%c0_337, %c2_338, %c0_339, %c0_340] : memref<3x3x8x24xf32, #tpu.memory_space<vmem>>, vector<1x1x8x24xf32>
    %344 = vector.shape_cast %343 : vector<1x1x8x24xf32> to vector<8x24xf32>
    %cst_341 = arith.constant dense<0.000000e+00> : vector<8x256xf32>
    %345 = tpu.matmul %344, %342, %cst_341 {dimension_numbers = #tpu.dot_dimension_numbers<[1], [0], [0], [1], [0, 0, 1, 1], [], []>} : vector<8x24xf32>, vector<24x256xf32>, vector<8x256xf32> -> vector<8x256xf32>
    %346 = arith.addf %340, %345 : vector<8x256xf32>
    %c0_342 = arith.constant 0 : index
    %c0_343 = arith.constant 0 : index
    %c0_344 = arith.constant 0 : index
    %347 = vector.load %arg5[%c0_342, %c0_343, %c0_344] : memref<3x8x1xf32, #tpu.memory_space<vmem>>, vector<1x8x1xf32>
    %348 = vector.shape_cast %347 : vector<1x8x1xf32> to vector<8x1xf32>
    %349 = vector.broadcast %348 : vector<8x1xf32> to vector<8x256xf32>
    %350 = arith.addf %346, %349 : vector<8x256xf32>
    %cst_345 = arith.constant 0.000000e+00 : f32
    %351 = vector.broadcast %cst_345 : f32 to vector<8x256xf32>
    %352 = arith.maximumf %350, %351 : vector<8x256xf32>
    %c1_346 = arith.constant 1 : index
    %c0_347 = arith.constant 0 : index
    %c0_348 = arith.constant 0 : index
    %353 = vector.load %arg12[%c1_346, %c0_347, %c0_348] : memref<2x64x256xf32, #tpu.memory_space<vmem>>, vector<1x8x256xf32>
    %354 = vector.shape_cast %353 : vector<1x8x256xf32> to vector<8x256xf32>
    %355 = vector.shape_cast %352 : vector<8x256xf32> to vector<1x8x256xf32>
    tpu.vector_store %arg12[%c1_346, %c0_347, %c0_348], %355 {strides = array<i32>} : memref<2x64x256xf32, #tpu.memory_space<vmem>>, vector<1x8x256xf32>,
    %356 = vector.extract_strided_slice %313 {offsets = [8, 0], sizes = [8, 256], strides = [1, 1]} : vector<32x256xf32> to vector<8x256xf32>
    %357 = arith.addf %352, %356 : vector<8x256xf32>
    %c1_349 = arith.constant 1 : index
    %c8_350 = arith.constant 8 : index
    %c128_351 = arith.constant 128 : index
    %358 = vector.load %arg11[%c1_349, %c8_350, %c128_351] : memref<2x24x512xf32, #tpu.memory_space<vmem>>, vector<1x8x256xf32>
    %359 = vector.shape_cast %358 : vector<1x8x256xf32> to vector<8x256xf32>
    %360 = vector.shape_cast %357 : vector<8x256xf32> to vector<1x8x256xf32>
    tpu.vector_store %arg11[%c1_349, %c8_350, %c128_351], %360 {strides = array<i32>} : memref<2x24x512xf32, #tpu.memory_space<vmem>>, vector<1x8x256xf32>,
    %c1_352 = arith.constant 1 : index
    %c8_353 = arith.constant 8 : index
    %c127_354 = arith.constant 127 : index
    %361 = vector.load %arg11[%c1_352, %c8_353, %c127_354] : memref<2x24x512xf32, #tpu.memory_space<vmem>>, vector<1x8x256xf32>
    %362 = vector.shape_cast %361 : vector<1x8x256xf32> to vector<8x256xf32>
    %363 = arith.mulf %362, %13 : vector<8x256xf32>
    %c1_355 = arith.constant 1 : index
    %c0_356 = arith.constant 0 : index
    %c128_357 = arith.constant 128 : index
    %364 = vector.load %arg11[%c1_355, %c0_356, %c128_357] : memref<2x24x512xf32, #tpu.memory_space<vmem>>, vector<1x8x256xf32>
    %365 = vector.shape_cast %364 : vector<1x8x256xf32> to vector<8x256xf32>
    %366 = vector.shape_cast %363 : vector<8x256xf32> to vector<1x8x256xf32>
    tpu.vector_store %arg11[%c1_355, %c0_356, %c128_357], %366 {strides = array<i32>} : memref<2x24x512xf32, #tpu.memory_space<vmem>>, vector<1x8x256xf32>,
    %c1_358 = arith.constant 1 : index
    %c8_359 = arith.constant 8 : index
    %c129_360 = arith.constant 129 : index
    %367 = vector.load %arg11[%c1_358, %c8_359, %c129_360] : memref<2x24x512xf32, #tpu.memory_space<vmem>>, vector<1x8x256xf32>
    %368 = vector.shape_cast %367 : vector<1x8x256xf32> to vector<8x256xf32>
    %369 = arith.mulf %368, %17 : vector<8x256xf32>
    %c1_361 = arith.constant 1 : index
    %c16_362 = arith.constant 16 : index
    %c128_363 = arith.constant 128 : index
    %370 = vector.load %arg11[%c1_361, %c16_362, %c128_363] : memref<2x24x512xf32, #tpu.memory_space<vmem>>, vector<1x8x256xf32>
    %371 = vector.shape_cast %370 : vector<1x8x256xf32> to vector<8x256xf32>
    %372 = vector.shape_cast %369 : vector<8x256xf32> to vector<1x8x256xf32>
    tpu.vector_store %arg11[%c1_361, %c16_362, %c128_363], %372 {strides = array<i32>} : memref<2x24x512xf32, #tpu.memory_space<vmem>>, vector<1x8x256xf32>,
    %c1_364 = arith.constant 1 : index
    %c0_365 = arith.constant 0 : index
    %c112_366 = arith.constant 112 : index
    %373 = vector.load %arg11[%c1_364, %c0_365, %c112_366] : memref<2x24x512xf32, #tpu.memory_space<vmem>>, vector<1x24x256xf32>
    %374 = vector.shape_cast %373 : vector<1x24x256xf32> to vector<24x256xf32>
    %c1_367 = arith.constant 1 : index
    %c0_368 = arith.constant 0 : index
    %c0_369 = arith.constant 0 : index
    %c0_370 = arith.constant 0 : index
    %375 = vector.load %arg4[%c1_367, %c0_368, %c0_369, %c0_370] : memref<3x3x8x24xf32, #tpu.memory_space<vmem>>, vector<1x1x8x24xf32>
    %376 = vector.shape_cast %375 : vector<1x1x8x24xf32> to vector<8x24xf32>
    %cst_371 = arith.constant dense<0.000000e+00> : vector<8x256xf32>
    %377 = tpu.matmul %376, %374, %cst_371 {dimension_numbers = #tpu.dot_dimension_numbers<[1], [0], [0], [1], [0, 0, 1, 1], [], []>} : vector<8x24xf32>, vector<24x256xf32>, vector<8x256xf32> -> vector<8x256xf32>
    %c1_372 = arith.constant 1 : index
    %c0_373 = arith.constant 0 : index
    %c128_374 = arith.constant 128 : index
    %378 = vector.load %arg11[%c1_372, %c0_373, %c128_374] : memref<2x24x512xf32, #tpu.memory_space<vmem>>, vector<1x24x256xf32>
    %379 = vector.shape_cast %378 : vector<1x24x256xf32> to vector<24x256xf32>
    %c1_375 = arith.constant 1 : index
    %c1_376 = arith.constant 1 : index
    %c0_377 = arith.constant 0 : index
    %c0_378 = arith.constant 0 : index
    %380 = vector.load %arg4[%c1_375, %c1_376, %c0_377, %c0_378] : memref<3x3x8x24xf32, #tpu.memory_space<vmem>>, vector<1x1x8x24xf32>
    %381 = vector.shape_cast %380 : vector<1x1x8x24xf32> to vector<8x24xf32>
    %cst_379 = arith.constant dense<0.000000e+00> : vector<8x256xf32>
    %382 = tpu.matmul %381, %379, %cst_379 {dimension_numbers = #tpu.dot_dimension_numbers<[1], [0], [0], [1], [0, 0, 1, 1], [], []>} : vector<8x24xf32>, vector<24x256xf32>, vector<8x256xf32> -> vector<8x256xf32>
    %383 = arith.addf %377, %382 : vector<8x256xf32>
    %c1_380 = arith.constant 1 : index
    %c0_381 = arith.constant 0 : index
    %c144_382 = arith.constant 144 : index
    %384 = vector.load %arg11[%c1_380, %c0_381, %c144_382] : memref<2x24x512xf32, #tpu.memory_space<vmem>>, vector<1x24x256xf32>
    %385 = vector.shape_cast %384 : vector<1x24x256xf32> to vector<24x256xf32>
    %c1_383 = arith.constant 1 : index
    %c2_384 = arith.constant 2 : index
    %c0_385 = arith.constant 0 : index
    %c0_386 = arith.constant 0 : index
    %386 = vector.load %arg4[%c1_383, %c2_384, %c0_385, %c0_386] : memref<3x3x8x24xf32, #tpu.memory_space<vmem>>, vector<1x1x8x24xf32>
    %387 = vector.shape_cast %386 : vector<1x1x8x24xf32> to vector<8x24xf32>
    %cst_387 = arith.constant dense<0.000000e+00> : vector<8x256xf32>
    %388 = tpu.matmul %387, %385, %cst_387 {dimension_numbers = #tpu.dot_dimension_numbers<[1], [0], [0], [1], [0, 0, 1, 1], [], []>} : vector<8x24xf32>, vector<24x256xf32>, vector<8x256xf32> -> vector<8x256xf32>
    %389 = arith.addf %383, %388 : vector<8x256xf32>
    %c1_388 = arith.constant 1 : index
    %c0_389 = arith.constant 0 : index
    %c0_390 = arith.constant 0 : index
    %390 = vector.load %arg5[%c1_388, %c0_389, %c0_390] : memref<3x8x1xf32, #tpu.memory_space<vmem>>, vector<1x8x1xf32>
    %391 = vector.shape_cast %390 : vector<1x8x1xf32> to vector<8x1xf32>
    %392 = vector.broadcast %391 : vector<8x1xf32> to vector<8x256xf32>
    %393 = arith.addf %389, %392 : vector<8x256xf32>
    %cst_391 = arith.constant 0.000000e+00 : f32
    %394 = vector.broadcast %cst_391 : f32 to vector<8x256xf32>
    %395 = arith.maximumf %393, %394 : vector<8x256xf32>
    %c1_392 = arith.constant 1 : index
    %c8_393 = arith.constant 8 : index
    %c0_394 = arith.constant 0 : index
    %396 = vector.load %arg12[%c1_392, %c8_393, %c0_394] : memref<2x64x256xf32, #tpu.memory_space<vmem>>, vector<1x8x256xf32>
    %397 = vector.shape_cast %396 : vector<1x8x256xf32> to vector<8x256xf32>
    %398 = vector.shape_cast %395 : vector<8x256xf32> to vector<1x8x256xf32>
    tpu.vector_store %arg12[%c1_392, %c8_393, %c0_394], %398 {strides = array<i32>} : memref<2x64x256xf32, #tpu.memory_space<vmem>>, vector<1x8x256xf32>,
    %399 = vector.extract_strided_slice %313 {offsets = [16, 0], sizes = [8, 256], strides = [1, 1]} : vector<32x256xf32> to vector<8x256xf32>
    %400 = arith.addf %395, %399 : vector<8x256xf32>
    %c1_395 = arith.constant 1 : index
    %c8_396 = arith.constant 8 : index
    %c128_397 = arith.constant 128 : index
    %401 = vector.load %arg11[%c1_395, %c8_396, %c128_397] : memref<2x24x512xf32, #tpu.memory_space<vmem>>, vector<1x8x256xf32>
    %402 = vector.shape_cast %401 : vector<1x8x256xf32> to vector<8x256xf32>
    %403 = vector.shape_cast %400 : vector<8x256xf32> to vector<1x8x256xf32>
    tpu.vector_store %arg11[%c1_395, %c8_396, %c128_397], %403 {strides = array<i32>} : memref<2x24x512xf32, #tpu.memory_space<vmem>>, vector<1x8x256xf32>,
    %c1_398 = arith.constant 1 : index
    %c8_399 = arith.constant 8 : index
    %c127_400 = arith.constant 127 : index
    %404 = vector.load %arg11[%c1_398, %c8_399, %c127_400] : memref<2x24x512xf32, #tpu.memory_space<vmem>>, vector<1x8x256xf32>
    %405 = vector.shape_cast %404 : vector<1x8x256xf32> to vector<8x256xf32>
    %406 = arith.mulf %405, %13 : vector<8x256xf32>
    %c1_401 = arith.constant 1 : index
    %c0_402 = arith.constant 0 : index
    %c128_403 = arith.constant 128 : index
    %407 = vector.load %arg11[%c1_401, %c0_402, %c128_403] : memref<2x24x512xf32, #tpu.memory_space<vmem>>, vector<1x8x256xf32>
    %408 = vector.shape_cast %407 : vector<1x8x256xf32> to vector<8x256xf32>
    %409 = vector.shape_cast %406 : vector<8x256xf32> to vector<1x8x256xf32>
    tpu.vector_store %arg11[%c1_401, %c0_402, %c128_403], %409 {strides = array<i32>} : memref<2x24x512xf32, #tpu.memory_space<vmem>>, vector<1x8x256xf32>,
    %c1_404 = arith.constant 1 : index
    %c8_405 = arith.constant 8 : index
    %c129_406 = arith.constant 129 : index
    %410 = vector.load %arg11[%c1_404, %c8_405, %c129_406] : memref<2x24x512xf32, #tpu.memory_space<vmem>>, vector<1x8x256xf32>
    %411 = vector.shape_cast %410 : vector<1x8x256xf32> to vector<8x256xf32>
    %412 = arith.mulf %411, %17 : vector<8x256xf32>
    %c1_407 = arith.constant 1 : index
    %c16_408 = arith.constant 16 : index
    %c128_409 = arith.constant 128 : index
    %413 = vector.load %arg11[%c1_407, %c16_408, %c128_409] : memref<2x24x512xf32, #tpu.memory_space<vmem>>, vector<1x8x256xf32>
    %414 = vector.shape_cast %413 : vector<1x8x256xf32> to vector<8x256xf32>
    %415 = vector.shape_cast %412 : vector<8x256xf32> to vector<1x8x256xf32>
    tpu.vector_store %arg11[%c1_407, %c16_408, %c128_409], %415 {strides = array<i32>} : memref<2x24x512xf32, #tpu.memory_space<vmem>>, vector<1x8x256xf32>,
    %c1_410 = arith.constant 1 : index
    %c0_411 = arith.constant 0 : index
    %c112_412 = arith.constant 112 : index
    %416 = vector.load %arg11[%c1_410, %c0_411, %c112_412] : memref<2x24x512xf32, #tpu.memory_space<vmem>>, vector<1x24x256xf32>
    %417 = vector.shape_cast %416 : vector<1x24x256xf32> to vector<24x256xf32>
    %c2_413 = arith.constant 2 : index
    %c0_414 = arith.constant 0 : index
    %c0_415 = arith.constant 0 : index
    %c0_416 = arith.constant 0 : index
    %418 = vector.load %arg4[%c2_413, %c0_414, %c0_415, %c0_416] : memref<3x3x8x24xf32, #tpu.memory_space<vmem>>, vector<1x1x8x24xf32>
    %419 = vector.shape_cast %418 : vector<1x1x8x24xf32> to vector<8x24xf32>
    %cst_417 = arith.constant dense<0.000000e+00> : vector<8x256xf32>
    %420 = tpu.matmul %419, %417, %cst_417 {dimension_numbers = #tpu.dot_dimension_numbers<[1], [0], [0], [1], [0, 0, 1, 1], [], []>} : vector<8x24xf32>, vector<24x256xf32>, vector<8x256xf32> -> vector<8x256xf32>
    %c1_418 = arith.constant 1 : index
    %c0_419 = arith.constant 0 : index
    %c128_420 = arith.constant 128 : index
    %421 = vector.load %arg11[%c1_418, %c0_419, %c128_420] : memref<2x24x512xf32, #tpu.memory_space<vmem>>, vector<1x24x256xf32>
    %422 = vector.shape_cast %421 : vector<1x24x256xf32> to vector<24x256xf32>
    %c2_421 = arith.constant 2 : index
    %c1_422 = arith.constant 1 : index
    %c0_423 = arith.constant 0 : index
    %c0_424 = arith.constant 0 : index
    %423 = vector.load %arg4[%c2_421, %c1_422, %c0_423, %c0_424] : memref<3x3x8x24xf32, #tpu.memory_space<vmem>>, vector<1x1x8x24xf32>
    %424 = vector.shape_cast %423 : vector<1x1x8x24xf32> to vector<8x24xf32>
    %cst_425 = arith.constant dense<0.000000e+00> : vector<8x256xf32>
    %425 = tpu.matmul %424, %422, %cst_425 {dimension_numbers = #tpu.dot_dimension_numbers<[1], [0], [0], [1], [0, 0, 1, 1], [], []>} : vector<8x24xf32>, vector<24x256xf32>, vector<8x256xf32> -> vector<8x256xf32>
    %426 = arith.addf %420, %425 : vector<8x256xf32>
    %c1_426 = arith.constant 1 : index
    %c0_427 = arith.constant 0 : index
    %c144_428 = arith.constant 144 : index
    %427 = vector.load %arg11[%c1_426, %c0_427, %c144_428] : memref<2x24x512xf32, #tpu.memory_space<vmem>>, vector<1x24x256xf32>
    %428 = vector.shape_cast %427 : vector<1x24x256xf32> to vector<24x256xf32>
    %c2_429 = arith.constant 2 : index
    %c2_430 = arith.constant 2 : index
    %c0_431 = arith.constant 0 : index
    %c0_432 = arith.constant 0 : index
    %429 = vector.load %arg4[%c2_429, %c2_430, %c0_431, %c0_432] : memref<3x3x8x24xf32, #tpu.memory_space<vmem>>, vector<1x1x8x24xf32>
    %430 = vector.shape_cast %429 : vector<1x1x8x24xf32> to vector<8x24xf32>
    %cst_433 = arith.constant dense<0.000000e+00> : vector<8x256xf32>
    %431 = tpu.matmul %430, %428, %cst_433 {dimension_numbers = #tpu.dot_dimension_numbers<[1], [0], [0], [1], [0, 0, 1, 1], [], []>} : vector<8x24xf32>, vector<24x256xf32>, vector<8x256xf32> -> vector<8x256xf32>
    %432 = arith.addf %426, %431 : vector<8x256xf32>
    %c2_434 = arith.constant 2 : index
    %c0_435 = arith.constant 0 : index
    %c0_436 = arith.constant 0 : index
    %433 = vector.load %arg5[%c2_434, %c0_435, %c0_436] : memref<3x8x1xf32, #tpu.memory_space<vmem>>, vector<1x8x1xf32>
    %434 = vector.shape_cast %433 : vector<1x8x1xf32> to vector<8x1xf32>
    %435 = vector.broadcast %434 : vector<8x1xf32> to vector<8x256xf32>
    %436 = arith.addf %432, %435 : vector<8x256xf32>
    %cst_437 = arith.constant 0.000000e+00 : f32
    %437 = vector.broadcast %cst_437 : f32 to vector<8x256xf32>
    %438 = arith.maximumf %436, %437 : vector<8x256xf32>
    %c1_438 = arith.constant 1 : index
    %c16_439 = arith.constant 16 : index
    %c0_440 = arith.constant 0 : index
    %439 = vector.load %arg12[%c1_438, %c16_439, %c0_440] : memref<2x64x256xf32, #tpu.memory_space<vmem>>, vector<1x8x256xf32>
    %440 = vector.shape_cast %439 : vector<1x8x256xf32> to vector<8x256xf32>
    %441 = vector.shape_cast %438 : vector<8x256xf32> to vector<1x8x256xf32>
    tpu.vector_store %arg12[%c1_438, %c16_439, %c0_440], %441 {strides = array<i32>} : memref<2x64x256xf32, #tpu.memory_space<vmem>>, vector<1x8x256xf32>,
    %442 = vector.extract_strided_slice %313 {offsets = [24, 0], sizes = [8, 256], strides = [1, 1]} : vector<32x256xf32> to vector<8x256xf32>
    %c1_441 = arith.constant 1 : index
    %c24_442 = arith.constant 24 : index
    %c0_443 = arith.constant 0 : index
    %443 = vector.load %arg12[%c1_441, %c24_442, %c0_443] : memref<2x64x256xf32, #tpu.memory_space<vmem>>, vector<1x8x256xf32>
    %444 = vector.shape_cast %443 : vector<1x8x256xf32> to vector<8x256xf32>
    %445 = vector.shape_cast %442 : vector<8x256xf32> to vector<1x8x256xf32>
    tpu.vector_store %arg12[%c1_441, %c24_442, %c0_443], %445 {strides = array<i32>} : memref<2x64x256xf32, #tpu.memory_space<vmem>>, vector<1x8x256xf32>,
    %446 = vector.extract_strided_slice %313 {offsets = [16, 0], sizes = [8, 256], strides = [1, 1]} : vector<32x256xf32> to vector<8x256xf32>
    %447 = arith.addf %438, %446 : vector<8x256xf32>
    %c1_444 = arith.constant 1 : index
    %c8_445 = arith.constant 8 : index
    %c128_446 = arith.constant 128 : index
    %448 = vector.load %arg11[%c1_444, %c8_445, %c128_446] : memref<2x24x512xf32, #tpu.memory_space<vmem>>, vector<1x8x256xf32>
    %449 = vector.shape_cast %448 : vector<1x8x256xf32> to vector<8x256xf32>
    %450 = vector.shape_cast %447 : vector<8x256xf32> to vector<1x8x256xf32>
    tpu.vector_store %arg11[%c1_444, %c8_445, %c128_446], %450 {strides = array<i32>} : memref<2x24x512xf32, #tpu.memory_space<vmem>>, vector<1x8x256xf32>,
    %c1_447 = arith.constant 1 : index
    %c8_448 = arith.constant 8 : index
    %c127_449 = arith.constant 127 : index
    %451 = vector.load %arg11[%c1_447, %c8_448, %c127_449] : memref<2x24x512xf32, #tpu.memory_space<vmem>>, vector<1x8x256xf32>
    %452 = vector.shape_cast %451 : vector<1x8x256xf32> to vector<8x256xf32>
    %453 = arith.mulf %452, %13 : vector<8x256xf32>
    %c1_450 = arith.constant 1 : index
    %c0_451 = arith.constant 0 : index
    %c128_452 = arith.constant 128 : index
    %454 = vector.load %arg11[%c1_450, %c0_451, %c128_452] : memref<2x24x512xf32, #tpu.memory_space<vmem>>, vector<1x8x256xf32>
    %455 = vector.shape_cast %454 : vector<1x8x256xf32> to vector<8x256xf32>
    %456 = vector.shape_cast %453 : vector<8x256xf32> to vector<1x8x256xf32>
    tpu.vector_store %arg11[%c1_450, %c0_451, %c128_452], %456 {strides = array<i32>} : memref<2x24x512xf32, #tpu.memory_space<vmem>>, vector<1x8x256xf32>,
    %c1_453 = arith.constant 1 : index
    %c8_454 = arith.constant 8 : index
    %c129_455 = arith.constant 129 : index
    %457 = vector.load %arg11[%c1_453, %c8_454, %c129_455] : memref<2x24x512xf32, #tpu.memory_space<vmem>>, vector<1x8x256xf32>
    %458 = vector.shape_cast %457 : vector<1x8x256xf32> to vector<8x256xf32>
    %459 = arith.mulf %458, %17 : vector<8x256xf32>
    %c1_456 = arith.constant 1 : index
    %c16_457 = arith.constant 16 : index
    %c128_458 = arith.constant 128 : index
    %460 = vector.load %arg11[%c1_456, %c16_457, %c128_458] : memref<2x24x512xf32, #tpu.memory_space<vmem>>, vector<1x8x256xf32>
    %461 = vector.shape_cast %460 : vector<1x8x256xf32> to vector<8x256xf32>
    %462 = vector.shape_cast %459 : vector<8x256xf32> to vector<1x8x256xf32>
    tpu.vector_store %arg11[%c1_456, %c16_457, %c128_458], %462 {strides = array<i32>} : memref<2x24x512xf32, #tpu.memory_space<vmem>>, vector<1x8x256xf32>,
    %c1_459 = arith.constant 1 : index
    %c0_460 = arith.constant 0 : index
    %c112_461 = arith.constant 112 : index
    %463 = vector.load %arg11[%c1_459, %c0_460, %c112_461] : memref<2x24x512xf32, #tpu.memory_space<vmem>>, vector<1x24x256xf32>
    %464 = vector.shape_cast %463 : vector<1x24x256xf32> to vector<24x256xf32>
    %c2_462 = arith.constant 2 : index
    %c0_463 = arith.constant 0 : index
    %c0_464 = arith.constant 0 : index
    %c0_465 = arith.constant 0 : index
    %465 = vector.load %arg6[%c2_462, %c0_463, %c0_464, %c0_465] : memref<3x3x8x24xf32, #tpu.memory_space<vmem>>, vector<1x1x8x24xf32>
    %466 = vector.shape_cast %465 : vector<1x1x8x24xf32> to vector<8x24xf32>
    %cst_466 = arith.constant dense<0.000000e+00> : vector<8x256xf32>
    %467 = tpu.matmul %466, %464, %cst_466 {dimension_numbers = #tpu.dot_dimension_numbers<[1], [0], [0], [1], [0, 0, 1, 1], [], []>} : vector<8x24xf32>, vector<24x256xf32>, vector<8x256xf32> -> vector<8x256xf32>
    %c1_467 = arith.constant 1 : index
    %c0_468 = arith.constant 0 : index
    %c128_469 = arith.constant 128 : index
    %468 = vector.load %arg11[%c1_467, %c0_468, %c128_469] : memref<2x24x512xf32, #tpu.memory_space<vmem>>, vector<1x24x256xf32>
    %469 = vector.shape_cast %468 : vector<1x24x256xf32> to vector<24x256xf32>
    %c2_470 = arith.constant 2 : index
    %c1_471 = arith.constant 1 : index
    %c0_472 = arith.constant 0 : index
    %c0_473 = arith.constant 0 : index
    %470 = vector.load %arg6[%c2_470, %c1_471, %c0_472, %c0_473] : memref<3x3x8x24xf32, #tpu.memory_space<vmem>>, vector<1x1x8x24xf32>
    %471 = vector.shape_cast %470 : vector<1x1x8x24xf32> to vector<8x24xf32>
    %cst_474 = arith.constant dense<0.000000e+00> : vector<8x256xf32>
    %472 = tpu.matmul %471, %469, %cst_474 {dimension_numbers = #tpu.dot_dimension_numbers<[1], [0], [0], [1], [0, 0, 1, 1], [], []>} : vector<8x24xf32>, vector<24x256xf32>, vector<8x256xf32> -> vector<8x256xf32>
    %473 = arith.addf %467, %472 : vector<8x256xf32>
    %c1_475 = arith.constant 1 : index
    %c0_476 = arith.constant 0 : index
    %c144_477 = arith.constant 144 : index
    %474 = vector.load %arg11[%c1_475, %c0_476, %c144_477] : memref<2x24x512xf32, #tpu.memory_space<vmem>>, vector<1x24x256xf32>
    %475 = vector.shape_cast %474 : vector<1x24x256xf32> to vector<24x256xf32>
    %c2_478 = arith.constant 2 : index
    %c2_479 = arith.constant 2 : index
    %c0_480 = arith.constant 0 : index
    %c0_481 = arith.constant 0 : index
    %476 = vector.load %arg6[%c2_478, %c2_479, %c0_480, %c0_481] : memref<3x3x8x24xf32, #tpu.memory_space<vmem>>, vector<1x1x8x24xf32>
    %477 = vector.shape_cast %476 : vector<1x1x8x24xf32> to vector<8x24xf32>
    %cst_482 = arith.constant dense<0.000000e+00> : vector<8x256xf32>
    %478 = tpu.matmul %477, %475, %cst_482 {dimension_numbers = #tpu.dot_dimension_numbers<[1], [0], [0], [1], [0, 0, 1, 1], [], []>} : vector<8x24xf32>, vector<24x256xf32>, vector<8x256xf32> -> vector<8x256xf32>
    %479 = arith.addf %473, %478 : vector<8x256xf32>
    %c2_483 = arith.constant 2 : index
    %c0_484 = arith.constant 0 : index
    %c0_485 = arith.constant 0 : index
    %480 = vector.load %arg7[%c2_483, %c0_484, %c0_485] : memref<3x8x1xf32, #tpu.memory_space<vmem>>, vector<1x8x1xf32>
    %481 = vector.shape_cast %480 : vector<1x8x1xf32> to vector<8x1xf32>
    %482 = vector.broadcast %481 : vector<8x1xf32> to vector<8x256xf32>
    %483 = arith.addf %479, %482 : vector<8x256xf32>
    %cst_486 = arith.constant 0.000000e+00 : f32
    %484 = vector.broadcast %cst_486 : f32 to vector<8x256xf32>
    %485 = arith.maximumf %483, %484 : vector<8x256xf32>
    %c1_487 = arith.constant 1 : index
    %c32_488 = arith.constant 32 : index
    %c0_489 = arith.constant 0 : index
    %486 = vector.load %arg12[%c1_487, %c32_488, %c0_489] : memref<2x64x256xf32, #tpu.memory_space<vmem>>, vector<1x8x256xf32>
    %487 = vector.shape_cast %486 : vector<1x8x256xf32> to vector<8x256xf32>
    %488 = vector.shape_cast %485 : vector<8x256xf32> to vector<1x8x256xf32>
    tpu.vector_store %arg12[%c1_487, %c32_488, %c0_489], %488 {strides = array<i32>} : memref<2x64x256xf32, #tpu.memory_space<vmem>>, vector<1x8x256xf32>,
    %489 = vector.extract_strided_slice %313 {offsets = [8, 0], sizes = [8, 256], strides = [1, 1]} : vector<32x256xf32> to vector<8x256xf32>
    %490 = arith.addf %485, %489 : vector<8x256xf32>
    %c1_490 = arith.constant 1 : index
    %c8_491 = arith.constant 8 : index
    %c128_492 = arith.constant 128 : index
    %491 = vector.load %arg11[%c1_490, %c8_491, %c128_492] : memref<2x24x512xf32, #tpu.memory_space<vmem>>, vector<1x8x256xf32>
    %492 = vector.shape_cast %491 : vector<1x8x256xf32> to vector<8x256xf32>
    %493 = vector.shape_cast %490 : vector<8x256xf32> to vector<1x8x256xf32>
    tpu.vector_store %arg11[%c1_490, %c8_491, %c128_492], %493 {strides = array<i32>} : memref<2x24x512xf32, #tpu.memory_space<vmem>>, vector<1x8x256xf32>,
    %c1_493 = arith.constant 1 : index
    %c8_494 = arith.constant 8 : index
    %c127_495 = arith.constant 127 : index
    %494 = vector.load %arg11[%c1_493, %c8_494, %c127_495] : memref<2x24x512xf32, #tpu.memory_space<vmem>>, vector<1x8x256xf32>
    %495 = vector.shape_cast %494 : vector<1x8x256xf32> to vector<8x256xf32>
    %496 = arith.mulf %495, %13 : vector<8x256xf32>
    %c1_496 = arith.constant 1 : index
    %c0_497 = arith.constant 0 : index
    %c128_498 = arith.constant 128 : index
    %497 = vector.load %arg11[%c1_496, %c0_497, %c128_498] : memref<2x24x512xf32, #tpu.memory_space<vmem>>, vector<1x8x256xf32>
    %498 = vector.shape_cast %497 : vector<1x8x256xf32> to vector<8x256xf32>
    %499 = vector.shape_cast %496 : vector<8x256xf32> to vector<1x8x256xf32>
    tpu.vector_store %arg11[%c1_496, %c0_497, %c128_498], %499 {strides = array<i32>} : memref<2x24x512xf32, #tpu.memory_space<vmem>>, vector<1x8x256xf32>,
    %c1_499 = arith.constant 1 : index
    %c8_500 = arith.constant 8 : index
    %c129_501 = arith.constant 129 : index
    %500 = vector.load %arg11[%c1_499, %c8_500, %c129_501] : memref<2x24x512xf32, #tpu.memory_space<vmem>>, vector<1x8x256xf32>
    %501 = vector.shape_cast %500 : vector<1x8x256xf32> to vector<8x256xf32>
    %502 = arith.mulf %501, %17 : vector<8x256xf32>
    %c1_502 = arith.constant 1 : index
    %c16_503 = arith.constant 16 : index
    %c128_504 = arith.constant 128 : index
    %503 = vector.load %arg11[%c1_502, %c16_503, %c128_504] : memref<2x24x512xf32, #tpu.memory_space<vmem>>, vector<1x8x256xf32>
    %504 = vector.shape_cast %503 : vector<1x8x256xf32> to vector<8x256xf32>
    %505 = vector.shape_cast %502 : vector<8x256xf32> to vector<1x8x256xf32>
    tpu.vector_store %arg11[%c1_502, %c16_503, %c128_504], %505 {strides = array<i32>} : memref<2x24x512xf32, #tpu.memory_space<vmem>>, vector<1x8x256xf32>,
    %c1_505 = arith.constant 1 : index
    %c0_506 = arith.constant 0 : index
    %c112_507 = arith.constant 112 : index
    %506 = vector.load %arg11[%c1_505, %c0_506, %c112_507] : memref<2x24x512xf32, #tpu.memory_space<vmem>>, vector<1x24x256xf32>
    %507 = vector.shape_cast %506 : vector<1x24x256xf32> to vector<24x256xf32>
    %c1_508 = arith.constant 1 : index
    %c0_509 = arith.constant 0 : index
    %c0_510 = arith.constant 0 : index
    %c0_511 = arith.constant 0 : index
    %508 = vector.load %arg6[%c1_508, %c0_509, %c0_510, %c0_511] : memref<3x3x8x24xf32, #tpu.memory_space<vmem>>, vector<1x1x8x24xf32>
    %509 = vector.shape_cast %508 : vector<1x1x8x24xf32> to vector<8x24xf32>
    %cst_512 = arith.constant dense<0.000000e+00> : vector<8x256xf32>
    %510 = tpu.matmul %509, %507, %cst_512 {dimension_numbers = #tpu.dot_dimension_numbers<[1], [0], [0], [1], [0, 0, 1, 1], [], []>} : vector<8x24xf32>, vector<24x256xf32>, vector<8x256xf32> -> vector<8x256xf32>
    %c1_513 = arith.constant 1 : index
    %c0_514 = arith.constant 0 : index
    %c128_515 = arith.constant 128 : index
    %511 = vector.load %arg11[%c1_513, %c0_514, %c128_515] : memref<2x24x512xf32, #tpu.memory_space<vmem>>, vector<1x24x256xf32>
    %512 = vector.shape_cast %511 : vector<1x24x256xf32> to vector<24x256xf32>
    %c1_516 = arith.constant 1 : index
    %c1_517 = arith.constant 1 : index
    %c0_518 = arith.constant 0 : index
    %c0_519 = arith.constant 0 : index
    %513 = vector.load %arg6[%c1_516, %c1_517, %c0_518, %c0_519] : memref<3x3x8x24xf32, #tpu.memory_space<vmem>>, vector<1x1x8x24xf32>
    %514 = vector.shape_cast %513 : vector<1x1x8x24xf32> to vector<8x24xf32>
    %cst_520 = arith.constant dense<0.000000e+00> : vector<8x256xf32>
    %515 = tpu.matmul %514, %512, %cst_520 {dimension_numbers = #tpu.dot_dimension_numbers<[1], [0], [0], [1], [0, 0, 1, 1], [], []>} : vector<8x24xf32>, vector<24x256xf32>, vector<8x256xf32> -> vector<8x256xf32>
    %516 = arith.addf %510, %515 : vector<8x256xf32>
    %c1_521 = arith.constant 1 : index
    %c0_522 = arith.constant 0 : index
    %c144_523 = arith.constant 144 : index
    %517 = vector.load %arg11[%c1_521, %c0_522, %c144_523] : memref<2x24x512xf32, #tpu.memory_space<vmem>>, vector<1x24x256xf32>
    %518 = vector.shape_cast %517 : vector<1x24x256xf32> to vector<24x256xf32>
    %c1_524 = arith.constant 1 : index
    %c2_525 = arith.constant 2 : index
    %c0_526 = arith.constant 0 : index
    %c0_527 = arith.constant 0 : index
    %519 = vector.load %arg6[%c1_524, %c2_525, %c0_526, %c0_527] : memref<3x3x8x24xf32, #tpu.memory_space<vmem>>, vector<1x1x8x24xf32>
    %520 = vector.shape_cast %519 : vector<1x1x8x24xf32> to vector<8x24xf32>
    %cst_528 = arith.constant dense<0.000000e+00> : vector<8x256xf32>
    %521 = tpu.matmul %520, %518, %cst_528 {dimension_numbers = #tpu.dot_dimension_numbers<[1], [0], [0], [1], [0, 0, 1, 1], [], []>} : vector<8x24xf32>, vector<24x256xf32>, vector<8x256xf32> -> vector<8x256xf32>
    %522 = arith.addf %516, %521 : vector<8x256xf32>
    %c1_529 = arith.constant 1 : index
    %c0_530 = arith.constant 0 : index
    %c0_531 = arith.constant 0 : index
    %523 = vector.load %arg7[%c1_529, %c0_530, %c0_531] : memref<3x8x1xf32, #tpu.memory_space<vmem>>, vector<1x8x1xf32>
    %524 = vector.shape_cast %523 : vector<1x8x1xf32> to vector<8x1xf32>
    %525 = vector.broadcast %524 : vector<8x1xf32> to vector<8x256xf32>
    %526 = arith.addf %522, %525 : vector<8x256xf32>
    %cst_532 = arith.constant 0.000000e+00 : f32
    %527 = vector.broadcast %cst_532 : f32 to vector<8x256xf32>
    %528 = arith.maximumf %526, %527 : vector<8x256xf32>
    %c1_533 = arith.constant 1 : index
    %c40_534 = arith.constant 40 : index
    %c0_535 = arith.constant 0 : index
    %529 = vector.load %arg12[%c1_533, %c40_534, %c0_535] : memref<2x64x256xf32, #tpu.memory_space<vmem>>, vector<1x8x256xf32>
    %530 = vector.shape_cast %529 : vector<1x8x256xf32> to vector<8x256xf32>
    %531 = vector.shape_cast %528 : vector<8x256xf32> to vector<1x8x256xf32>
    tpu.vector_store %arg12[%c1_533, %c40_534, %c0_535], %531 {strides = array<i32>} : memref<2x64x256xf32, #tpu.memory_space<vmem>>, vector<1x8x256xf32>,
    %532 = vector.extract_strided_slice %313 {offsets = [0, 0], sizes = [8, 256], strides = [1, 1]} : vector<32x256xf32> to vector<8x256xf32>
    %c1_536 = arith.constant 1 : index
    %c8_537 = arith.constant 8 : index
    %c128_538 = arith.constant 128 : index
    %533 = vector.load %arg11[%c1_536, %c8_537, %c128_538] : memref<2x24x512xf32, #tpu.memory_space<vmem>>, vector<1x8x256xf32>
    %534 = vector.shape_cast %533 : vector<1x8x256xf32> to vector<8x256xf32>
    %535 = vector.shape_cast %532 : vector<8x256xf32> to vector<1x8x256xf32>
    tpu.vector_store %arg11[%c1_536, %c8_537, %c128_538], %535 {strides = array<i32>} : memref<2x24x512xf32, #tpu.memory_space<vmem>>, vector<1x8x256xf32>,
    %c1_539 = arith.constant 1 : index
    %c8_540 = arith.constant 8 : index
    %c127_541 = arith.constant 127 : index
    %536 = vector.load %arg11[%c1_539, %c8_540, %c127_541] : memref<2x24x512xf32, #tpu.memory_space<vmem>>, vector<1x8x256xf32>
    %537 = vector.shape_cast %536 : vector<1x8x256xf32> to vector<8x256xf32>
    %538 = arith.mulf %537, %13 : vector<8x256xf32>
    %c1_542 = arith.constant 1 : index
    %c0_543 = arith.constant 0 : index
    %c128_544 = arith.constant 128 : index
    %539 = vector.load %arg11[%c1_542, %c0_543, %c128_544] : memref<2x24x512xf32, #tpu.memory_space<vmem>>, vector<1x8x256xf32>
    %540 = vector.shape_cast %539 : vector<1x8x256xf32> to vector<8x256xf32>
    %541 = vector.shape_cast %538 : vector<8x256xf32> to vector<1x8x256xf32>
    tpu.vector_store %arg11[%c1_542, %c0_543, %c128_544], %541 {strides = array<i32>} : memref<2x24x512xf32, #tpu.memory_space<vmem>>, vector<1x8x256xf32>,
    %c1_545 = arith.constant 1 : index
    %c8_546 = arith.constant 8 : index
    %c129_547 = arith.constant 129 : index
    %542 = vector.load %arg11[%c1_545, %c8_546, %c129_547] : memref<2x24x512xf32, #tpu.memory_space<vmem>>, vector<1x8x256xf32>
    %543 = vector.shape_cast %542 : vector<1x8x256xf32> to vector<8x256xf32>
    %544 = arith.mulf %543, %17 : vector<8x256xf32>
    %c1_548 = arith.constant 1 : index
    %c16_549 = arith.constant 16 : index
    %c128_550 = arith.constant 128 : index
    %545 = vector.load %arg11[%c1_548, %c16_549, %c128_550] : memref<2x24x512xf32, #tpu.memory_space<vmem>>, vector<1x8x256xf32>
    %546 = vector.shape_cast %545 : vector<1x8x256xf32> to vector<8x256xf32>
    %547 = vector.shape_cast %544 : vector<8x256xf32> to vector<1x8x256xf32>
    tpu.vector_store %arg11[%c1_548, %c16_549, %c128_550], %547 {strides = array<i32>} : memref<2x24x512xf32, #tpu.memory_space<vmem>>, vector<1x8x256xf32>,
    %c1_551 = arith.constant 1 : index
    %c0_552 = arith.constant 0 : index
    %c112_553 = arith.constant 112 : index
    %548 = vector.load %arg11[%c1_551, %c0_552, %c112_553] : memref<2x24x512xf32, #tpu.memory_space<vmem>>, vector<1x24x256xf32>
    %549 = vector.shape_cast %548 : vector<1x24x256xf32> to vector<24x256xf32>
    %c0_554 = arith.constant 0 : index
    %c0_555 = arith.constant 0 : index
    %c0_556 = arith.constant 0 : index
    %c0_557 = arith.constant 0 : index
    %550 = vector.load %arg6[%c0_554, %c0_555, %c0_556, %c0_557] : memref<3x3x8x24xf32, #tpu.memory_space<vmem>>, vector<1x1x8x24xf32>
    %551 = vector.shape_cast %550 : vector<1x1x8x24xf32> to vector<8x24xf32>
    %cst_558 = arith.constant dense<0.000000e+00> : vector<8x256xf32>
    %552 = tpu.matmul %551, %549, %cst_558 {dimension_numbers = #tpu.dot_dimension_numbers<[1], [0], [0], [1], [0, 0, 1, 1], [], []>} : vector<8x24xf32>, vector<24x256xf32>, vector<8x256xf32> -> vector<8x256xf32>
    %c1_559 = arith.constant 1 : index
    %c0_560 = arith.constant 0 : index
    %c128_561 = arith.constant 128 : index
    %553 = vector.load %arg11[%c1_559, %c0_560, %c128_561] : memref<2x24x512xf32, #tpu.memory_space<vmem>>, vector<1x24x256xf32>
    %554 = vector.shape_cast %553 : vector<1x24x256xf32> to vector<24x256xf32>
    %c0_562 = arith.constant 0 : index
    %c1_563 = arith.constant 1 : index
    %c0_564 = arith.constant 0 : index
    %c0_565 = arith.constant 0 : index
    %555 = vector.load %arg6[%c0_562, %c1_563, %c0_564, %c0_565] : memref<3x3x8x24xf32, #tpu.memory_space<vmem>>, vector<1x1x8x24xf32>
    %556 = vector.shape_cast %555 : vector<1x1x8x24xf32> to vector<8x24xf32>
    %cst_566 = arith.constant dense<0.000000e+00> : vector<8x256xf32>
    %557 = tpu.matmul %556, %554, %cst_566 {dimension_numbers = #tpu.dot_dimension_numbers<[1], [0], [0], [1], [0, 0, 1, 1], [], []>} : vector<8x24xf32>, vector<24x256xf32>, vector<8x256xf32> -> vector<8x256xf32>
    %558 = arith.addf %552, %557 : vector<8x256xf32>
    %c1_567 = arith.constant 1 : index
    %c0_568 = arith.constant 0 : index
    %c144_569 = arith.constant 144 : index
    %559 = vector.load %arg11[%c1_567, %c0_568, %c144_569] : memref<2x24x512xf32, #tpu.memory_space<vmem>>, vector<1x24x256xf32>
    %560 = vector.shape_cast %559 : vector<1x24x256xf32> to vector<24x256xf32>
    %c0_570 = arith.constant 0 : index
    %c2_571 = arith.constant 2 : index
    %c0_572 = arith.constant 0 : index
    %c0_573 = arith.constant 0 : index
    %561 = vector.load %arg6[%c0_570, %c2_571, %c0_572, %c0_573] : memref<3x3x8x24xf32, #tpu.memory_space<vmem>>, vector<1x1x8x24xf32>
    %562 = vector.shape_cast %561 : vector<1x1x8x24xf32> to vector<8x24xf32>
    %cst_574 = arith.constant dense<0.000000e+00> : vector<8x256xf32>
    %563 = tpu.matmul %562, %560, %cst_574 {dimension_numbers = #tpu.dot_dimension_numbers<[1], [0], [0], [1], [0, 0, 1, 1], [], []>} : vector<8x24xf32>, vector<24x256xf32>, vector<8x256xf32> -> vector<8x256xf32>
    %564 = arith.addf %558, %563 : vector<8x256xf32>
    %c0_575 = arith.constant 0 : index
    %c0_576 = arith.constant 0 : index
    %c0_577 = arith.constant 0 : index
    %565 = vector.load %arg7[%c0_575, %c0_576, %c0_577] : memref<3x8x1xf32, #tpu.memory_space<vmem>>, vector<1x8x1xf32>
    %566 = vector.shape_cast %565 : vector<1x8x1xf32> to vector<8x1xf32>
    %567 = vector.broadcast %566 : vector<8x1xf32> to vector<8x256xf32>
    %568 = arith.addf %564, %567 : vector<8x256xf32>
    %cst_578 = arith.constant 0.000000e+00 : f32
    %569 = vector.broadcast %cst_578 : f32 to vector<8x256xf32>
    %570 = arith.maximumf %568, %569 : vector<8x256xf32>
    %c1_579 = arith.constant 1 : index
    %c48_580 = arith.constant 48 : index
    %c0_581 = arith.constant 0 : index
    %571 = vector.load %arg12[%c1_579, %c48_580, %c0_581] : memref<2x64x256xf32, #tpu.memory_space<vmem>>, vector<1x8x256xf32>
    %572 = vector.shape_cast %571 : vector<1x8x256xf32> to vector<8x256xf32>
    %573 = vector.shape_cast %570 : vector<8x256xf32> to vector<1x8x256xf32>
    tpu.vector_store %arg12[%c1_579, %c48_580, %c0_581], %573 {strides = array<i32>} : memref<2x64x256xf32, #tpu.memory_space<vmem>>, vector<1x8x256xf32>,
    %574 = vector.extract_strided_slice %313 {offsets = [0, 0], sizes = [8, 256], strides = [1, 1]} : vector<32x256xf32> to vector<8x256xf32>
    %c1_582 = arith.constant 1 : index
    %c56_583 = arith.constant 56 : index
    %c0_584 = arith.constant 0 : index
    %575 = vector.load %arg12[%c1_582, %c56_583, %c0_584] : memref<2x64x256xf32, #tpu.memory_space<vmem>>, vector<1x8x256xf32>
    %576 = vector.shape_cast %575 : vector<1x8x256xf32> to vector<8x256xf32>
    %577 = vector.shape_cast %574 : vector<8x256xf32> to vector<1x8x256xf32>
    tpu.vector_store %arg12[%c1_582, %c56_583, %c0_584], %577 {strides = array<i32>} : memref<2x64x256xf32, #tpu.memory_space<vmem>>, vector<1x8x256xf32>,
    %c1_585 = arith.constant 1 : index
    %c0_586 = arith.constant 0 : index
    %c0_587 = arith.constant 0 : index
    %578 = vector.load %arg12[%c1_585, %c0_586, %c0_587] : memref<2x64x256xf32, #tpu.memory_space<vmem>>, vector<1x64x256xf32>
    %579 = vector.shape_cast %578 : vector<1x64x256xf32> to vector<64x256xf32>
    %cst_588 = arith.constant dense<0.000000e+00> : vector<32x256xf32>
    %580 = tpu.matmul %23, %579, %cst_588 {dimension_numbers = #tpu.dot_dimension_numbers<[1], [0], [0], [1], [0, 0, 1, 1], [], []>} : vector<32x64xf32>, vector<64x256xf32>, vector<32x256xf32> -> vector<32x256xf32>
    %581 = vector.broadcast %24 : vector<32x1xf32> to vector<32x256xf32>
    %582 = arith.addf %580, %581 : vector<32x256xf32>
    %583 = arith.addf %582, %308 : vector<32x256xf32>
    %cst_589 = arith.constant 0.000000e+00 : f32
    %584 = vector.broadcast %cst_589 : f32 to vector<32x256xf32>
    %585 = arith.maximumf %583, %584 : vector<32x256xf32>
    %c1_590 = arith.constant 1 : index
    %c0_591 = arith.constant 0 : index
    %c0_592 = arith.constant 0 : index
    %586 = vector.load %arg10[%c1_590, %c0_591, %c0_592] : memref<2x32x256xf32, #tpu.memory_space<vmem>>, vector<1x32x256xf32>
    %587 = vector.shape_cast %586 : vector<1x32x256xf32> to vector<32x256xf32>
    %588 = vector.shape_cast %585 : vector<32x256xf32> to vector<1x32x256xf32>
    tpu.vector_store %arg10[%c1_590, %c0_591, %c0_592], %588 {strides = array<i32>} : memref<2x32x256xf32, #tpu.memory_space<vmem>>, vector<1x32x256xf32>,
    return
  }
  func.func @transform_0(%arg0: i32) -> (i32, i32, i32) {
    %c0_i32 = arith.constant 0 : i32
    %c0_i32_0 = arith.constant 0 : i32
    %c0_i32_1 = arith.constant 0 : i32
    return %arg0, %c0_i32, %c0_i32_0 : i32, i32, i32
  }
  func.func @transform_1(%arg0: i32) -> (i32, i32) {
    %c0_i32 = arith.constant 0 : i32
    %c0_i32_0 = arith.constant 0 : i32
    %c0_i32_1 = arith.constant 0 : i32
    return %c0_i32, %c0_i32_0 : i32, i32
  }
  func.func @transform_2(%arg0: i32) -> (i32, i32) {
    %c0_i32 = arith.constant 0 : i32
    %c0_i32_0 = arith.constant 0 : i32
    %c0_i32_1 = arith.constant 0 : i32
    return %c0_i32, %c0_i32_0 : i32, i32
  }
  func.func @transform_3(%arg0: i32) -> (i32, i32, i32, i32) {
    %c0_i32 = arith.constant 0 : i32
    %c0_i32_0 = arith.constant 0 : i32
    %c0_i32_1 = arith.constant 0 : i32
    %c0_i32_2 = arith.constant 0 : i32
    %c0_i32_3 = arith.constant 0 : i32
    return %c0_i32, %c0_i32_0, %c0_i32_1, %c0_i32_2 : i32, i32, i32, i32
  }
  func.func @transform_4(%arg0: i32) -> (i32, i32, i32) {
    %c0_i32 = arith.constant 0 : i32
    %c0_i32_0 = arith.constant 0 : i32
    %c0_i32_1 = arith.constant 0 : i32
    %c0_i32_2 = arith.constant 0 : i32
    return %c0_i32, %c0_i32_0, %c0_i32_1 : i32, i32, i32
  }
  func.func @transform_5(%arg0: i32) -> (i32, i32, i32, i32) {
    %c0_i32 = arith.constant 0 : i32
    %c0_i32_0 = arith.constant 0 : i32
    %c0_i32_1 = arith.constant 0 : i32
    %c0_i32_2 = arith.constant 0 : i32
    %c0_i32_3 = arith.constant 0 : i32
    return %c0_i32, %c0_i32_0, %c0_i32_1, %c0_i32_2 : i32, i32, i32, i32
  }
  func.func @transform_6(%arg0: i32) -> (i32, i32, i32) {
    %c0_i32 = arith.constant 0 : i32
    %c0_i32_0 = arith.constant 0 : i32
    %c0_i32_1 = arith.constant 0 : i32
    %c0_i32_2 = arith.constant 0 : i32
    return %c0_i32, %c0_i32_0, %c0_i32_1 : i32, i32, i32
  }
  func.func @transform_7(%arg0: i32) -> (i32, i32) {
    %c0_i32 = arith.constant 0 : i32
    %c0_i32_0 = arith.constant 0 : i32
    %c0_i32_1 = arith.constant 0 : i32
    return %c0_i32, %c0_i32_0 : i32, i32
  }
  func.func @transform_8(%arg0: i32) -> (i32, i32) {
    %c0_i32 = arith.constant 0 : i32
    %c0_i32_0 = arith.constant 0 : i32
    %c0_i32_1 = arith.constant 0 : i32
    return %c0_i32, %c0_i32_0 : i32, i32
  }
  func.func @transform_9(%arg0: i32) -> (i32, i32, i32) {
    %c0_i32 = arith.constant 0 : i32
    %c0_i32_0 = arith.constant 0 : i32
    %c0_i32_1 = arith.constant 0 : i32
    return %arg0, %c0_i32, %c0_i32_0 : i32, i32, i32
  }
}

</mosaic_0001>

<llo_original>
// kernel: tpu_custom_call.1
$region0: #{tpu_custom_call.1}
  #allocation0 [shape = 'u32[]', space=smem, size = 0x4, offset = 0x4, fixed_abs, tag = 'smem constant byte address 0x4 - core index']
  #allocation1 [shape = 'u32[144,128]{1,0:T(1,128)}', space=vmem, size = 0x12000, scoped, tag = 'internal scratch']
  #allocation2 [shape = 'f32[2,24,512]{2,1,0:T(8,128)}', space=vmem, size = 0x18000, scoped, tag = 'scratch operand']
  #allocation3 [shape = 'f32[2,64,256]{2,1,0:T(8,128)}', space=vmem, size = 0x20000, scoped, tag = 'scratch operand']
  %s0 = inlined_call_operand.hbm [shape: f32[2,32,256], index: 0, kind: input, shape index: {}]
  %s1 = inlined_call_operand.vmem [shape: f32[32,32], index: 1, kind: input, shape index: {}]
  %s2 = inlined_call_operand.vmem [shape: f32[32,1], index: 2, kind: input, shape index: {}]
  %s3 = inlined_call_operand.vmem [shape: f32[3,3,8,24], index: 3, kind: input, shape index: {}]
  %s4 = inlined_call_operand.vmem [shape: f32[3,8,1], index: 4, kind: input, shape index: {}]
  %s5 = inlined_call_operand.hbm [shape: f32[3,3,8,24], index: 5, kind: input, shape index: {}]
  %s6 = inlined_call_operand.vmem [shape: f32[3,8,1], index: 6, kind: input, shape index: {}]
  %s7 = inlined_call_operand.hbm [shape: f32[32,64], index: 7, kind: input, shape index: {}]
  %s8 = inlined_call_operand.vmem [shape: f32[32,1], index: 8, kind: input, shape index: {}]
  %s9 = inlined_call_operand.hbm [shape: f32[2,32,256], index: 9, kind: output, shape index: {}]
  %s10 = sld [smem:[#allocation0]]
  $region58: #{tpu_custom_call.1} parent=0
    _
  %s12 = ssub.s32 1, %s10
  %s13 = scalar_select 0, %s12, %s10
  $region1: #{tpu_custom_call.1} parent=0
    #allocation4 [shape = 'u8[65536]{0}', space=vmem, size = 0x10000, scoped, tag = 'input window, operand 0, single buffered']
    #allocation5 [shape = 's32[1]{0}', space=sflag, size = 0x4, scoped, tag = 'scoped memory for tpu_custom_call.1']
    #allocation6 [shape = 's32[1]{0}', space=sflag, size = 0x4, scoped, tag = 'scoped memory for tpu_custom_call.1']
    #allocation7 [shape = 'u8[36864]{0}', space=vmem, size = 0x9000, scoped, tag = 'input window, operand 5, single buffered']
    #allocation8 [shape = 's32[1]{0}', space=sflag, size = 0x4, scoped, tag = 'scoped memory for tpu_custom_call.1']
    #allocation9 [shape = 'u8[16384]{0}', space=vmem, size = 0x4000, scoped, tag = 'input window, operand 7, single buffered']
    #allocation10 [shape = 'u8[65536]{0}', space=vmem, size = 0x10000, scoped, tag = 'output window, operand 0, single buffered']
    %14 = vsyncpa [#allocation5], 0
    %15 = vsyncpa [#allocation8], 0
    %16 = vsyncpa [#allocation6], 0
    // Predicated region
    $region2: #{tpu_custom_call.1} parent=1 // pred_check
      _
    $region3: #{tpu_custom_call.1} parent=1 // pred_check_branch
      %18 = sbr.rel (0) target = $region5
    $region4: #{tpu_custom_call.1} parent=1 // pred_region
      %s20 = ssub.s32 2048, 2048
      %21 = vsyncadd [#allocation5], %s20
      %s22 = sshll.u32 [#allocation4], 4
      %s23 = int_to_ptr.vmem [resolvable:$true] %s22
      %28 = dma.hbm_to_vmem [thread:$0]  %s0, 2048, %s23, [#allocation5], 256, 256, 16
    $region5: #{tpu_custom_call.1} parent=1 // pred_fallthru
      _
    // Predicated region
    $region6: #{tpu_custom_call.1} parent=1 // pred_check
      _
    $region7: #{tpu_custom_call.1} parent=1 // pred_check_branch
      %30 = sbr.rel (0) target = $region9
    $region8: #{tpu_custom_call.1} parent=1 // pred_region
      _
    $region9: #{tpu_custom_call.1} parent=1 // pred_fallthru
      _
    // Predicated region
    $region10: #{tpu_custom_call.1} parent=1 // pred_check
      _
    $region11: #{tpu_custom_call.1} parent=1 // pred_check_branch
      %32 = sbr.rel (0) target = $region13
    $region12: #{tpu_custom_call.1} parent=1 // pred_region
      _
    $region13: #{tpu_custom_call.1} parent=1 // pred_fallthru
      _
    // Predicated region
    $region14: #{tpu_custom_call.1} parent=1 // pred_check
      _
    $region15: #{tpu_custom_call.1} parent=1 // pred_check_branch
      %34 = sbr.rel (0) target = $region17
    $region16: #{tpu_custom_call.1} parent=1 // pred_region
      _
    $region17: #{tpu_custom_call.1} parent=1 // pred_fallthru
      _
    // Predicated region
    $region18: #{tpu_custom_call.1} parent=1 // pred_check
      _
    $region19: #{tpu_custom_call.1} parent=1 // pred_check_branch
      %36 = sbr.rel (0) target = $region21
    $region20: #{tpu_custom_call.1} parent=1 // pred_region
      _
    $region21: #{tpu_custom_call.1} parent=1 // pred_fallthru
      _
    // Predicated region
    $region22: #{tpu_custom_call.1} parent=1 // pred_check
      _
    $region23: #{tpu_custom_call.1} parent=1 // pred_check_branch
      %38 = sbr.rel (0) target = $region25
    $region24: #{tpu_custom_call.1} parent=1 // pred_region
      %s40 = ssub.s32 1152, 1152
      %41 = vsyncadd [#allocation8], %s40
      %s42 = sshll.u32 [#allocation7], 4
      %s43 = int_to_ptr.vmem [resolvable:$true] %s42
      %48 = dma.hbm_to_vmem [thread:$0]  %s5, 1152, %s43, [#allocation8], 128, 128, 8
    $region25: #{tpu_custom_call.1} parent=1 // pred_fallthru
      _
    // Predicated region
    $region26: #{tpu_custom_call.1} parent=1 // pred_check
      _
    $region27: #{tpu_custom_call.1} parent=1 // pred_check_branch
      %50 = sbr.rel (0) target = $region29
    $region28: #{tpu_custom_call.1} parent=1 // pred_region
      _
    $region29: #{tpu_custom_call.1} parent=1 // pred_fallthru
      _
    // Predicated region
    $region30: #{tpu_custom_call.1} parent=1 // pred_check
      _
    $region31: #{tpu_custom_call.1} parent=1 // pred_check_branch
      %52 = sbr.rel (0) target = $region33
    $region32: #{tpu_custom_call.1} parent=1 // pred_region
      %s54 = ssub.s32 512, 512
      %55 = vsyncadd [#allocation8], %s54
      %s56 = sshll.u32 [#allocation9], 4
      %s57 = int_to_ptr.vmem [resolvable:$true] %s56
      %62 = dma.hbm_to_vmem [thread:$0]  %s7, 512, %s57, [#allocation8], 128, 128, 8
    $region33: #{tpu_custom_call.1} parent=1 // pred_fallthru
      _
    // Predicated region
    $region34: #{tpu_custom_call.1} parent=1 // pred_check
      _
    $region35: #{tpu_custom_call.1} parent=1 // pred_check_branch
      %64 = sbr.rel (0) target = $region37
    $region36: #{tpu_custom_call.1} parent=1 // pred_region
      _
    $region37: #{tpu_custom_call.1} parent=1 // pred_fallthru
      _
    // Predicated region
    $region38: #{tpu_custom_call.1} parent=1 // pred_check
      _
    $region39: #{tpu_custom_call.1} parent=1 // pred_check_branch
      %66 = sbr.rel (0) target = $region41
    $region40: #{tpu_custom_call.1} parent=1 // pred_region
      %67 = dma.done [#allocation5], 2048
    $region41: #{tpu_custom_call.1} parent=1 // pred_fallthru
      _
    // Predicated region
    $region42: #{tpu_custom_call.1} parent=1 // pred_check
      _
    $region43: #{tpu_custom_call.1} parent=1 // pred_check_branch
      %69 = sbr.rel (0) target = $region45
    $region44: #{tpu_custom_call.1} parent=1 // pred_region
      %70 = dma.done [#allocation8], 1152
    $region45: #{tpu_custom_call.1} parent=1 // pred_fallthru
      _
    // Predicated region
    $region46: #{tpu_custom_call.1} parent=1 // pred_check
      _
    $region47: #{tpu_custom_call.1} parent=1 // pred_check_branch
      %72 = sbr.rel (0) target = $region49
    $region48: #{tpu_custom_call.1} parent=1 // pred_region
      %73 = dma.done [#allocation8], 512
    $region49: #{tpu_custom_call.1} parent=1 // pred_fallthru
      _
    %v74 = vlaneseq
    %v75 = vand.u32 %v74, 127
    %v76 = vadd.s32 %v75, 128
    %v77 = vcvt.s32.f32 %v75
    %v78 = vcvt.s32.f32 %v76
    %v79 = vadd.f32 %v77, 0.5
    %v80 = vadd.f32 %v78, 0.5
    %v81 = vmul.f32 %v79, 0.0625
    %v82 = vmul.f32 %v80, 0.0625
    %v83 = vfloor.f32 %v81
    %v84 = vfloor.f32 %v82
    %v85 = vmul.f32 %v83, 16.0
    %v86 = vmul.f32 %v84, 16.0
    %v87 = vsub.f32 %v77, %v85
    %v88 = vsub.f32 %v78, %v86
    %vm89 = vcmp.ge.f32.partialorder %v87, 0.5
    %vm90 = vcmp.ge.f32.partialorder %v88, 0.5
    %v91 = vsel %vm89, 1, 0
    %v92 = vsel %vm90, 1, 0
    %v93 = vcvt.s32.f32 %v91
    %v94 = vcvt.s32.f32 %v92
    %vm95 = vcmp.le.f32.partialorder %v87, 14.5
    %vm96 = vcmp.le.f32.partialorder %v88, 14.5
    %v97 = vsel %vm95, 1, 0
    %v98 = vsel %vm96, 1, 0
    %v99 = vcvt.s32.f32 %v97
    %v100 = vcvt.s32.f32 %v98
    %101 = vst [vmem:[#allocation2] sm:$0xff] 0.0
    %102 = vst [vmem:[#allocation2 + $0x20] sm:$0xff] 0.0
    %103 = vst [vmem:[#allocation2 + $0x40] sm:$0xff] 0.0
    %104 = vst [vmem:[#allocation2 + $0x60] sm:$0xff] 0.0
    %105 = vst [vmem:[#allocation2 + $0x80] sm:$0xff] 0.0
    %106 = vst [vmem:[#allocation2 + $0xa0] sm:$0xff] 0.0
    %107 = vst [vmem:[#allocation2 + $0x18] sm:$0xff] 0.0
    %108 = vst [vmem:[#allocation2 + $0x38] sm:$0xff] 0.0
    %109 = vst [vmem:[#allocation2 + $0x58] sm:$0xff] 0.0
    %110 = vst [vmem:[#allocation2 + $0x78] sm:$0xff] 0.0
    %111 = vst [vmem:[#allocation2 + $0x98] sm:$0xff] 0.0
    %112 = vst [vmem:[#allocation2 + $0xb8] sm:$0xff] 0.0
    %v113 = vld [vmem:[%s1] sm:$0xff]
    %v114 = vld [vmem:[%s1 + $0x8] sm:$0xff]
    %v115 = vld [vmem:[%s1 + $0x10] sm:$0xff]
    %v116 = vld [vmem:[%s1 + $0x18] sm:$0xff]
    %v117 = vld [vmem:[%s2] sm:$0xff]
    %v118 = vld [vmem:[%s2 + $0x8] sm:$0xff]
    %v119 = vld [vmem:[%s2 + $0x10] sm:$0xff]
    %v120 = vld [vmem:[%s2 + $0x18] sm:$0xff]
    %v121 = vld [vmem:[#allocation9] sm:$0xff]
    %v122 = vld [vmem:[#allocation9 + $0x8] sm:$0xff]
    %v123 = vld [vmem:[#allocation9 + $0x10] sm:$0xff]
    %v124 = vld [vmem:[#allocation9 + $0x18] sm:$0xff]
    %v125 = vld [vmem:[%s8] sm:$0xff]
    %v126 = vld [vmem:[%s8 + $0x8] sm:$0xff]
    %v127 = vld [vmem:[%s8 + $0x10] sm:$0xff]
    %v128 = vld [vmem:[%s8 + $0x18] sm:$0xff]
    %v129 = vld [vmem:[#allocation4] sm:$0xff]
    %v130 = vld [vmem:[#allocation4 + $0x8] sm:$0xff]
    %v131 = vld [vmem:[#allocation4 + $0x10] sm:$0xff]
    %v132 = vld [vmem:[#allocation4 + $0x18] sm:$0xff]
    %v133 = vld [vmem:[#allocation4 + $0x20] sm:$0xff]
    %v134 = vld [vmem:[#allocation4 + $0x28] sm:$0xff]
    %v135 = vld [vmem:[#allocation4 + $0x30] sm:$0xff]
    %v136 = vld [vmem:[#allocation4 + $0x38] sm:$0xff]
    %138 = vset.pattern.permute.xlu0 0
    %139 = vperm.xlu0 %138, %v117
    %v140 = vpop.permute.xlu0 %139
    %143 = vset.pattern.permute.xlu0 0
    %144 = vperm.xlu0 %143, %v118
    %v145 = vpop.permute.xlu0 %144
    %148 = vset.pattern.permute.xlu0 0
    %149 = vperm.xlu0 %148, %v119
    %v150 = vpop.permute.xlu0 %149
    %153 = vset.pattern.permute.xlu0 0
    %154 = vperm.xlu0 %153, %v120
    %v155 = vpop.permute.xlu0 %154
    %vm157 = vcmask 261120
    %v159 = vsel %vm157, %v113, 0
    %v162 = vsel %vm157, %v114, 0
    %v165 = vsel %vm157, %v115, 0
    %v168 = vsel %vm157, %v116, 0
    %170 = vmatprep.subr.mxu0 0.0
    %171 = vmatpush1.msra.mxu0 0.0
    %172 = vmatprep.subr.mxu0 0.0
    %173 = vmatpush1.msra.mxu0 0.0
    %174 = vmatprep.subr.mxu0 0.0
    %175 = vmatpush1.msra.mxu0 0.0
    %176 = vmatprep.subr.mxu0 0.0
    %177 = vmatpush1.msra.mxu0 0.0
    %178 = vmatprep.subr.mxu0 0.0
    %179 = vmatpush1.msra.mxu0 0.0
    %180 = vmatprep.subr.mxu0 0.0
    %181 = vmatpush1.msra.mxu0 0.0
    %182 = vmatprep.subr.mxu0 0.0
    %183 = vmatpush1.msra.mxu0 0.0
    %184 = vmatprep.subr.mxu0 0.0
    %185 = vmatpush1.msra.mxu0 0.0
    %186 = vmatprep.subr.mxu0 0.0
    %187 = vmatpush1.msra.mxu0 0.0
    %188 = vmatprep.subr.mxu0 0.0
    %189 = vmatpush1.msra.mxu0 0.0
    %190 = vmatprep.subr.mxu0 0.0
    %191 = vmatpush1.msra.mxu0 0.0
    %192 = vmatprep.subr.mxu0 0.0
    %193 = vmatpush1.msra.mxu0 0.0
    %194 = vmatprep.subr.mxu0 %v136
    %195 = vmatpush1.msra.mxu0 %v135
    %196 = vmatprep.subr.mxu0 %v134
    %197 = vmatpush1.msra.mxu0 %v133
    %198 = vmatprep.subr.mxu0 %v132
    %199 = vmatpush1.msra.mxu0 %v131
    %200 = vmatprep.subr.mxu0 %v130
    %201 = vmatpush1.msra.mxu0 %v129
    %202 = vmatprep.subr.mxu0 0.0
    %203 = vmatpush2.msra.mxu0 0.0
    %204 = vmatprep.subr.mxu0 0.0
    %205 = vmatpush2.msra.mxu0 0.0
    %206 = vmatprep.subr.mxu0 0.0
    %207 = vmatpush2.msra.mxu0 0.0
    %208 = vmatprep.subr.mxu0 0.0
    %209 = vmatpush2.msra.mxu0 0.0
    %210 = vmatprep.subr.mxu0 0.0
    %211 = vmatpush2.msra.mxu0 0.0
    %212 = vmatprep.subr.mxu0 0.0
    %213 = vmatpush2.msra.mxu0 0.0
    %214 = vmatprep.subr.mxu0 0.0
    %215 = vmatpush2.msra.mxu0 0.0
    %216 = vmatprep.subr.mxu0 0.0
    %217 = vmatpush2.msra.mxu0 0.0
    %218 = vmatprep.subr.mxu0 0.0
    %219 = vmatpush2.msra.mxu0 0.0
    %220 = vmatprep.subr.mxu0 0.0
    %221 = vmatpush2.msra.mxu0 0.0
    %222 = vmatprep.subr.mxu0 0.0
    %223 = vmatpush2.msra.mxu0 0.0
    %224 = vmatprep.subr.mxu0 0.0
    %225 = vmatpush2.msra.mxu0 0.0
    %226 = vmatprep.subr.mxu0 0.0
    %227 = vmatpush2.msra.mxu0 0.0
    %228 = vmatprep.subr.mxu0 0.0
    %229 = vmatpush2.msra.mxu0 0.0
    %230 = vmatprep.subr.mxu0 0.0
    %231 = vmatpush2.msra.mxu0 0.0
    %232 = vmatprep.subr.mxu0 0.0
    %233 = vmatpush2.msra.mxu0 0.0
    %234 = vmatprep.mubr.f32.mxu0 0.0
    %235 = vmatmul.mubr.f32.gmra.mxu0 %v159
    %v236 = vpop.f32.mrf.mxu0
    %v237 = vadd.f32 %v140, %v236
    %v238 = vpop.f32.mrf.mxu0
    %v239 = vadd.f32 %v140, %v238
    %240 = vmatprep.mubr.f32.mxu0 0.0
    %241 = vmatmul.mubr.f32.gmra.mxu0 %v162
    %v242 = vpop.f32.mrf.mxu0
    %v243 = vadd.f32 %v145, %v242
    %v244 = vpop.f32.mrf.mxu0
    %v245 = vadd.f32 %v145, %v244
    %246 = vmatprep.mubr.f32.mxu0 0.0
    %247 = vmatmul.mubr.f32.gmra.mxu0 %v165
    %v248 = vpop.f32.mrf.mxu0
    %v249 = vadd.f32 %v150, %v248
    %v250 = vpop.f32.mrf.mxu0
    %v251 = vadd.f32 %v150, %v250
    %252 = vmatprep.mubr.f32.mxu0 0.0
    %253 = vmatmul.mubr.f32.gmra.mxu0 %v168
    %v254 = vpop.f32.mrf.mxu0
    %v255 = vadd.f32 %v155, %v254
    %v256 = vpop.f32.mrf.mxu0
    %v257 = vadd.f32 %v155, %v256
    %258 = vdwg.mxu0
    %v259 = vmax.f32 %v237, 0.0
    %v260 = vmax.f32 %v239, 0.0
    %v261 = vmax.f32 %v243, 0.0
    %v262 = vmax.f32 %v245, 0.0
    %v263 = vmax.f32 %v249, 0.0
    %v264 = vmax.f32 %v251, 0.0
    %v265 = vmax.f32 %v255, 0.0
    %v266 = vmax.f32 %v257, 0.0
    %267 = vst [vmem:[#allocation2 + $0x28] sm:$0xff] %v259
    %268 = vst [vmem:[#allocation2 + $0x30] sm:$0xff] %v260
    %v269 = vld [vmem:[#allocation2 + $0x20] sm:$0xff]
    %v270 = vld [vmem:[#allocation2 + $0x28] sm:$0xff]
    %v271 = vld [vmem:[#allocation2 + $0x30] sm:$0xff]
    %274 = vrot.lane.b32.xlu0 %v93, 127
    %v275 = vpop.permute.xlu0 %274
    %276 = vrot.lane.b32.xlu0 %v94, 127
    %v277 = vpop.permute.xlu0 %276
    %vm278 = vcmask 1039360
    %v279 = vsel %vm278, %v275, %v277
    %v283 = vmul.f32 %v269, %v275
    %v284 = vmul.f32 %v270, %v279
    %v285 = vmul.f32 %v271, %v277
    %289 = vrot.lane.b32.xlu0 %v283, 1
    %v290 = vpop.permute.xlu0 %289
    %291 = vrot.lane.b32.xlu0 %v284, 1
    %v292 = vpop.permute.xlu0 %291
    %293 = vrot.lane.b32.xlu0 %v285, 1
    %v294 = vpop.permute.xlu0 %293
    %vm295 = vcmask 7168
    %v296 = vsel %vm295, %v290, %v292
    %v297 = vsel %vm295, %v292, %v294
    %300 = vst [vmem:[#allocation2 + $0x8] sm:$0xff] %v296
    %301 = vst [vmem:[#allocation2 + $0x10] sm:$0xff] %v297
    %v302 = vld [vmem:[#allocation2 + $0x28] sm:$0xff]
    %v303 = vld [vmem:[#allocation2 + $0x30] sm:$0xff]
    %v304 = vld [vmem:[#allocation2 + $0x38] sm:$0xff]
    %307 = vrot.lane.b32.xlu0 %v99, 1
    %v308 = vpop.permute.xlu0 %307
    %309 = vrot.lane.b32.xlu0 %v100, 1
    %v310 = vpop.permute.xlu0 %309
    %v311 = vsel %vm295, %v308, %v310
    %v315 = vmul.f32 %v302, %v308
    %v316 = vmul.f32 %v303, %v311
    %v317 = vmul.f32 %v304, %v310
    %321 = vrot.lane.b32.xlu0 %v315, 127
    %v322 = vpop.permute.xlu0 %321
    %323 = vrot.lane.b32.xlu0 %v316, 127
    %v324 = vpop.permute.xlu0 %323
    %325 = vrot.lane.b32.xlu0 %v317, 127
    %v326 = vpop.permute.xlu0 %325
    %v327 = vsel %vm278, %v322, %v324
    %v328 = vsel %vm278, %v324, %v326
    %331 = vst [vmem:[#allocation2 + $0x48] sm:$0xff] %v327
    %332 = vst [vmem:[#allocation2 + $0x50] sm:$0xff] %v328
    %v333 = vld [vmem:[#allocation2] sm:$0xff]
    %v334 = vld [vmem:[#allocation2 + $0x8] sm:$0xff]
    %v335 = vld [vmem:[#allocation2 + $0x10] sm:$0xff]
    %v336 = vld [vmem:[#allocation2 + $0x20] sm:$0xff]
    %v337 = vld [vmem:[#allocation2 + $0x28] sm:$0xff]
    %v338 = vld [vmem:[#allocation2 + $0x30] sm:$0xff]
    %v339 = vld [vmem:[#allocation2 + $0x40] sm:$0xff]
    %v340 = vld [vmem:[#allocation2 + $0x48] sm:$0xff]
    %v341 = vld [vmem:[#allocation2 + $0x50] sm:$0xff]
    %v342 = vld [vmem:[%s3] sm:$0xff]
    %s343 = scalar_lea.vmem %s3, 8
    %v344 = vld [vmem:[%s343] sm:$0xff]
    %vm345 = vcmask 195584
    %v347 = vsel %vm345, %v344, 0
    %349 = vmatprep.subr.mxu0 0.0
    %350 = vmatpush1.msra.mxu0 0.0
    %351 = vmatprep.subr.mxu0 0.0
    %352 = vmatpush1.msra.mxu0 0.0
    %353 = vmatprep.subr.mxu0 0.0
    %354 = vmatpush1.msra.mxu0 0.0
    %355 = vmatprep.subr.mxu0 0.0
    %356 = vmatpush1.msra.mxu0 0.0
    %357 = vmatprep.subr.mxu0 0.0
    %358 = vmatpush1.msra.mxu0 0.0
    %359 = vmatprep.subr.mxu0 0.0
    %360 = vmatpush1.msra.mxu0 0.0
    %361 = vmatprep.subr.mxu0 0.0
    %362 = vmatpush1.msra.mxu0 0.0
    %363 = vmatprep.subr.mxu0 0.0
    %364 = vmatpush1.msra.mxu0 0.0
    %365 = vmatprep.subr.mxu0 0.0
    %366 = vmatpush1.msra.mxu0 0.0
    %367 = vmatprep.subr.mxu0 0.0
    %368 = vmatpush1.msra.mxu0 0.0
    %369 = vmatprep.subr.mxu0 0.0
    %370 = vmatpush1.msra.mxu0 0.0
    %371 = vmatprep.subr.mxu0 0.0
    %372 = vmatpush1.msra.mxu0 0.0
    %373 = vmatprep.subr.mxu0 0.0
    %374 = vmatpush1.msra.mxu0 0.0
    %375 = vmatprep.subr.mxu0 %v341
    %376 = vmatpush1.msra.mxu0 %v340
    %377 = vmatprep.subr.mxu0 %v338
    %378 = vmatpush1.msra.mxu0 %v337
    %379 = vmatprep.subr.mxu0 %v335
    %380 = vmatpush1.msra.mxu0 %v334
    %381 = vmatprep.subr.mxu0 0.0
    %382 = vmatpush2.msra.mxu0 0.0
    %383 = vmatprep.subr.mxu0 0.0
    %384 = vmatpush2.msra.mxu0 0.0
    %385 = vmatprep.subr.mxu0 0.0
    %386 = vmatpush2.msra.mxu0 0.0
    %387 = vmatprep.subr.mxu0 0.0
    %388 = vmatpush2.msra.mxu0 0.0
    %389 = vmatprep.subr.mxu0 0.0
    %390 = vmatpush2.msra.mxu0 0.0
    %391 = vmatprep.subr.mxu0 0.0
    %392 = vmatpush2.msra.mxu0 0.0
    %393 = vmatprep.subr.mxu0 0.0
    %394 = vmatpush2.msra.mxu0 0.0
    %395 = vmatprep.subr.mxu0 0.0
    %396 = vmatpush2.msra.mxu0 0.0
    %397 = vmatprep.subr.mxu0 0.0
    %398 = vmatpush2.msra.mxu0 0.0
    %399 = vmatprep.subr.mxu0 0.0
    %400 = vmatpush2.msra.mxu0 0.0
    %401 = vmatprep.subr.mxu0 0.0
    %402 = vmatpush2.msra.mxu0 0.0
    %403 = vmatprep.subr.mxu0 0.0
    %404 = vmatpush2.msra.mxu0 0.0
    %405 = vmatprep.subr.mxu0 0.0
    %406 = vmatpush2.msra.mxu0 0.0
    %407 = vmatprep.subr.mxu0 0.0
    %408 = vmatpush2.msra.mxu0 0.0
    %409 = vmatprep.subr.mxu0 0.0
    %410 = vmatpush2.msra.mxu0 0.0
    %411 = vmatprep.subr.mxu0 0.0
    %412 = vmatpush2.msra.mxu0 0.0
    %413 = vmatprep.mubr.f32.mxu0 0.0
    %414 = vmatmul.mubr.f32.gmra.mxu0 %v347
    %v415 = vpop.f32.mrf.mxu0
    %v416 = vadd.f32 0.0, %v415
    %v417 = vpop.f32.mrf.mxu0
    %v418 = vadd.f32 0.0, %v417
    %419 = vdwg.mxu0
    %429 = vrot.lane.b32.xlu0 %v333, 16
    %v430 = vpop.permute.xlu0 %429
    %431 = vrot.lane.b32.xlu0 %v334, 16
    %v432 = vpop.permute.xlu0 %431
    %433 = vrot.lane.b32.xlu0 %v335, 16
    %v434 = vpop.permute.xlu0 %433
    %435 = vrot.lane.b32.xlu0 %v336, 16
    %v436 = vpop.permute.xlu0 %435
    %437 = vrot.lane.b32.xlu0 %v337, 16
    %v438 = vpop.permute.xlu0 %437
    %439 = vrot.lane.b32.xlu0 %v338, 16
    %v440 = vpop.permute.xlu0 %439
    %441 = vrot.lane.b32.xlu0 %v339, 16
    %v442 = vpop.permute.xlu0 %441
    %443 = vrot.lane.b32.xlu0 %v340, 16
    %v444 = vpop.permute.xlu0 %443
    %445 = vrot.lane.b32.xlu0 %v341, 16
    %v446 = vpop.permute.xlu0 %445
    %vm447 = vcmask 130048
    %v448 = vsel %vm447, %v430, %v432
    %v449 = vsel %vm447, %v432, %v434
    %v450 = vsel %vm447, %v436, %v438
    %v451 = vsel %vm447, %v438, %v440
    %v452 = vsel %vm447, %v442, %v444
    %v453 = vsel %vm447, %v444, %v446
    %v461 = vsel %vm345, %v342, 0
    %463 = vmatprep.subr.mxu0 0.0
    %464 = vmatpush1.msra.mxu0 0.0
    %465 = vmatprep.subr.mxu0 0.0
    %466 = vmatpush1.msra.mxu0 0.0
    %467 = vmatprep.subr.mxu0 0.0
    %468 = vmatpush1.msra.mxu0 0.0
    %469 = vmatprep.subr.mxu0 0.0
    %470 = vmatpush1.msra.mxu0 0.0
    %471 = vmatprep.subr.mxu0 0.0
    %472 = vmatpush1.msra.mxu0 0.0
    %473 = vmatprep.subr.mxu0 0.0
    %474 = vmatpush1.msra.mxu0 0.0
    %475 = vmatprep.subr.mxu0 0.0
    %476 = vmatpush1.msra.mxu0 0.0
    %477 = vmatprep.subr.mxu0 0.0
    %478 = vmatpush1.msra.mxu0 0.0
    %479 = vmatprep.subr.mxu0 0.0
    %480 = vmatpush1.msra.mxu0 0.0
    %481 = vmatprep.subr.mxu0 0.0
    %482 = vmatpush1.msra.mxu0 0.0
    %483 = vmatprep.subr.mxu0 0.0
    %484 = vmatpush1.msra.mxu0 0.0
    %485 = vmatprep.subr.mxu0 0.0
    %486 = vmatpush1.msra.mxu0 0.0
    %487 = vmatprep.subr.mxu0 0.0
    %488 = vmatpush1.msra.mxu0 0.0
    %489 = vmatprep.subr.mxu0 %v453
    %490 = vmatpush1.msra.mxu0 %v452
    %491 = vmatprep.subr.mxu0 %v451
    %492 = vmatpush1.msra.mxu0 %v450
    %493 = vmatprep.subr.mxu0 %v449
    %494 = vmatpush1.msra.mxu0 %v448
    %495 = vmatprep.subr.mxu0 0.0
    %496 = vmatpush2.msra.mxu0 0.0
    %497 = vmatprep.subr.mxu0 0.0
    %498 = vmatpush2.msra.mxu0 0.0
    %499 = vmatprep.subr.mxu0 0.0
    %500 = vmatpush2.msra.mxu0 0.0
    %501 = vmatprep.subr.mxu0 0.0
    %502 = vmatpush2.msra.mxu0 0.0
    %503 = vmatprep.subr.mxu0 0.0
    %504 = vmatpush2.msra.mxu0 0.0
    %505 = vmatprep.subr.mxu0 0.0
    %506 = vmatpush2.msra.mxu0 0.0
    %507 = vmatprep.subr.mxu0 0.0
    %508 = vmatpush2.msra.mxu0 0.0
    %509 = vmatprep.subr.mxu0 0.0
    %510 = vmatpush2.msra.mxu0 0.0
    %511 = vmatprep.subr.mxu0 0.0
    %512 = vmatpush2.msra.mxu0 0.0
    %513 = vmatprep.subr.mxu0 0.0
    %514 = vmatpush2.msra.mxu0 0.0
    %515 = vmatprep.subr.mxu0 0.0
    %516 = vmatpush2.msra.mxu0 0.0
    %517 = vmatprep.subr.mxu0 0.0
    %518 = vmatpush2.msra.mxu0 0.0
    %519 = vmatprep.subr.mxu0 0.0
    %520 = vmatpush2.msra.mxu0 0.0
    %521 = vmatprep.subr.mxu0 0.0
    %522 = vmatpush2.msra.mxu0 0.0
    %523 = vmatprep.subr.mxu0 0.0
    %524 = vmatpush2.msra.mxu0 0.0
    %525 = vmatprep.subr.mxu0 0.0
    %526 = vmatpush2.msra.mxu0 0.0
    %527 = vmatprep.mubr.f32.mxu0 0.0
    %528 = vmatmul.mubr.f32.gmra.mxu0 %v461
    %v529 = vpop.f32.mrf.mxu0
    %v530 = vadd.f32 %v416, %v529
    %v531 = vpop.f32.mrf.mxu0
    %v532 = vadd.f32 %v418, %v531
    %533 = vdwg.mxu0
    %v534 = vld [vmem:[#allocation2 + $0x8] sm:$0xff]
    %v535 = vld [vmem:[#allocation2 + $0x10] sm:$0xff]
    %v536 = vld [vmem:[#allocation2 + $0x18] sm:$0xff]
    %v537 = vld [vmem:[#allocation2 + $0x28] sm:$0xff]
    %v538 = vld [vmem:[#allocation2 + $0x30] sm:$0xff]
    %v539 = vld [vmem:[#allocation2 + $0x38] sm:$0xff]
    %v540 = vld [vmem:[#allocation2 + $0x48] sm:$0xff]
    %v541 = vld [vmem:[#allocation2 + $0x50] sm:$0xff]
    %v542 = vld [vmem:[#allocation2 + $0x58] sm:$0xff]
    %s543 = scalar_lea.vmem %s3, 16
    %v544 = vld [vmem:[%s543] sm:$0xff]
    %554 = vrot.lane.b32.xlu0 %v534, 112
    %v555 = vpop.permute.xlu0 %554
    %556 = vrot.lane.b32.xlu0 %v535, 112
    %v557 = vpop.permute.xlu0 %556
    %558 = vrot.lane.b32.xlu0 %v536, 112
    %v559 = vpop.permute.xlu0 %558
    %560 = vrot.lane.b32.xlu0 %v537, 112
    %v561 = vpop.permute.xlu0 %560
    %562 = vrot.lane.b32.xlu0 %v538, 112
    %v563 = vpop.permute.xlu0 %562
    %564 = vrot.lane.b32.xlu0 %v539, 112
    %v565 = vpop.permute.xlu0 %564
    %566 = vrot.lane.b32.xlu0 %v540, 112
    %v567 = vpop.permute.xlu0 %566
    %568 = vrot.lane.b32.xlu0 %v541, 112
    %v569 = vpop.permute.xlu0 %568
    %570 = vrot.lane.b32.xlu0 %v542, 112
    %v571 = vpop.permute.xlu0 %570
    %vm572 = vcmask 916480
    %v573 = vsel %vm572, %v555, %v557
    %v574 = vsel %vm572, %v557, %v559
    %v575 = vsel %vm572, %v561, %v563
    %v576 = vsel %vm572, %v563, %v565
    %v577 = vsel %vm572, %v567, %v569
    %v578 = vsel %vm572, %v569, %v571
    %v586 = vsel %vm345, %v544, 0
    %588 = vmatprep.subr.mxu0 0.0
    %589 = vmatpush1.msra.mxu0 0.0
    %590 = vmatprep.subr.mxu0 0.0
    %591 = vmatpush1.msra.mxu0 0.0
    %592 = vmatprep.subr.mxu0 0.0
    %593 = vmatpush1.msra.mxu0 0.0
    %594 = vmatprep.subr.mxu0 0.0
    %595 = vmatpush1.msra.mxu0 0.0
    %596 = vmatprep.subr.mxu0 0.0
    %597 = vmatpush1.msra.mxu0 0.0
    %598 = vmatprep.subr.mxu0 0.0
    %599 = vmatpush1.msra.mxu0 0.0
    %600 = vmatprep.subr.mxu0 0.0
    %601 = vmatpush1.msra.mxu0 0.0
    %602 = vmatprep.subr.mxu0 0.0
    %603 = vmatpush1.msra.mxu0 0.0
    %604 = vmatprep.subr.mxu0 0.0
    %605 = vmatpush1.msra.mxu0 0.0
    %606 = vmatprep.subr.mxu0 0.0
    %607 = vmatpush1.msra.mxu0 0.0
    %608 = vmatprep.subr.mxu0 0.0
    %609 = vmatpush1.msra.mxu0 0.0
    %610 = vmatprep.subr.mxu0 0.0
    %611 = vmatpush1.msra.mxu0 0.0
    %612 = vmatprep.subr.mxu0 0.0
    %613 = vmatpush1.msra.mxu0 0.0
    %614 = vmatprep.subr.mxu0 %v578
    %615 = vmatpush1.msra.mxu0 %v577
    %616 = vmatprep.subr.mxu0 %v576
    %617 = vmatpush1.msra.mxu0 %v575
    %618 = vmatprep.subr.mxu0 %v574
    %619 = vmatpush1.msra.mxu0 %v573
    %620 = vmatprep.subr.mxu0 0.0
    %621 = vmatpush2.msra.mxu0 0.0
    %622 = vmatprep.subr.mxu0 0.0
    %623 = vmatpush2.msra.mxu0 0.0
    %624 = vmatprep.subr.mxu0 0.0
    %625 = vmatpush2.msra.mxu0 0.0
    %626 = vmatprep.subr.mxu0 0.0
    %627 = vmatpush2.msra.mxu0 0.0
    %628 = vmatprep.subr.mxu0 0.0
    %629 = vmatpush2.msra.mxu0 0.0
    %630 = vmatprep.subr.mxu0 0.0
    %631 = vmatpush2.msra.mxu0 0.0
    %632 = vmatprep.subr.mxu0 0.0
    %633 = vmatpush2.msra.mxu0 0.0
    %634 = vmatprep.subr.mxu0 0.0
    %635 = vmatpush2.msra.mxu0 0.0
    %636 = vmatprep.subr.mxu0 0.0
    %637 = vmatpush2.msra.mxu0 0.0
    %638 = vmatprep.subr.mxu0 0.0
    %639 = vmatpush2.msra.mxu0 0.0
    %640 = vmatprep.subr.mxu0 0.0
    %641 = vmatpush2.msra.mxu0 0.0
    %642 = vmatprep.subr.mxu0 0.0
    %643 = vmatpush2.msra.mxu0 0.0
    %644 = vmatprep.subr.mxu0 0.0
    %645 = vmatpush2.msra.mxu0 0.0
    %646 = vmatprep.subr.mxu0 0.0
    %647 = vmatpush2.msra.mxu0 0.0
    %648 = vmatprep.subr.mxu0 0.0
    %649 = vmatpush2.msra.mxu0 0.0
    %650 = vmatprep.subr.mxu0 0.0
    %651 = vmatpush2.msra.mxu0 0.0
    %652 = vmatprep.mubr.f32.mxu0 0.0
    %653 = vmatmul.mubr.f32.gmra.mxu0 %v586
    %v654 = vpop.f32.mrf.mxu0
    %v655 = vadd.f32 0.0, %v654
    %v656 = vpop.f32.mrf.mxu0
    %v657 = vadd.f32 0.0, %v656
    %658 = vdwg.mxu0
    %v659 = vadd.f32 %v530, %v655
    %v660 = vadd.f32 %v532, %v657
    %v661 = vld [vmem:[%s4] sm:$0xff]
    %663 = vset.pattern.permute.xlu0 0
    %664 = vperm.xlu0 %663, %v661
    %v665 = vpop.permute.xlu0 %664
    %v667 = vadd.f32 %v659, %v665
    %v668 = vadd.f32 %v660, %v665
    %v669 = vmax.f32 %v667, 0.0
    %v670 = vmax.f32 %v668, 0.0
    %671 = vst [vmem:[#allocation3] sm:$0xff] %v669
    %672 = vst [vmem:[#allocation3 + $0x8] sm:$0xff] %v670
    %v673 = vadd.f32 %v669, %v261
    %v674 = vadd.f32 %v670, %v262
    %675 = vst [vmem:[#allocation2 + $0x28] sm:$0xff] %v673
    %676 = vst [vmem:[#allocation2 + $0x30] sm:$0xff] %v674
    %v677 = vld [vmem:[#allocation2 + $0x20] sm:$0xff]
    %v678 = vld [vmem:[#allocation2 + $0x28] sm:$0xff]
    %v679 = vld [vmem:[#allocation2 + $0x30] sm:$0xff]
    %v680 = vmul.f32 %v677, %v275
    %v681 = vmul.f32 %v678, %v279
    %v682 = vmul.f32 %v679, %v277
    %686 = vrot.lane.b32.xlu0 %v680, 1
    %v687 = vpop.permute.xlu0 %686
    %688 = vrot.lane.b32.xlu0 %v681, 1
    %v689 = vpop.permute.xlu0 %688
    %690 = vrot.lane.b32.xlu0 %v682, 1
    %v691 = vpop.permute.xlu0 %690
    %v692 = vsel %vm295, %v687, %v689
    %v693 = vsel %vm295, %v689, %v691
    %696 = vst [vmem:[#allocation2 + $0x8] sm:$0xff] %v692
    %697 = vst [vmem:[#allocation2 + $0x10] sm:$0xff] %v693
    %v698 = vld [vmem:[#allocation2 + $0x28] sm:$0xff]
    %v699 = vld [vmem:[#allocation2 + $0x30] sm:$0xff]
    %v700 = vld [vmem:[#allocation2 + $0x38] sm:$0xff]
    %v701 = vmul.f32 %v698, %v308
    %v702 = vmul.f32 %v699, %v311
    %v703 = vmul.f32 %v700, %v310
    %707 = vrot.lane.b32.xlu0 %v701, 127
    %v708 = vpop.permute.xlu0 %707
    %709 = vrot.lane.b32.xlu0 %v702, 127
    %v710 = vpop.permute.xlu0 %709
    %711 = vrot.lane.b32.xlu0 %v703, 127
    %v712 = vpop.permute.xlu0 %711
    %v713 = vsel %vm278, %v708, %v710
    %v714 = vsel %vm278, %v710, %v712
    %717 = vst [vmem:[#allocation2 + $0x48] sm:$0xff] %v713
    %718 = vst [vmem:[#allocation2 + $0x50] sm:$0xff] %v714
    %v719 = vld [vmem:[#allocation2] sm:$0xff]
    %v720 = vld [vmem:[#allocation2 + $0x8] sm:$0xff]
    %v721 = vld [vmem:[#allocation2 + $0x10] sm:$0xff]
    %v722 = vld [vmem:[#allocation2 + $0x20] sm:$0xff]
    %v723 = vld [vmem:[#allocation2 + $0x28] sm:$0xff]
    %v724 = vld [vmem:[#allocation2 + $0x30] sm:$0xff]
    %v725 = vld [vmem:[#allocation2 + $0x40] sm:$0xff]
    %v726 = vld [vmem:[#allocation2 + $0x48] sm:$0xff]
    %v727 = vld [vmem:[#allocation2 + $0x50] sm:$0xff]
    %s728 = scalar_lea.vmem %s3, 24
    %v729 = vld [vmem:[%s728] sm:$0xff]
    %s730 = scalar_lea.vmem %s3, 32
    %v731 = vld [vmem:[%s730] sm:$0xff]
    %v733 = vsel %vm345, %v731, 0
    %735 = vmatprep.subr.mxu0 0.0
    %736 = vmatpush1.msra.mxu0 0.0
    %737 = vmatprep.subr.mxu0 0.0
    %738 = vmatpush1.msra.mxu0 0.0
    %739 = vmatprep.subr.mxu0 0.0
    %740 = vmatpush1.msra.mxu0 0.0
    %741 = vmatprep.subr.mxu0 0.0
    %742 = vmatpush1.msra.mxu0 0.0
    %743 = vmatprep.subr.mxu0 0.0
    %744 = vmatpush1.msra.mxu0 0.0
    %745 = vmatprep.subr.mxu0 0.0
    %746 = vmatpush1.msra.mxu0 0.0
    %747 = vmatprep.subr.mxu0 0.0
    %748 = vmatpush1.msra.mxu0 0.0
    %749 = vmatprep.subr.mxu0 0.0
    %750 = vmatpush1.msra.mxu0 0.0
    %751 = vmatprep.subr.mxu0 0.0
    %752 = vmatpush1.msra.mxu0 0.0
    %753 = vmatprep.subr.mxu0 0.0
    %754 = vmatpush1.msra.mxu0 0.0
    %755 = vmatprep.subr.mxu0 0.0
    %756 = vmatpush1.msra.mxu0 0.0
    %757 = vmatprep.subr.mxu0 0.0
    %758 = vmatpush1.msra.mxu0 0.0
    %759 = vmatprep.subr.mxu0 0.0
    %760 = vmatpush1.msra.mxu0 0.0
    %761 = vmatprep.subr.mxu0 %v727
    %762 = vmatpush1.msra.mxu0 %v726
    %763 = vmatprep.subr.mxu0 %v724
    %764 = vmatpush1.msra.mxu0 %v723
    %765 = vmatprep.subr.mxu0 %v721
    %766 = vmatpush1.msra.mxu0 %v720
    %767 = vmatprep.subr.mxu0 0.0
    %768 = vmatpush2.msra.mxu0 0.0
    %769 = vmatprep.subr.mxu0 0.0
    %770 = vmatpush2.msra.mxu0 0.0
    %771 = vmatprep.subr.mxu0 0.0
    %772 = vmatpush2.msra.mxu0 0.0
    %773 = vmatprep.subr.mxu0 0.0
    %774 = vmatpush2.msra.mxu0 0.0
    %775 = vmatprep.subr.mxu0 0.0
    %776 = vmatpush2.msra.mxu0 0.0
    %777 = vmatprep.subr.mxu0 0.0
    %778 = vmatpush2.msra.mxu0 0.0
    %779 = vmatprep.subr.mxu0 0.0
    %780 = vmatpush2.msra.mxu0 0.0
    %781 = vmatprep.subr.mxu0 0.0
    %782 = vmatpush2.msra.mxu0 0.0
    %783 = vmatprep.subr.mxu0 0.0
    %784 = vmatpush2.msra.mxu0 0.0
    %785 = vmatprep.subr.mxu0 0.0
    %786 = vmatpush2.msra.mxu0 0.0
    %787 = vmatprep.subr.mxu0 0.0
    %788 = vmatpush2.msra.mxu0 0.0
    %789 = vmatprep.subr.mxu0 0.0
    %790 = vmatpush2.msra.mxu0 0.0
    %791 = vmatprep.subr.mxu0 0.0
    %792 = vmatpush2.msra.mxu0 0.0
    %793 = vmatprep.subr.mxu0 0.0
    %794 = vmatpush2.msra.mxu0 0.0
    %795 = vmatprep.subr.mxu0 0.0
    %796 = vmatpush2.msra.mxu0 0.0
    %797 = vmatprep.subr.mxu0 0.0
    %798 = vmatpush2.msra.mxu0 0.0
    %799 = vmatprep.mubr.f32.mxu0 0.0
    %800 = vmatmul.mubr.f32.gmra.mxu0 %v733
    %v801 = vpop.f32.mrf.mxu0
    %v802 = vadd.f32 0.0, %v801
    %v803 = vpop.f32.mrf.mxu0
    %v804 = vadd.f32 0.0, %v803
    %805 = vdwg.mxu0
    %815 = vrot.lane.b32.xlu0 %v719, 16
    %v816 = vpop.permute.xlu0 %815
    %817 = vrot.lane.b32.xlu0 %v720, 16
    %v818 = vpop.permute.xlu0 %817
    %819 = vrot.lane.b32.xlu0 %v721, 16
    %v820 = vpop.permute.xlu0 %819
    %821 = vrot.lane.b32.xlu0 %v722, 16
    %v822 = vpop.permute.xlu0 %821
    %823 = vrot.lane.b32.xlu0 %v723, 16
    %v824 = vpop.permute.xlu0 %823
    %825 = vrot.lane.b32.xlu0 %v724, 16
    %v826 = vpop.permute.xlu0 %825
    %827 = vrot.lane.b32.xlu0 %v725, 16
    %v828 = vpop.permute.xlu0 %827
    %829 = vrot.lane.b32.xlu0 %v726, 16
    %v830 = vpop.permute.xlu0 %829
    %831 = vrot.lane.b32.xlu0 %v727, 16
    %v832 = vpop.permute.xlu0 %831
    %v833 = vsel %vm447, %v816, %v818
    %v834 = vsel %vm447, %v818, %v820
    %v835 = vsel %vm447, %v822, %v824
    %v836 = vsel %vm447, %v824, %v826
    %v837 = vsel %vm447, %v828, %v830
    %v838 = vsel %vm447, %v830, %v832
    %v846 = vsel %vm345, %v729, 0
    %848 = vmatprep.subr.mxu0 0.0
    %849 = vmatpush1.msra.mxu0 0.0
    %850 = vmatprep.subr.mxu0 0.0
    %851 = vmatpush1.msra.mxu0 0.0
    %852 = vmatprep.subr.mxu0 0.0
    %853 = vmatpush1.msra.mxu0 0.0
    %854 = vmatprep.subr.mxu0 0.0
    %855 = vmatpush1.msra.mxu0 0.0
    %856 = vmatprep.subr.mxu0 0.0
    %857 = vmatpush1.msra.mxu0 0.0
    %858 = vmatprep.subr.mxu0 0.0
    %859 = vmatpush1.msra.mxu0 0.0
    %860 = vmatprep.subr.mxu0 0.0
    %861 = vmatpush1.msra.mxu0 0.0
    %862 = vmatprep.subr.mxu0 0.0
    %863 = vmatpush1.msra.mxu0 0.0
    %864 = vmatprep.subr.mxu0 0.0
    %865 = vmatpush1.msra.mxu0 0.0
    %866 = vmatprep.subr.mxu0 0.0
    %867 = vmatpush1.msra.mxu0 0.0
    %868 = vmatprep.subr.mxu0 0.0
    %869 = vmatpush1.msra.mxu0 0.0
    %870 = vmatprep.subr.mxu0 0.0
    %871 = vmatpush1.msra.mxu0 0.0
    %872 = vmatprep.subr.mxu0 0.0
    %873 = vmatpush1.msra.mxu0 0.0
    %874 = vmatprep.subr.mxu0 %v838
    %875 = vmatpush1.msra.mxu0 %v837
    %876 = vmatprep.subr.mxu0 %v836
    %877 = vmatpush1.msra.mxu0 %v835
    %878 = vmatprep.subr.mxu0 %v834
    %879 = vmatpush1.msra.mxu0 %v833
    %880 = vmatprep.subr.mxu0 0.0
    %881 = vmatpush2.msra.mxu0 0.0
    %882 = vmatprep.subr.mxu0 0.0
    %883 = vmatpush2.msra.mxu0 0.0
    %884 = vmatprep.subr.mxu0 0.0
    %885 = vmatpush2.msra.mxu0 0.0
    %886 = vmatprep.subr.mxu0 0.0
    %887 = vmatpush2.msra.mxu0 0.0
    %888 = vmatprep.subr.mxu0 0.0
    %889 = vmatpush2.msra.mxu0 0.0
    %890 = vmatprep.subr.mxu0 0.0
    %891 = vmatpush2.msra.mxu0 0.0
    %892 = vmatprep.subr.mxu0 0.0
    %893 = vmatpush2.msra.mxu0 0.0
    %894 = vmatprep.subr.mxu0 0.0
    %895 = vmatpush2.msra.mxu0 0.0
    %896 = vmatprep.subr.mxu0 0.0
    %897 = vmatpush2.msra.mxu0 0.0
    %898 = vmatprep.subr.mxu0 0.0
    %899 = vmatpush2.msra.mxu0 0.0
    %900 = vmatprep.subr.mxu0 0.0
    %901 = vmatpush2.msra.mxu0 0.0
    %902 = vmatprep.subr.mxu0 0.0
    %903 = vmatpush2.msra.mxu0 0.0
    %904 = vmatprep.subr.mxu0 0.0
    %905 = vmatpush2.msra.mxu0 0.0
    %906 = vmatprep.subr.mxu0 0.0
    %907 = vmatpush2.msra.mxu0 0.0
    %908 = vmatprep.subr.mxu0 0.0
    %909 = vmatpush2.msra.mxu0 0.0
    %910 = vmatprep.subr.mxu0 0.0
    %911 = vmatpush2.msra.mxu0 0.0
    %912 = vmatprep.mubr.f32.mxu0 0.0
    %913 = vmatmul.mubr.f32.gmra.mxu0 %v846
    %v914 = vpop.f32.mrf.mxu0
    %v915 = vadd.f32 %v802, %v914
    %v916 = vpop.f32.mrf.mxu0
    %v917 = vadd.f32 %v804, %v916
    %918 = vdwg.mxu0
    %v919 = vld [vmem:[#allocation2 + $0x8] sm:$0xff]
    %v920 = vld [vmem:[#allocation2 + $0x10] sm:$0xff]
    %v921 = vld [vmem:[#allocation2 + $0x18] sm:$0xff]
    %v922 = vld [vmem:[#allocation2 + $0x28] sm:$0xff]
    %v923 = vld [vmem:[#allocation2 + $0x30] sm:$0xff]
    %v924 = vld [vmem:[#allocation2 + $0x38] sm:$0xff]
    %v925 = vld [vmem:[#allocation2 + $0x48] sm:$0xff]
    %v926 = vld [vmem:[#allocation2 + $0x50] sm:$0xff]
    %v927 = vld [vmem:[#allocation2 + $0x58] sm:$0xff]
    %s928 = scalar_lea.vmem %s3, 40
    %v929 = vld [vmem:[%s928] sm:$0xff]
    %939 = vrot.lane.b32.xlu0 %v919, 112
    %v940 = vpop.permute.xlu0 %939
    %941 = vrot.lane.b32.xlu0 %v920, 112
    %v942 = vpop.permute.xlu0 %941
    %943 = vrot.lane.b32.xlu0 %v921, 112
    %v944 = vpop.permute.xlu0 %943
    %945 = vrot.lane.b32.xlu0 %v922, 112
    %v946 = vpop.permute.xlu0 %945
    %947 = vrot.lane.b32.xlu0 %v923, 112
    %v948 = vpop.permute.xlu0 %947
    %949 = vrot.lane.b32.xlu0 %v924, 112
    %v950 = vpop.permute.xlu0 %949
    %951 = vrot.lane.b32.xlu0 %v925, 112
    %v952 = vpop.permute.xlu0 %951
    %953 = vrot.lane.b32.xlu0 %v926, 112
    %v954 = vpop.permute.xlu0 %953
    %955 = vrot.lane.b32.xlu0 %v927, 112
    %v956 = vpop.permute.xlu0 %955
    %v957 = vsel %vm572, %v940, %v942
    %v958 = vsel %vm572, %v942, %v944
    %v959 = vsel %vm572, %v946, %v948
    %v960 = vsel %vm572, %v948, %v950
    %v961 = vsel %vm572, %v952, %v954
    %v962 = vsel %vm572, %v954, %v956
    %v970 = vsel %vm345, %v929, 0
    %972 = vmatprep.subr.mxu0 0.0
    %973 = vmatpush1.msra.mxu0 0.0
    %974 = vmatprep.subr.mxu0 0.0
    %975 = vmatpush1.msra.mxu0 0.0
    %976 = vmatprep.subr.mxu0 0.0
    %977 = vmatpush1.msra.mxu0 0.0
    %978 = vmatprep.subr.mxu0 0.0
    %979 = vmatpush1.msra.mxu0 0.0
    %980 = vmatprep.subr.mxu0 0.0
    %981 = vmatpush1.msra.mxu0 0.0
    %982 = vmatprep.subr.mxu0 0.0
    %983 = vmatpush1.msra.mxu0 0.0
    %984 = vmatprep.subr.mxu0 0.0
    %985 = vmatpush1.msra.mxu0 0.0
    %986 = vmatprep.subr.mxu0 0.0
    %987 = vmatpush1.msra.mxu0 0.0
    %988 = vmatprep.subr.mxu0 0.0
    %989 = vmatpush1.msra.mxu0 0.0
    %990 = vmatprep.subr.mxu0 0.0
    %991 = vmatpush1.msra.mxu0 0.0
    %992 = vmatprep.subr.mxu0 0.0
    %993 = vmatpush1.msra.mxu0 0.0
    %994 = vmatprep.subr.mxu0 0.0
    %995 = vmatpush1.msra.mxu0 0.0
    %996 = vmatprep.subr.mxu0 0.0
    %997 = vmatpush1.msra.mxu0 0.0
    %998 = vmatprep.subr.mxu0 %v962
    %999 = vmatpush1.msra.mxu0 %v961
    %1000 = vmatprep.subr.mxu0 %v960
    %1001 = vmatpush1.msra.mxu0 %v959
    %1002 = vmatprep.subr.mxu0 %v958
    %1003 = vmatpush1.msra.mxu0 %v957
    %1004 = vmatprep.subr.mxu0 0.0
    %1005 = vmatpush2.msra.mxu0 0.0
    %1006 = vmatprep.subr.mxu0 0.0
    %1007 = vmatpush2.msra.mxu0 0.0
    %1008 = vmatprep.subr.mxu0 0.0
    %1009 = vmatpush2.msra.mxu0 0.0
    %1010 = vmatprep.subr.mxu0 0.0
    %1011 = vmatpush2.msra.mxu0 0.0
    %1012 = vmatprep.subr.mxu0 0.0
    %1013 = vmatpush2.msra.mxu0 0.0
    %1014 = vmatprep.subr.mxu0 0.0
    %1015 = vmatpush2.msra.mxu0 0.0
    %1016 = vmatprep.subr.mxu0 0.0
    %1017 = vmatpush2.msra.mxu0 0.0
    %1018 = vmatprep.subr.mxu0 0.0
    %1019 = vmatpush2.msra.mxu0 0.0
    %1020 = vmatprep.subr.mxu0 0.0
    %1021 = vmatpush2.msra.mxu0 0.0
    %1022 = vmatprep.subr.mxu0 0.0
    %1023 = vmatpush2.msra.mxu0 0.0
    %1024 = vmatprep.subr.mxu0 0.0
    %1025 = vmatpush2.msra.mxu0 0.0
    %1026 = vmatprep.subr.mxu0 0.0
    %1027 = vmatpush2.msra.mxu0 0.0
    %1028 = vmatprep.subr.mxu0 0.0
    %1029 = vmatpush2.msra.mxu0 0.0
    %1030 = vmatprep.subr.mxu0 0.0
    %1031 = vmatpush2.msra.mxu0 0.0
    %1032 = vmatprep.subr.mxu0 0.0
    %1033 = vmatpush2.msra.mxu0 0.0
    %1034 = vmatprep.subr.mxu0 0.0
    %1035 = vmatpush2.msra.mxu0 0.0
    %1036 = vmatprep.mubr.f32.mxu0 0.0
    %1037 = vmatmul.mubr.f32.gmra.mxu0 %v970
    %v1038 = vpop.f32.mrf.mxu0
    %v1039 = vadd.f32 0.0, %v1038
    %v1040 = vpop.f32.mrf.mxu0
    %v1041 = vadd.f32 0.0, %v1040
    %1042 = vdwg.mxu0
    %v1043 = vadd.f32 %v915, %v1039
    %v1044 = vadd.f32 %v917, %v1041
    %s1045 = scalar_lea.vmem %s4, 8
    %v1046 = vld [vmem:[%s1045] sm:$0xff]
    %1048 = vset.pattern.permute.xlu0 0
    %1049 = vperm.xlu0 %1048, %v1046
    %v1050 = vpop.permute.xlu0 %1049
    %v1052 = vadd.f32 %v1043, %v1050
    %v1053 = vadd.f32 %v1044, %v1050
    %v1054 = vmax.f32 %v1052, 0.0
    %v1055 = vmax.f32 %v1053, 0.0
    %1056 = vst [vmem:[#allocation3 + $0x10] sm:$0xff] %v1054
    %1057 = vst [vmem:[#allocation3 + $0x18] sm:$0xff] %v1055
    %v1058 = vadd.f32 %v1054, %v263
    %v1059 = vadd.f32 %v1055, %v264
    %1060 = vst [vmem:[#allocation2 + $0x28] sm:$0xff] %v1058
    %1061 = vst [vmem:[#allocation2 + $0x30] sm:$0xff] %v1059
    %v1062 = vld [vmem:[#allocation2 + $0x20] sm:$0xff]
    %v1063 = vld [vmem:[#allocation2 + $0x28] sm:$0xff]
    %v1064 = vld [vmem:[#allocation2 + $0x30] sm:$0xff]
    %v1065 = vmul.f32 %v1062, %v275
    %v1066 = vmul.f32 %v1063, %v279
    %v1067 = vmul.f32 %v1064, %v277
    %1071 = vrot.lane.b32.xlu0 %v1065, 1
    %v1072 = vpop.permute.xlu0 %1071
    %1073 = vrot.lane.b32.xlu0 %v1066, 1
    %v1074 = vpop.permute.xlu0 %1073
    %1075 = vrot.lane.b32.xlu0 %v1067, 1
    %v1076 = vpop.permute.xlu0 %1075
    %v1077 = vsel %vm295, %v1072, %v1074
    %v1078 = vsel %vm295, %v1074, %v1076
    %1081 = vst [vmem:[#allocation2 + $0x8] sm:$0xff] %v1077
    %1082 = vst [vmem:[#allocation2 + $0x10] sm:$0xff] %v1078
    %v1083 = vld [vmem:[#allocation2 + $0x28] sm:$0xff]
    %v1084 = vld [vmem:[#allocation2 + $0x30] sm:$0xff]
    %v1085 = vld [vmem:[#allocation2 + $0x38] sm:$0xff]
    %v1086 = vmul.f32 %v1083, %v308
    %v1087 = vmul.f32 %v1084, %v311
    %v1088 = vmul.f32 %v1085, %v310
    %1092 = vrot.lane.b32.xlu0 %v1086, 127
    %v1093 = vpop.permute.xlu0 %1092
    %1094 = vrot.lane.b32.xlu0 %v1087, 127
    %v1095 = vpop.permute.xlu0 %1094
    %1096 = vrot.lane.b32.xlu0 %v1088, 127
    %v1097 = vpop.permute.xlu0 %1096
    %v1098 = vsel %vm278, %v1093, %v1095
    %v1099 = vsel %vm278, %v1095, %v1097
    %1102 = vst [vmem:[#allocation2 + $0x48] sm:$0xff] %v1098
    %1103 = vst [vmem:[#allocation2 + $0x50] sm:$0xff] %v1099
    %v1104 = vld [vmem:[#allocation2] sm:$0xff]
    %v1105 = vld [vmem:[#allocation2 + $0x8] sm:$0xff]
    %v1106 = vld [vmem:[#allocation2 + $0x10] sm:$0xff]
    %v1107 = vld [vmem:[#allocation2 + $0x20] sm:$0xff]
    %v1108 = vld [vmem:[#allocation2 + $0x28] sm:$0xff]
    %v1109 = vld [vmem:[#allocation2 + $0x30] sm:$0xff]
    %v1110 = vld [vmem:[#allocation2 + $0x40] sm:$0xff]
    %v1111 = vld [vmem:[#allocation2 + $0x48] sm:$0xff]
    %v1112 = vld [vmem:[#allocation2 + $0x50] sm:$0xff]
    %s1113 = scalar_lea.vmem %s3, 48
    %v1114 = vld [vmem:[%s1113] sm:$0xff]
    %s1115 = scalar_lea.vmem %s3, 56
    %v1116 = vld [vmem:[%s1115] sm:$0xff]
    %v1118 = vsel %vm345, %v1116, 0
    %1120 = vmatprep.subr.mxu0 0.0
    %1121 = vmatpush1.msra.mxu0 0.0
    %1122 = vmatprep.subr.mxu0 0.0
    %1123 = vmatpush1.msra.mxu0 0.0
    %1124 = vmatprep.subr.mxu0 0.0
    %1125 = vmatpush1.msra.mxu0 0.0
    %1126 = vmatprep.subr.mxu0 0.0
    %1127 = vmatpush1.msra.mxu0 0.0
    %1128 = vmatprep.subr.mxu0 0.0
    %1129 = vmatpush1.msra.mxu0 0.0
    %1130 = vmatprep.subr.mxu0 0.0
    %1131 = vmatpush1.msra.mxu0 0.0
    %1132 = vmatprep.subr.mxu0 0.0
    %1133 = vmatpush1.msra.mxu0 0.0
    %1134 = vmatprep.subr.mxu0 0.0
    %1135 = vmatpush1.msra.mxu0 0.0
    %1136 = vmatprep.subr.mxu0 0.0
    %1137 = vmatpush1.msra.mxu0 0.0
    %1138 = vmatprep.subr.mxu0 0.0
    %1139 = vmatpush1.msra.mxu0 0.0
    %1140 = vmatprep.subr.mxu0 0.0
    %1141 = vmatpush1.msra.mxu0 0.0
    %1142 = vmatprep.subr.mxu0 0.0
    %1143 = vmatpush1.msra.mxu0 0.0
    %1144 = vmatprep.subr.mxu0 0.0
    %1145 = vmatpush1.msra.mxu0 0.0
    %1146 = vmatprep.subr.mxu0 %v1112
    %1147 = vmatpush1.msra.mxu0 %v1111
    %1148 = vmatprep.subr.mxu0 %v1109
    %1149 = vmatpush1.msra.mxu0 %v1108
    %1150 = vmatprep.subr.mxu0 %v1106
    %1151 = vmatpush1.msra.mxu0 %v1105
    %1152 = vmatprep.subr.mxu0 0.0
    %1153 = vmatpush2.msra.mxu0 0.0
    %1154 = vmatprep.subr.mxu0 0.0
    %1155 = vmatpush2.msra.mxu0 0.0
    %1156 = vmatprep.subr.mxu0 0.0
    %1157 = vmatpush2.msra.mxu0 0.0
    %1158 = vmatprep.subr.mxu0 0.0
    %1159 = vmatpush2.msra.mxu0 0.0
    %1160 = vmatprep.subr.mxu0 0.0
    %1161 = vmatpush2.msra.mxu0 0.0
    %1162 = vmatprep.subr.mxu0 0.0
    %1163 = vmatpush2.msra.mxu0 0.0
    %1164 = vmatprep.subr.mxu0 0.0
    %1165 = vmatpush2.msra.mxu0 0.0
    %1166 = vmatprep.subr.mxu0 0.0
    %1167 = vmatpush2.msra.mxu0 0.0
    %1168 = vmatprep.subr.mxu0 0.0
    %1169 = vmatpush2.msra.mxu0 0.0
    %1170 = vmatprep.subr.mxu0 0.0
    %1171 = vmatpush2.msra.mxu0 0.0
    %1172 = vmatprep.subr.mxu0 0.0
    %1173 = vmatpush2.msra.mxu0 0.0
    %1174 = vmatprep.subr.mxu0 0.0
    %1175 = vmatpush2.msra.mxu0 0.0
    %1176 = vmatprep.subr.mxu0 0.0
    %1177 = vmatpush2.msra.mxu0 0.0
    %1178 = vmatprep.subr.mxu0 0.0
    %1179 = vmatpush2.msra.mxu0 0.0
    %1180 = vmatprep.subr.mxu0 0.0
    %1181 = vmatpush2.msra.mxu0 0.0
    %1182 = vmatprep.subr.mxu0 0.0
    %1183 = vmatpush2.msra.mxu0 0.0
    %1184 = vmatprep.mubr.f32.mxu0 0.0
    %1185 = vmatmul.mubr.f32.gmra.mxu0 %v1118
    %v1186 = vpop.f32.mrf.mxu0
    %v1187 = vadd.f32 0.0, %v1186
    %v1188 = vpop.f32.mrf.mxu0
    %v1189 = vadd.f32 0.0, %v1188
    %1190 = vdwg.mxu0
    %1200 = vrot.lane.b32.xlu0 %v1104, 16
    %v1201 = vpop.permute.xlu0 %1200
    %1202 = vrot.lane.b32.xlu0 %v1105, 16
    %v1203 = vpop.permute.xlu0 %1202
    %1204 = vrot.lane.b32.xlu0 %v1106, 16
    %v1205 = vpop.permute.xlu0 %1204
    %1206 = vrot.lane.b32.xlu0 %v1107, 16
    %v1207 = vpop.permute.xlu0 %1206
    %1208 = vrot.lane.b32.xlu0 %v1108, 16
    %v1209 = vpop.permute.xlu0 %1208
    %1210 = vrot.lane.b32.xlu0 %v1109, 16
    %v1211 = vpop.permute.xlu0 %1210
    %1212 = vrot.lane.b32.xlu0 %v1110, 16
    %v1213 = vpop.permute.xlu0 %1212
    %1214 = vrot.lane.b32.xlu0 %v1111, 16
    %v1215 = vpop.permute.xlu0 %1214
    %1216 = vrot.lane.b32.xlu0 %v1112, 16
    %v1217 = vpop.permute.xlu0 %1216
    %v1218 = vsel %vm447, %v1201, %v1203
    %v1219 = vsel %vm447, %v1203, %v1205
    %v1220 = vsel %vm447, %v1207, %v1209
    %v1221 = vsel %vm447, %v1209, %v1211
    %v1222 = vsel %vm447, %v1213, %v1215
    %v1223 = vsel %vm447, %v1215, %v1217
    %v1231 = vsel %vm345, %v1114, 0
    %1233 = vmatprep.subr.mxu0 0.0
    %1234 = vmatpush1.msra.mxu0 0.0
    %1235 = vmatprep.subr.mxu0 0.0
    %1236 = vmatpush1.msra.mxu0 0.0
    %1237 = vmatprep.subr.mxu0 0.0
    %1238 = vmatpush1.msra.mxu0 0.0
    %1239 = vmatprep.subr.mxu0 0.0
    %1240 = vmatpush1.msra.mxu0 0.0
    %1241 = vmatprep.subr.mxu0 0.0
    %1242 = vmatpush1.msra.mxu0 0.0
    %1243 = vmatprep.subr.mxu0 0.0
    %1244 = vmatpush1.msra.mxu0 0.0
    %1245 = vmatprep.subr.mxu0 0.0
    %1246 = vmatpush1.msra.mxu0 0.0
    %1247 = vmatprep.subr.mxu0 0.0
    %1248 = vmatpush1.msra.mxu0 0.0
    %1249 = vmatprep.subr.mxu0 0.0
    %1250 = vmatpush1.msra.mxu0 0.0
    %1251 = vmatprep.subr.mxu0 0.0
    %1252 = vmatpush1.msra.mxu0 0.0
    %1253 = vmatprep.subr.mxu0 0.0
    %1254 = vmatpush1.msra.mxu0 0.0
    %1255 = vmatprep.subr.mxu0 0.0
    %1256 = vmatpush1.msra.mxu0 0.0
    %1257 = vmatprep.subr.mxu0 0.0
    %1258 = vmatpush1.msra.mxu0 0.0
    %1259 = vmatprep.subr.mxu0 %v1223
    %1260 = vmatpush1.msra.mxu0 %v1222
    %1261 = vmatprep.subr.mxu0 %v1221
    %1262 = vmatpush1.msra.mxu0 %v1220
    %1263 = vmatprep.subr.mxu0 %v1219
    %1264 = vmatpush1.msra.mxu0 %v1218
    %1265 = vmatprep.subr.mxu0 0.0
    %1266 = vmatpush2.msra.mxu0 0.0
    %1267 = vmatprep.subr.mxu0 0.0
    %1268 = vmatpush2.msra.mxu0 0.0
    %1269 = vmatprep.subr.mxu0 0.0
    %1270 = vmatpush2.msra.mxu0 0.0
    %1271 = vmatprep.subr.mxu0 0.0
    %1272 = vmatpush2.msra.mxu0 0.0
    %1273 = vmatprep.subr.mxu0 0.0
    %1274 = vmatpush2.msra.mxu0 0.0
    %1275 = vmatprep.subr.mxu0 0.0
    %1276 = vmatpush2.msra.mxu0 0.0
    %1277 = vmatprep.subr.mxu0 0.0
    %1278 = vmatpush2.msra.mxu0 0.0
    %1279 = vmatprep.subr.mxu0 0.0
    %1280 = vmatpush2.msra.mxu0 0.0
    %1281 = vmatprep.subr.mxu0 0.0
    %1282 = vmatpush2.msra.mxu0 0.0
    %1283 = vmatprep.subr.mxu0 0.0
    %1284 = vmatpush2.msra.mxu0 0.0
    %1285 = vmatprep.subr.mxu0 0.0
    %1286 = vmatpush2.msra.mxu0 0.0
    %1287 = vmatprep.subr.mxu0 0.0
    %1288 = vmatpush2.msra.mxu0 0.0
    %1289 = vmatprep.subr.mxu0 0.0
    %1290 = vmatpush2.msra.mxu0 0.0
    %1291 = vmatprep.subr.mxu0 0.0
    %1292 = vmatpush2.msra.mxu0 0.0
    %1293 = vmatprep.subr.mxu0 0.0
    %1294 = vmatpush2.msra.mxu0 0.0
    %1295 = vmatprep.subr.mxu0 0.0
    %1296 = vmatpush2.msra.mxu0 0.0
    %1297 = vmatprep.mubr.f32.mxu0 0.0
    %1298 = vmatmul.mubr.f32.gmra.mxu0 %v1231
    %v1299 = vpop.f32.mrf.mxu0
    %v1300 = vadd.f32 %v1187, %v1299
    %v1301 = vpop.f32.mrf.mxu0
    %v1302 = vadd.f32 %v1189, %v1301
    %1303 = vdwg.mxu0
    %v1304 = vld [vmem:[#allocation2 + $0x8] sm:$0xff]
    %v1305 = vld [vmem:[#allocation2 + $0x10] sm:$0xff]
    %v1306 = vld [vmem:[#allocation2 + $0x18] sm:$0xff]
    %v1307 = vld [vmem:[#allocation2 + $0x28] sm:$0xff]
    %v1308 = vld [vmem:[#allocation2 + $0x30] sm:$0xff]
    %v1309 = vld [vmem:[#allocation2 + $0x38] sm:$0xff]
    %v1310 = vld [vmem:[#allocation2 + $0x48] sm:$0xff]
    %v1311 = vld [vmem:[#allocation2 + $0x50] sm:$0xff]
    %v1312 = vld [vmem:[#allocation2 + $0x58] sm:$0xff]
    %s1313 = scalar_lea.vmem %s3, 64
    %v1314 = vld [vmem:[%s1313] sm:$0xff]
    %1324 = vrot.lane.b32.xlu0 %v1304, 112
    %v1325 = vpop.permute.xlu0 %1324
    %1326 = vrot.lane.b32.xlu0 %v1305, 112
    %v1327 = vpop.permute.xlu0 %1326
    %1328 = vrot.lane.b32.xlu0 %v1306, 112
    %v1329 = vpop.permute.xlu0 %1328
    %1330 = vrot.lane.b32.xlu0 %v1307, 112
    %v1331 = vpop.permute.xlu0 %1330
    %1332 = vrot.lane.b32.xlu0 %v1308, 112
    %v1333 = vpop.permute.xlu0 %1332
    %1334 = vrot.lane.b32.xlu0 %v1309, 112
    %v1335 = vpop.permute.xlu0 %1334
    %1336 = vrot.lane.b32.xlu0 %v1310, 112
    %v1337 = vpop.permute.xlu0 %1336
    %1338 = vrot.lane.b32.xlu0 %v1311, 112
    %v1339 = vpop.permute.xlu0 %1338
    %1340 = vrot.lane.b32.xlu0 %v1312, 112
    %v1341 = vpop.permute.xlu0 %1340
    %v1342 = vsel %vm572, %v1325, %v1327
    %v1343 = vsel %vm572, %v1327, %v1329
    %v1344 = vsel %vm572, %v1331, %v1333
    %v1345 = vsel %vm572, %v1333, %v1335
    %v1346 = vsel %vm572, %v1337, %v1339
    %v1347 = vsel %vm572, %v1339, %v1341
    %v1355 = vsel %vm345, %v1314, 0
    %1357 = vmatprep.subr.mxu0 0.0
    %1358 = vmatpush1.msra.mxu0 0.0
    %1359 = vmatprep.subr.mxu0 0.0
    %1360 = vmatpush1.msra.mxu0 0.0
    %1361 = vmatprep.subr.mxu0 0.0
    %1362 = vmatpush1.msra.mxu0 0.0
    %1363 = vmatprep.subr.mxu0 0.0
    %1364 = vmatpush1.msra.mxu0 0.0
    %1365 = vmatprep.subr.mxu0 0.0
    %1366 = vmatpush1.msra.mxu0 0.0
    %1367 = vmatprep.subr.mxu0 0.0
    %1368 = vmatpush1.msra.mxu0 0.0
    %1369 = vmatprep.subr.mxu0 0.0
    %1370 = vmatpush1.msra.mxu0 0.0
    %1371 = vmatprep.subr.mxu0 0.0
    %1372 = vmatpush1.msra.mxu0 0.0
    %1373 = vmatprep.subr.mxu0 0.0
    %1374 = vmatpush1.msra.mxu0 0.0
    %1375 = vmatprep.subr.mxu0 0.0
    %1376 = vmatpush1.msra.mxu0 0.0
    %1377 = vmatprep.subr.mxu0 0.0
    %1378 = vmatpush1.msra.mxu0 0.0
    %1379 = vmatprep.subr.mxu0 0.0
    %1380 = vmatpush1.msra.mxu0 0.0
    %1381 = vmatprep.subr.mxu0 0.0
    %1382 = vmatpush1.msra.mxu0 0.0
    %1383 = vmatprep.subr.mxu0 %v1347
    %1384 = vmatpush1.msra.mxu0 %v1346
    %1385 = vmatprep.subr.mxu0 %v1345
    %1386 = vmatpush1.msra.mxu0 %v1344
    %1387 = vmatprep.subr.mxu0 %v1343
    %1388 = vmatpush1.msra.mxu0 %v1342
    %1389 = vmatprep.subr.mxu0 0.0
    %1390 = vmatpush2.msra.mxu0 0.0
    %1391 = vmatprep.subr.mxu0 0.0
    %1392 = vmatpush2.msra.mxu0 0.0
    %1393 = vmatprep.subr.mxu0 0.0
    %1394 = vmatpush2.msra.mxu0 0.0
    %1395 = vmatprep.subr.mxu0 0.0
    %1396 = vmatpush2.msra.mxu0 0.0
    %1397 = vmatprep.subr.mxu0 0.0
    %1398 = vmatpush2.msra.mxu0 0.0
    %1399 = vmatprep.subr.mxu0 0.0
    %1400 = vmatpush2.msra.mxu0 0.0
    %1401 = vmatprep.subr.mxu0 0.0
    %1402 = vmatpush2.msra.mxu0 0.0
    %1403 = vmatprep.subr.mxu0 0.0
    %1404 = vmatpush2.msra.mxu0 0.0
    %1405 = vmatprep.subr.mxu0 0.0
    %1406 = vmatpush2.msra.mxu0 0.0
    %1407 = vmatprep.subr.mxu0 0.0
    %1408 = vmatpush2.msra.mxu0 0.0
    %1409 = vmatprep.subr.mxu0 0.0
    %1410 = vmatpush2.msra.mxu0 0.0
    %1411 = vmatprep.subr.mxu0 0.0
    %1412 = vmatpush2.msra.mxu0 0.0
    %1413 = vmatprep.subr.mxu0 0.0
    %1414 = vmatpush2.msra.mxu0 0.0
    %1415 = vmatprep.subr.mxu0 0.0
    %1416 = vmatpush2.msra.mxu0 0.0
    %1417 = vmatprep.subr.mxu0 0.0
    %1418 = vmatpush2.msra.mxu0 0.0
    %1419 = vmatprep.subr.mxu0 0.0
    %1420 = vmatpush2.msra.mxu0 0.0
    %1421 = vmatprep.mubr.f32.mxu0 0.0
    %1422 = vmatmul.mubr.f32.gmra.mxu0 %v1355
    %v1423 = vpop.f32.mrf.mxu0
    %v1424 = vadd.f32 0.0, %v1423
    %v1425 = vpop.f32.mrf.mxu0
    %v1426 = vadd.f32 0.0, %v1425
    %1427 = vdwg.mxu0
    %v1428 = vadd.f32 %v1300, %v1424
    %v1429 = vadd.f32 %v1302, %v1426
    %s1430 = scalar_lea.vmem %s4, 16
    %v1431 = vld [vmem:[%s1430] sm:$0xff]
    %1433 = vset.pattern.permute.xlu0 0
    %1434 = vperm.xlu0 %1433, %v1431
    %v1435 = vpop.permute.xlu0 %1434
    %v1437 = vadd.f32 %v1428, %v1435
    %v1438 = vadd.f32 %v1429, %v1435
    %v1439 = vmax.f32 %v1437, 0.0
    %v1440 = vmax.f32 %v1438, 0.0
    %1441 = vst [vmem:[#allocation3 + $0x20] sm:$0xff] %v1439
    %1442 = vst [vmem:[#allocation3 + $0x28] sm:$0xff] %v1440
    %1443 = vst [vmem:[#allocation3 + $0x30] sm:$0xff] %v265
    %1444 = vst [vmem:[#allocation3 + $0x38] sm:$0xff] %v266
    %v1445 = vadd.f32 %v1439, %v263
    %v1446 = vadd.f32 %v1440, %v264
    %1447 = vst [vmem:[#allocation2 + $0x28] sm:$0xff] %v1445
    %1448 = vst [vmem:[#allocation2 + $0x30] sm:$0xff] %v1446
    %v1449 = vld [vmem:[#allocation2 + $0x20] sm:$0xff]
    %v1450 = vld [vmem:[#allocation2 + $0x28] sm:$0xff]
    %v1451 = vld [vmem:[#allocation2 + $0x30] sm:$0xff]
    %v1452 = vmul.f32 %v1449, %v275
    %v1453 = vmul.f32 %v1450, %v279
    %v1454 = vmul.f32 %v1451, %v277
    %1458 = vrot.lane.b32.xlu0 %v1452, 1
    %v1459 = vpop.permute.xlu0 %1458
    %1460 = vrot.lane.b32.xlu0 %v1453, 1
    %v1461 = vpop.permute.xlu0 %1460
    %1462 = vrot.lane.b32.xlu0 %v1454, 1
    %v1463 = vpop.permute.xlu0 %1462
    %v1464 = vsel %vm295, %v1459, %v1461
    %v1465 = vsel %vm295, %v1461, %v1463
    %1468 = vst [vmem:[#allocation2 + $0x8] sm:$0xff] %v1464
    %1469 = vst [vmem:[#allocation2 + $0x10] sm:$0xff] %v1465
    %v1470 = vld [vmem:[#allocation2 + $0x28] sm:$0xff]
    %v1471 = vld [vmem:[#allocation2 + $0x30] sm:$0xff]
    %v1472 = vld [vmem:[#allocation2 + $0x38] sm:$0xff]
    %v1473 = vmul.f32 %v1470, %v308
    %v1474 = vmul.f32 %v1471, %v311
    %v1475 = vmul.f32 %v1472, %v310
    %1479 = vrot.lane.b32.xlu0 %v1473, 127
    %v1480 = vpop.permute.xlu0 %1479
    %1481 = vrot.lane.b32.xlu0 %v1474, 127
    %v1482 = vpop.permute.xlu0 %1481
    %1483 = vrot.lane.b32.xlu0 %v1475, 127
    %v1484 = vpop.permute.xlu0 %1483
    %v1485 = vsel %vm278, %v1480, %v1482
    %v1486 = vsel %vm278, %v1482, %v1484
    %1489 = vst [vmem:[#allocation2 + $0x48] sm:$0xff] %v1485
    %1490 = vst [vmem:[#allocation2 + $0x50] sm:$0xff] %v1486
    %v1491 = vld [vmem:[#allocation2] sm:$0xff]
    %v1492 = vld [vmem:[#allocation2 + $0x8] sm:$0xff]
    %v1493 = vld [vmem:[#allocation2 + $0x10] sm:$0xff]
    %v1494 = vld [vmem:[#allocation2 + $0x20] sm:$0xff]
    %v1495 = vld [vmem:[#allocation2 + $0x28] sm:$0xff]
    %v1496 = vld [vmem:[#allocation2 + $0x30] sm:$0xff]
    %v1497 = vld [vmem:[#allocation2 + $0x40] sm:$0xff]
    %v1498 = vld [vmem:[#allocation2 + $0x48] sm:$0xff]
    %v1499 = vld [vmem:[#allocation2 + $0x50] sm:$0xff]
    %s1500 = scalar_lea.vmem [#allocation7], 48
    %v1501 = vld [vmem:[%s1500] sm:$0xff]
    %s1502 = scalar_lea.vmem [#allocation7], 56
    %v1503 = vld [vmem:[%s1502] sm:$0xff]
    %v1505 = vsel %vm345, %v1503, 0
    %1507 = vmatprep.subr.mxu0 0.0
    %1508 = vmatpush1.msra.mxu0 0.0
    %1509 = vmatprep.subr.mxu0 0.0
    %1510 = vmatpush1.msra.mxu0 0.0
    %1511 = vmatprep.subr.mxu0 0.0
    %1512 = vmatpush1.msra.mxu0 0.0
    %1513 = vmatprep.subr.mxu0 0.0
    %1514 = vmatpush1.msra.mxu0 0.0
    %1515 = vmatprep.subr.mxu0 0.0
    %1516 = vmatpush1.msra.mxu0 0.0
    %1517 = vmatprep.subr.mxu0 0.0
    %1518 = vmatpush1.msra.mxu0 0.0
    %1519 = vmatprep.subr.mxu0 0.0
    %1520 = vmatpush1.msra.mxu0 0.0
    %1521 = vmatprep.subr.mxu0 0.0
    %1522 = vmatpush1.msra.mxu0 0.0
    %1523 = vmatprep.subr.mxu0 0.0
    %1524 = vmatpush1.msra.mxu0 0.0
    %1525 = vmatprep.subr.mxu0 0.0
    %1526 = vmatpush1.msra.mxu0 0.0
    %1527 = vmatprep.subr.mxu0 0.0
    %1528 = vmatpush1.msra.mxu0 0.0
    %1529 = vmatprep.subr.mxu0 0.0
    %1530 = vmatpush1.msra.mxu0 0.0
    %1531 = vmatprep.subr.mxu0 0.0
    %1532 = vmatpush1.msra.mxu0 0.0
    %1533 = vmatprep.subr.mxu0 %v1499
    %1534 = vmatpush1.msra.mxu0 %v1498
    %1535 = vmatprep.subr.mxu0 %v1496
    %1536 = vmatpush1.msra.mxu0 %v1495
    %1537 = vmatprep.subr.mxu0 %v1493
    %1538 = vmatpush1.msra.mxu0 %v1492
    %1539 = vmatprep.subr.mxu0 0.0
    %1540 = vmatpush2.msra.mxu0 0.0
    %1541 = vmatprep.subr.mxu0 0.0
    %1542 = vmatpush2.msra.mxu0 0.0
    %1543 = vmatprep.subr.mxu0 0.0
    %1544 = vmatpush2.msra.mxu0 0.0
    %1545 = vmatprep.subr.mxu0 0.0
    %1546 = vmatpush2.msra.mxu0 0.0
    %1547 = vmatprep.subr.mxu0 0.0
    %1548 = vmatpush2.msra.mxu0 0.0
    %1549 = vmatprep.subr.mxu0 0.0
    %1550 = vmatpush2.msra.mxu0 0.0
    %1551 = vmatprep.subr.mxu0 0.0
    %1552 = vmatpush2.msra.mxu0 0.0
    %1553 = vmatprep.subr.mxu0 0.0
    %1554 = vmatpush2.msra.mxu0 0.0
    %1555 = vmatprep.subr.mxu0 0.0
    %1556 = vmatpush2.msra.mxu0 0.0
    %1557 = vmatprep.subr.mxu0 0.0
    %1558 = vmatpush2.msra.mxu0 0.0
    %1559 = vmatprep.subr.mxu0 0.0
    %1560 = vmatpush2.msra.mxu0 0.0
    %1561 = vmatprep.subr.mxu0 0.0
    %1562 = vmatpush2.msra.mxu0 0.0
    %1563 = vmatprep.subr.mxu0 0.0
    %1564 = vmatpush2.msra.mxu0 0.0
    %1565 = vmatprep.subr.mxu0 0.0
    %1566 = vmatpush2.msra.mxu0 0.0
    %1567 = vmatprep.subr.mxu0 0.0
    %1568 = vmatpush2.msra.mxu0 0.0
    %1569 = vmatprep.subr.mxu0 0.0
    %1570 = vmatpush2.msra.mxu0 0.0
    %1571 = vmatprep.mubr.f32.mxu0 0.0
    %1572 = vmatmul.mubr.f32.gmra.mxu0 %v1505
    %v1573 = vpop.f32.mrf.mxu0
    %v1574 = vadd.f32 0.0, %v1573
    %v1575 = vpop.f32.mrf.mxu0
    %v1576 = vadd.f32 0.0, %v1575
    %1577 = vdwg.mxu0
    %1587 = vrot.lane.b32.xlu0 %v1491, 16
    %v1588 = vpop.permute.xlu0 %1587
    %1589 = vrot.lane.b32.xlu0 %v1492, 16
    %v1590 = vpop.permute.xlu0 %1589
    %1591 = vrot.lane.b32.xlu0 %v1493, 16
    %v1592 = vpop.permute.xlu0 %1591
    %1593 = vrot.lane.b32.xlu0 %v1494, 16
    %v1594 = vpop.permute.xlu0 %1593
    %1595 = vrot.lane.b32.xlu0 %v1495, 16
    %v1596 = vpop.permute.xlu0 %1595
    %1597 = vrot.lane.b32.xlu0 %v1496, 16
    %v1598 = vpop.permute.xlu0 %1597
    %1599 = vrot.lane.b32.xlu0 %v1497, 16
    %v1600 = vpop.permute.xlu0 %1599
    %1601 = vrot.lane.b32.xlu0 %v1498, 16
    %v1602 = vpop.permute.xlu0 %1601
    %1603 = vrot.lane.b32.xlu0 %v1499, 16
    %v1604 = vpop.permute.xlu0 %1603
    %v1605 = vsel %vm447, %v1588, %v1590
    %v1606 = vsel %vm447, %v1590, %v1592
    %v1607 = vsel %vm447, %v1594, %v1596
    %v1608 = vsel %vm447, %v1596, %v1598
    %v1609 = vsel %vm447, %v1600, %v1602
    %v1610 = vsel %vm447, %v1602, %v1604
    %v1618 = vsel %vm345, %v1501, 0
    %1620 = vmatprep.subr.mxu0 0.0
    %1621 = vmatpush1.msra.mxu0 0.0
    %1622 = vmatprep.subr.mxu0 0.0
    %1623 = vmatpush1.msra.mxu0 0.0
    %1624 = vmatprep.subr.mxu0 0.0
    %1625 = vmatpush1.msra.mxu0 0.0
    %1626 = vmatprep.subr.mxu0 0.0
    %1627 = vmatpush1.msra.mxu0 0.0
    %1628 = vmatprep.subr.mxu0 0.0
    %1629 = vmatpush1.msra.mxu0 0.0
    %1630 = vmatprep.subr.mxu0 0.0
    %1631 = vmatpush1.msra.mxu0 0.0
    %1632 = vmatprep.subr.mxu0 0.0
    %1633 = vmatpush1.msra.mxu0 0.0
    %1634 = vmatprep.subr.mxu0 0.0
    %1635 = vmatpush1.msra.mxu0 0.0
    %1636 = vmatprep.subr.mxu0 0.0
    %1637 = vmatpush1.msra.mxu0 0.0
    %1638 = vmatprep.subr.mxu0 0.0
    %1639 = vmatpush1.msra.mxu0 0.0
    %1640 = vmatprep.subr.mxu0 0.0
    %1641 = vmatpush1.msra.mxu0 0.0
    %1642 = vmatprep.subr.mxu0 0.0
    %1643 = vmatpush1.msra.mxu0 0.0
    %1644 = vmatprep.subr.mxu0 0.0
    %1645 = vmatpush1.msra.mxu0 0.0
    %1646 = vmatprep.subr.mxu0 %v1610
    %1647 = vmatpush1.msra.mxu0 %v1609
    %1648 = vmatprep.subr.mxu0 %v1608
    %1649 = vmatpush1.msra.mxu0 %v1607
    %1650 = vmatprep.subr.mxu0 %v1606
    %1651 = vmatpush1.msra.mxu0 %v1605
    %1652 = vmatprep.subr.mxu0 0.0
    %1653 = vmatpush2.msra.mxu0 0.0
    %1654 = vmatprep.subr.mxu0 0.0
    %1655 = vmatpush2.msra.mxu0 0.0
    %1656 = vmatprep.subr.mxu0 0.0
    %1657 = vmatpush2.msra.mxu0 0.0
    %1658 = vmatprep.subr.mxu0 0.0
    %1659 = vmatpush2.msra.mxu0 0.0
    %1660 = vmatprep.subr.mxu0 0.0
    %1661 = vmatpush2.msra.mxu0 0.0
    %1662 = vmatprep.subr.mxu0 0.0
    %1663 = vmatpush2.msra.mxu0 0.0
    %1664 = vmatprep.subr.mxu0 0.0
    %1665 = vmatpush2.msra.mxu0 0.0
    %1666 = vmatprep.subr.mxu0 0.0
    %1667 = vmatpush2.msra.mxu0 0.0
    %1668 = vmatprep.subr.mxu0 0.0
    %1669 = vmatpush2.msra.mxu0 0.0
    %1670 = vmatprep.subr.mxu0 0.0
    %1671 = vmatpush2.msra.mxu0 0.0
    %1672 = vmatprep.subr.mxu0 0.0
    %1673 = vmatpush2.msra.mxu0 0.0
    %1674 = vmatprep.subr.mxu0 0.0
    %1675 = vmatpush2.msra.mxu0 0.0
    %1676 = vmatprep.subr.mxu0 0.0
    %1677 = vmatpush2.msra.mxu0 0.0
    %1678 = vmatprep.subr.mxu0 0.0
    %1679 = vmatpush2.msra.mxu0 0.0
    %1680 = vmatprep.subr.mxu0 0.0
    %1681 = vmatpush2.msra.mxu0 0.0
    %1682 = vmatprep.subr.mxu0 0.0
    %1683 = vmatpush2.msra.mxu0 0.0
    %1684 = vmatprep.mubr.f32.mxu0 0.0
    %1685 = vmatmul.mubr.f32.gmra.mxu0 %v1618
    %v1686 = vpop.f32.mrf.mxu0
    %v1687 = vadd.f32 %v1574, %v1686
    %v1688 = vpop.f32.mrf.mxu0
    %v1689 = vadd.f32 %v1576, %v1688
    %1690 = vdwg.mxu0
    %v1691 = vld [vmem:[#allocation2 + $0x8] sm:$0xff]
    %v1692 = vld [vmem:[#allocation2 + $0x10] sm:$0xff]
    %v1693 = vld [vmem:[#allocation2 + $0x18] sm:$0xff]
    %v1694 = vld [vmem:[#allocation2 + $0x28] sm:$0xff]
    %v1695 = vld [vmem:[#allocation2 + $0x30] sm:$0xff]
    %v1696 = vld [vmem:[#allocation2 + $0x38] sm:$0xff]
    %v1697 = vld [vmem:[#allocation2 + $0x48] sm:$0xff]
    %v1698 = vld [vmem:[#allocation2 + $0x50] sm:$0xff]
    %v1699 = vld [vmem:[#allocation2 + $0x58] sm:$0xff]
    %s1700 = scalar_lea.vmem [#allocation7], 64
    %v1701 = vld [vmem:[%s1700] sm:$0xff]
    %1711 = vrot.lane.b32.xlu0 %v1691, 112
    %v1712 = vpop.permute.xlu0 %1711
    %1713 = vrot.lane.b32.xlu0 %v1692, 112
    %v1714 = vpop.permute.xlu0 %1713
    %1715 = vrot.lane.b32.xlu0 %v1693, 112
    %v1716 = vpop.permute.xlu0 %1715
    %1717 = vrot.lane.b32.xlu0 %v1694, 112
    %v1718 = vpop.permute.xlu0 %1717
    %1719 = vrot.lane.b32.xlu0 %v1695, 112
    %v1720 = vpop.permute.xlu0 %1719
    %1721 = vrot.lane.b32.xlu0 %v1696, 112
    %v1722 = vpop.permute.xlu0 %1721
    %1723 = vrot.lane.b32.xlu0 %v1697, 112
    %v1724 = vpop.permute.xlu0 %1723
    %1725 = vrot.lane.b32.xlu0 %v1698, 112
    %v1726 = vpop.permute.xlu0 %1725
    %1727 = vrot.lane.b32.xlu0 %v1699, 112
    %v1728 = vpop.permute.xlu0 %1727
    %v1729 = vsel %vm572, %v1712, %v1714
    %v1730 = vsel %vm572, %v1714, %v1716
    %v1731 = vsel %vm572, %v1718, %v1720
    %v1732 = vsel %vm572, %v1720, %v1722
    %v1733 = vsel %vm572, %v1724, %v1726
    %v1734 = vsel %vm572, %v1726, %v1728
    %v1742 = vsel %vm345, %v1701, 0
    %1744 = vmatprep.subr.mxu0 0.0
    %1745 = vmatpush1.msra.mxu0 0.0
    %1746 = vmatprep.subr.mxu0 0.0
    %1747 = vmatpush1.msra.mxu0 0.0
    %1748 = vmatprep.subr.mxu0 0.0
    %1749 = vmatpush1.msra.mxu0 0.0
    %1750 = vmatprep.subr.mxu0 0.0
    %1751 = vmatpush1.msra.mxu0 0.0
    %1752 = vmatprep.subr.mxu0 0.0
    %1753 = vmatpush1.msra.mxu0 0.0
    %1754 = vmatprep.subr.mxu0 0.0
    %1755 = vmatpush1.msra.mxu0 0.0
    %1756 = vmatprep.subr.mxu0 0.0
    %1757 = vmatpush1.msra.mxu0 0.0
    %1758 = vmatprep.subr.mxu0 0.0
    %1759 = vmatpush1.msra.mxu0 0.0
    %1760 = vmatprep.subr.mxu0 0.0
    %1761 = vmatpush1.msra.mxu0 0.0
    %1762 = vmatprep.subr.mxu0 0.0
    %1763 = vmatpush1.msra.mxu0 0.0
    %1764 = vmatprep.subr.mxu0 0.0
    %1765 = vmatpush1.msra.mxu0 0.0
    %1766 = vmatprep.subr.mxu0 0.0
    %1767 = vmatpush1.msra.mxu0 0.0
    %1768 = vmatprep.subr.mxu0 0.0
    %1769 = vmatpush1.msra.mxu0 0.0
    %1770 = vmatprep.subr.mxu0 %v1734
    %1771 = vmatpush1.msra.mxu0 %v1733
    %1772 = vmatprep.subr.mxu0 %v1732
    %1773 = vmatpush1.msra.mxu0 %v1731
    %1774 = vmatprep.subr.mxu0 %v1730
    %1775 = vmatpush1.msra.mxu0 %v1729
    %1776 = vmatprep.subr.mxu0 0.0
    %1777 = vmatpush2.msra.mxu0 0.0
    %1778 = vmatprep.subr.mxu0 0.0
    %1779 = vmatpush2.msra.mxu0 0.0
    %1780 = vmatprep.subr.mxu0 0.0
    %1781 = vmatpush2.msra.mxu0 0.0
    %1782 = vmatprep.subr.mxu0 0.0
    %1783 = vmatpush2.msra.mxu0 0.0
    %1784 = vmatprep.subr.mxu0 0.0
    %1785 = vmatpush2.msra.mxu0 0.0
    %1786 = vmatprep.subr.mxu0 0.0
    %1787 = vmatpush2.msra.mxu0 0.0
    %1788 = vmatprep.subr.mxu0 0.0
    %1789 = vmatpush2.msra.mxu0 0.0
    %1790 = vmatprep.subr.mxu0 0.0
    %1791 = vmatpush2.msra.mxu0 0.0
    %1792 = vmatprep.subr.mxu0 0.0
    %1793 = vmatpush2.msra.mxu0 0.0
    %1794 = vmatprep.subr.mxu0 0.0
    %1795 = vmatpush2.msra.mxu0 0.0
    %1796 = vmatprep.subr.mxu0 0.0
    %1797 = vmatpush2.msra.mxu0 0.0
    %1798 = vmatprep.subr.mxu0 0.0
    %1799 = vmatpush2.msra.mxu0 0.0
    %1800 = vmatprep.subr.mxu0 0.0
    %1801 = vmatpush2.msra.mxu0 0.0
    %1802 = vmatprep.subr.mxu0 0.0
    %1803 = vmatpush2.msra.mxu0 0.0
    %1804 = vmatprep.subr.mxu0 0.0
    %1805 = vmatpush2.msra.mxu0 0.0
    %1806 = vmatprep.subr.mxu0 0.0
    %1807 = vmatpush2.msra.mxu0 0.0
    %1808 = vmatprep.mubr.f32.mxu0 0.0
    %1809 = vmatmul.mubr.f32.gmra.mxu0 %v1742
    %v1810 = vpop.f32.mrf.mxu0
    %v1811 = vadd.f32 0.0, %v1810
    %v1812 = vpop.f32.mrf.mxu0
    %v1813 = vadd.f32 0.0, %v1812
    %1814 = vdwg.mxu0
    %v1815 = vadd.f32 %v1687, %v1811
    %v1816 = vadd.f32 %v1689, %v1813
    %s1817 = scalar_lea.vmem %s6, 16
    %v1818 = vld [vmem:[%s1817] sm:$0xff]
    %1820 = vset.pattern.permute.xlu0 0
    %1821 = vperm.xlu0 %1820, %v1818
    %v1822 = vpop.permute.xlu0 %1821
    %v1824 = vadd.f32 %v1815, %v1822
    %v1825 = vadd.f32 %v1816, %v1822
    %v1826 = vmax.f32 %v1824, 0.0
    %v1827 = vmax.f32 %v1825, 0.0
    %1828 = vst [vmem:[#allocation3 + $0x40] sm:$0xff] %v1826
    %1829 = vst [vmem:[#allocation3 + $0x48] sm:$0xff] %v1827
    %v1830 = vadd.f32 %v1826, %v261
    %v1831 = vadd.f32 %v1827, %v262
    %1832 = vst [vmem:[#allocation2 + $0x28] sm:$0xff] %v1830
    %1833 = vst [vmem:[#allocation2 + $0x30] sm:$0xff] %v1831
    %v1834 = vld [vmem:[#allocation2 + $0x20] sm:$0xff]
    %v1835 = vld [vmem:[#allocation2 + $0x28] sm:$0xff]
    %v1836 = vld [vmem:[#allocation2 + $0x30] sm:$0xff]
    %v1837 = vmul.f32 %v1834, %v275
    %v1838 = vmul.f32 %v1835, %v279
    %v1839 = vmul.f32 %v1836, %v277
    %1843 = vrot.lane.b32.xlu0 %v1837, 1
    %v1844 = vpop.permute.xlu0 %1843
    %1845 = vrot.lane.b32.xlu0 %v1838, 1
    %v1846 = vpop.permute.xlu0 %1845
    %1847 = vrot.lane.b32.xlu0 %v1839, 1
    %v1848 = vpop.permute.xlu0 %1847
    %v1849 = vsel %vm295, %v1844, %v1846
    %v1850 = vsel %vm295, %v1846, %v1848
    %1853 = vst [vmem:[#allocation2 + $0x8] sm:$0xff] %v1849
    %1854 = vst [vmem:[#allocation2 + $0x10] sm:$0xff] %v1850
    %v1855 = vld [vmem:[#allocation2 + $0x28] sm:$0xff]
    %v1856 = vld [vmem:[#allocation2 + $0x30] sm:$0xff]
    %v1857 = vld [vmem:[#allocation2 + $0x38] sm:$0xff]
    %v1858 = vmul.f32 %v1855, %v308
    %v1859 = vmul.f32 %v1856, %v311
    %v1860 = vmul.f32 %v1857, %v310
    %1864 = vrot.lane.b32.xlu0 %v1858, 127
    %v1865 = vpop.permute.xlu0 %1864
    %1866 = vrot.lane.b32.xlu0 %v1859, 127
    %v1867 = vpop.permute.xlu0 %1866
    %1868 = vrot.lane.b32.xlu0 %v1860, 127
    %v1869 = vpop.permute.xlu0 %1868
    %v1870 = vsel %vm278, %v1865, %v1867
    %v1871 = vsel %vm278, %v1867, %v1869
    %1874 = vst [vmem:[#allocation2 + $0x48] sm:$0xff] %v1870
    %1875 = vst [vmem:[#allocation2 + $0x50] sm:$0xff] %v1871
    %v1876 = vld [vmem:[#allocation2] sm:$0xff]
    %v1877 = vld [vmem:[#allocation2 + $0x8] sm:$0xff]
    %v1878 = vld [vmem:[#allocation2 + $0x10] sm:$0xff]
    %v1879 = vld [vmem:[#allocation2 + $0x20] sm:$0xff]
    %v1880 = vld [vmem:[#allocation2 + $0x28] sm:$0xff]
    %v1881 = vld [vmem:[#allocation2 + $0x30] sm:$0xff]
    %v1882 = vld [vmem:[#allocation2 + $0x40] sm:$0xff]
    %v1883 = vld [vmem:[#allocation2 + $0x48] sm:$0xff]
    %v1884 = vld [vmem:[#allocation2 + $0x50] sm:$0xff]
    %s1885 = scalar_lea.vmem [#allocation7], 24
    %v1886 = vld [vmem:[%s1885] sm:$0xff]
    %s1887 = scalar_lea.vmem [#allocation7], 32
    %v1888 = vld [vmem:[%s1887] sm:$0xff]
    %v1890 = vsel %vm345, %v1888, 0
    %1892 = vmatprep.subr.mxu0 0.0
    %1893 = vmatpush1.msra.mxu0 0.0
    %1894 = vmatprep.subr.mxu0 0.0
    %1895 = vmatpush1.msra.mxu0 0.0
    %1896 = vmatprep.subr.mxu0 0.0
    %1897 = vmatpush1.msra.mxu0 0.0
    %1898 = vmatprep.subr.mxu0 0.0
    %1899 = vmatpush1.msra.mxu0 0.0
    %1900 = vmatprep.subr.mxu0 0.0
    %1901 = vmatpush1.msra.mxu0 0.0
    %1902 = vmatprep.subr.mxu0 0.0
    %1903 = vmatpush1.msra.mxu0 0.0
    %1904 = vmatprep.subr.mxu0 0.0
    %1905 = vmatpush1.msra.mxu0 0.0
    %1906 = vmatprep.subr.mxu0 0.0
    %1907 = vmatpush1.msra.mxu0 0.0
    %1908 = vmatprep.subr.mxu0 0.0
    %1909 = vmatpush1.msra.mxu0 0.0
    %1910 = vmatprep.subr.mxu0 0.0
    %1911 = vmatpush1.msra.mxu0 0.0
    %1912 = vmatprep.subr.mxu0 0.0
    %1913 = vmatpush1.msra.mxu0 0.0
    %1914 = vmatprep.subr.mxu0 0.0
    %1915 = vmatpush1.msra.mxu0 0.0
    %1916 = vmatprep.subr.mxu0 0.0
    %1917 = vmatpush1.msra.mxu0 0.0
    %1918 = vmatprep.subr.mxu0 %v1884
    %1919 = vmatpush1.msra.mxu0 %v1883
    %1920 = vmatprep.subr.mxu0 %v1881
    %1921 = vmatpush1.msra.mxu0 %v1880
    %1922 = vmatprep.subr.mxu0 %v1878
    %1923 = vmatpush1.msra.mxu0 %v1877
    %1924 = vmatprep.subr.mxu0 0.0
    %1925 = vmatpush2.msra.mxu0 0.0
    %1926 = vmatprep.subr.mxu0 0.0
    %1927 = vmatpush2.msra.mxu0 0.0
    %1928 = vmatprep.subr.mxu0 0.0
    %1929 = vmatpush2.msra.mxu0 0.0
    %1930 = vmatprep.subr.mxu0 0.0
    %1931 = vmatpush2.msra.mxu0 0.0
    %1932 = vmatprep.subr.mxu0 0.0
    %1933 = vmatpush2.msra.mxu0 0.0
    %1934 = vmatprep.subr.mxu0 0.0
    %1935 = vmatpush2.msra.mxu0 0.0
    %1936 = vmatprep.subr.mxu0 0.0
    %1937 = vmatpush2.msra.mxu0 0.0
    %1938 = vmatprep.subr.mxu0 0.0
    %1939 = vmatpush2.msra.mxu0 0.0
    %1940 = vmatprep.subr.mxu0 0.0
    %1941 = vmatpush2.msra.mxu0 0.0
    %1942 = vmatprep.subr.mxu0 0.0
    %1943 = vmatpush2.msra.mxu0 0.0
    %1944 = vmatprep.subr.mxu0 0.0
    %1945 = vmatpush2.msra.mxu0 0.0
    %1946 = vmatprep.subr.mxu0 0.0
    %1947 = vmatpush2.msra.mxu0 0.0
    %1948 = vmatprep.subr.mxu0 0.0
    %1949 = vmatpush2.msra.mxu0 0.0
    %1950 = vmatprep.subr.mxu0 0.0
    %1951 = vmatpush2.msra.mxu0 0.0
    %1952 = vmatprep.subr.mxu0 0.0
    %1953 = vmatpush2.msra.mxu0 0.0
    %1954 = vmatprep.subr.mxu0 0.0
    %1955 = vmatpush2.msra.mxu0 0.0
    %1956 = vmatprep.mubr.f32.mxu0 0.0
    %1957 = vmatmul.mubr.f32.gmra.mxu0 %v1890
    %v1958 = vpop.f32.mrf.mxu0
    %v1959 = vadd.f32 0.0, %v1958
    %v1960 = vpop.f32.mrf.mxu0
    %v1961 = vadd.f32 0.0, %v1960
    %1962 = vdwg.mxu0
    %1972 = vrot.lane.b32.xlu0 %v1876, 16
    %v1973 = vpop.permute.xlu0 %1972
    %1974 = vrot.lane.b32.xlu0 %v1877, 16
    %v1975 = vpop.permute.xlu0 %1974
    %1976 = vrot.lane.b32.xlu0 %v1878, 16
    %v1977 = vpop.permute.xlu0 %1976
    %1978 = vrot.lane.b32.xlu0 %v1879, 16
    %v1979 = vpop.permute.xlu0 %1978
    %1980 = vrot.lane.b32.xlu0 %v1880, 16
    %v1981 = vpop.permute.xlu0 %1980
    %1982 = vrot.lane.b32.xlu0 %v1881, 16
    %v1983 = vpop.permute.xlu0 %1982
    %1984 = vrot.lane.b32.xlu0 %v1882, 16
    %v1985 = vpop.permute.xlu0 %1984
    %1986 = vrot.lane.b32.xlu0 %v1883, 16
    %v1987 = vpop.permute.xlu0 %1986
    %1988 = vrot.lane.b32.xlu0 %v1884, 16
    %v1989 = vpop.permute.xlu0 %1988
    %v1990 = vsel %vm447, %v1973, %v1975
    %v1991 = vsel %vm447, %v1975, %v1977
    %v1992 = vsel %vm447, %v1979, %v1981
    %v1993 = vsel %vm447, %v1981, %v1983
    %v1994 = vsel %vm447, %v1985, %v1987
    %v1995 = vsel %vm447, %v1987, %v1989
    %v2003 = vsel %vm345, %v1886, 0
    %2005 = vmatprep.subr.mxu0 0.0
    %2006 = vmatpush1.msra.mxu0 0.0
    %2007 = vmatprep.subr.mxu0 0.0
    %2008 = vmatpush1.msra.mxu0 0.0
    %2009 = vmatprep.subr.mxu0 0.0
    %2010 = vmatpush1.msra.mxu0 0.0
    %2011 = vmatprep.subr.mxu0 0.0
    %2012 = vmatpush1.msra.mxu0 0.0
    %2013 = vmatprep.subr.mxu0 0.0
    %2014 = vmatpush1.msra.mxu0 0.0
    %2015 = vmatprep.subr.mxu0 0.0
    %2016 = vmatpush1.msra.mxu0 0.0
    %2017 = vmatprep.subr.mxu0 0.0
    %2018 = vmatpush1.msra.mxu0 0.0
    %2019 = vmatprep.subr.mxu0 0.0
    %2020 = vmatpush1.msra.mxu0 0.0
    %2021 = vmatprep.subr.mxu0 0.0
    %2022 = vmatpush1.msra.mxu0 0.0
    %2023 = vmatprep.subr.mxu0 0.0
    %2024 = vmatpush1.msra.mxu0 0.0
    %2025 = vmatprep.subr.mxu0 0.0
    %2026 = vmatpush1.msra.mxu0 0.0
    %2027 = vmatprep.subr.mxu0 0.0
    %2028 = vmatpush1.msra.mxu0 0.0
    %2029 = vmatprep.subr.mxu0 0.0
    %2030 = vmatpush1.msra.mxu0 0.0
    %2031 = vmatprep.subr.mxu0 %v1995
    %2032 = vmatpush1.msra.mxu0 %v1994
    %2033 = vmatprep.subr.mxu0 %v1993
    %2034 = vmatpush1.msra.mxu0 %v1992
    %2035 = vmatprep.subr.mxu0 %v1991
    %2036 = vmatpush1.msra.mxu0 %v1990
    %2037 = vmatprep.subr.mxu0 0.0
    %2038 = vmatpush2.msra.mxu0 0.0
    %2039 = vmatprep.subr.mxu0 0.0
    %2040 = vmatpush2.msra.mxu0 0.0
    %2041 = vmatprep.subr.mxu0 0.0
    %2042 = vmatpush2.msra.mxu0 0.0
    %2043 = vmatprep.subr.mxu0 0.0
    %2044 = vmatpush2.msra.mxu0 0.0
    %2045 = vmatprep.subr.mxu0 0.0
    %2046 = vmatpush2.msra.mxu0 0.0
    %2047 = vmatprep.subr.mxu0 0.0
    %2048 = vmatpush2.msra.mxu0 0.0
    %2049 = vmatprep.subr.mxu0 0.0
    %2050 = vmatpush2.msra.mxu0 0.0
    %2051 = vmatprep.subr.mxu0 0.0
    %2052 = vmatpush2.msra.mxu0 0.0
    %2053 = vmatprep.subr.mxu0 0.0
    %2054 = vmatpush2.msra.mxu0 0.0
    %2055 = vmatprep.subr.mxu0 0.0
    %2056 = vmatpush2.msra.mxu0 0.0
    %2057 = vmatprep.subr.mxu0 0.0
    %2058 = vmatpush2.msra.mxu0 0.0
    %2059 = vmatprep.subr.mxu0 0.0
    %2060 = vmatpush2.msra.mxu0 0.0
    %2061 = vmatprep.subr.mxu0 0.0
    %2062 = vmatpush2.msra.mxu0 0.0
    %2063 = vmatprep.subr.mxu0 0.0
    %2064 = vmatpush2.msra.mxu0 0.0
    %2065 = vmatprep.subr.mxu0 0.0
    %2066 = vmatpush2.msra.mxu0 0.0
    %2067 = vmatprep.subr.mxu0 0.0
    %2068 = vmatpush2.msra.mxu0 0.0
    %2069 = vmatprep.mubr.f32.mxu0 0.0
    %2070 = vmatmul.mubr.f32.gmra.mxu0 %v2003
    %v2071 = vpop.f32.mrf.mxu0
    %v2072 = vadd.f32 %v1959, %v2071
    %v2073 = vpop.f32.mrf.mxu0
    %v2074 = vadd.f32 %v1961, %v2073
    %2075 = vdwg.mxu0
    %v2076 = vld [vmem:[#allocation2 + $0x8] sm:$0xff]
    %v2077 = vld [vmem:[#allocation2 + $0x10] sm:$0xff]
    %v2078 = vld [vmem:[#allocation2 + $0x18] sm:$0xff]
    %v2079 = vld [vmem:[#allocation2 + $0x28] sm:$0xff]
    %v2080 = vld [vmem:[#allocation2 + $0x30] sm:$0xff]
    %v2081 = vld [vmem:[#allocation2 + $0x38] sm:$0xff]
    %v2082 = vld [vmem:[#allocation2 + $0x48] sm:$0xff]
    %v2083 = vld [vmem:[#allocation2 + $0x50] sm:$0xff]
    %v2084 = vld [vmem:[#allocation2 + $0x58] sm:$0xff]
    %s2085 = scalar_lea.vmem [#allocation7], 40
    %v2086 = vld [vmem:[%s2085] sm:$0xff]
    %2096 = vrot.lane.b32.xlu0 %v2076, 112
    %v2097 = vpop.permute.xlu0 %2096
    %2098 = vrot.lane.b32.xlu0 %v2077, 112
    %v2099 = vpop.permute.xlu0 %2098
    %2100 = vrot.lane.b32.xlu0 %v2078, 112
    %v2101 = vpop.permute.xlu0 %2100
    %2102 = vrot.lane.b32.xlu0 %v2079, 112
    %v2103 = vpop.permute.xlu0 %2102
    %2104 = vrot.lane.b32.xlu0 %v2080, 112
    %v2105 = vpop.permute.xlu0 %2104
    %2106 = vrot.lane.b32.xlu0 %v2081, 112
    %v2107 = vpop.permute.xlu0 %2106
    %2108 = vrot.lane.b32.xlu0 %v2082, 112
    %v2109 = vpop.permute.xlu0 %2108
    %2110 = vrot.lane.b32.xlu0 %v2083, 112
    %v2111 = vpop.permute.xlu0 %2110
    %2112 = vrot.lane.b32.xlu0 %v2084, 112
    %v2113 = vpop.permute.xlu0 %2112
    %v2114 = vsel %vm572, %v2097, %v2099
    %v2115 = vsel %vm572, %v2099, %v2101
    %v2116 = vsel %vm572, %v2103, %v2105
    %v2117 = vsel %vm572, %v2105, %v2107
    %v2118 = vsel %vm572, %v2109, %v2111
    %v2119 = vsel %vm572, %v2111, %v2113
    %v2127 = vsel %vm345, %v2086, 0
    %2129 = vmatprep.subr.mxu0 0.0
    %2130 = vmatpush1.msra.mxu0 0.0
    %2131 = vmatprep.subr.mxu0 0.0
    %2132 = vmatpush1.msra.mxu0 0.0
    %2133 = vmatprep.subr.mxu0 0.0
    %2134 = vmatpush1.msra.mxu0 0.0
    %2135 = vmatprep.subr.mxu0 0.0
    %2136 = vmatpush1.msra.mxu0 0.0
    %2137 = vmatprep.subr.mxu0 0.0
    %2138 = vmatpush1.msra.mxu0 0.0
    %2139 = vmatprep.subr.mxu0 0.0
    %2140 = vmatpush1.msra.mxu0 0.0
    %2141 = vmatprep.subr.mxu0 0.0
    %2142 = vmatpush1.msra.mxu0 0.0
    %2143 = vmatprep.subr.mxu0 0.0
    %2144 = vmatpush1.msra.mxu0 0.0
    %2145 = vmatprep.subr.mxu0 0.0
    %2146 = vmatpush1.msra.mxu0 0.0
    %2147 = vmatprep.subr.mxu0 0.0
    %2148 = vmatpush1.msra.mxu0 0.0
    %2149 = vmatprep.subr.mxu0 0.0
    %2150 = vmatpush1.msra.mxu0 0.0
    %2151 = vmatprep.subr.mxu0 0.0
    %2152 = vmatpush1.msra.mxu0 0.0
    %2153 = vmatprep.subr.mxu0 0.0
    %2154 = vmatpush1.msra.mxu0 0.0
    %2155 = vmatprep.subr.mxu0 %v2119
    %2156 = vmatpush1.msra.mxu0 %v2118
    %2157 = vmatprep.subr.mxu0 %v2117
    %2158 = vmatpush1.msra.mxu0 %v2116
    %2159 = vmatprep.subr.mxu0 %v2115
    %2160 = vmatpush1.msra.mxu0 %v2114
    %2161 = vmatprep.subr.mxu0 0.0
    %2162 = vmatpush2.msra.mxu0 0.0
    %2163 = vmatprep.subr.mxu0 0.0
    %2164 = vmatpush2.msra.mxu0 0.0
    %2165 = vmatprep.subr.mxu0 0.0
    %2166 = vmatpush2.msra.mxu0 0.0
    %2167 = vmatprep.subr.mxu0 0.0
    %2168 = vmatpush2.msra.mxu0 0.0
    %2169 = vmatprep.subr.mxu0 0.0
    %2170 = vmatpush2.msra.mxu0 0.0
    %2171 = vmatprep.subr.mxu0 0.0
    %2172 = vmatpush2.msra.mxu0 0.0
    %2173 = vmatprep.subr.mxu0 0.0
    %2174 = vmatpush2.msra.mxu0 0.0
    %2175 = vmatprep.subr.mxu0 0.0
    %2176 = vmatpush2.msra.mxu0 0.0
    %2177 = vmatprep.subr.mxu0 0.0
    %2178 = vmatpush2.msra.mxu0 0.0
    %2179 = vmatprep.subr.mxu0 0.0
    %2180 = vmatpush2.msra.mxu0 0.0
    %2181 = vmatprep.subr.mxu0 0.0
    %2182 = vmatpush2.msra.mxu0 0.0
    %2183 = vmatprep.subr.mxu0 0.0
    %2184 = vmatpush2.msra.mxu0 0.0
    %2185 = vmatprep.subr.mxu0 0.0
    %2186 = vmatpush2.msra.mxu0 0.0
    %2187 = vmatprep.subr.mxu0 0.0
    %2188 = vmatpush2.msra.mxu0 0.0
    %2189 = vmatprep.subr.mxu0 0.0
    %2190 = vmatpush2.msra.mxu0 0.0
    %2191 = vmatprep.subr.mxu0 0.0
    %2192 = vmatpush2.msra.mxu0 0.0
    %2193 = vmatprep.mubr.f32.mxu0 0.0
    %2194 = vmatmul.mubr.f32.gmra.mxu0 %v2127
    %v2195 = vpop.f32.mrf.mxu0
    %v2196 = vadd.f32 0.0, %v2195
    %v2197 = vpop.f32.mrf.mxu0
    %v2198 = vadd.f32 0.0, %v2197
    %2199 = vdwg.mxu0
    %v2200 = vadd.f32 %v2072, %v2196
    %v2201 = vadd.f32 %v2074, %v2198
    %s2202 = scalar_lea.vmem %s6, 8
    %v2203 = vld [vmem:[%s2202] sm:$0xff]
    %2205 = vset.pattern.permute.xlu0 0
    %2206 = vperm.xlu0 %2205, %v2203
    %v2207 = vpop.permute.xlu0 %2206
    %v2209 = vadd.f32 %v2200, %v2207
    %v2210 = vadd.f32 %v2201, %v2207
    %v2211 = vmax.f32 %v2209, 0.0
    %v2212 = vmax.f32 %v2210, 0.0
    %2213 = vst [vmem:[#allocation3 + $0x50] sm:$0xff] %v2211
    %2214 = vst [vmem:[#allocation3 + $0x58] sm:$0xff] %v2212
    %2215 = vst [vmem:[#allocation2 + $0x28] sm:$0xff] %v259
    %2216 = vst [vmem:[#allocation2 + $0x30] sm:$0xff] %v260
    %v2217 = vld [vmem:[#allocation2 + $0x20] sm:$0xff]
    %v2218 = vld [vmem:[#allocation2 + $0x28] sm:$0xff]
    %v2219 = vld [vmem:[#allocation2 + $0x30] sm:$0xff]
    %v2220 = vmul.f32 %v2217, %v275
    %v2221 = vmul.f32 %v2218, %v279
    %v2222 = vmul.f32 %v2219, %v277
    %2226 = vrot.lane.b32.xlu0 %v2220, 1
    %v2227 = vpop.permute.xlu0 %2226
    %2228 = vrot.lane.b32.xlu0 %v2221, 1
    %v2229 = vpop.permute.xlu0 %2228
    %2230 = vrot.lane.b32.xlu0 %v2222, 1
    %v2231 = vpop.permute.xlu0 %2230
    %v2232 = vsel %vm295, %v2227, %v2229
    %v2233 = vsel %vm295, %v2229, %v2231
    %2236 = vst [vmem:[#allocation2 + $0x8] sm:$0xff] %v2232
    %2237 = vst [vmem:[#allocation2 + $0x10] sm:$0xff] %v2233
    %v2238 = vld [vmem:[#allocation2 + $0x28] sm:$0xff]
    %v2239 = vld [vmem:[#allocation2 + $0x30] sm:$0xff]
    %v2240 = vld [vmem:[#allocation2 + $0x38] sm:$0xff]
    %v2241 = vmul.f32 %v2238, %v308
    %v2242 = vmul.f32 %v2239, %v311
    %v2243 = vmul.f32 %v2240, %v310
    %2247 = vrot.lane.b32.xlu0 %v2241, 127
    %v2248 = vpop.permute.xlu0 %2247
    %2249 = vrot.lane.b32.xlu0 %v2242, 127
    %v2250 = vpop.permute.xlu0 %2249
    %2251 = vrot.lane.b32.xlu0 %v2243, 127
    %v2252 = vpop.permute.xlu0 %2251
    %v2253 = vsel %vm278, %v2248, %v2250
    %v2254 = vsel %vm278, %v2250, %v2252
    %2257 = vst [vmem:[#allocation2 + $0x48] sm:$0xff] %v2253
    %2258 = vst [vmem:[#allocation2 + $0x50] sm:$0xff] %v2254
    %v2259 = vld [vmem:[#allocation2] sm:$0xff]
    %v2260 = vld [vmem:[#allocation2 + $0x8] sm:$0xff]
    %v2261 = vld [vmem:[#allocation2 + $0x10] sm:$0xff]
    %v2262 = vld [vmem:[#allocation2 + $0x20] sm:$0xff]
    %v2263 = vld [vmem:[#allocation2 + $0x28] sm:$0xff]
    %v2264 = vld [vmem:[#allocation2 + $0x30] sm:$0xff]
    %v2265 = vld [vmem:[#allocation2 + $0x40] sm:$0xff]
    %v2266 = vld [vmem:[#allocation2 + $0x48] sm:$0xff]
    %v2267 = vld [vmem:[#allocation2 + $0x50] sm:$0xff]
    %v2268 = vld [vmem:[#allocation7] sm:$0xff]
    %s2269 = scalar_lea.vmem [#allocation7], 8
    %v2270 = vld [vmem:[%s2269] sm:$0xff]
    %v2272 = vsel %vm345, %v2270, 0
    %2274 = vmatprep.subr.mxu0 0.0
    %2275 = vmatpush1.msra.mxu0 0.0
    %2276 = vmatprep.subr.mxu0 0.0
    %2277 = vmatpush1.msra.mxu0 0.0
    %2278 = vmatprep.subr.mxu0 0.0
    %2279 = vmatpush1.msra.mxu0 0.0
    %2280 = vmatprep.subr.mxu0 0.0
    %2281 = vmatpush1.msra.mxu0 0.0
    %2282 = vmatprep.subr.mxu0 0.0
    %2283 = vmatpush1.msra.mxu0 0.0
    %2284 = vmatprep.subr.mxu0 0.0
    %2285 = vmatpush1.msra.mxu0 0.0
    %2286 = vmatprep.subr.mxu0 0.0
    %2287 = vmatpush1.msra.mxu0 0.0
    %2288 = vmatprep.subr.mxu0 0.0
    %2289 = vmatpush1.msra.mxu0 0.0
    %2290 = vmatprep.subr.mxu0 0.0
    %2291 = vmatpush1.msra.mxu0 0.0
    %2292 = vmatprep.subr.mxu0 0.0
    %2293 = vmatpush1.msra.mxu0 0.0
    %2294 = vmatprep.subr.mxu0 0.0
    %2295 = vmatpush1.msra.mxu0 0.0
    %2296 = vmatprep.subr.mxu0 0.0
    %2297 = vmatpush1.msra.mxu0 0.0
    %2298 = vmatprep.subr.mxu0 0.0
    %2299 = vmatpush1.msra.mxu0 0.0
    %2300 = vmatprep.subr.mxu0 %v2267
    %2301 = vmatpush1.msra.mxu0 %v2266
    %2302 = vmatprep.subr.mxu0 %v2264
    %2303 = vmatpush1.msra.mxu0 %v2263
    %2304 = vmatprep.subr.mxu0 %v2261
    %2305 = vmatpush1.msra.mxu0 %v2260
    %2306 = vmatprep.subr.mxu0 0.0
    %2307 = vmatpush2.msra.mxu0 0.0
    %2308 = vmatprep.subr.mxu0 0.0
    %2309 = vmatpush2.msra.mxu0 0.0
    %2310 = vmatprep.subr.mxu0 0.0
    %2311 = vmatpush2.msra.mxu0 0.0
    %2312 = vmatprep.subr.mxu0 0.0
    %2313 = vmatpush2.msra.mxu0 0.0
    %2314 = vmatprep.subr.mxu0 0.0
    %2315 = vmatpush2.msra.mxu0 0.0
    %2316 = vmatprep.subr.mxu0 0.0
    %2317 = vmatpush2.msra.mxu0 0.0
    %2318 = vmatprep.subr.mxu0 0.0
    %2319 = vmatpush2.msra.mxu0 0.0
    %2320 = vmatprep.subr.mxu0 0.0
    %2321 = vmatpush2.msra.mxu0 0.0
    %2322 = vmatprep.subr.mxu0 0.0
    %2323 = vmatpush2.msra.mxu0 0.0
    %2324 = vmatprep.subr.mxu0 0.0
    %2325 = vmatpush2.msra.mxu0 0.0
    %2326 = vmatprep.subr.mxu0 0.0
    %2327 = vmatpush2.msra.mxu0 0.0
    %2328 = vmatprep.subr.mxu0 0.0
    %2329 = vmatpush2.msra.mxu0 0.0
    %2330 = vmatprep.subr.mxu0 0.0
    %2331 = vmatpush2.msra.mxu0 0.0
    %2332 = vmatprep.subr.mxu0 0.0
    %2333 = vmatpush2.msra.mxu0 0.0
    %2334 = vmatprep.subr.mxu0 0.0
    %2335 = vmatpush2.msra.mxu0 0.0
    %2336 = vmatprep.subr.mxu0 0.0
    %2337 = vmatpush2.msra.mxu0 0.0
    %2338 = vmatprep.mubr.f32.mxu0 0.0
    %2339 = vmatmul.mubr.f32.gmra.mxu0 %v2272
    %v2340 = vpop.f32.mrf.mxu0
    %v2341 = vadd.f32 0.0, %v2340
    %v2342 = vpop.f32.mrf.mxu0
    %v2343 = vadd.f32 0.0, %v2342
    %2344 = vdwg.mxu0
    %2354 = vrot.lane.b32.xlu0 %v2259, 16
    %v2355 = vpop.permute.xlu0 %2354
    %2356 = vrot.lane.b32.xlu0 %v2260, 16
    %v2357 = vpop.permute.xlu0 %2356
    %2358 = vrot.lane.b32.xlu0 %v2261, 16
    %v2359 = vpop.permute.xlu0 %2358
    %2360 = vrot.lane.b32.xlu0 %v2262, 16
    %v2361 = vpop.permute.xlu0 %2360
    %2362 = vrot.lane.b32.xlu0 %v2263, 16
    %v2363 = vpop.permute.xlu0 %2362
    %2364 = vrot.lane.b32.xlu0 %v2264, 16
    %v2365 = vpop.permute.xlu0 %2364
    %2366 = vrot.lane.b32.xlu0 %v2265, 16
    %v2367 = vpop.permute.xlu0 %2366
    %2368 = vrot.lane.b32.xlu0 %v2266, 16
    %v2369 = vpop.permute.xlu0 %2368
    %2370 = vrot.lane.b32.xlu0 %v2267, 16
    %v2371 = vpop.permute.xlu0 %2370
    %v2372 = vsel %vm447, %v2355, %v2357
    %v2373 = vsel %vm447, %v2357, %v2359
    %v2374 = vsel %vm447, %v2361, %v2363
    %v2375 = vsel %vm447, %v2363, %v2365
    %v2376 = vsel %vm447, %v2367, %v2369
    %v2377 = vsel %vm447, %v2369, %v2371
    %v2385 = vsel %vm345, %v2268, 0
    %2387 = vmatprep.subr.mxu0 0.0
    %2388 = vmatpush1.msra.mxu0 0.0
    %2389 = vmatprep.subr.mxu0 0.0
    %2390 = vmatpush1.msra.mxu0 0.0
    %2391 = vmatprep.subr.mxu0 0.0
    %2392 = vmatpush1.msra.mxu0 0.0
    %2393 = vmatprep.subr.mxu0 0.0
    %2394 = vmatpush1.msra.mxu0 0.0
    %2395 = vmatprep.subr.mxu0 0.0
    %2396 = vmatpush1.msra.mxu0 0.0
    %2397 = vmatprep.subr.mxu0 0.0
    %2398 = vmatpush1.msra.mxu0 0.0
    %2399 = vmatprep.subr.mxu0 0.0
    %2400 = vmatpush1.msra.mxu0 0.0
    %2401 = vmatprep.subr.mxu0 0.0
    %2402 = vmatpush1.msra.mxu0 0.0
    %2403 = vmatprep.subr.mxu0 0.0
    %2404 = vmatpush1.msra.mxu0 0.0
    %2405 = vmatprep.subr.mxu0 0.0
    %2406 = vmatpush1.msra.mxu0 0.0
    %2407 = vmatprep.subr.mxu0 0.0
    %2408 = vmatpush1.msra.mxu0 0.0
    %2409 = vmatprep.subr.mxu0 0.0
    %2410 = vmatpush1.msra.mxu0 0.0
    %2411 = vmatprep.subr.mxu0 0.0
    %2412 = vmatpush1.msra.mxu0 0.0
    %2413 = vmatprep.subr.mxu0 %v2377
    %2414 = vmatpush1.msra.mxu0 %v2376
    %2415 = vmatprep.subr.mxu0 %v2375
    %2416 = vmatpush1.msra.mxu0 %v2374
    %2417 = vmatprep.subr.mxu0 %v2373
    %2418 = vmatpush1.msra.mxu0 %v2372
    %2419 = vmatprep.subr.mxu0 0.0
    %2420 = vmatpush2.msra.mxu0 0.0
    %2421 = vmatprep.subr.mxu0 0.0
    %2422 = vmatpush2.msra.mxu0 0.0
    %2423 = vmatprep.subr.mxu0 0.0
    %2424 = vmatpush2.msra.mxu0 0.0
    %2425 = vmatprep.subr.mxu0 0.0
    %2426 = vmatpush2.msra.mxu0 0.0
    %2427 = vmatprep.subr.mxu0 0.0
    %2428 = vmatpush2.msra.mxu0 0.0
    %2429 = vmatprep.subr.mxu0 0.0
    %2430 = vmatpush2.msra.mxu0 0.0
    %2431 = vmatprep.subr.mxu0 0.0
    %2432 = vmatpush2.msra.mxu0 0.0
    %2433 = vmatprep.subr.mxu0 0.0
    %2434 = vmatpush2.msra.mxu0 0.0
    %2435 = vmatprep.subr.mxu0 0.0
    %2436 = vmatpush2.msra.mxu0 0.0
    %2437 = vmatprep.subr.mxu0 0.0
    %2438 = vmatpush2.msra.mxu0 0.0
    %2439 = vmatprep.subr.mxu0 0.0
    %2440 = vmatpush2.msra.mxu0 0.0
    %2441 = vmatprep.subr.mxu0 0.0
    %2442 = vmatpush2.msra.mxu0 0.0
    %2443 = vmatprep.subr.mxu0 0.0
    %2444 = vmatpush2.msra.mxu0 0.0
    %2445 = vmatprep.subr.mxu0 0.0
    %2446 = vmatpush2.msra.mxu0 0.0
    %2447 = vmatprep.subr.mxu0 0.0
    %2448 = vmatpush2.msra.mxu0 0.0
    %2449 = vmatprep.subr.mxu0 0.0
    %2450 = vmatpush2.msra.mxu0 0.0
    %2451 = vmatprep.mubr.f32.mxu0 0.0
    %2452 = vmatmul.mubr.f32.gmra.mxu0 %v2385
    %v2453 = vpop.f32.mrf.mxu0
    %v2454 = vadd.f32 %v2341, %v2453
    %v2455 = vpop.f32.mrf.mxu0
    %v2456 = vadd.f32 %v2343, %v2455
    %2457 = vdwg.mxu0
    %v2458 = vld [vmem:[#allocation2 + $0x8] sm:$0xff]
    %v2459 = vld [vmem:[#allocation2 + $0x10] sm:$0xff]
    %v2460 = vld [vmem:[#allocation2 + $0x18] sm:$0xff]
    %v2461 = vld [vmem:[#allocation2 + $0x28] sm:$0xff]
    %v2462 = vld [vmem:[#allocation2 + $0x30] sm:$0xff]
    %v2463 = vld [vmem:[#allocation2 + $0x38] sm:$0xff]
    %v2464 = vld [vmem:[#allocation2 + $0x48] sm:$0xff]
    %v2465 = vld [vmem:[#allocation2 + $0x50] sm:$0xff]
    %v2466 = vld [vmem:[#allocation2 + $0x58] sm:$0xff]
    %s2467 = scalar_lea.vmem [#allocation7], 16
    %v2468 = vld [vmem:[%s2467] sm:$0xff]
    %2478 = vrot.lane.b32.xlu0 %v2458, 112
    %v2479 = vpop.permute.xlu0 %2478
    %2480 = vrot.lane.b32.xlu0 %v2459, 112
    %v2481 = vpop.permute.xlu0 %2480
    %2482 = vrot.lane.b32.xlu0 %v2460, 112
    %v2483 = vpop.permute.xlu0 %2482
    %2484 = vrot.lane.b32.xlu0 %v2461, 112
    %v2485 = vpop.permute.xlu0 %2484
    %2486 = vrot.lane.b32.xlu0 %v2462, 112
    %v2487 = vpop.permute.xlu0 %2486
    %2488 = vrot.lane.b32.xlu0 %v2463, 112
    %v2489 = vpop.permute.xlu0 %2488
    %2490 = vrot.lane.b32.xlu0 %v2464, 112
    %v2491 = vpop.permute.xlu0 %2490
    %2492 = vrot.lane.b32.xlu0 %v2465, 112
    %v2493 = vpop.permute.xlu0 %2492
    %2494 = vrot.lane.b32.xlu0 %v2466, 112
    %v2495 = vpop.permute.xlu0 %2494
    %v2496 = vsel %vm572, %v2479, %v2481
    %v2497 = vsel %vm572, %v2481, %v2483
    %v2498 = vsel %vm572, %v2485, %v2487
    %v2499 = vsel %vm572, %v2487, %v2489
    %v2500 = vsel %vm572, %v2491, %v2493
    %v2501 = vsel %vm572, %v2493, %v2495
    %v2509 = vsel %vm345, %v2468, 0
    %2511 = vmatprep.subr.mxu0 0.0
    %2512 = vmatpush1.msra.mxu0 0.0
    %2513 = vmatprep.subr.mxu0 0.0
    %2514 = vmatpush1.msra.mxu0 0.0
    %2515 = vmatprep.subr.mxu0 0.0
    %2516 = vmatpush1.msra.mxu0 0.0
    %2517 = vmatprep.subr.mxu0 0.0
    %2518 = vmatpush1.msra.mxu0 0.0
    %2519 = vmatprep.subr.mxu0 0.0
    %2520 = vmatpush1.msra.mxu0 0.0
    %2521 = vmatprep.subr.mxu0 0.0
    %2522 = vmatpush1.msra.mxu0 0.0
    %2523 = vmatprep.subr.mxu0 0.0
    %2524 = vmatpush1.msra.mxu0 0.0
    %2525 = vmatprep.subr.mxu0 0.0
    %2526 = vmatpush1.msra.mxu0 0.0
    %2527 = vmatprep.subr.mxu0 0.0
    %2528 = vmatpush1.msra.mxu0 0.0
    %2529 = vmatprep.subr.mxu0 0.0
    %2530 = vmatpush1.msra.mxu0 0.0
    %2531 = vmatprep.subr.mxu0 0.0
    %2532 = vmatpush1.msra.mxu0 0.0
    %2533 = vmatprep.subr.mxu0 0.0
    %2534 = vmatpush1.msra.mxu0 0.0
    %2535 = vmatprep.subr.mxu0 0.0
    %2536 = vmatpush1.msra.mxu0 0.0
    %2537 = vmatprep.subr.mxu0 %v2501
    %2538 = vmatpush1.msra.mxu0 %v2500
    %2539 = vmatprep.subr.mxu0 %v2499
    %2540 = vmatpush1.msra.mxu0 %v2498
    %2541 = vmatprep.subr.mxu0 %v2497
    %2542 = vmatpush1.msra.mxu0 %v2496
    %2543 = vmatprep.subr.mxu0 0.0
    %2544 = vmatpush2.msra.mxu0 0.0
    %2545 = vmatprep.subr.mxu0 0.0
    %2546 = vmatpush2.msra.mxu0 0.0
    %2547 = vmatprep.subr.mxu0 0.0
    %2548 = vmatpush2.msra.mxu0 0.0
    %2549 = vmatprep.subr.mxu0 0.0
    %2550 = vmatpush2.msra.mxu0 0.0
    %2551 = vmatprep.subr.mxu0 0.0
    %2552 = vmatpush2.msra.mxu0 0.0
    %2553 = vmatprep.subr.mxu0 0.0
    %2554 = vmatpush2.msra.mxu0 0.0
    %2555 = vmatprep.subr.mxu0 0.0
    %2556 = vmatpush2.msra.mxu0 0.0
    %2557 = vmatprep.subr.mxu0 0.0
    %2558 = vmatpush2.msra.mxu0 0.0
    %2559 = vmatprep.subr.mxu0 0.0
    %2560 = vmatpush2.msra.mxu0 0.0
    %2561 = vmatprep.subr.mxu0 0.0
    %2562 = vmatpush2.msra.mxu0 0.0
    %2563 = vmatprep.subr.mxu0 0.0
    %2564 = vmatpush2.msra.mxu0 0.0
    %2565 = vmatprep.subr.mxu0 0.0
    %2566 = vmatpush2.msra.mxu0 0.0
    %2567 = vmatprep.subr.mxu0 0.0
    %2568 = vmatpush2.msra.mxu0 0.0
    %2569 = vmatprep.subr.mxu0 0.0
    %2570 = vmatpush2.msra.mxu0 0.0
    %2571 = vmatprep.subr.mxu0 0.0
    %2572 = vmatpush2.msra.mxu0 0.0
    %2573 = vmatprep.subr.mxu0 0.0
    %2574 = vmatpush2.msra.mxu0 0.0
    %2575 = vmatprep.mubr.f32.mxu0 0.0
    %2576 = vmatmul.mubr.f32.gmra.mxu0 %v2509
    %v2577 = vpop.f32.mrf.mxu0
    %v2578 = vadd.f32 0.0, %v2577
    %v2579 = vpop.f32.mrf.mxu0
    %v2580 = vadd.f32 0.0, %v2579
    %2581 = vdwg.mxu0
    %v2582 = vadd.f32 %v2454, %v2578
    %v2583 = vadd.f32 %v2456, %v2580
    %v2584 = vld [vmem:[%s6] sm:$0xff]
    %2586 = vset.pattern.permute.xlu0 0
    %2587 = vperm.xlu0 %2586, %v2584
    %v2588 = vpop.permute.xlu0 %2587
    %v2590 = vadd.f32 %v2582, %v2588
    %v2591 = vadd.f32 %v2583, %v2588
    %v2592 = vmax.f32 %v2590, 0.0
    %v2593 = vmax.f32 %v2591, 0.0
    %2594 = vst [vmem:[#allocation3 + $0x60] sm:$0xff] %v2592
    %2595 = vst [vmem:[#allocation3 + $0x68] sm:$0xff] %v2593
    %2596 = vst [vmem:[#allocation3 + $0x70] sm:$0xff] %v259
    %2597 = vst [vmem:[#allocation3 + $0x78] sm:$0xff] %v260
    %v2598 = vld [vmem:[#allocation3] sm:$0xff]
    %v2599 = vld [vmem:[#allocation3 + $0x8] sm:$0xff]
    %v2600 = vld [vmem:[#allocation3 + $0x10] sm:$0xff]
    %v2601 = vld [vmem:[#allocation3 + $0x18] sm:$0xff]
    %v2602 = vld [vmem:[#allocation3 + $0x20] sm:$0xff]
    %v2603 = vld [vmem:[#allocation3 + $0x28] sm:$0xff]
    %v2604 = vld [vmem:[#allocation3 + $0x30] sm:$0xff]
    %v2605 = vld [vmem:[#allocation3 + $0x38] sm:$0xff]
    %v2606 = vld [vmem:[#allocation3 + $0x40] sm:$0xff]
    %v2607 = vld [vmem:[#allocation3 + $0x48] sm:$0xff]
    %v2608 = vld [vmem:[#allocation3 + $0x50] sm:$0xff]
    %v2609 = vld [vmem:[#allocation3 + $0x58] sm:$0xff]
    %v2610 = vld [vmem:[#allocation3 + $0x60] sm:$0xff]
    %v2611 = vld [vmem:[#allocation3 + $0x68] sm:$0xff]
    %v2612 = vld [vmem:[#allocation3 + $0x70] sm:$0xff]
    %v2613 = vld [vmem:[#allocation3 + $0x78] sm:$0xff]
    %2615 = vset.pattern.permute.xlu0 0
    %2616 = vperm.xlu0 %2615, %v125
    %v2617 = vpop.permute.xlu0 %2616
    %2620 = vset.pattern.permute.xlu0 0
    %2621 = vperm.xlu0 %2620, %v126
    %v2622 = vpop.permute.xlu0 %2621
    %2625 = vset.pattern.permute.xlu0 0
    %2626 = vperm.xlu0 %2625, %v127
    %v2627 = vpop.permute.xlu0 %2626
    %2630 = vset.pattern.permute.xlu0 0
    %2631 = vperm.xlu0 %2630, %v128
    %v2632 = vpop.permute.xlu0 %2631
    %vm2634 = vcmask 523264
    %v2636 = vsel %vm2634, %v121, 0
    %v2639 = vsel %vm2634, %v122, 0
    %v2642 = vsel %vm2634, %v123, 0
    %v2645 = vsel %vm2634, %v124, 0
    %2647 = vmatprep.subr.mxu0 0.0
    %2648 = vmatpush1.msra.mxu0 0.0
    %2649 = vmatprep.subr.mxu0 0.0
    %2650 = vmatpush1.msra.mxu0 0.0
    %2651 = vmatprep.subr.mxu0 0.0
    %2652 = vmatpush1.msra.mxu0 0.0
    %2653 = vmatprep.subr.mxu0 0.0
    %2654 = vmatpush1.msra.mxu0 0.0
    %2655 = vmatprep.subr.mxu0 0.0
    %2656 = vmatpush1.msra.mxu0 0.0
    %2657 = vmatprep.subr.mxu0 0.0
    %2658 = vmatpush1.msra.mxu0 0.0
    %2659 = vmatprep.subr.mxu0 0.0
    %2660 = vmatpush1.msra.mxu0 0.0
    %2661 = vmatprep.subr.mxu0 0.0
    %2662 = vmatpush1.msra.mxu0 0.0
    %2663 = vmatprep.subr.mxu0 %v2613
    %2664 = vmatpush1.msra.mxu0 %v2612
    %2665 = vmatprep.subr.mxu0 %v2611
    %2666 = vmatpush1.msra.mxu0 %v2610
    %2667 = vmatprep.subr.mxu0 %v2609
    %2668 = vmatpush1.msra.mxu0 %v2608
    %2669 = vmatprep.subr.mxu0 %v2607
    %2670 = vmatpush1.msra.mxu0 %v2606
    %2671 = vmatprep.subr.mxu0 %v2605
    %2672 = vmatpush1.msra.mxu0 %v2604
    %2673 = vmatprep.subr.mxu0 %v2603
    %2674 = vmatpush1.msra.mxu0 %v2602
    %2675 = vmatprep.subr.mxu0 %v2601
    %2676 = vmatpush1.msra.mxu0 %v2600
    %2677 = vmatprep.subr.mxu0 %v2599
    %2678 = vmatpush1.msra.mxu0 %v2598
    %2679 = vmatprep.subr.mxu0 0.0
    %2680 = vmatpush2.msra.mxu0 0.0
    %2681 = vmatprep.subr.mxu0 0.0
    %2682 = vmatpush2.msra.mxu0 0.0
    %2683 = vmatprep.subr.mxu0 0.0
    %2684 = vmatpush2.msra.mxu0 0.0
    %2685 = vmatprep.subr.mxu0 0.0
    %2686 = vmatpush2.msra.mxu0 0.0
    %2687 = vmatprep.subr.mxu0 0.0
    %2688 = vmatpush2.msra.mxu0 0.0
    %2689 = vmatprep.subr.mxu0 0.0
    %2690 = vmatpush2.msra.mxu0 0.0
    %2691 = vmatprep.subr.mxu0 0.0
    %2692 = vmatpush2.msra.mxu0 0.0
    %2693 = vmatprep.subr.mxu0 0.0
    %2694 = vmatpush2.msra.mxu0 0.0
    %2695 = vmatprep.subr.mxu0 0.0
    %2696 = vmatpush2.msra.mxu0 0.0
    %2697 = vmatprep.subr.mxu0 0.0
    %2698 = vmatpush2.msra.mxu0 0.0
    %2699 = vmatprep.subr.mxu0 0.0
    %2700 = vmatpush2.msra.mxu0 0.0
    %2701 = vmatprep.subr.mxu0 0.0
    %2702 = vmatpush2.msra.mxu0 0.0
    %2703 = vmatprep.subr.mxu0 0.0
    %2704 = vmatpush2.msra.mxu0 0.0
    %2705 = vmatprep.subr.mxu0 0.0
    %2706 = vmatpush2.msra.mxu0 0.0
    %2707 = vmatprep.subr.mxu0 0.0
    %2708 = vmatpush2.msra.mxu0 0.0
    %2709 = vmatprep.subr.mxu0 0.0
    %2710 = vmatpush2.msra.mxu0 0.0
    %2711 = vmatprep.mubr.f32.mxu0 0.0
    %2712 = vmatmul.mubr.f32.gmra.mxu0 %v2636
    %v2713 = vpop.f32.mrf.mxu0
    %v2714 = vadd.f32 %v2617, %v2713
    %v2715 = vpop.f32.mrf.mxu0
    %v2716 = vadd.f32 %v2617, %v2715
    %2717 = vmatprep.mubr.f32.mxu0 0.0
    %2718 = vmatmul.mubr.f32.gmra.mxu0 %v2639
    %v2719 = vpop.f32.mrf.mxu0
    %v2720 = vadd.f32 %v2622, %v2719
    %v2721 = vpop.f32.mrf.mxu0
    %v2722 = vadd.f32 %v2622, %v2721
    %2723 = vmatprep.mubr.f32.mxu0 0.0
    %2724 = vmatmul.mubr.f32.gmra.mxu0 %v2642
    %v2725 = vpop.f32.mrf.mxu0
    %v2726 = vadd.f32 %v2627, %v2725
    %v2727 = vpop.f32.mrf.mxu0
    %v2728 = vadd.f32 %v2627, %v2727
    %2729 = vmatprep.mubr.f32.mxu0 0.0
    %2730 = vmatmul.mubr.f32.gmra.mxu0 %v2645
    %v2731 = vpop.f32.mrf.mxu0
    %v2732 = vadd.f32 %v2632, %v2731
    %v2733 = vpop.f32.mrf.mxu0
    %v2734 = vadd.f32 %v2632, %v2733
    %2735 = vdwg.mxu0
    %v2736 = vadd.f32 %v2714, %v129
    %v2737 = vadd.f32 %v2716, %v130
    %v2738 = vadd.f32 %v2720, %v131
    %v2739 = vadd.f32 %v2722, %v132
    %v2740 = vadd.f32 %v2726, %v133
    %v2741 = vadd.f32 %v2728, %v134
    %v2742 = vadd.f32 %v2732, %v135
    %v2743 = vadd.f32 %v2734, %v136
    %v2744 = vmax.f32 %v2736, 0.0
    %v2745 = vmax.f32 %v2737, 0.0
    %v2746 = vmax.f32 %v2738, 0.0
    %v2747 = vmax.f32 %v2739, 0.0
    %v2748 = vmax.f32 %v2740, 0.0
    %v2749 = vmax.f32 %v2741, 0.0
    %v2750 = vmax.f32 %v2742, 0.0
    %v2751 = vmax.f32 %v2743, 0.0
    %2752 = vst [vmem:[#allocation10] sm:$0xff] %v2744
    %2753 = vst [vmem:[#allocation10 + $0x8] sm:$0xff] %v2745
    %2754 = vst [vmem:[#allocation10 + $0x10] sm:$0xff] %v2746
    %2755 = vst [vmem:[#allocation10 + $0x18] sm:$0xff] %v2747
    %2756 = vst [vmem:[#allocation10 + $0x20] sm:$0xff] %v2748
    %2757 = vst [vmem:[#allocation10 + $0x28] sm:$0xff] %v2749
    %2758 = vst [vmem:[#allocation10 + $0x30] sm:$0xff] %v2750
    %2759 = vst [vmem:[#allocation10 + $0x38] sm:$0xff] %v2751
    %s2760 = scalar_lea.vmem [#allocation4], 64
    %v2761 = vld [vmem:[%s2760] sm:$0xff]
    %v2762 = vld [vmem:[%s2760 + $0x8] sm:$0xff]
    %v2763 = vld [vmem:[%s2760 + $0x10] sm:$0xff]
    %v2764 = vld [vmem:[%s2760 + $0x18] sm:$0xff]
    %v2765 = vld [vmem:[%s2760 + $0x20] sm:$0xff]
    %v2766 = vld [vmem:[%s2760 + $0x28] sm:$0xff]
    %v2767 = vld [vmem:[%s2760 + $0x30] sm:$0xff]
    %v2768 = vld [vmem:[%s2760 + $0x38] sm:$0xff]
    %2769 = vmatprep.subr.mxu0 0.0
    %2770 = vmatpush1.msra.mxu0 0.0
    %2771 = vmatprep.subr.mxu0 0.0
    %2772 = vmatpush1.msra.mxu0 0.0
    %2773 = vmatprep.subr.mxu0 0.0
    %2774 = vmatpush1.msra.mxu0 0.0
    %2775 = vmatprep.subr.mxu0 0.0
    %2776 = vmatpush1.msra.mxu0 0.0
    %2777 = vmatprep.subr.mxu0 0.0
    %2778 = vmatpush1.msra.mxu0 0.0
    %2779 = vmatprep.subr.mxu0 0.0
    %2780 = vmatpush1.msra.mxu0 0.0
    %2781 = vmatprep.subr.mxu0 0.0
    %2782 = vmatpush1.msra.mxu0 0.0
    %2783 = vmatprep.subr.mxu0 0.0
    %2784 = vmatpush1.msra.mxu0 0.0
    %2785 = vmatprep.subr.mxu0 0.0
    %2786 = vmatpush1.msra.mxu0 0.0
    %2787 = vmatprep.subr.mxu0 0.0
    %2788 = vmatpush1.msra.mxu0 0.0
    %2789 = vmatprep.subr.mxu0 0.0
    %2790 = vmatpush1.msra.mxu0 0.0
    %2791 = vmatprep.subr.mxu0 0.0
    %2792 = vmatpush1.msra.mxu0 0.0
    %2793 = vmatprep.subr.mxu0 %v2768
    %2794 = vmatpush1.msra.mxu0 %v2767
    %2795 = vmatprep.subr.mxu0 %v2766
    %2796 = vmatpush1.msra.mxu0 %v2765
    %2797 = vmatprep.subr.mxu0 %v2764
    %2798 = vmatpush1.msra.mxu0 %v2763
    %2799 = vmatprep.subr.mxu0 %v2762
    %2800 = vmatpush1.msra.mxu0 %v2761
    %2801 = vmatprep.subr.mxu0 0.0
    %2802 = vmatpush2.msra.mxu0 0.0
    %2803 = vmatprep.subr.mxu0 0.0
    %2804 = vmatpush2.msra.mxu0 0.0
    %2805 = vmatprep.subr.mxu0 0.0
    %2806 = vmatpush2.msra.mxu0 0.0
    %2807 = vmatprep.subr.mxu0 0.0
    %2808 = vmatpush2.msra.mxu0 0.0
    %2809 = vmatprep.subr.mxu0 0.0
    %2810 = vmatpush2.msra.mxu0 0.0
    %2811 = vmatprep.subr.mxu0 0.0
    %2812 = vmatpush2.msra.mxu0 0.0
    %2813 = vmatprep.subr.mxu0 0.0
    %2814 = vmatpush2.msra.mxu0 0.0
    %2815 = vmatprep.subr.mxu0 0.0
    %2816 = vmatpush2.msra.mxu0 0.0
    %2817 = vmatprep.subr.mxu0 0.0
    %2818 = vmatpush2.msra.mxu0 0.0
    %2819 = vmatprep.subr.mxu0 0.0
    %2820 = vmatpush2.msra.mxu0 0.0
    %2821 = vmatprep.subr.mxu0 0.0
    %2822 = vmatpush2.msra.mxu0 0.0
    %2823 = vmatprep.subr.mxu0 0.0
    %2824 = vmatpush2.msra.mxu0 0.0
    %2825 = vmatprep.subr.mxu0 0.0
    %2826 = vmatpush2.msra.mxu0 0.0
    %2827 = vmatprep.subr.mxu0 0.0
    %2828 = vmatpush2.msra.mxu0 0.0
    %2829 = vmatprep.subr.mxu0 0.0
    %2830 = vmatpush2.msra.mxu0 0.0
    %2831 = vmatprep.subr.mxu0 0.0
    %2832 = vmatpush2.msra.mxu0 0.0
    %2833 = vmatprep.mubr.f32.mxu0 0.0
    %2834 = vmatmul.mubr.f32.gmra.mxu0 %v159
    %v2835 = vpop.f32.mrf.mxu0
    %v2836 = vadd.f32 %v140, %v2835
    %v2837 = vpop.f32.mrf.mxu0
    %v2838 = vadd.f32 %v140, %v2837
    %2839 = vmatprep.mubr.f32.mxu0 0.0
    %2840 = vmatmul.mubr.f32.gmra.mxu0 %v162
    %v2841 = vpop.f32.mrf.mxu0
    %v2842 = vadd.f32 %v145, %v2841
    %v2843 = vpop.f32.mrf.mxu0
    %v2844 = vadd.f32 %v145, %v2843
    %2845 = vmatprep.mubr.f32.mxu0 0.0
    %2846 = vmatmul.mubr.f32.gmra.mxu0 %v165
    %v2847 = vpop.f32.mrf.mxu0
    %v2848 = vadd.f32 %v150, %v2847
    %v2849 = vpop.f32.mrf.mxu0
    %v2850 = vadd.f32 %v150, %v2849
    %2851 = vmatprep.mubr.f32.mxu0 0.0
    %2852 = vmatmul.mubr.f32.gmra.mxu0 %v168
    %v2853 = vpop.f32.mrf.mxu0
    %v2854 = vadd.f32 %v155, %v2853
    %v2855 = vpop.f32.mrf.mxu0
    %v2856 = vadd.f32 %v155, %v2855
    %2857 = vdwg.mxu0
    %v2858 = vmax.f32 %v2836, 0.0
    %v2859 = vmax.f32 %v2838, 0.0
    %v2860 = vmax.f32 %v2842, 0.0
    %v2861 = vmax.f32 %v2844, 0.0
    %v2862 = vmax.f32 %v2848, 0.0
    %v2863 = vmax.f32 %v2850, 0.0
    %v2864 = vmax.f32 %v2854, 0.0
    %v2865 = vmax.f32 %v2856, 0.0
    %s2866 = scalar_lea.vmem [#allocation2], 96
    %2867 = vst [vmem:[%s2866 + $0x28] sm:$0xff] %v2858
    %2868 = vst [vmem:[%s2866 + $0x30] sm:$0xff] %v2859
    %v2869 = vld [vmem:[%s2866 + $0x20] sm:$0xff]
    %v2870 = vld [vmem:[%s2866 + $0x28] sm:$0xff]
    %v2871 = vld [vmem:[%s2866 + $0x30] sm:$0xff]
    %v2872 = vmul.f32 %v2869, %v275
    %v2873 = vmul.f32 %v2870, %v279
    %v2874 = vmul.f32 %v2871, %v277
    %2878 = vrot.lane.b32.xlu0 %v2872, 1
    %v2879 = vpop.permute.xlu0 %2878
    %2880 = vrot.lane.b32.xlu0 %v2873, 1
    %v2881 = vpop.permute.xlu0 %2880
    %2882 = vrot.lane.b32.xlu0 %v2874, 1
    %v2883 = vpop.permute.xlu0 %2882
    %v2884 = vsel %vm295, %v2879, %v2881
    %v2885 = vsel %vm295, %v2881, %v2883
    %2888 = vst [vmem:[%s2866 + $0x8] sm:$0xff] %v2884
    %2889 = vst [vmem:[%s2866 + $0x10] sm:$0xff] %v2885
    %v2890 = vld [vmem:[%s2866 + $0x28] sm:$0xff]
    %v2891 = vld [vmem:[%s2866 + $0x30] sm:$0xff]
    %v2892 = vld [vmem:[%s2866 + $0x38] sm:$0xff]
    %v2893 = vmul.f32 %v2890, %v308
    %v2894 = vmul.f32 %v2891, %v311
    %v2895 = vmul.f32 %v2892, %v310
    %2899 = vrot.lane.b32.xlu0 %v2893, 127
    %v2900 = vpop.permute.xlu0 %2899
    %2901 = vrot.lane.b32.xlu0 %v2894, 127
    %v2902 = vpop.permute.xlu0 %2901
    %2903 = vrot.lane.b32.xlu0 %v2895, 127
    %v2904 = vpop.permute.xlu0 %2903
    %v2905 = vsel %vm278, %v2900, %v2902
    %v2906 = vsel %vm278, %v2902, %v2904
    %2909 = vst [vmem:[%s2866 + $0x48] sm:$0xff] %v2905
    %2910 = vst [vmem:[%s2866 + $0x50] sm:$0xff] %v2906
    %v2911 = vld [vmem:[%s2866] sm:$0xff]
    %v2912 = vld [vmem:[%s2866 + $0x8] sm:$0xff]
    %v2913 = vld [vmem:[%s2866 + $0x10] sm:$0xff]
    %v2914 = vld [vmem:[%s2866 + $0x20] sm:$0xff]
    %v2915 = vld [vmem:[%s2866 + $0x28] sm:$0xff]
    %v2916 = vld [vmem:[%s2866 + $0x30] sm:$0xff]
    %v2917 = vld [vmem:[%s2866 + $0x40] sm:$0xff]
    %v2918 = vld [vmem:[%s2866 + $0x48] sm:$0xff]
    %v2919 = vld [vmem:[%s2866 + $0x50] sm:$0xff]
    %v2920 = vld [vmem:[%s3] sm:$0xff]
    %v2921 = vld [vmem:[%s343] sm:$0xff]
    %v2923 = vsel %vm345, %v2921, 0
    %2925 = vmatprep.subr.mxu0 0.0
    %2926 = vmatpush1.msra.mxu0 0.0
    %2927 = vmatprep.subr.mxu0 0.0
    %2928 = vmatpush1.msra.mxu0 0.0
    %2929 = vmatprep.subr.mxu0 0.0
    %2930 = vmatpush1.msra.mxu0 0.0
    %2931 = vmatprep.subr.mxu0 0.0
    %2932 = vmatpush1.msra.mxu0 0.0
    %2933 = vmatprep.subr.mxu0 0.0
    %2934 = vmatpush1.msra.mxu0 0.0
    %2935 = vmatprep.subr.mxu0 0.0
    %2936 = vmatpush1.msra.mxu0 0.0
    %2937 = vmatprep.subr.mxu0 0.0
    %2938 = vmatpush1.msra.mxu0 0.0
    %2939 = vmatprep.subr.mxu0 0.0
    %2940 = vmatpush1.msra.mxu0 0.0
    %2941 = vmatprep.subr.mxu0 0.0
    %2942 = vmatpush1.msra.mxu0 0.0
    %2943 = vmatprep.subr.mxu0 0.0
    %2944 = vmatpush1.msra.mxu0 0.0
    %2945 = vmatprep.subr.mxu0 0.0
    %2946 = vmatpush1.msra.mxu0 0.0
    %2947 = vmatprep.subr.mxu0 0.0
    %2948 = vmatpush1.msra.mxu0 0.0
    %2949 = vmatprep.subr.mxu0 0.0
    %2950 = vmatpush1.msra.mxu0 0.0
    %2951 = vmatprep.subr.mxu0 %v2919
    %2952 = vmatpush1.msra.mxu0 %v2918
    %2953 = vmatprep.subr.mxu0 %v2916
    %2954 = vmatpush1.msra.mxu0 %v2915
    %2955 = vmatprep.subr.mxu0 %v2913
    %2956 = vmatpush1.msra.mxu0 %v2912
    %2957 = vmatprep.subr.mxu0 0.0
    %2958 = vmatpush2.msra.mxu0 0.0
    %2959 = vmatprep.subr.mxu0 0.0
    %2960 = vmatpush2.msra.mxu0 0.0
    %2961 = vmatprep.subr.mxu0 0.0
    %2962 = vmatpush2.msra.mxu0 0.0
    %2963 = vmatprep.subr.mxu0 0.0
    %2964 = vmatpush2.msra.mxu0 0.0
    %2965 = vmatprep.subr.mxu0 0.0
    %2966 = vmatpush2.msra.mxu0 0.0
    %2967 = vmatprep.subr.mxu0 0.0
    %2968 = vmatpush2.msra.mxu0 0.0
    %2969 = vmatprep.subr.mxu0 0.0
    %2970 = vmatpush2.msra.mxu0 0.0
    %2971 = vmatprep.subr.mxu0 0.0
    %2972 = vmatpush2.msra.mxu0 0.0
    %2973 = vmatprep.subr.mxu0 0.0
    %2974 = vmatpush2.msra.mxu0 0.0
    %2975 = vmatprep.subr.mxu0 0.0
    %2976 = vmatpush2.msra.mxu0 0.0
    %2977 = vmatprep.subr.mxu0 0.0
    %2978 = vmatpush2.msra.mxu0 0.0
    %2979 = vmatprep.subr.mxu0 0.0
    %2980 = vmatpush2.msra.mxu0 0.0
    %2981 = vmatprep.subr.mxu0 0.0
    %2982 = vmatpush2.msra.mxu0 0.0
    %2983 = vmatprep.subr.mxu0 0.0
    %2984 = vmatpush2.msra.mxu0 0.0
    %2985 = vmatprep.subr.mxu0 0.0
    %2986 = vmatpush2.msra.mxu0 0.0
    %2987 = vmatprep.subr.mxu0 0.0
    %2988 = vmatpush2.msra.mxu0 0.0
    %2989 = vmatprep.mubr.f32.mxu0 0.0
    %2990 = vmatmul.mubr.f32.gmra.mxu0 %v2923
    %v2991 = vpop.f32.mrf.mxu0
    %v2992 = vadd.f32 0.0, %v2991
    %v2993 = vpop.f32.mrf.mxu0
    %v2994 = vadd.f32 0.0, %v2993
    %2995 = vdwg.mxu0
    %3005 = vrot.lane.b32.xlu0 %v2911, 16
    %v3006 = vpop.permute.xlu0 %3005
    %3007 = vrot.lane.b32.xlu0 %v2912, 16
    %v3008 = vpop.permute.xlu0 %3007
    %3009 = vrot.lane.b32.xlu0 %v2913, 16
    %v3010 = vpop.permute.xlu0 %3009
    %3011 = vrot.lane.b32.xlu0 %v2914, 16
    %v3012 = vpop.permute.xlu0 %3011
    %3013 = vrot.lane.b32.xlu0 %v2915, 16
    %v3014 = vpop.permute.xlu0 %3013
    %3015 = vrot.lane.b32.xlu0 %v2916, 16
    %v3016 = vpop.permute.xlu0 %3015
    %3017 = vrot.lane.b32.xlu0 %v2917, 16
    %v3018 = vpop.permute.xlu0 %3017
    %3019 = vrot.lane.b32.xlu0 %v2918, 16
    %v3020 = vpop.permute.xlu0 %3019
    %3021 = vrot.lane.b32.xlu0 %v2919, 16
    %v3022 = vpop.permute.xlu0 %3021
    %v3023 = vsel %vm447, %v3006, %v3008
    %v3024 = vsel %vm447, %v3008, %v3010
    %v3025 = vsel %vm447, %v3012, %v3014
    %v3026 = vsel %vm447, %v3014, %v3016
    %v3027 = vsel %vm447, %v3018, %v3020
    %v3028 = vsel %vm447, %v3020, %v3022
    %v3036 = vsel %vm345, %v2920, 0
    %3038 = vmatprep.subr.mxu0 0.0
    %3039 = vmatpush1.msra.mxu0 0.0
    %3040 = vmatprep.subr.mxu0 0.0
    %3041 = vmatpush1.msra.mxu0 0.0
    %3042 = vmatprep.subr.mxu0 0.0
    %3043 = vmatpush1.msra.mxu0 0.0
    %3044 = vmatprep.subr.mxu0 0.0
    %3045 = vmatpush1.msra.mxu0 0.0
    %3046 = vmatprep.subr.mxu0 0.0
    %3047 = vmatpush1.msra.mxu0 0.0
    %3048 = vmatprep.subr.mxu0 0.0
    %3049 = vmatpush1.msra.mxu0 0.0
    %3050 = vmatprep.subr.mxu0 0.0
    %3051 = vmatpush1.msra.mxu0 0.0
    %3052 = vmatprep.subr.mxu0 0.0
    %3053 = vmatpush1.msra.mxu0 0.0
    %3054 = vmatprep.subr.mxu0 0.0
    %3055 = vmatpush1.msra.mxu0 0.0
    %3056 = vmatprep.subr.mxu0 0.0
    %3057 = vmatpush1.msra.mxu0 0.0
    %3058 = vmatprep.subr.mxu0 0.0
    %3059 = vmatpush1.msra.mxu0 0.0
    %3060 = vmatprep.subr.mxu0 0.0
    %3061 = vmatpush1.msra.mxu0 0.0
    %3062 = vmatprep.subr.mxu0 0.0
    %3063 = vmatpush1.msra.mxu0 0.0
    %3064 = vmatprep.subr.mxu0 %v3028
    %3065 = vmatpush1.msra.mxu0 %v3027
    %3066 = vmatprep.subr.mxu0 %v3026
    %3067 = vmatpush1.msra.mxu0 %v3025
    %3068 = vmatprep.subr.mxu0 %v3024
    %3069 = vmatpush1.msra.mxu0 %v3023
    %3070 = vmatprep.subr.mxu0 0.0
    %3071 = vmatpush2.msra.mxu0 0.0
    %3072 = vmatprep.subr.mxu0 0.0
    %3073 = vmatpush2.msra.mxu0 0.0
    %3074 = vmatprep.subr.mxu0 0.0
    %3075 = vmatpush2.msra.mxu0 0.0
    %3076 = vmatprep.subr.mxu0 0.0
    %3077 = vmatpush2.msra.mxu0 0.0
    %3078 = vmatprep.subr.mxu0 0.0
    %3079 = vmatpush2.msra.mxu0 0.0
    %3080 = vmatprep.subr.mxu0 0.0
    %3081 = vmatpush2.msra.mxu0 0.0
    %3082 = vmatprep.subr.mxu0 0.0
    %3083 = vmatpush2.msra.mxu0 0.0
    %3084 = vmatprep.subr.mxu0 0.0
    %3085 = vmatpush2.msra.mxu0 0.0
    %3086 = vmatprep.subr.mxu0 0.0
    %3087 = vmatpush2.msra.mxu0 0.0
    %3088 = vmatprep.subr.mxu0 0.0
    %3089 = vmatpush2.msra.mxu0 0.0
    %3090 = vmatprep.subr.mxu0 0.0
    %3091 = vmatpush2.msra.mxu0 0.0
    %3092 = vmatprep.subr.mxu0 0.0
    %3093 = vmatpush2.msra.mxu0 0.0
    %3094 = vmatprep.subr.mxu0 0.0
    %3095 = vmatpush2.msra.mxu0 0.0
    %3096 = vmatprep.subr.mxu0 0.0
    %3097 = vmatpush2.msra.mxu0 0.0
    %3098 = vmatprep.subr.mxu0 0.0
    %3099 = vmatpush2.msra.mxu0 0.0
    %3100 = vmatprep.subr.mxu0 0.0
    %3101 = vmatpush2.msra.mxu0 0.0
    %3102 = vmatprep.mubr.f32.mxu0 0.0
    %3103 = vmatmul.mubr.f32.gmra.mxu0 %v3036
    %v3104 = vpop.f32.mrf.mxu0
    %v3105 = vadd.f32 %v2992, %v3104
    %v3106 = vpop.f32.mrf.mxu0
    %v3107 = vadd.f32 %v2994, %v3106
    %3108 = vdwg.mxu0
    %v3109 = vld [vmem:[%s2866 + $0x8] sm:$0xff]
    %v3110 = vld [vmem:[%s2866 + $0x10] sm:$0xff]
    %v3111 = vld [vmem:[%s2866 + $0x18] sm:$0xff]
    %v3112 = vld [vmem:[%s2866 + $0x28] sm:$0xff]
    %v3113 = vld [vmem:[%s2866 + $0x30] sm:$0xff]
    %v3114 = vld [vmem:[%s2866 + $0x38] sm:$0xff]
    %v3115 = vld [vmem:[%s2866 + $0x48] sm:$0xff]
    %v3116 = vld [vmem:[%s2866 + $0x50] sm:$0xff]
    %v3117 = vld [vmem:[%s2866 + $0x58] sm:$0xff]
    %v3118 = vld [vmem:[%s543] sm:$0xff]
    %3128 = vrot.lane.b32.xlu0 %v3109, 112
    %v3129 = vpop.permute.xlu0 %3128
    %3130 = vrot.lane.b32.xlu0 %v3110, 112
    %v3131 = vpop.permute.xlu0 %3130
    %3132 = vrot.lane.b32.xlu0 %v3111, 112
    %v3133 = vpop.permute.xlu0 %3132
    %3134 = vrot.lane.b32.xlu0 %v3112, 112
    %v3135 = vpop.permute.xlu0 %3134
    %3136 = vrot.lane.b32.xlu0 %v3113, 112
    %v3137 = vpop.permute.xlu0 %3136
    %3138 = vrot.lane.b32.xlu0 %v3114, 112
    %v3139 = vpop.permute.xlu0 %3138
    %3140 = vrot.lane.b32.xlu0 %v3115, 112
    %v3141 = vpop.permute.xlu0 %3140
    %3142 = vrot.lane.b32.xlu0 %v3116, 112
    %v3143 = vpop.permute.xlu0 %3142
    %3144 = vrot.lane.b32.xlu0 %v3117, 112
    %v3145 = vpop.permute.xlu0 %3144
    %v3146 = vsel %vm572, %v3129, %v3131
    %v3147 = vsel %vm572, %v3131, %v3133
    %v3148 = vsel %vm572, %v3135, %v3137
    %v3149 = vsel %vm572, %v3137, %v3139
    %v3150 = vsel %vm572, %v3141, %v3143
    %v3151 = vsel %vm572, %v3143, %v3145
    %v3159 = vsel %vm345, %v3118, 0
    %3161 = vmatprep.subr.mxu0 0.0
    %3162 = vmatpush1.msra.mxu0 0.0
    %3163 = vmatprep.subr.mxu0 0.0
    %3164 = vmatpush1.msra.mxu0 0.0
    %3165 = vmatprep.subr.mxu0 0.0
    %3166 = vmatpush1.msra.mxu0 0.0
    %3167 = vmatprep.subr.mxu0 0.0
    %3168 = vmatpush1.msra.mxu0 0.0
    %3169 = vmatprep.subr.mxu0 0.0
    %3170 = vmatpush1.msra.mxu0 0.0
    %3171 = vmatprep.subr.mxu0 0.0
    %3172 = vmatpush1.msra.mxu0 0.0
    %3173 = vmatprep.subr.mxu0 0.0
    %3174 = vmatpush1.msra.mxu0 0.0
    %3175 = vmatprep.subr.mxu0 0.0
    %3176 = vmatpush1.msra.mxu0 0.0
    %3177 = vmatprep.subr.mxu0 0.0
    %3178 = vmatpush1.msra.mxu0 0.0
    %3179 = vmatprep.subr.mxu0 0.0
    %3180 = vmatpush1.msra.mxu0 0.0
    %3181 = vmatprep.subr.mxu0 0.0
    %3182 = vmatpush1.msra.mxu0 0.0
    %3183 = vmatprep.subr.mxu0 0.0
    %3184 = vmatpush1.msra.mxu0 0.0
    %3185 = vmatprep.subr.mxu0 0.0
    %3186 = vmatpush1.msra.mxu0 0.0
    %3187 = vmatprep.subr.mxu0 %v3151
    %3188 = vmatpush1.msra.mxu0 %v3150
    %3189 = vmatprep.subr.mxu0 %v3149
    %3190 = vmatpush1.msra.mxu0 %v3148
    %3191 = vmatprep.subr.mxu0 %v3147
    %3192 = vmatpush1.msra.mxu0 %v3146
    %3193 = vmatprep.subr.mxu0 0.0
    %3194 = vmatpush2.msra.mxu0 0.0
    %3195 = vmatprep.subr.mxu0 0.0
    %3196 = vmatpush2.msra.mxu0 0.0
    %3197 = vmatprep.subr.mxu0 0.0
    %3198 = vmatpush2.msra.mxu0 0.0
    %3199 = vmatprep.subr.mxu0 0.0
    %3200 = vmatpush2.msra.mxu0 0.0
    %3201 = vmatprep.subr.mxu0 0.0
    %3202 = vmatpush2.msra.mxu0 0.0
    %3203 = vmatprep.subr.mxu0 0.0
    %3204 = vmatpush2.msra.mxu0 0.0
    %3205 = vmatprep.subr.mxu0 0.0
    %3206 = vmatpush2.msra.mxu0 0.0
    %3207 = vmatprep.subr.mxu0 0.0
    %3208 = vmatpush2.msra.mxu0 0.0
    %3209 = vmatprep.subr.mxu0 0.0
    %3210 = vmatpush2.msra.mxu0 0.0
    %3211 = vmatprep.subr.mxu0 0.0
    %3212 = vmatpush2.msra.mxu0 0.0
    %3213 = vmatprep.subr.mxu0 0.0
    %3214 = vmatpush2.msra.mxu0 0.0
    %3215 = vmatprep.subr.mxu0 0.0
    %3216 = vmatpush2.msra.mxu0 0.0
    %3217 = vmatprep.subr.mxu0 0.0
    %3218 = vmatpush2.msra.mxu0 0.0
    %3219 = vmatprep.subr.mxu0 0.0
    %3220 = vmatpush2.msra.mxu0 0.0
    %3221 = vmatprep.subr.mxu0 0.0
    %3222 = vmatpush2.msra.mxu0 0.0
    %3223 = vmatprep.subr.mxu0 0.0
    %3224 = vmatpush2.msra.mxu0 0.0
    %3225 = vmatprep.mubr.f32.mxu0 0.0
    %3226 = vmatmul.mubr.f32.gmra.mxu0 %v3159
    %v3227 = vpop.f32.mrf.mxu0
    %v3228 = vadd.f32 0.0, %v3227
    %v3229 = vpop.f32.mrf.mxu0
    %v3230 = vadd.f32 0.0, %v3229
    %3231 = vdwg.mxu0
    %v3232 = vadd.f32 %v3105, %v3228
    %v3233 = vadd.f32 %v3107, %v3230
    %v3234 = vld [vmem:[%s4] sm:$0xff]
    %3236 = vset.pattern.permute.xlu0 0
    %3237 = vperm.xlu0 %3236, %v3234
    %v3238 = vpop.permute.xlu0 %3237
    %v3240 = vadd.f32 %v3232, %v3238
    %v3241 = vadd.f32 %v3233, %v3238
    %v3242 = vmax.f32 %v3240, 0.0
    %v3243 = vmax.f32 %v3241, 0.0
    %s3244 = scalar_lea.vmem [#allocation3], 128
    %3245 = vst [vmem:[%s3244] sm:$0xff] %v3242
    %3246 = vst [vmem:[%s3244 + $0x8] sm:$0xff] %v3243
    %v3247 = vadd.f32 %v3242, %v2860
    %v3248 = vadd.f32 %v3243, %v2861
    %3249 = vst [vmem:[%s2866 + $0x28] sm:$0xff] %v3247
    %3250 = vst [vmem:[%s2866 + $0x30] sm:$0xff] %v3248
    %v3251 = vld [vmem:[%s2866 + $0x20] sm:$0xff]
    %v3252 = vld [vmem:[%s2866 + $0x28] sm:$0xff]
    %v3253 = vld [vmem:[%s2866 + $0x30] sm:$0xff]
    %v3254 = vmul.f32 %v3251, %v275
    %v3255 = vmul.f32 %v3252, %v279
    %v3256 = vmul.f32 %v3253, %v277
    %3260 = vrot.lane.b32.xlu0 %v3254, 1
    %v3261 = vpop.permute.xlu0 %3260
    %3262 = vrot.lane.b32.xlu0 %v3255, 1
    %v3263 = vpop.permute.xlu0 %3262
    %3264 = vrot.lane.b32.xlu0 %v3256, 1
    %v3265 = vpop.permute.xlu0 %3264
    %v3266 = vsel %vm295, %v3261, %v3263
    %v3267 = vsel %vm295, %v3263, %v3265
    %3270 = vst [vmem:[%s2866 + $0x8] sm:$0xff] %v3266
    %3271 = vst [vmem:[%s2866 + $0x10] sm:$0xff] %v3267
    %v3272 = vld [vmem:[%s2866 + $0x28] sm:$0xff]
    %v3273 = vld [vmem:[%s2866 + $0x30] sm:$0xff]
    %v3274 = vld [vmem:[%s2866 + $0x38] sm:$0xff]
    %v3275 = vmul.f32 %v3272, %v308
    %v3276 = vmul.f32 %v3273, %v311
    %v3277 = vmul.f32 %v3274, %v310
    %3281 = vrot.lane.b32.xlu0 %v3275, 127
    %v3282 = vpop.permute.xlu0 %3281
    %3283 = vrot.lane.b32.xlu0 %v3276, 127
    %v3284 = vpop.permute.xlu0 %3283
    %3285 = vrot.lane.b32.xlu0 %v3277, 127
    %v3286 = vpop.permute.xlu0 %3285
    %v3287 = vsel %vm278, %v3282, %v3284
    %v3288 = vsel %vm278, %v3284, %v3286
    %3291 = vst [vmem:[%s2866 + $0x48] sm:$0xff] %v3287
    %3292 = vst [vmem:[%s2866 + $0x50] sm:$0xff] %v3288
    %v3293 = vld [vmem:[%s2866] sm:$0xff]
    %v3294 = vld [vmem:[%s2866 + $0x8] sm:$0xff]
    %v3295 = vld [vmem:[%s2866 + $0x10] sm:$0xff]
    %v3296 = vld [vmem:[%s2866 + $0x20] sm:$0xff]
    %v3297 = vld [vmem:[%s2866 + $0x28] sm:$0xff]
    %v3298 = vld [vmem:[%s2866 + $0x30] sm:$0xff]
    %v3299 = vld [vmem:[%s2866 + $0x40] sm:$0xff]
    %v3300 = vld [vmem:[%s2866 + $0x48] sm:$0xff]
    %v3301 = vld [vmem:[%s2866 + $0x50] sm:$0xff]
    %v3302 = vld [vmem:[%s728] sm:$0xff]
    %v3303 = vld [vmem:[%s730] sm:$0xff]
    %v3305 = vsel %vm345, %v3303, 0
    %3307 = vmatprep.subr.mxu0 0.0
    %3308 = vmatpush1.msra.mxu0 0.0
    %3309 = vmatprep.subr.mxu0 0.0
    %3310 = vmatpush1.msra.mxu0 0.0
    %3311 = vmatprep.subr.mxu0 0.0
    %3312 = vmatpush1.msra.mxu0 0.0
    %3313 = vmatprep.subr.mxu0 0.0
    %3314 = vmatpush1.msra.mxu0 0.0
    %3315 = vmatprep.subr.mxu0 0.0
    %3316 = vmatpush1.msra.mxu0 0.0
    %3317 = vmatprep.subr.mxu0 0.0
    %3318 = vmatpush1.msra.mxu0 0.0
    %3319 = vmatprep.subr.mxu0 0.0
    %3320 = vmatpush1.msra.mxu0 0.0
    %3321 = vmatprep.subr.mxu0 0.0
    %3322 = vmatpush1.msra.mxu0 0.0
    %3323 = vmatprep.subr.mxu0 0.0
    %3324 = vmatpush1.msra.mxu0 0.0
    %3325 = vmatprep.subr.mxu0 0.0
    %3326 = vmatpush1.msra.mxu0 0.0
    %3327 = vmatprep.subr.mxu0 0.0
    %3328 = vmatpush1.msra.mxu0 0.0
    %3329 = vmatprep.subr.mxu0 0.0
    %3330 = vmatpush1.msra.mxu0 0.0
    %3331 = vmatprep.subr.mxu0 0.0
    %3332 = vmatpush1.msra.mxu0 0.0
    %3333 = vmatprep.subr.mxu0 %v3301
    %3334 = vmatpush1.msra.mxu0 %v3300
    %3335 = vmatprep.subr.mxu0 %v3298
    %3336 = vmatpush1.msra.mxu0 %v3297
    %3337 = vmatprep.subr.mxu0 %v3295
    %3338 = vmatpush1.msra.mxu0 %v3294
    %3339 = vmatprep.subr.mxu0 0.0
    %3340 = vmatpush2.msra.mxu0 0.0
    %3341 = vmatprep.subr.mxu0 0.0
    %3342 = vmatpush2.msra.mxu0 0.0
    %3343 = vmatprep.subr.mxu0 0.0
    %3344 = vmatpush2.msra.mxu0 0.0
    %3345 = vmatprep.subr.mxu0 0.0
    %3346 = vmatpush2.msra.mxu0 0.0
    %3347 = vmatprep.subr.mxu0 0.0
    %3348 = vmatpush2.msra.mxu0 0.0
    %3349 = vmatprep.subr.mxu0 0.0
    %3350 = vmatpush2.msra.mxu0 0.0
    %3351 = vmatprep.subr.mxu0 0.0
    %3352 = vmatpush2.msra.mxu0 0.0
    %3353 = vmatprep.subr.mxu0 0.0
    %3354 = vmatpush2.msra.mxu0 0.0
    %3355 = vmatprep.subr.mxu0 0.0
    %3356 = vmatpush2.msra.mxu0 0.0
    %3357 = vmatprep.subr.mxu0 0.0
    %3358 = vmatpush2.msra.mxu0 0.0
    %3359 = vmatprep.subr.mxu0 0.0
    %3360 = vmatpush2.msra.mxu0 0.0
    %3361 = vmatprep.subr.mxu0 0.0
    %3362 = vmatpush2.msra.mxu0 0.0
    %3363 = vmatprep.subr.mxu0 0.0
    %3364 = vmatpush2.msra.mxu0 0.0
    %3365 = vmatprep.subr.mxu0 0.0
    %3366 = vmatpush2.msra.mxu0 0.0
    %3367 = vmatprep.subr.mxu0 0.0
    %3368 = vmatpush2.msra.mxu0 0.0
    %3369 = vmatprep.subr.mxu0 0.0
    %3370 = vmatpush2.msra.mxu0 0.0
    %3371 = vmatprep.mubr.f32.mxu0 0.0
    %3372 = vmatmul.mubr.f32.gmra.mxu0 %v3305
    %v3373 = vpop.f32.mrf.mxu0
    %v3374 = vadd.f32 0.0, %v3373
    %v3375 = vpop.f32.mrf.mxu0
    %v3376 = vadd.f32 0.0, %v3375
    %3377 = vdwg.mxu0
    %3387 = vrot.lane.b32.xlu0 %v3293, 16
    %v3388 = vpop.permute.xlu0 %3387
    %3389 = vrot.lane.b32.xlu0 %v3294, 16
    %v3390 = vpop.permute.xlu0 %3389
    %3391 = vrot.lane.b32.xlu0 %v3295, 16
    %v3392 = vpop.permute.xlu0 %3391
    %3393 = vrot.lane.b32.xlu0 %v3296, 16
    %v3394 = vpop.permute.xlu0 %3393
    %3395 = vrot.lane.b32.xlu0 %v3297, 16
    %v3396 = vpop.permute.xlu0 %3395
    %3397 = vrot.lane.b32.xlu0 %v3298, 16
    %v3398 = vpop.permute.xlu0 %3397
    %3399 = vrot.lane.b32.xlu0 %v3299, 16
    %v3400 = vpop.permute.xlu0 %3399
    %3401 = vrot.lane.b32.xlu0 %v3300, 16
    %v3402 = vpop.permute.xlu0 %3401
    %3403 = vrot.lane.b32.xlu0 %v3301, 16
    %v3404 = vpop.permute.xlu0 %3403
    %v3405 = vsel %vm447, %v3388, %v3390
    %v3406 = vsel %vm447, %v3390, %v3392
    %v3407 = vsel %vm447, %v3394, %v3396
    %v3408 = vsel %vm447, %v3396, %v3398
    %v3409 = vsel %vm447, %v3400, %v3402
    %v3410 = vsel %vm447, %v3402, %v3404
    %v3418 = vsel %vm345, %v3302, 0
    %3420 = vmatprep.subr.mxu0 0.0
    %3421 = vmatpush1.msra.mxu0 0.0
    %3422 = vmatprep.subr.mxu0 0.0
    %3423 = vmatpush1.msra.mxu0 0.0
    %3424 = vmatprep.subr.mxu0 0.0
    %3425 = vmatpush1.msra.mxu0 0.0
    %3426 = vmatprep.subr.mxu0 0.0
    %3427 = vmatpush1.msra.mxu0 0.0
    %3428 = vmatprep.subr.mxu0 0.0
    %3429 = vmatpush1.msra.mxu0 0.0
    %3430 = vmatprep.subr.mxu0 0.0
    %3431 = vmatpush1.msra.mxu0 0.0
    %3432 = vmatprep.subr.mxu0 0.0
    %3433 = vmatpush1.msra.mxu0 0.0
    %3434 = vmatprep.subr.mxu0 0.0
    %3435 = vmatpush1.msra.mxu0 0.0
    %3436 = vmatprep.subr.mxu0 0.0
    %3437 = vmatpush1.msra.mxu0 0.0
    %3438 = vmatprep.subr.mxu0 0.0
    %3439 = vmatpush1.msra.mxu0 0.0
    %3440 = vmatprep.subr.mxu0 0.0
    %3441 = vmatpush1.msra.mxu0 0.0
    %3442 = vmatprep.subr.mxu0 0.0
    %3443 = vmatpush1.msra.mxu0 0.0
    %3444 = vmatprep.subr.mxu0 0.0
    %3445 = vmatpush1.msra.mxu0 0.0
    %3446 = vmatprep.subr.mxu0 %v3410
    %3447 = vmatpush1.msra.mxu0 %v3409
    %3448 = vmatprep.subr.mxu0 %v3408
    %3449 = vmatpush1.msra.mxu0 %v3407
    %3450 = vmatprep.subr.mxu0 %v3406
    %3451 = vmatpush1.msra.mxu0 %v3405
    %3452 = vmatprep.subr.mxu0 0.0
    %3453 = vmatpush2.msra.mxu0 0.0
    %3454 = vmatprep.subr.mxu0 0.0
    %3455 = vmatpush2.msra.mxu0 0.0
    %3456 = vmatprep.subr.mxu0 0.0
    %3457 = vmatpush2.msra.mxu0 0.0
    %3458 = vmatprep.subr.mxu0 0.0
    %3459 = vmatpush2.msra.mxu0 0.0
    %3460 = vmatprep.subr.mxu0 0.0
    %3461 = vmatpush2.msra.mxu0 0.0
    %3462 = vmatprep.subr.mxu0 0.0
    %3463 = vmatpush2.msra.mxu0 0.0
    %3464 = vmatprep.subr.mxu0 0.0
    %3465 = vmatpush2.msra.mxu0 0.0
    %3466 = vmatprep.subr.mxu0 0.0
    %3467 = vmatpush2.msra.mxu0 0.0
    %3468 = vmatprep.subr.mxu0 0.0
    %3469 = vmatpush2.msra.mxu0 0.0
    %3470 = vmatprep.subr.mxu0 0.0
    %3471 = vmatpush2.msra.mxu0 0.0
    %3472 = vmatprep.subr.mxu0 0.0
    %3473 = vmatpush2.msra.mxu0 0.0
    %3474 = vmatprep.subr.mxu0 0.0
    %3475 = vmatpush2.msra.mxu0 0.0
    %3476 = vmatprep.subr.mxu0 0.0
    %3477 = vmatpush2.msra.mxu0 0.0
    %3478 = vmatprep.subr.mxu0 0.0
    %3479 = vmatpush2.msra.mxu0 0.0
    %3480 = vmatprep.subr.mxu0 0.0
    %3481 = vmatpush2.msra.mxu0 0.0
    %3482 = vmatprep.subr.mxu0 0.0
    %3483 = vmatpush2.msra.mxu0 0.0
    %3484 = vmatprep.mubr.f32.mxu0 0.0
    %3485 = vmatmul.mubr.f32.gmra.mxu0 %v3418
    %v3486 = vpop.f32.mrf.mxu0
    %v3487 = vadd.f32 %v3374, %v3486
    %v3488 = vpop.f32.mrf.mxu0
    %v3489 = vadd.f32 %v3376, %v3488
    %3490 = vdwg.mxu0
    %v3491 = vld [vmem:[%s2866 + $0x8] sm:$0xff]
    %v3492 = vld [vmem:[%s2866 + $0x10] sm:$0xff]
    %v3493 = vld [vmem:[%s2866 + $0x18] sm:$0xff]
    %v3494 = vld [vmem:[%s2866 + $0x28] sm:$0xff]
    %v3495 = vld [vmem:[%s2866 + $0x30] sm:$0xff]
    %v3496 = vld [vmem:[%s2866 + $0x38] sm:$0xff]
    %v3497 = vld [vmem:[%s2866 + $0x48] sm:$0xff]
    %v3498 = vld [vmem:[%s2866 + $0x50] sm:$0xff]
    %v3499 = vld [vmem:[%s2866 + $0x58] sm:$0xff]
    %v3500 = vld [vmem:[%s928] sm:$0xff]
    %3510 = vrot.lane.b32.xlu0 %v3491, 112
    %v3511 = vpop.permute.xlu0 %3510
    %3512 = vrot.lane.b32.xlu0 %v3492, 112
    %v3513 = vpop.permute.xlu0 %3512
    %3514 = vrot.lane.b32.xlu0 %v3493, 112
    %v3515 = vpop.permute.xlu0 %3514
    %3516 = vrot.lane.b32.xlu0 %v3494, 112
    %v3517 = vpop.permute.xlu0 %3516
    %3518 = vrot.lane.b32.xlu0 %v3495, 112
    %v3519 = vpop.permute.xlu0 %3518
    %3520 = vrot.lane.b32.xlu0 %v3496, 112
    %v3521 = vpop.permute.xlu0 %3520
    %3522 = vrot.lane.b32.xlu0 %v3497, 112
    %v3523 = vpop.permute.xlu0 %3522
    %3524 = vrot.lane.b32.xlu0 %v3498, 112
    %v3525 = vpop.permute.xlu0 %3524
    %3526 = vrot.lane.b32.xlu0 %v3499, 112
    %v3527 = vpop.permute.xlu0 %3526
    %v3528 = vsel %vm572, %v3511, %v3513
    %v3529 = vsel %vm572, %v3513, %v3515
    %v3530 = vsel %vm572, %v3517, %v3519
    %v3531 = vsel %vm572, %v3519, %v3521
    %v3532 = vsel %vm572, %v3523, %v3525
    %v3533 = vsel %vm572, %v3525, %v3527
    %v3541 = vsel %vm345, %v3500, 0
    %3543 = vmatprep.subr.mxu0 0.0
    %3544 = vmatpush1.msra.mxu0 0.0
    %3545 = vmatprep.subr.mxu0 0.0
    %3546 = vmatpush1.msra.mxu0 0.0
    %3547 = vmatprep.subr.mxu0 0.0
    %3548 = vmatpush1.msra.mxu0 0.0
    %3549 = vmatprep.subr.mxu0 0.0
    %3550 = vmatpush1.msra.mxu0 0.0
    %3551 = vmatprep.subr.mxu0 0.0
    %3552 = vmatpush1.msra.mxu0 0.0
    %3553 = vmatprep.subr.mxu0 0.0
    %3554 = vmatpush1.msra.mxu0 0.0
    %3555 = vmatprep.subr.mxu0 0.0
    %3556 = vmatpush1.msra.mxu0 0.0
    %3557 = vmatprep.subr.mxu0 0.0
    %3558 = vmatpush1.msra.mxu0 0.0
    %3559 = vmatprep.subr.mxu0 0.0
    %3560 = vmatpush1.msra.mxu0 0.0
    %3561 = vmatprep.subr.mxu0 0.0
    %3562 = vmatpush1.msra.mxu0 0.0
    %3563 = vmatprep.subr.mxu0 0.0
    %3564 = vmatpush1.msra.mxu0 0.0
    %3565 = vmatprep.subr.mxu0 0.0
    %3566 = vmatpush1.msra.mxu0 0.0
    %3567 = vmatprep.subr.mxu0 0.0
    %3568 = vmatpush1.msra.mxu0 0.0
    %3569 = vmatprep.subr.mxu0 %v3533
    %3570 = vmatpush1.msra.mxu0 %v3532
    %3571 = vmatprep.subr.mxu0 %v3531
    %3572 = vmatpush1.msra.mxu0 %v3530
    %3573 = vmatprep.subr.mxu0 %v3529
    %3574 = vmatpush1.msra.mxu0 %v3528
    %3575 = vmatprep.subr.mxu0 0.0
    %3576 = vmatpush2.msra.mxu0 0.0
    %3577 = vmatprep.subr.mxu0 0.0
    %3578 = vmatpush2.msra.mxu0 0.0
    %3579 = vmatprep.subr.mxu0 0.0
    %3580 = vmatpush2.msra.mxu0 0.0
    %3581 = vmatprep.subr.mxu0 0.0
    %3582 = vmatpush2.msra.mxu0 0.0
    %3583 = vmatprep.subr.mxu0 0.0
    %3584 = vmatpush2.msra.mxu0 0.0
    %3585 = vmatprep.subr.mxu0 0.0
    %3586 = vmatpush2.msra.mxu0 0.0
    %3587 = vmatprep.subr.mxu0 0.0
    %3588 = vmatpush2.msra.mxu0 0.0
    %3589 = vmatprep.subr.mxu0 0.0
    %3590 = vmatpush2.msra.mxu0 0.0
    %3591 = vmatprep.subr.mxu0 0.0
    %3592 = vmatpush2.msra.mxu0 0.0
    %3593 = vmatprep.subr.mxu0 0.0
    %3594 = vmatpush2.msra.mxu0 0.0
    %3595 = vmatprep.subr.mxu0 0.0
    %3596 = vmatpush2.msra.mxu0 0.0
    %3597 = vmatprep.subr.mxu0 0.0
    %3598 = vmatpush2.msra.mxu0 0.0
    %3599 = vmatprep.subr.mxu0 0.0
    %3600 = vmatpush2.msra.mxu0 0.0
    %3601 = vmatprep.subr.mxu0 0.0
    %3602 = vmatpush2.msra.mxu0 0.0
    %3603 = vmatprep.subr.mxu0 0.0
    %3604 = vmatpush2.msra.mxu0 0.0
    %3605 = vmatprep.subr.mxu0 0.0
    %3606 = vmatpush2.msra.mxu0 0.0
    %3607 = vmatprep.mubr.f32.mxu0 0.0
    %3608 = vmatmul.mubr.f32.gmra.mxu0 %v3541
    %v3609 = vpop.f32.mrf.mxu0
    %v3610 = vadd.f32 0.0, %v3609
    %v3611 = vpop.f32.mrf.mxu0
    %v3612 = vadd.f32 0.0, %v3611
    %3613 = vdwg.mxu0
    %v3614 = vadd.f32 %v3487, %v3610
    %v3615 = vadd.f32 %v3489, %v3612
    %v3616 = vld [vmem:[%s1045] sm:$0xff]
    %3618 = vset.pattern.permute.xlu0 0
    %3619 = vperm.xlu0 %3618, %v3616
    %v3620 = vpop.permute.xlu0 %3619
    %v3622 = vadd.f32 %v3614, %v3620
    %v3623 = vadd.f32 %v3615, %v3620
    %v3624 = vmax.f32 %v3622, 0.0
    %v3625 = vmax.f32 %v3623, 0.0
    %3626 = vst [vmem:[%s3244 + $0x10] sm:$0xff] %v3624
    %3627 = vst [vmem:[%s3244 + $0x18] sm:$0xff] %v3625
    %v3628 = vadd.f32 %v3624, %v2862
    %v3629 = vadd.f32 %v3625, %v2863
    %3630 = vst [vmem:[%s2866 + $0x28] sm:$0xff] %v3628
    %3631 = vst [vmem:[%s2866 + $0x30] sm:$0xff] %v3629
    %v3632 = vld [vmem:[%s2866 + $0x20] sm:$0xff]
    %v3633 = vld [vmem:[%s2866 + $0x28] sm:$0xff]
    %v3634 = vld [vmem:[%s2866 + $0x30] sm:$0xff]
    %v3635 = vmul.f32 %v3632, %v275
    %v3636 = vmul.f32 %v3633, %v279
    %v3637 = vmul.f32 %v3634, %v277
    %3641 = vrot.lane.b32.xlu0 %v3635, 1
    %v3642 = vpop.permute.xlu0 %3641
    %3643 = vrot.lane.b32.xlu0 %v3636, 1
    %v3644 = vpop.permute.xlu0 %3643
    %3645 = vrot.lane.b32.xlu0 %v3637, 1
    %v3646 = vpop.permute.xlu0 %3645
    %v3647 = vsel %vm295, %v3642, %v3644
    %v3648 = vsel %vm295, %v3644, %v3646
    %3651 = vst [vmem:[%s2866 + $0x8] sm:$0xff] %v3647
    %3652 = vst [vmem:[%s2866 + $0x10] sm:$0xff] %v3648
    %v3653 = vld [vmem:[%s2866 + $0x28] sm:$0xff]
    %v3654 = vld [vmem:[%s2866 + $0x30] sm:$0xff]
    %v3655 = vld [vmem:[%s2866 + $0x38] sm:$0xff]
    %v3656 = vmul.f32 %v3653, %v308
    %v3657 = vmul.f32 %v3654, %v311
    %v3658 = vmul.f32 %v3655, %v310
    %3662 = vrot.lane.b32.xlu0 %v3656, 127
    %v3663 = vpop.permute.xlu0 %3662
    %3664 = vrot.lane.b32.xlu0 %v3657, 127
    %v3665 = vpop.permute.xlu0 %3664
    %3666 = vrot.lane.b32.xlu0 %v3658, 127
    %v3667 = vpop.permute.xlu0 %3666
    %v3668 = vsel %vm278, %v3663, %v3665
    %v3669 = vsel %vm278, %v3665, %v3667
    %3672 = vst [vmem:[%s2866 + $0x48] sm:$0xff] %v3668
    %3673 = vst [vmem:[%s2866 + $0x50] sm:$0xff] %v3669
    %v3674 = vld [vmem:[%s2866] sm:$0xff]
    %v3675 = vld [vmem:[%s2866 + $0x8] sm:$0xff]
    %v3676 = vld [vmem:[%s2866 + $0x10] sm:$0xff]
    %v3677 = vld [vmem:[%s2866 + $0x20] sm:$0xff]
    %v3678 = vld [vmem:[%s2866 + $0x28] sm:$0xff]
    %v3679 = vld [vmem:[%s2866 + $0x30] sm:$0xff]
    %v3680 = vld [vmem:[%s2866 + $0x40] sm:$0xff]
    %v3681 = vld [vmem:[%s2866 + $0x48] sm:$0xff]
    %v3682 = vld [vmem:[%s2866 + $0x50] sm:$0xff]
    %v3683 = vld [vmem:[%s1113] sm:$0xff]
    %v3684 = vld [vmem:[%s1115] sm:$0xff]
    %v3686 = vsel %vm345, %v3684, 0
    %3688 = vmatprep.subr.mxu0 0.0
    %3689 = vmatpush1.msra.mxu0 0.0
    %3690 = vmatprep.subr.mxu0 0.0
    %3691 = vmatpush1.msra.mxu0 0.0
    %3692 = vmatprep.subr.mxu0 0.0
    %3693 = vmatpush1.msra.mxu0 0.0
    %3694 = vmatprep.subr.mxu0 0.0
    %3695 = vmatpush1.msra.mxu0 0.0
    %3696 = vmatprep.subr.mxu0 0.0
    %3697 = vmatpush1.msra.mxu0 0.0
    %3698 = vmatprep.subr.mxu0 0.0
    %3699 = vmatpush1.msra.mxu0 0.0
    %3700 = vmatprep.subr.mxu0 0.0
    %3701 = vmatpush1.msra.mxu0 0.0
    %3702 = vmatprep.subr.mxu0 0.0
    %3703 = vmatpush1.msra.mxu0 0.0
    %3704 = vmatprep.subr.mxu0 0.0
    %3705 = vmatpush1.msra.mxu0 0.0
    %3706 = vmatprep.subr.mxu0 0.0
    %3707 = vmatpush1.msra.mxu0 0.0
    %3708 = vmatprep.subr.mxu0 0.0
    %3709 = vmatpush1.msra.mxu0 0.0
    %3710 = vmatprep.subr.mxu0 0.0
    %3711 = vmatpush1.msra.mxu0 0.0
    %3712 = vmatprep.subr.mxu0 0.0
    %3713 = vmatpush1.msra.mxu0 0.0
    %3714 = vmatprep.subr.mxu0 %v3682
    %3715 = vmatpush1.msra.mxu0 %v3681
    %3716 = vmatprep.subr.mxu0 %v3679
    %3717 = vmatpush1.msra.mxu0 %v3678
    %3718 = vmatprep.subr.mxu0 %v3676
    %3719 = vmatpush1.msra.mxu0 %v3675
    %3720 = vmatprep.subr.mxu0 0.0
    %3721 = vmatpush2.msra.mxu0 0.0
    %3722 = vmatprep.subr.mxu0 0.0
    %3723 = vmatpush2.msra.mxu0 0.0
    %3724 = vmatprep.subr.mxu0 0.0
    %3725 = vmatpush2.msra.mxu0 0.0
    %3726 = vmatprep.subr.mxu0 0.0
    %3727 = vmatpush2.msra.mxu0 0.0
    %3728 = vmatprep.subr.mxu0 0.0
    %3729 = vmatpush2.msra.mxu0 0.0
    %3730 = vmatprep.subr.mxu0 0.0
    %3731 = vmatpush2.msra.mxu0 0.0
    %3732 = vmatprep.subr.mxu0 0.0
    %3733 = vmatpush2.msra.mxu0 0.0
    %3734 = vmatprep.subr.mxu0 0.0
    %3735 = vmatpush2.msra.mxu0 0.0
    %3736 = vmatprep.subr.mxu0 0.0
    %3737 = vmatpush2.msra.mxu0 0.0
    %3738 = vmatprep.subr.mxu0 0.0
    %3739 = vmatpush2.msra.mxu0 0.0
    %3740 = vmatprep.subr.mxu0 0.0
    %3741 = vmatpush2.msra.mxu0 0.0
    %3742 = vmatprep.subr.mxu0 0.0
    %3743 = vmatpush2.msra.mxu0 0.0
    %3744 = vmatprep.subr.mxu0 0.0
    %3745 = vmatpush2.msra.mxu0 0.0
    %3746 = vmatprep.subr.mxu0 0.0
    %3747 = vmatpush2.msra.mxu0 0.0
    %3748 = vmatprep.subr.mxu0 0.0
    %3749 = vmatpush2.msra.mxu0 0.0
    %3750 = vmatprep.subr.mxu0 0.0
    %3751 = vmatpush2.msra.mxu0 0.0
    %3752 = vmatprep.mubr.f32.mxu0 0.0
    %3753 = vmatmul.mubr.f32.gmra.mxu0 %v3686
    %v3754 = vpop.f32.mrf.mxu0
    %v3755 = vadd.f32 0.0, %v3754
    %v3756 = vpop.f32.mrf.mxu0
    %v3757 = vadd.f32 0.0, %v3756
    %3758 = vdwg.mxu0
    %3768 = vrot.lane.b32.xlu0 %v3674, 16
    %v3769 = vpop.permute.xlu0 %3768
    %3770 = vrot.lane.b32.xlu0 %v3675, 16
    %v3771 = vpop.permute.xlu0 %3770
    %3772 = vrot.lane.b32.xlu0 %v3676, 16
    %v3773 = vpop.permute.xlu0 %3772
    %3774 = vrot.lane.b32.xlu0 %v3677, 16
    %v3775 = vpop.permute.xlu0 %3774
    %3776 = vrot.lane.b32.xlu0 %v3678, 16
    %v3777 = vpop.permute.xlu0 %3776
    %3778 = vrot.lane.b32.xlu0 %v3679, 16
    %v3779 = vpop.permute.xlu0 %3778
    %3780 = vrot.lane.b32.xlu0 %v3680, 16
    %v3781 = vpop.permute.xlu0 %3780
    %3782 = vrot.lane.b32.xlu0 %v3681, 16
    %v3783 = vpop.permute.xlu0 %3782
    %3784 = vrot.lane.b32.xlu0 %v3682, 16
    %v3785 = vpop.permute.xlu0 %3784
    %v3786 = vsel %vm447, %v3769, %v3771
    %v3787 = vsel %vm447, %v3771, %v3773
    %v3788 = vsel %vm447, %v3775, %v3777
    %v3789 = vsel %vm447, %v3777, %v3779
    %v3790 = vsel %vm447, %v3781, %v3783
    %v3791 = vsel %vm447, %v3783, %v3785
    %v3799 = vsel %vm345, %v3683, 0
    %3801 = vmatprep.subr.mxu0 0.0
    %3802 = vmatpush1.msra.mxu0 0.0
    %3803 = vmatprep.subr.mxu0 0.0
    %3804 = vmatpush1.msra.mxu0 0.0
    %3805 = vmatprep.subr.mxu0 0.0
    %3806 = vmatpush1.msra.mxu0 0.0
    %3807 = vmatprep.subr.mxu0 0.0
    %3808 = vmatpush1.msra.mxu0 0.0
    %3809 = vmatprep.subr.mxu0 0.0
    %3810 = vmatpush1.msra.mxu0 0.0
    %3811 = vmatprep.subr.mxu0 0.0
    %3812 = vmatpush1.msra.mxu0 0.0
    %3813 = vmatprep.subr.mxu0 0.0
    %3814 = vmatpush1.msra.mxu0 0.0
    %3815 = vmatprep.subr.mxu0 0.0
    %3816 = vmatpush1.msra.mxu0 0.0
    %3817 = vmatprep.subr.mxu0 0.0
    %3818 = vmatpush1.msra.mxu0 0.0
    %3819 = vmatprep.subr.mxu0 0.0
    %3820 = vmatpush1.msra.mxu0 0.0
    %3821 = vmatprep.subr.mxu0 0.0
    %3822 = vmatpush1.msra.mxu0 0.0
    %3823 = vmatprep.subr.mxu0 0.0
    %3824 = vmatpush1.msra.mxu0 0.0
    %3825 = vmatprep.subr.mxu0 0.0
    %3826 = vmatpush1.msra.mxu0 0.0
    %3827 = vmatprep.subr.mxu0 %v3791
    %3828 = vmatpush1.msra.mxu0 %v3790
    %3829 = vmatprep.subr.mxu0 %v3789
    %3830 = vmatpush1.msra.mxu0 %v3788
    %3831 = vmatprep.subr.mxu0 %v3787
    %3832 = vmatpush1.msra.mxu0 %v3786
    %3833 = vmatprep.subr.mxu0 0.0
    %3834 = vmatpush2.msra.mxu0 0.0
    %3835 = vmatprep.subr.mxu0 0.0
    %3836 = vmatpush2.msra.mxu0 0.0
    %3837 = vmatprep.subr.mxu0 0.0
    %3838 = vmatpush2.msra.mxu0 0.0
    %3839 = vmatprep.subr.mxu0 0.0
    %3840 = vmatpush2.msra.mxu0 0.0
    %3841 = vmatprep.subr.mxu0 0.0
    %3842 = vmatpush2.msra.mxu0 0.0
    %3843 = vmatprep.subr.mxu0 0.0
    %3844 = vmatpush2.msra.mxu0 0.0
    %3845 = vmatprep.subr.mxu0 0.0
    %3846 = vmatpush2.msra.mxu0 0.0
    %3847 = vmatprep.subr.mxu0 0.0
    %3848 = vmatpush2.msra.mxu0 0.0
    %3849 = vmatprep.subr.mxu0 0.0
    %3850 = vmatpush2.msra.mxu0 0.0
    %3851 = vmatprep.subr.mxu0 0.0
    %3852 = vmatpush2.msra.mxu0 0.0
    %3853 = vmatprep.subr.mxu0 0.0
    %3854 = vmatpush2.msra.mxu0 0.0
    %3855 = vmatprep.subr.mxu0 0.0
    %3856 = vmatpush2.msra.mxu0 0.0
    %3857 = vmatprep.subr.mxu0 0.0
    %3858 = vmatpush2.msra.mxu0 0.0
    %3859 = vmatprep.subr.mxu0 0.0
    %3860 = vmatpush2.msra.mxu0 0.0
    %3861 = vmatprep.subr.mxu0 0.0
    %3862 = vmatpush2.msra.mxu0 0.0
    %3863 = vmatprep.subr.mxu0 0.0
    %3864 = vmatpush2.msra.mxu0 0.0
    %3865 = vmatprep.mubr.f32.mxu0 0.0
    %3866 = vmatmul.mubr.f32.gmra.mxu0 %v3799
    %v3867 = vpop.f32.mrf.mxu0
    %v3868 = vadd.f32 %v3755, %v3867
    %v3869 = vpop.f32.mrf.mxu0
    %v3870 = vadd.f32 %v3757, %v3869
    %3871 = vdwg.mxu0
    %v3872 = vld [vmem:[%s2866 + $0x8] sm:$0xff]
    %v3873 = vld [vmem:[%s2866 + $0x10] sm:$0xff]
    %v3874 = vld [vmem:[%s2866 + $0x18] sm:$0xff]
    %v3875 = vld [vmem:[%s2866 + $0x28] sm:$0xff]
    %v3876 = vld [vmem:[%s2866 + $0x30] sm:$0xff]
    %v3877 = vld [vmem:[%s2866 + $0x38] sm:$0xff]
    %v3878 = vld [vmem:[%s2866 + $0x48] sm:$0xff]
    %v3879 = vld [vmem:[%s2866 + $0x50] sm:$0xff]
    %v3880 = vld [vmem:[%s2866 + $0x58] sm:$0xff]
    %v3881 = vld [vmem:[%s1313] sm:$0xff]
    %3891 = vrot.lane.b32.xlu0 %v3872, 112
    %v3892 = vpop.permute.xlu0 %3891
    %3893 = vrot.lane.b32.xlu0 %v3873, 112
    %v3894 = vpop.permute.xlu0 %3893
    %3895 = vrot.lane.b32.xlu0 %v3874, 112
    %v3896 = vpop.permute.xlu0 %3895
    %3897 = vrot.lane.b32.xlu0 %v3875, 112
    %v3898 = vpop.permute.xlu0 %3897
    %3899 = vrot.lane.b32.xlu0 %v3876, 112
    %v3900 = vpop.permute.xlu0 %3899
    %3901 = vrot.lane.b32.xlu0 %v3877, 112
    %v3902 = vpop.permute.xlu0 %3901
    %3903 = vrot.lane.b32.xlu0 %v3878, 112
    %v3904 = vpop.permute.xlu0 %3903
    %3905 = vrot.lane.b32.xlu0 %v3879, 112
    %v3906 = vpop.permute.xlu0 %3905
    %3907 = vrot.lane.b32.xlu0 %v3880, 112
    %v3908 = vpop.permute.xlu0 %3907
    %v3909 = vsel %vm572, %v3892, %v3894
    %v3910 = vsel %vm572, %v3894, %v3896
    %v3911 = vsel %vm572, %v3898, %v3900
    %v3912 = vsel %vm572, %v3900, %v3902
    %v3913 = vsel %vm572, %v3904, %v3906
    %v3914 = vsel %vm572, %v3906, %v3908
    %v3922 = vsel %vm345, %v3881, 0
    %3924 = vmatprep.subr.mxu0 0.0
    %3925 = vmatpush1.msra.mxu0 0.0
    %3926 = vmatprep.subr.mxu0 0.0
    %3927 = vmatpush1.msra.mxu0 0.0
    %3928 = vmatprep.subr.mxu0 0.0
    %3929 = vmatpush1.msra.mxu0 0.0
    %3930 = vmatprep.subr.mxu0 0.0
    %3931 = vmatpush1.msra.mxu0 0.0
    %3932 = vmatprep.subr.mxu0 0.0
    %3933 = vmatpush1.msra.mxu0 0.0
    %3934 = vmatprep.subr.mxu0 0.0
    %3935 = vmatpush1.msra.mxu0 0.0
    %3936 = vmatprep.subr.mxu0 0.0
    %3937 = vmatpush1.msra.mxu0 0.0
    %3938 = vmatprep.subr.mxu0 0.0
    %3939 = vmatpush1.msra.mxu0 0.0
    %3940 = vmatprep.subr.mxu0 0.0
    %3941 = vmatpush1.msra.mxu0 0.0
    %3942 = vmatprep.subr.mxu0 0.0
    %3943 = vmatpush1.msra.mxu0 0.0
    %3944 = vmatprep.subr.mxu0 0.0
    %3945 = vmatpush1.msra.mxu0 0.0
    %3946 = vmatprep.subr.mxu0 0.0
    %3947 = vmatpush1.msra.mxu0 0.0
    %3948 = vmatprep.subr.mxu0 0.0
    %3949 = vmatpush1.msra.mxu0 0.0
    %3950 = vmatprep.subr.mxu0 %v3914
    %3951 = vmatpush1.msra.mxu0 %v3913
    %3952 = vmatprep.subr.mxu0 %v3912
    %3953 = vmatpush1.msra.mxu0 %v3911
    %3954 = vmatprep.subr.mxu0 %v3910
    %3955 = vmatpush1.msra.mxu0 %v3909
    %3956 = vmatprep.subr.mxu0 0.0
    %3957 = vmatpush2.msra.mxu0 0.0
    %3958 = vmatprep.subr.mxu0 0.0
    %3959 = vmatpush2.msra.mxu0 0.0
    %3960 = vmatprep.subr.mxu0 0.0
    %3961 = vmatpush2.msra.mxu0 0.0
    %3962 = vmatprep.subr.mxu0 0.0
    %3963 = vmatpush2.msra.mxu0 0.0
    %3964 = vmatprep.subr.mxu0 0.0
    %3965 = vmatpush2.msra.mxu0 0.0
    %3966 = vmatprep.subr.mxu0 0.0
    %3967 = vmatpush2.msra.mxu0 0.0
    %3968 = vmatprep.subr.mxu0 0.0
    %3969 = vmatpush2.msra.mxu0 0.0
    %3970 = vmatprep.subr.mxu0 0.0
    %3971 = vmatpush2.msra.mxu0 0.0
    %3972 = vmatprep.subr.mxu0 0.0
    %3973 = vmatpush2.msra.mxu0 0.0
    %3974 = vmatprep.subr.mxu0 0.0
    %3975 = vmatpush2.msra.mxu0 0.0
    %3976 = vmatprep.subr.mxu0 0.0
    %3977 = vmatpush2.msra.mxu0 0.0
    %3978 = vmatprep.subr.mxu0 0.0
    %3979 = vmatpush2.msra.mxu0 0.0
    %3980 = vmatprep.subr.mxu0 0.0
    %3981 = vmatpush2.msra.mxu0 0.0
    %3982 = vmatprep.subr.mxu0 0.0
    %3983 = vmatpush2.msra.mxu0 0.0
    %3984 = vmatprep.subr.mxu0 0.0
    %3985 = vmatpush2.msra.mxu0 0.0
    %3986 = vmatprep.subr.mxu0 0.0
    %3987 = vmatpush2.msra.mxu0 0.0
    %3988 = vmatprep.mubr.f32.mxu0 0.0
    %3989 = vmatmul.mubr.f32.gmra.mxu0 %v3922
    %v3990 = vpop.f32.mrf.mxu0
    %v3991 = vadd.f32 0.0, %v3990
    %v3992 = vpop.f32.mrf.mxu0
    %v3993 = vadd.f32 0.0, %v3992
    %3994 = vdwg.mxu0
    %v3995 = vadd.f32 %v3868, %v3991
    %v3996 = vadd.f32 %v3870, %v3993
    %v3997 = vld [vmem:[%s1430] sm:$0xff]
    %3999 = vset.pattern.permute.xlu0 0
    %4000 = vperm.xlu0 %3999, %v3997
    %v4001 = vpop.permute.xlu0 %4000
    %v4003 = vadd.f32 %v3995, %v4001
    %v4004 = vadd.f32 %v3996, %v4001
    %v4005 = vmax.f32 %v4003, 0.0
    %v4006 = vmax.f32 %v4004, 0.0
    %4007 = vst [vmem:[%s3244 + $0x20] sm:$0xff] %v4005
    %4008 = vst [vmem:[%s3244 + $0x28] sm:$0xff] %v4006
    %4009 = vst [vmem:[%s3244 + $0x30] sm:$0xff] %v2864
    %4010 = vst [vmem:[%s3244 + $0x38] sm:$0xff] %v2865
    %v4011 = vadd.f32 %v4005, %v2862
    %v4012 = vadd.f32 %v4006, %v2863
    %4013 = vst [vmem:[%s2866 + $0x28] sm:$0xff] %v4011
    %4014 = vst [vmem:[%s2866 + $0x30] sm:$0xff] %v4012
    %v4015 = vld [vmem:[%s2866 + $0x20] sm:$0xff]
    %v4016 = vld [vmem:[%s2866 + $0x28] sm:$0xff]
    %v4017 = vld [vmem:[%s2866 + $0x30] sm:$0xff]
    %v4018 = vmul.f32 %v4015, %v275
    %v4019 = vmul.f32 %v4016, %v279
    %v4020 = vmul.f32 %v4017, %v277
    %4024 = vrot.lane.b32.xlu0 %v4018, 1
    %v4025 = vpop.permute.xlu0 %4024
    %4026 = vrot.lane.b32.xlu0 %v4019, 1
    %v4027 = vpop.permute.xlu0 %4026
    %4028 = vrot.lane.b32.xlu0 %v4020, 1
    %v4029 = vpop.permute.xlu0 %4028
    %v4030 = vsel %vm295, %v4025, %v4027
    %v4031 = vsel %vm295, %v4027, %v4029
    %4034 = vst [vmem:[%s2866 + $0x8] sm:$0xff] %v4030
    %4035 = vst [vmem:[%s2866 + $0x10] sm:$0xff] %v4031
    %v4036 = vld [vmem:[%s2866 + $0x28] sm:$0xff]
    %v4037 = vld [vmem:[%s2866 + $0x30] sm:$0xff]
    %v4038 = vld [vmem:[%s2866 + $0x38] sm:$0xff]
    %v4039 = vmul.f32 %v4036, %v308
    %v4040 = vmul.f32 %v4037, %v311
    %v4041 = vmul.f32 %v4038, %v310
    %4045 = vrot.lane.b32.xlu0 %v4039, 127
    %v4046 = vpop.permute.xlu0 %4045
    %4047 = vrot.lane.b32.xlu0 %v4040, 127
    %v4048 = vpop.permute.xlu0 %4047
    %4049 = vrot.lane.b32.xlu0 %v4041, 127
    %v4050 = vpop.permute.xlu0 %4049
    %v4051 = vsel %vm278, %v4046, %v4048
    %v4052 = vsel %vm278, %v4048, %v4050
    %4055 = vst [vmem:[%s2866 + $0x48] sm:$0xff] %v4051
    %4056 = vst [vmem:[%s2866 + $0x50] sm:$0xff] %v4052
    %v4057 = vld [vmem:[%s2866] sm:$0xff]
    %v4058 = vld [vmem:[%s2866 + $0x8] sm:$0xff]
    %v4059 = vld [vmem:[%s2866 + $0x10] sm:$0xff]
    %v4060 = vld [vmem:[%s2866 + $0x20] sm:$0xff]
    %v4061 = vld [vmem:[%s2866 + $0x28] sm:$0xff]
    %v4062 = vld [vmem:[%s2866 + $0x30] sm:$0xff]
    %v4063 = vld [vmem:[%s2866 + $0x40] sm:$0xff]
    %v4064 = vld [vmem:[%s2866 + $0x48] sm:$0xff]
    %v4065 = vld [vmem:[%s2866 + $0x50] sm:$0xff]
    %v4066 = vld [vmem:[%s1500] sm:$0xff]
    %v4067 = vld [vmem:[%s1502] sm:$0xff]
    %v4069 = vsel %vm345, %v4067, 0
    %4071 = vmatprep.subr.mxu0 0.0
    %4072 = vmatpush1.msra.mxu0 0.0
    %4073 = vmatprep.subr.mxu0 0.0
    %4074 = vmatpush1.msra.mxu0 0.0
    %4075 = vmatprep.subr.mxu0 0.0
    %4076 = vmatpush1.msra.mxu0 0.0
    %4077 = vmatprep.subr.mxu0 0.0
    %4078 = vmatpush1.msra.mxu0 0.0
    %4079 = vmatprep.subr.mxu0 0.0
    %4080 = vmatpush1.msra.mxu0 0.0
    %4081 = vmatprep.subr.mxu0 0.0
    %4082 = vmatpush1.msra.mxu0 0.0
    %4083 = vmatprep.subr.mxu0 0.0
    %4084 = vmatpush1.msra.mxu0 0.0
    %4085 = vmatprep.subr.mxu0 0.0
    %4086 = vmatpush1.msra.mxu0 0.0
    %4087 = vmatprep.subr.mxu0 0.0
    %4088 = vmatpush1.msra.mxu0 0.0
    %4089 = vmatprep.subr.mxu0 0.0
    %4090 = vmatpush1.msra.mxu0 0.0
    %4091 = vmatprep.subr.mxu0 0.0
    %4092 = vmatpush1.msra.mxu0 0.0
    %4093 = vmatprep.subr.mxu0 0.0
    %4094 = vmatpush1.msra.mxu0 0.0
    %4095 = vmatprep.subr.mxu0 0.0
    %4096 = vmatpush1.msra.mxu0 0.0
    %4097 = vmatprep.subr.mxu0 %v4065
    %4098 = vmatpush1.msra.mxu0 %v4064
    %4099 = vmatprep.subr.mxu0 %v4062
    %4100 = vmatpush1.msra.mxu0 %v4061
    %4101 = vmatprep.subr.mxu0 %v4059
    %4102 = vmatpush1.msra.mxu0 %v4058
    %4103 = vmatprep.subr.mxu0 0.0
    %4104 = vmatpush2.msra.mxu0 0.0
    %4105 = vmatprep.subr.mxu0 0.0
    %4106 = vmatpush2.msra.mxu0 0.0
    %4107 = vmatprep.subr.mxu0 0.0
    %4108 = vmatpush2.msra.mxu0 0.0
    %4109 = vmatprep.subr.mxu0 0.0
    %4110 = vmatpush2.msra.mxu0 0.0
    %4111 = vmatprep.subr.mxu0 0.0
    %4112 = vmatpush2.msra.mxu0 0.0
    %4113 = vmatprep.subr.mxu0 0.0
    %4114 = vmatpush2.msra.mxu0 0.0
    %4115 = vmatprep.subr.mxu0 0.0
    %4116 = vmatpush2.msra.mxu0 0.0
    %4117 = vmatprep.subr.mxu0 0.0
    %4118 = vmatpush2.msra.mxu0 0.0
    %4119 = vmatprep.subr.mxu0 0.0
    %4120 = vmatpush2.msra.mxu0 0.0
    %4121 = vmatprep.subr.mxu0 0.0
    %4122 = vmatpush2.msra.mxu0 0.0
    %4123 = vmatprep.subr.mxu0 0.0
    %4124 = vmatpush2.msra.mxu0 0.0
    %4125 = vmatprep.subr.mxu0 0.0
    %4126 = vmatpush2.msra.mxu0 0.0
    %4127 = vmatprep.subr.mxu0 0.0
    %4128 = vmatpush2.msra.mxu0 0.0
    %4129 = vmatprep.subr.mxu0 0.0
    %4130 = vmatpush2.msra.mxu0 0.0
    %4131 = vmatprep.subr.mxu0 0.0
    %4132 = vmatpush2.msra.mxu0 0.0
    %4133 = vmatprep.subr.mxu0 0.0
    %4134 = vmatpush2.msra.mxu0 0.0
    %4135 = vmatprep.mubr.f32.mxu0 0.0
    %4136 = vmatmul.mubr.f32.gmra.mxu0 %v4069
    %v4137 = vpop.f32.mrf.mxu0
    %v4138 = vadd.f32 0.0, %v4137
    %v4139 = vpop.f32.mrf.mxu0
    %v4140 = vadd.f32 0.0, %v4139
    %4141 = vdwg.mxu0
    %4151 = vrot.lane.b32.xlu0 %v4057, 16
    %v4152 = vpop.permute.xlu0 %4151
    %4153 = vrot.lane.b32.xlu0 %v4058, 16
    %v4154 = vpop.permute.xlu0 %4153
    %4155 = vrot.lane.b32.xlu0 %v4059, 16
    %v4156 = vpop.permute.xlu0 %4155
    %4157 = vrot.lane.b32.xlu0 %v4060, 16
    %v4158 = vpop.permute.xlu0 %4157
    %4159 = vrot.lane.b32.xlu0 %v4061, 16
    %v4160 = vpop.permute.xlu0 %4159
    %4161 = vrot.lane.b32.xlu0 %v4062, 16
    %v4162 = vpop.permute.xlu0 %4161
    %4163 = vrot.lane.b32.xlu0 %v4063, 16
    %v4164 = vpop.permute.xlu0 %4163
    %4165 = vrot.lane.b32.xlu0 %v4064, 16
    %v4166 = vpop.permute.xlu0 %4165
    %4167 = vrot.lane.b32.xlu0 %v4065, 16
    %v4168 = vpop.permute.xlu0 %4167
    %v4169 = vsel %vm447, %v4152, %v4154
    %v4170 = vsel %vm447, %v4154, %v4156
    %v4171 = vsel %vm447, %v4158, %v4160
    %v4172 = vsel %vm447, %v4160, %v4162
    %v4173 = vsel %vm447, %v4164, %v4166
    %v4174 = vsel %vm447, %v4166, %v4168
    %v4182 = vsel %vm345, %v4066, 0
    %4184 = vmatprep.subr.mxu0 0.0
    %4185 = vmatpush1.msra.mxu0 0.0
    %4186 = vmatprep.subr.mxu0 0.0
    %4187 = vmatpush1.msra.mxu0 0.0
    %4188 = vmatprep.subr.mxu0 0.0
    %4189 = vmatpush1.msra.mxu0 0.0
    %4190 = vmatprep.subr.mxu0 0.0
    %4191 = vmatpush1.msra.mxu0 0.0
    %4192 = vmatprep.subr.mxu0 0.0
    %4193 = vmatpush1.msra.mxu0 0.0
    %4194 = vmatprep.subr.mxu0 0.0
    %4195 = vmatpush1.msra.mxu0 0.0
    %4196 = vmatprep.subr.mxu0 0.0
    %4197 = vmatpush1.msra.mxu0 0.0
    %4198 = vmatprep.subr.mxu0 0.0
    %4199 = vmatpush1.msra.mxu0 0.0
    %4200 = vmatprep.subr.mxu0 0.0
    %4201 = vmatpush1.msra.mxu0 0.0
    %4202 = vmatprep.subr.mxu0 0.0
    %4203 = vmatpush1.msra.mxu0 0.0
    %4204 = vmatprep.subr.mxu0 0.0
    %4205 = vmatpush1.msra.mxu0 0.0
    %4206 = vmatprep.subr.mxu0 0.0
    %4207 = vmatpush1.msra.mxu0 0.0
    %4208 = vmatprep.subr.mxu0 0.0
    %4209 = vmatpush1.msra.mxu0 0.0
    %4210 = vmatprep.subr.mxu0 %v4174
    %4211 = vmatpush1.msra.mxu0 %v4173
    %4212 = vmatprep.subr.mxu0 %v4172
    %4213 = vmatpush1.msra.mxu0 %v4171
    %4214 = vmatprep.subr.mxu0 %v4170
    %4215 = vmatpush1.msra.mxu0 %v4169
    %4216 = vmatprep.subr.mxu0 0.0
    %4217 = vmatpush2.msra.mxu0 0.0
    %4218 = vmatprep.subr.mxu0 0.0
    %4219 = vmatpush2.msra.mxu0 0.0
    %4220 = vmatprep.subr.mxu0 0.0
    %4221 = vmatpush2.msra.mxu0 0.0
    %4222 = vmatprep.subr.mxu0 0.0
    %4223 = vmatpush2.msra.mxu0 0.0
    %4224 = vmatprep.subr.mxu0 0.0
    %4225 = vmatpush2.msra.mxu0 0.0
    %4226 = vmatprep.subr.mxu0 0.0
    %4227 = vmatpush2.msra.mxu0 0.0
    %4228 = vmatprep.subr.mxu0 0.0
    %4229 = vmatpush2.msra.mxu0 0.0
    %4230 = vmatprep.subr.mxu0 0.0
    %4231 = vmatpush2.msra.mxu0 0.0
    %4232 = vmatprep.subr.mxu0 0.0
    %4233 = vmatpush2.msra.mxu0 0.0
    %4234 = vmatprep.subr.mxu0 0.0
    %4235 = vmatpush2.msra.mxu0 0.0
    %4236 = vmatprep.subr.mxu0 0.0
    %4237 = vmatpush2.msra.mxu0 0.0
    %4238 = vmatprep.subr.mxu0 0.0
    %4239 = vmatpush2.msra.mxu0 0.0
    %4240 = vmatprep.subr.mxu0 0.0
    %4241 = vmatpush2.msra.mxu0 0.0
    %4242 = vmatprep.subr.mxu0 0.0
    %4243 = vmatpush2.msra.mxu0 0.0
    %4244 = vmatprep.subr.mxu0 0.0
    %4245 = vmatpush2.msra.mxu0 0.0
    %4246 = vmatprep.subr.mxu0 0.0
    %4247 = vmatpush2.msra.mxu0 0.0
    %4248 = vmatprep.mubr.f32.mxu0 0.0
    %4249 = vmatmul.mubr.f32.gmra.mxu0 %v4182
    %v4250 = vpop.f32.mrf.mxu0
    %v4251 = vadd.f32 %v4138, %v4250
    %v4252 = vpop.f32.mrf.mxu0
    %v4253 = vadd.f32 %v4140, %v4252
    %4254 = vdwg.mxu0
    %v4255 = vld [vmem:[%s2866 + $0x8] sm:$0xff]
    %v4256 = vld [vmem:[%s2866 + $0x10] sm:$0xff]
    %v4257 = vld [vmem:[%s2866 + $0x18] sm:$0xff]
    %v4258 = vld [vmem:[%s2866 + $0x28] sm:$0xff]
    %v4259 = vld [vmem:[%s2866 + $0x30] sm:$0xff]
    %v4260 = vld [vmem:[%s2866 + $0x38] sm:$0xff]
    %v4261 = vld [vmem:[%s2866 + $0x48] sm:$0xff]
    %v4262 = vld [vmem:[%s2866 + $0x50] sm:$0xff]
    %v4263 = vld [vmem:[%s2866 + $0x58] sm:$0xff]
    %v4264 = vld [vmem:[%s1700] sm:$0xff]
    %4274 = vrot.lane.b32.xlu0 %v4255, 112
    %v4275 = vpop.permute.xlu0 %4274
    %4276 = vrot.lane.b32.xlu0 %v4256, 112
    %v4277 = vpop.permute.xlu0 %4276
    %4278 = vrot.lane.b32.xlu0 %v4257, 112
    %v4279 = vpop.permute.xlu0 %4278
    %4280 = vrot.lane.b32.xlu0 %v4258, 112
    %v4281 = vpop.permute.xlu0 %4280
    %4282 = vrot.lane.b32.xlu0 %v4259, 112
    %v4283 = vpop.permute.xlu0 %4282
    %4284 = vrot.lane.b32.xlu0 %v4260, 112
    %v4285 = vpop.permute.xlu0 %4284
    %4286 = vrot.lane.b32.xlu0 %v4261, 112
    %v4287 = vpop.permute.xlu0 %4286
    %4288 = vrot.lane.b32.xlu0 %v4262, 112
    %v4289 = vpop.permute.xlu0 %4288
    %4290 = vrot.lane.b32.xlu0 %v4263, 112
    %v4291 = vpop.permute.xlu0 %4290
    %v4292 = vsel %vm572, %v4275, %v4277
    %v4293 = vsel %vm572, %v4277, %v4279
    %v4294 = vsel %vm572, %v4281, %v4283
    %v4295 = vsel %vm572, %v4283, %v4285
    %v4296 = vsel %vm572, %v4287, %v4289
    %v4297 = vsel %vm572, %v4289, %v4291
    %v4305 = vsel %vm345, %v4264, 0
    %4307 = vmatprep.subr.mxu0 0.0
    %4308 = vmatpush1.msra.mxu0 0.0
    %4309 = vmatprep.subr.mxu0 0.0
    %4310 = vmatpush1.msra.mxu0 0.0
    %4311 = vmatprep.subr.mxu0 0.0
    %4312 = vmatpush1.msra.mxu0 0.0
    %4313 = vmatprep.subr.mxu0 0.0
    %4314 = vmatpush1.msra.mxu0 0.0
    %4315 = vmatprep.subr.mxu0 0.0
    %4316 = vmatpush1.msra.mxu0 0.0
    %4317 = vmatprep.subr.mxu0 0.0
    %4318 = vmatpush1.msra.mxu0 0.0
    %4319 = vmatprep.subr.mxu0 0.0
    %4320 = vmatpush1.msra.mxu0 0.0
    %4321 = vmatprep.subr.mxu0 0.0
    %4322 = vmatpush1.msra.mxu0 0.0
    %4323 = vmatprep.subr.mxu0 0.0
    %4324 = vmatpush1.msra.mxu0 0.0
    %4325 = vmatprep.subr.mxu0 0.0
    %4326 = vmatpush1.msra.mxu0 0.0
    %4327 = vmatprep.subr.mxu0 0.0
    %4328 = vmatpush1.msra.mxu0 0.0
    %4329 = vmatprep.subr.mxu0 0.0
    %4330 = vmatpush1.msra.mxu0 0.0
    %4331 = vmatprep.subr.mxu0 0.0
    %4332 = vmatpush1.msra.mxu0 0.0
    %4333 = vmatprep.subr.mxu0 %v4297
    %4334 = vmatpush1.msra.mxu0 %v4296
    %4335 = vmatprep.subr.mxu0 %v4295
    %4336 = vmatpush1.msra.mxu0 %v4294
    %4337 = vmatprep.subr.mxu0 %v4293
    %4338 = vmatpush1.msra.mxu0 %v4292
    %4339 = vmatprep.subr.mxu0 0.0
    %4340 = vmatpush2.msra.mxu0 0.0
    %4341 = vmatprep.subr.mxu0 0.0
    %4342 = vmatpush2.msra.mxu0 0.0
    %4343 = vmatprep.subr.mxu0 0.0
    %4344 = vmatpush2.msra.mxu0 0.0
    %4345 = vmatprep.subr.mxu0 0.0
    %4346 = vmatpush2.msra.mxu0 0.0
    %4347 = vmatprep.subr.mxu0 0.0
    %4348 = vmatpush2.msra.mxu0 0.0
    %4349 = vmatprep.subr.mxu0 0.0
    %4350 = vmatpush2.msra.mxu0 0.0
    %4351 = vmatprep.subr.mxu0 0.0
    %4352 = vmatpush2.msra.mxu0 0.0
    %4353 = vmatprep.subr.mxu0 0.0
    %4354 = vmatpush2.msra.mxu0 0.0
    %4355 = vmatprep.subr.mxu0 0.0
    %4356 = vmatpush2.msra.mxu0 0.0
    %4357 = vmatprep.subr.mxu0 0.0
    %4358 = vmatpush2.msra.mxu0 0.0
    %4359 = vmatprep.subr.mxu0 0.0
    %4360 = vmatpush2.msra.mxu0 0.0
    %4361 = vmatprep.subr.mxu0 0.0
    %4362 = vmatpush2.msra.mxu0 0.0
    %4363 = vmatprep.subr.mxu0 0.0
    %4364 = vmatpush2.msra.mxu0 0.0
    %4365 = vmatprep.subr.mxu0 0.0
    %4366 = vmatpush2.msra.mxu0 0.0
    %4367 = vmatprep.subr.mxu0 0.0
    %4368 = vmatpush2.msra.mxu0 0.0
    %4369 = vmatprep.subr.mxu0 0.0
    %4370 = vmatpush2.msra.mxu0 0.0
    %4371 = vmatprep.mubr.f32.mxu0 0.0
    %4372 = vmatmul.mubr.f32.gmra.mxu0 %v4305
    %v4373 = vpop.f32.mrf.mxu0
    %v4374 = vadd.f32 0.0, %v4373
    %v4375 = vpop.f32.mrf.mxu0
    %v4376 = vadd.f32 0.0, %v4375
    %4377 = vdwg.mxu0
    %v4378 = vadd.f32 %v4251, %v4374
    %v4379 = vadd.f32 %v4253, %v4376
    %v4380 = vld [vmem:[%s1817] sm:$0xff]
    %4382 = vset.pattern.permute.xlu0 0
    %4383 = vperm.xlu0 %4382, %v4380
    %v4384 = vpop.permute.xlu0 %4383
    %v4386 = vadd.f32 %v4378, %v4384
    %v4387 = vadd.f32 %v4379, %v4384
    %v4388 = vmax.f32 %v4386, 0.0
    %v4389 = vmax.f32 %v4387, 0.0
    %4390 = vst [vmem:[%s3244 + $0x40] sm:$0xff] %v4388
    %4391 = vst [vmem:[%s3244 + $0x48] sm:$0xff] %v4389
    %v4392 = vadd.f32 %v4388, %v2860
    %v4393 = vadd.f32 %v4389, %v2861
    %4394 = vst [vmem:[%s2866 + $0x28] sm:$0xff] %v4392
    %4395 = vst [vmem:[%s2866 + $0x30] sm:$0xff] %v4393
    %v4396 = vld [vmem:[%s2866 + $0x20] sm:$0xff]
    %v4397 = vld [vmem:[%s2866 + $0x28] sm:$0xff]
    %v4398 = vld [vmem:[%s2866 + $0x30] sm:$0xff]
    %v4399 = vmul.f32 %v4396, %v275
    %v4400 = vmul.f32 %v4397, %v279
    %v4401 = vmul.f32 %v4398, %v277
    %4405 = vrot.lane.b32.xlu0 %v4399, 1
    %v4406 = vpop.permute.xlu0 %4405
    %4407 = vrot.lane.b32.xlu0 %v4400, 1
    %v4408 = vpop.permute.xlu0 %4407
    %4409 = vrot.lane.b32.xlu0 %v4401, 1
    %v4410 = vpop.permute.xlu0 %4409
    %v4411 = vsel %vm295, %v4406, %v4408
    %v4412 = vsel %vm295, %v4408, %v4410
    %4415 = vst [vmem:[%s2866 + $0x8] sm:$0xff] %v4411
    %4416 = vst [vmem:[%s2866 + $0x10] sm:$0xff] %v4412
    %v4417 = vld [vmem:[%s2866 + $0x28] sm:$0xff]
    %v4418 = vld [vmem:[%s2866 + $0x30] sm:$0xff]
    %v4419 = vld [vmem:[%s2866 + $0x38] sm:$0xff]
    %v4420 = vmul.f32 %v4417, %v308
    %v4421 = vmul.f32 %v4418, %v311
    %v4422 = vmul.f32 %v4419, %v310
    %4426 = vrot.lane.b32.xlu0 %v4420, 127
    %v4427 = vpop.permute.xlu0 %4426
    %4428 = vrot.lane.b32.xlu0 %v4421, 127
    %v4429 = vpop.permute.xlu0 %4428
    %4430 = vrot.lane.b32.xlu0 %v4422, 127
    %v4431 = vpop.permute.xlu0 %4430
    %v4432 = vsel %vm278, %v4427, %v4429
    %v4433 = vsel %vm278, %v4429, %v4431
    %4436 = vst [vmem:[%s2866 + $0x48] sm:$0xff] %v4432
    %4437 = vst [vmem:[%s2866 + $0x50] sm:$0xff] %v4433
    %v4438 = vld [vmem:[%s2866] sm:$0xff]
    %v4439 = vld [vmem:[%s2866 + $0x8] sm:$0xff]
    %v4440 = vld [vmem:[%s2866 + $0x10] sm:$0xff]
    %v4441 = vld [vmem:[%s2866 + $0x20] sm:$0xff]
    %v4442 = vld [vmem:[%s2866 + $0x28] sm:$0xff]
    %v4443 = vld [vmem:[%s2866 + $0x30] sm:$0xff]
    %v4444 = vld [vmem:[%s2866 + $0x40] sm:$0xff]
    %v4445 = vld [vmem:[%s2866 + $0x48] sm:$0xff]
    %v4446 = vld [vmem:[%s2866 + $0x50] sm:$0xff]
    %v4447 = vld [vmem:[%s1885] sm:$0xff]
    %v4448 = vld [vmem:[%s1887] sm:$0xff]
    %v4450 = vsel %vm345, %v4448, 0
    %4452 = vmatprep.subr.mxu0 0.0
    %4453 = vmatpush1.msra.mxu0 0.0
    %4454 = vmatprep.subr.mxu0 0.0
    %4455 = vmatpush1.msra.mxu0 0.0
    %4456 = vmatprep.subr.mxu0 0.0
    %4457 = vmatpush1.msra.mxu0 0.0
    %4458 = vmatprep.subr.mxu0 0.0
    %4459 = vmatpush1.msra.mxu0 0.0
    %4460 = vmatprep.subr.mxu0 0.0
    %4461 = vmatpush1.msra.mxu0 0.0
    %4462 = vmatprep.subr.mxu0 0.0
    %4463 = vmatpush1.msra.mxu0 0.0
    %4464 = vmatprep.subr.mxu0 0.0
    %4465 = vmatpush1.msra.mxu0 0.0
    %4466 = vmatprep.subr.mxu0 0.0
    %4467 = vmatpush1.msra.mxu0 0.0
    %4468 = vmatprep.subr.mxu0 0.0
    %4469 = vmatpush1.msra.mxu0 0.0
    %4470 = vmatprep.subr.mxu0 0.0
    %4471 = vmatpush1.msra.mxu0 0.0
    %4472 = vmatprep.subr.mxu0 0.0
    %4473 = vmatpush1.msra.mxu0 0.0
    %4474 = vmatprep.subr.mxu0 0.0
    %4475 = vmatpush1.msra.mxu0 0.0
    %4476 = vmatprep.subr.mxu0 0.0
    %4477 = vmatpush1.msra.mxu0 0.0
    %4478 = vmatprep.subr.mxu0 %v4446
    %4479 = vmatpush1.msra.mxu0 %v4445
    %4480 = vmatprep.subr.mxu0 %v4443
    %4481 = vmatpush1.msra.mxu0 %v4442
    %4482 = vmatprep.subr.mxu0 %v4440
    %4483 = vmatpush1.msra.mxu0 %v4439
    %4484 = vmatprep.subr.mxu0 0.0
    %4485 = vmatpush2.msra.mxu0 0.0
    %4486 = vmatprep.subr.mxu0 0.0
    %4487 = vmatpush2.msra.mxu0 0.0
    %4488 = vmatprep.subr.mxu0 0.0
    %4489 = vmatpush2.msra.mxu0 0.0
    %4490 = vmatprep.subr.mxu0 0.0
    %4491 = vmatpush2.msra.mxu0 0.0
    %4492 = vmatprep.subr.mxu0 0.0
    %4493 = vmatpush2.msra.mxu0 0.0
    %4494 = vmatprep.subr.mxu0 0.0
    %4495 = vmatpush2.msra.mxu0 0.0
    %4496 = vmatprep.subr.mxu0 0.0
    %4497 = vmatpush2.msra.mxu0 0.0
    %4498 = vmatprep.subr.mxu0 0.0
    %4499 = vmatpush2.msra.mxu0 0.0
    %4500 = vmatprep.subr.mxu0 0.0
    %4501 = vmatpush2.msra.mxu0 0.0
    %4502 = vmatprep.subr.mxu0 0.0
    %4503 = vmatpush2.msra.mxu0 0.0
    %4504 = vmatprep.subr.mxu0 0.0
    %4505 = vmatpush2.msra.mxu0 0.0
    %4506 = vmatprep.subr.mxu0 0.0
    %4507 = vmatpush2.msra.mxu0 0.0
    %4508 = vmatprep.subr.mxu0 0.0
    %4509 = vmatpush2.msra.mxu0 0.0
    %4510 = vmatprep.subr.mxu0 0.0
    %4511 = vmatpush2.msra.mxu0 0.0
    %4512 = vmatprep.subr.mxu0 0.0
    %4513 = vmatpush2.msra.mxu0 0.0
    %4514 = vmatprep.subr.mxu0 0.0
    %4515 = vmatpush2.msra.mxu0 0.0
    %4516 = vmatprep.mubr.f32.mxu0 0.0
    %4517 = vmatmul.mubr.f32.gmra.mxu0 %v4450
    %v4518 = vpop.f32.mrf.mxu0
    %v4519 = vadd.f32 0.0, %v4518
    %v4520 = vpop.f32.mrf.mxu0
    %v4521 = vadd.f32 0.0, %v4520
    %4522 = vdwg.mxu0
    %4532 = vrot.lane.b32.xlu0 %v4438, 16
    %v4533 = vpop.permute.xlu0 %4532
    %4534 = vrot.lane.b32.xlu0 %v4439, 16
    %v4535 = vpop.permute.xlu0 %4534
    %4536 = vrot.lane.b32.xlu0 %v4440, 16
    %v4537 = vpop.permute.xlu0 %4536
    %4538 = vrot.lane.b32.xlu0 %v4441, 16
    %v4539 = vpop.permute.xlu0 %4538
    %4540 = vrot.lane.b32.xlu0 %v4442, 16
    %v4541 = vpop.permute.xlu0 %4540
    %4542 = vrot.lane.b32.xlu0 %v4443, 16
    %v4543 = vpop.permute.xlu0 %4542
    %4544 = vrot.lane.b32.xlu0 %v4444, 16
    %v4545 = vpop.permute.xlu0 %4544
    %4546 = vrot.lane.b32.xlu0 %v4445, 16
    %v4547 = vpop.permute.xlu0 %4546
    %4548 = vrot.lane.b32.xlu0 %v4446, 16
    %v4549 = vpop.permute.xlu0 %4548
    %v4550 = vsel %vm447, %v4533, %v4535
    %v4551 = vsel %vm447, %v4535, %v4537
    %v4552 = vsel %vm447, %v4539, %v4541
    %v4553 = vsel %vm447, %v4541, %v4543
    %v4554 = vsel %vm447, %v4545, %v4547
    %v4555 = vsel %vm447, %v4547, %v4549
    %v4563 = vsel %vm345, %v4447, 0
    %4565 = vmatprep.subr.mxu0 0.0
    %4566 = vmatpush1.msra.mxu0 0.0
    %4567 = vmatprep.subr.mxu0 0.0
    %4568 = vmatpush1.msra.mxu0 0.0
    %4569 = vmatprep.subr.mxu0 0.0
    %4570 = vmatpush1.msra.mxu0 0.0
    %4571 = vmatprep.subr.mxu0 0.0
    %4572 = vmatpush1.msra.mxu0 0.0
    %4573 = vmatprep.subr.mxu0 0.0
    %4574 = vmatpush1.msra.mxu0 0.0
    %4575 = vmatprep.subr.mxu0 0.0
    %4576 = vmatpush1.msra.mxu0 0.0
    %4577 = vmatprep.subr.mxu0 0.0
    %4578 = vmatpush1.msra.mxu0 0.0
    %4579 = vmatprep.subr.mxu0 0.0
    %4580 = vmatpush1.msra.mxu0 0.0
    %4581 = vmatprep.subr.mxu0 0.0
    %4582 = vmatpush1.msra.mxu0 0.0
    %4583 = vmatprep.subr.mxu0 0.0
    %4584 = vmatpush1.msra.mxu0 0.0
    %4585 = vmatprep.subr.mxu0 0.0
    %4586 = vmatpush1.msra.mxu0 0.0
    %4587 = vmatprep.subr.mxu0 0.0
    %4588 = vmatpush1.msra.mxu0 0.0
    %4589 = vmatprep.subr.mxu0 0.0
    %4590 = vmatpush1.msra.mxu0 0.0
    %4591 = vmatprep.subr.mxu0 %v4555
    %4592 = vmatpush1.msra.mxu0 %v4554
    %4593 = vmatprep.subr.mxu0 %v4553
    %4594 = vmatpush1.msra.mxu0 %v4552
    %4595 = vmatprep.subr.mxu0 %v4551
    %4596 = vmatpush1.msra.mxu0 %v4550
    %4597 = vmatprep.subr.mxu0 0.0
    %4598 = vmatpush2.msra.mxu0 0.0
    %4599 = vmatprep.subr.mxu0 0.0
    %4600 = vmatpush2.msra.mxu0 0.0
    %4601 = vmatprep.subr.mxu0 0.0
    %4602 = vmatpush2.msra.mxu0 0.0
    %4603 = vmatprep.subr.mxu0 0.0
    %4604 = vmatpush2.msra.mxu0 0.0
    %4605 = vmatprep.subr.mxu0 0.0
    %4606 = vmatpush2.msra.mxu0 0.0
    %4607 = vmatprep.subr.mxu0 0.0
    %4608 = vmatpush2.msra.mxu0 0.0
    %4609 = vmatprep.subr.mxu0 0.0
    %4610 = vmatpush2.msra.mxu0 0.0
    %4611 = vmatprep.subr.mxu0 0.0
    %4612 = vmatpush2.msra.mxu0 0.0
    %4613 = vmatprep.subr.mxu0 0.0
    %4614 = vmatpush2.msra.mxu0 0.0
    %4615 = vmatprep.subr.mxu0 0.0
    %4616 = vmatpush2.msra.mxu0 0.0
    %4617 = vmatprep.subr.mxu0 0.0
    %4618 = vmatpush2.msra.mxu0 0.0
    %4619 = vmatprep.subr.mxu0 0.0
    %4620 = vmatpush2.msra.mxu0 0.0
    %4621 = vmatprep.subr.mxu0 0.0
    %4622 = vmatpush2.msra.mxu0 0.0
    %4623 = vmatprep.subr.mxu0 0.0
    %4624 = vmatpush2.msra.mxu0 0.0
    %4625 = vmatprep.subr.mxu0 0.0
    %4626 = vmatpush2.msra.mxu0 0.0
    %4627 = vmatprep.subr.mxu0 0.0
    %4628 = vmatpush2.msra.mxu0 0.0
    %4629 = vmatprep.mubr.f32.mxu0 0.0
    %4630 = vmatmul.mubr.f32.gmra.mxu0 %v4563
    %v4631 = vpop.f32.mrf.mxu0
    %v4632 = vadd.f32 %v4519, %v4631
    %v4633 = vpop.f32.mrf.mxu0
    %v4634 = vadd.f32 %v4521, %v4633
    %4635 = vdwg.mxu0
    %v4636 = vld [vmem:[%s2866 + $0x8] sm:$0xff]
    %v4637 = vld [vmem:[%s2866 + $0x10] sm:$0xff]
    %v4638 = vld [vmem:[%s2866 + $0x18] sm:$0xff]
    %v4639 = vld [vmem:[%s2866 + $0x28] sm:$0xff]
    %v4640 = vld [vmem:[%s2866 + $0x30] sm:$0xff]
    %v4641 = vld [vmem:[%s2866 + $0x38] sm:$0xff]
    %v4642 = vld [vmem:[%s2866 + $0x48] sm:$0xff]
    %v4643 = vld [vmem:[%s2866 + $0x50] sm:$0xff]
    %v4644 = vld [vmem:[%s2866 + $0x58] sm:$0xff]
    %v4645 = vld [vmem:[%s2085] sm:$0xff]
    %4655 = vrot.lane.b32.xlu0 %v4636, 112
    %v4656 = vpop.permute.xlu0 %4655
    %4657 = vrot.lane.b32.xlu0 %v4637, 112
    %v4658 = vpop.permute.xlu0 %4657
    %4659 = vrot.lane.b32.xlu0 %v4638, 112
    %v4660 = vpop.permute.xlu0 %4659
    %4661 = vrot.lane.b32.xlu0 %v4639, 112
    %v4662 = vpop.permute.xlu0 %4661
    %4663 = vrot.lane.b32.xlu0 %v4640, 112
    %v4664 = vpop.permute.xlu0 %4663
    %4665 = vrot.lane.b32.xlu0 %v4641, 112
    %v4666 = vpop.permute.xlu0 %4665
    %4667 = vrot.lane.b32.xlu0 %v4642, 112
    %v4668 = vpop.permute.xlu0 %4667
    %4669 = vrot.lane.b32.xlu0 %v4643, 112
    %v4670 = vpop.permute.xlu0 %4669
    %4671 = vrot.lane.b32.xlu0 %v4644, 112
    %v4672 = vpop.permute.xlu0 %4671
    %v4673 = vsel %vm572, %v4656, %v4658
    %v4674 = vsel %vm572, %v4658, %v4660
    %v4675 = vsel %vm572, %v4662, %v4664
    %v4676 = vsel %vm572, %v4664, %v4666
    %v4677 = vsel %vm572, %v4668, %v4670
    %v4678 = vsel %vm572, %v4670, %v4672
    %v4686 = vsel %vm345, %v4645, 0
    %4688 = vmatprep.subr.mxu0 0.0
    %4689 = vmatpush1.msra.mxu0 0.0
    %4690 = vmatprep.subr.mxu0 0.0
    %4691 = vmatpush1.msra.mxu0 0.0
    %4692 = vmatprep.subr.mxu0 0.0
    %4693 = vmatpush1.msra.mxu0 0.0
    %4694 = vmatprep.subr.mxu0 0.0
    %4695 = vmatpush1.msra.mxu0 0.0
    %4696 = vmatprep.subr.mxu0 0.0
    %4697 = vmatpush1.msra.mxu0 0.0
    %4698 = vmatprep.subr.mxu0 0.0
    %4699 = vmatpush1.msra.mxu0 0.0
    %4700 = vmatprep.subr.mxu0 0.0
    %4701 = vmatpush1.msra.mxu0 0.0
    %4702 = vmatprep.subr.mxu0 0.0
    %4703 = vmatpush1.msra.mxu0 0.0
    %4704 = vmatprep.subr.mxu0 0.0
    %4705 = vmatpush1.msra.mxu0 0.0
    %4706 = vmatprep.subr.mxu0 0.0
    %4707 = vmatpush1.msra.mxu0 0.0
    %4708 = vmatprep.subr.mxu0 0.0
    %4709 = vmatpush1.msra.mxu0 0.0
    %4710 = vmatprep.subr.mxu0 0.0
    %4711 = vmatpush1.msra.mxu0 0.0
    %4712 = vmatprep.subr.mxu0 0.0
    %4713 = vmatpush1.msra.mxu0 0.0
    %4714 = vmatprep.subr.mxu0 %v4678
    %4715 = vmatpush1.msra.mxu0 %v4677
    %4716 = vmatprep.subr.mxu0 %v4676
    %4717 = vmatpush1.msra.mxu0 %v4675
    %4718 = vmatprep.subr.mxu0 %v4674
    %4719 = vmatpush1.msra.mxu0 %v4673
    %4720 = vmatprep.subr.mxu0 0.0
    %4721 = vmatpush2.msra.mxu0 0.0
    %4722 = vmatprep.subr.mxu0 0.0
    %4723 = vmatpush2.msra.mxu0 0.0
    %4724 = vmatprep.subr.mxu0 0.0
    %4725 = vmatpush2.msra.mxu0 0.0
    %4726 = vmatprep.subr.mxu0 0.0
    %4727 = vmatpush2.msra.mxu0 0.0
    %4728 = vmatprep.subr.mxu0 0.0
    %4729 = vmatpush2.msra.mxu0 0.0
    %4730 = vmatprep.subr.mxu0 0.0
    %4731 = vmatpush2.msra.mxu0 0.0
    %4732 = vmatprep.subr.mxu0 0.0
    %4733 = vmatpush2.msra.mxu0 0.0
    %4734 = vmatprep.subr.mxu0 0.0
    %4735 = vmatpush2.msra.mxu0 0.0
    %4736 = vmatprep.subr.mxu0 0.0
    %4737 = vmatpush2.msra.mxu0 0.0
    %4738 = vmatprep.subr.mxu0 0.0
    %4739 = vmatpush2.msra.mxu0 0.0
    %4740 = vmatprep.subr.mxu0 0.0
    %4741 = vmatpush2.msra.mxu0 0.0
    %4742 = vmatprep.subr.mxu0 0.0
    %4743 = vmatpush2.msra.mxu0 0.0
    %4744 = vmatprep.subr.mxu0 0.0
    %4745 = vmatpush2.msra.mxu0 0.0
    %4746 = vmatprep.subr.mxu0 0.0
    %4747 = vmatpush2.msra.mxu0 0.0
    %4748 = vmatprep.subr.mxu0 0.0
    %4749 = vmatpush2.msra.mxu0 0.0
    %4750 = vmatprep.subr.mxu0 0.0
    %4751 = vmatpush2.msra.mxu0 0.0
    %4752 = vmatprep.mubr.f32.mxu0 0.0
    %4753 = vmatmul.mubr.f32.gmra.mxu0 %v4686
    %v4754 = vpop.f32.mrf.mxu0
    %v4755 = vadd.f32 0.0, %v4754
    %v4756 = vpop.f32.mrf.mxu0
    %v4757 = vadd.f32 0.0, %v4756
    %4758 = vdwg.mxu0
    %v4759 = vadd.f32 %v4632, %v4755
    %v4760 = vadd.f32 %v4634, %v4757
    %v4761 = vld [vmem:[%s2202] sm:$0xff]
    %4763 = vset.pattern.permute.xlu0 0
    %4764 = vperm.xlu0 %4763, %v4761
    %v4765 = vpop.permute.xlu0 %4764
    %v4767 = vadd.f32 %v4759, %v4765
    %v4768 = vadd.f32 %v4760, %v4765
    %v4769 = vmax.f32 %v4767, 0.0
    %v4770 = vmax.f32 %v4768, 0.0
    %4771 = vst [vmem:[%s3244 + $0x50] sm:$0xff] %v4769
    %4772 = vst [vmem:[%s3244 + $0x58] sm:$0xff] %v4770
    %4773 = vst [vmem:[%s2866 + $0x28] sm:$0xff] %v2858
    %4774 = vst [vmem:[%s2866 + $0x30] sm:$0xff] %v2859
    %v4775 = vld [vmem:[%s2866 + $0x20] sm:$0xff]
    %v4776 = vld [vmem:[%s2866 + $0x28] sm:$0xff]
    %v4777 = vld [vmem:[%s2866 + $0x30] sm:$0xff]
    %v4778 = vmul.f32 %v4775, %v275
    %v4779 = vmul.f32 %v4776, %v279
    %v4780 = vmul.f32 %v4777, %v277
    %4784 = vrot.lane.b32.xlu0 %v4778, 1
    %v4785 = vpop.permute.xlu0 %4784
    %4786 = vrot.lane.b32.xlu0 %v4779, 1
    %v4787 = vpop.permute.xlu0 %4786
    %4788 = vrot.lane.b32.xlu0 %v4780, 1
    %v4789 = vpop.permute.xlu0 %4788
    %v4790 = vsel %vm295, %v4785, %v4787
    %v4791 = vsel %vm295, %v4787, %v4789
    %4794 = vst [vmem:[%s2866 + $0x8] sm:$0xff] %v4790
    %4795 = vst [vmem:[%s2866 + $0x10] sm:$0xff] %v4791
    %v4796 = vld [vmem:[%s2866 + $0x28] sm:$0xff]
    %v4797 = vld [vmem:[%s2866 + $0x30] sm:$0xff]
    %v4798 = vld [vmem:[%s2866 + $0x38] sm:$0xff]
    %v4799 = vmul.f32 %v4796, %v308
    %v4800 = vmul.f32 %v4797, %v311
    %v4801 = vmul.f32 %v4798, %v310
    %4805 = vrot.lane.b32.xlu0 %v4799, 127
    %v4806 = vpop.permute.xlu0 %4805
    %4807 = vrot.lane.b32.xlu0 %v4800, 127
    %v4808 = vpop.permute.xlu0 %4807
    %4809 = vrot.lane.b32.xlu0 %v4801, 127
    %v4810 = vpop.permute.xlu0 %4809
    %v4811 = vsel %vm278, %v4806, %v4808
    %v4812 = vsel %vm278, %v4808, %v4810
    %4815 = vst [vmem:[%s2866 + $0x48] sm:$0xff] %v4811
    %4816 = vst [vmem:[%s2866 + $0x50] sm:$0xff] %v4812
    %v4817 = vld [vmem:[%s2866] sm:$0xff]
    %v4818 = vld [vmem:[%s2866 + $0x8] sm:$0xff]
    %v4819 = vld [vmem:[%s2866 + $0x10] sm:$0xff]
    %v4820 = vld [vmem:[%s2866 + $0x20] sm:$0xff]
    %v4821 = vld [vmem:[%s2866 + $0x28] sm:$0xff]
    %v4822 = vld [vmem:[%s2866 + $0x30] sm:$0xff]
    %v4823 = vld [vmem:[%s2866 + $0x40] sm:$0xff]
    %v4824 = vld [vmem:[%s2866 + $0x48] sm:$0xff]
    %v4825 = vld [vmem:[%s2866 + $0x50] sm:$0xff]
    %v4826 = vld [vmem:[#allocation7] sm:$0xff]
    %v4827 = vld [vmem:[%s2269] sm:$0xff]
    %v4829 = vsel %vm345, %v4827, 0
    %4831 = vmatprep.subr.mxu0 0.0
    %4832 = vmatpush1.msra.mxu0 0.0
    %4833 = vmatprep.subr.mxu0 0.0
    %4834 = vmatpush1.msra.mxu0 0.0
    %4835 = vmatprep.subr.mxu0 0.0
    %4836 = vmatpush1.msra.mxu0 0.0
    %4837 = vmatprep.subr.mxu0 0.0
    %4838 = vmatpush1.msra.mxu0 0.0
    %4839 = vmatprep.subr.mxu0 0.0
    %4840 = vmatpush1.msra.mxu0 0.0
    %4841 = vmatprep.subr.mxu0 0.0
    %4842 = vmatpush1.msra.mxu0 0.0
    %4843 = vmatprep.subr.mxu0 0.0
    %4844 = vmatpush1.msra.mxu0 0.0
    %4845 = vmatprep.subr.mxu0 0.0
    %4846 = vmatpush1.msra.mxu0 0.0
    %4847 = vmatprep.subr.mxu0 0.0
    %4848 = vmatpush1.msra.mxu0 0.0
    %4849 = vmatprep.subr.mxu0 0.0
    %4850 = vmatpush1.msra.mxu0 0.0
    %4851 = vmatprep.subr.mxu0 0.0
    %4852 = vmatpush1.msra.mxu0 0.0
    %4853 = vmatprep.subr.mxu0 0.0
    %4854 = vmatpush1.msra.mxu0 0.0
    %4855 = vmatprep.subr.mxu0 0.0
    %4856 = vmatpush1.msra.mxu0 0.0
    %4857 = vmatprep.subr.mxu0 %v4825
    %4858 = vmatpush1.msra.mxu0 %v4824
    %4859 = vmatprep.subr.mxu0 %v4822
    %4860 = vmatpush1.msra.mxu0 %v4821
    %4861 = vmatprep.subr.mxu0 %v4819
    %4862 = vmatpush1.msra.mxu0 %v4818
    %4863 = vmatprep.subr.mxu0 0.0
    %4864 = vmatpush2.msra.mxu0 0.0
    %4865 = vmatprep.subr.mxu0 0.0
    %4866 = vmatpush2.msra.mxu0 0.0
    %4867 = vmatprep.subr.mxu0 0.0
    %4868 = vmatpush2.msra.mxu0 0.0
    %4869 = vmatprep.subr.mxu0 0.0
    %4870 = vmatpush2.msra.mxu0 0.0
    %4871 = vmatprep.subr.mxu0 0.0
    %4872 = vmatpush2.msra.mxu0 0.0
    %4873 = vmatprep.subr.mxu0 0.0
    %4874 = vmatpush2.msra.mxu0 0.0
    %4875 = vmatprep.subr.mxu0 0.0
    %4876 = vmatpush2.msra.mxu0 0.0
    %4877 = vmatprep.subr.mxu0 0.0
    %4878 = vmatpush2.msra.mxu0 0.0
    %4879 = vmatprep.subr.mxu0 0.0
    %4880 = vmatpush2.msra.mxu0 0.0
    %4881 = vmatprep.subr.mxu0 0.0
    %4882 = vmatpush2.msra.mxu0 0.0
    %4883 = vmatprep.subr.mxu0 0.0
    %4884 = vmatpush2.msra.mxu0 0.0
    %4885 = vmatprep.subr.mxu0 0.0
    %4886 = vmatpush2.msra.mxu0 0.0
    %4887 = vmatprep.subr.mxu0 0.0
    %4888 = vmatpush2.msra.mxu0 0.0
    %4889 = vmatprep.subr.mxu0 0.0
    %4890 = vmatpush2.msra.mxu0 0.0
    %4891 = vmatprep.subr.mxu0 0.0
    %4892 = vmatpush2.msra.mxu0 0.0
    %4893 = vmatprep.subr.mxu0 0.0
    %4894 = vmatpush2.msra.mxu0 0.0
    %4895 = vmatprep.mubr.f32.mxu0 0.0
    %4896 = vmatmul.mubr.f32.gmra.mxu0 %v4829
    %v4897 = vpop.f32.mrf.mxu0
    %v4898 = vadd.f32 0.0, %v4897
    %v4899 = vpop.f32.mrf.mxu0
    %v4900 = vadd.f32 0.0, %v4899
    %4901 = vdwg.mxu0
    %4911 = vrot.lane.b32.xlu0 %v4817, 16
    %v4912 = vpop.permute.xlu0 %4911
    %4913 = vrot.lane.b32.xlu0 %v4818, 16
    %v4914 = vpop.permute.xlu0 %4913
    %4915 = vrot.lane.b32.xlu0 %v4819, 16
    %v4916 = vpop.permute.xlu0 %4915
    %4917 = vrot.lane.b32.xlu0 %v4820, 16
    %v4918 = vpop.permute.xlu0 %4917
    %4919 = vrot.lane.b32.xlu0 %v4821, 16
    %v4920 = vpop.permute.xlu0 %4919
    %4921 = vrot.lane.b32.xlu0 %v4822, 16
    %v4922 = vpop.permute.xlu0 %4921
    %4923 = vrot.lane.b32.xlu0 %v4823, 16
    %v4924 = vpop.permute.xlu0 %4923
    %4925 = vrot.lane.b32.xlu0 %v4824, 16
    %v4926 = vpop.permute.xlu0 %4925
    %4927 = vrot.lane.b32.xlu0 %v4825, 16
    %v4928 = vpop.permute.xlu0 %4927
    %v4929 = vsel %vm447, %v4912, %v4914
    %v4930 = vsel %vm447, %v4914, %v4916
    %v4931 = vsel %vm447, %v4918, %v4920
    %v4932 = vsel %vm447, %v4920, %v4922
    %v4933 = vsel %vm447, %v4924, %v4926
    %v4934 = vsel %vm447, %v4926, %v4928
    %v4942 = vsel %vm345, %v4826, 0
    %4944 = vmatprep.subr.mxu0 0.0
    %4945 = vmatpush1.msra.mxu0 0.0
    %4946 = vmatprep.subr.mxu0 0.0
    %4947 = vmatpush1.msra.mxu0 0.0
    %4948 = vmatprep.subr.mxu0 0.0
    %4949 = vmatpush1.msra.mxu0 0.0
    %4950 = vmatprep.subr.mxu0 0.0
    %4951 = vmatpush1.msra.mxu0 0.0
    %4952 = vmatprep.subr.mxu0 0.0
    %4953 = vmatpush1.msra.mxu0 0.0
    %4954 = vmatprep.subr.mxu0 0.0
    %4955 = vmatpush1.msra.mxu0 0.0
    %4956 = vmatprep.subr.mxu0 0.0
    %4957 = vmatpush1.msra.mxu0 0.0
    %4958 = vmatprep.subr.mxu0 0.0
    %4959 = vmatpush1.msra.mxu0 0.0
    %4960 = vmatprep.subr.mxu0 0.0
    %4961 = vmatpush1.msra.mxu0 0.0
    %4962 = vmatprep.subr.mxu0 0.0
    %4963 = vmatpush1.msra.mxu0 0.0
    %4964 = vmatprep.subr.mxu0 0.0
    %4965 = vmatpush1.msra.mxu0 0.0
    %4966 = vmatprep.subr.mxu0 0.0
    %4967 = vmatpush1.msra.mxu0 0.0
    %4968 = vmatprep.subr.mxu0 0.0
    %4969 = vmatpush1.msra.mxu0 0.0
    %4970 = vmatprep.subr.mxu0 %v4934
    %4971 = vmatpush1.msra.mxu0 %v4933
    %4972 = vmatprep.subr.mxu0 %v4932
    %4973 = vmatpush1.msra.mxu0 %v4931
    %4974 = vmatprep.subr.mxu0 %v4930
    %4975 = vmatpush1.msra.mxu0 %v4929
    %4976 = vmatprep.subr.mxu0 0.0
    %4977 = vmatpush2.msra.mxu0 0.0
    %4978 = vmatprep.subr.mxu0 0.0
    %4979 = vmatpush2.msra.mxu0 0.0
    %4980 = vmatprep.subr.mxu0 0.0
    %4981 = vmatpush2.msra.mxu0 0.0
    %4982 = vmatprep.subr.mxu0 0.0
    %4983 = vmatpush2.msra.mxu0 0.0
    %4984 = vmatprep.subr.mxu0 0.0
    %4985 = vmatpush2.msra.mxu0 0.0
    %4986 = vmatprep.subr.mxu0 0.0
    %4987 = vmatpush2.msra.mxu0 0.0
    %4988 = vmatprep.subr.mxu0 0.0
    %4989 = vmatpush2.msra.mxu0 0.0
    %4990 = vmatprep.subr.mxu0 0.0
    %4991 = vmatpush2.msra.mxu0 0.0
    %4992 = vmatprep.subr.mxu0 0.0
    %4993 = vmatpush2.msra.mxu0 0.0
    %4994 = vmatprep.subr.mxu0 0.0
    %4995 = vmatpush2.msra.mxu0 0.0
    %4996 = vmatprep.subr.mxu0 0.0
    %4997 = vmatpush2.msra.mxu0 0.0
    %4998 = vmatprep.subr.mxu0 0.0
    %4999 = vmatpush2.msra.mxu0 0.0
    %5000 = vmatprep.subr.mxu0 0.0
    %5001 = vmatpush2.msra.mxu0 0.0
    %5002 = vmatprep.subr.mxu0 0.0
    %5003 = vmatpush2.msra.mxu0 0.0
    %5004 = vmatprep.subr.mxu0 0.0
    %5005 = vmatpush2.msra.mxu0 0.0
    %5006 = vmatprep.subr.mxu0 0.0
    %5007 = vmatpush2.msra.mxu0 0.0
    %5008 = vmatprep.mubr.f32.mxu0 0.0
    %5009 = vmatmul.mubr.f32.gmra.mxu0 %v4942
    %v5010 = vpop.f32.mrf.mxu0
    %v5011 = vadd.f32 %v4898, %v5010
    %v5012 = vpop.f32.mrf.mxu0
    %v5013 = vadd.f32 %v4900, %v5012
    %5014 = vdwg.mxu0
    %v5015 = vld [vmem:[%s2866 + $0x8] sm:$0xff]
    %v5016 = vld [vmem:[%s2866 + $0x10] sm:$0xff]
    %v5017 = vld [vmem:[%s2866 + $0x18] sm:$0xff]
    %v5018 = vld [vmem:[%s2866 + $0x28] sm:$0xff]
    %v5019 = vld [vmem:[%s2866 + $0x30] sm:$0xff]
    %v5020 = vld [vmem:[%s2866 + $0x38] sm:$0xff]
    %v5021 = vld [vmem:[%s2866 + $0x48] sm:$0xff]
    %v5022 = vld [vmem:[%s2866 + $0x50] sm:$0xff]
    %v5023 = vld [vmem:[%s2866 + $0x58] sm:$0xff]
    %v5024 = vld [vmem:[%s2467] sm:$0xff]
    %5034 = vrot.lane.b32.xlu0 %v5015, 112
    %v5035 = vpop.permute.xlu0 %5034
    %5036 = vrot.lane.b32.xlu0 %v5016, 112
    %v5037 = vpop.permute.xlu0 %5036
    %5038 = vrot.lane.b32.xlu0 %v5017, 112
    %v5039 = vpop.permute.xlu0 %5038
    %5040 = vrot.lane.b32.xlu0 %v5018, 112
    %v5041 = vpop.permute.xlu0 %5040
    %5042 = vrot.lane.b32.xlu0 %v5019, 112
    %v5043 = vpop.permute.xlu0 %5042
    %5044 = vrot.lane.b32.xlu0 %v5020, 112
    %v5045 = vpop.permute.xlu0 %5044
    %5046 = vrot.lane.b32.xlu0 %v5021, 112
    %v5047 = vpop.permute.xlu0 %5046
    %5048 = vrot.lane.b32.xlu0 %v5022, 112
    %v5049 = vpop.permute.xlu0 %5048
    %5050 = vrot.lane.b32.xlu0 %v5023, 112
    %v5051 = vpop.permute.xlu0 %5050
    %v5052 = vsel %vm572, %v5035, %v5037
    %v5053 = vsel %vm572, %v5037, %v5039
    %v5054 = vsel %vm572, %v5041, %v5043
    %v5055 = vsel %vm572, %v5043, %v5045
    %v5056 = vsel %vm572, %v5047, %v5049
    %v5057 = vsel %vm572, %v5049, %v5051
    %v5065 = vsel %vm345, %v5024, 0
    %5067 = vmatprep.subr.mxu0 0.0
    %5068 = vmatpush1.msra.mxu0 0.0
    %5069 = vmatprep.subr.mxu0 0.0
    %5070 = vmatpush1.msra.mxu0 0.0
    %5071 = vmatprep.subr.mxu0 0.0
    %5072 = vmatpush1.msra.mxu0 0.0
    %5073 = vmatprep.subr.mxu0 0.0
    %5074 = vmatpush1.msra.mxu0 0.0
    %5075 = vmatprep.subr.mxu0 0.0
    %5076 = vmatpush1.msra.mxu0 0.0
    %5077 = vmatprep.subr.mxu0 0.0
    %5078 = vmatpush1.msra.mxu0 0.0
    %5079 = vmatprep.subr.mxu0 0.0
    %5080 = vmatpush1.msra.mxu0 0.0
    %5081 = vmatprep.subr.mxu0 0.0
    %5082 = vmatpush1.msra.mxu0 0.0
    %5083 = vmatprep.subr.mxu0 0.0
    %5084 = vmatpush1.msra.mxu0 0.0
    %5085 = vmatprep.subr.mxu0 0.0
    %5086 = vmatpush1.msra.mxu0 0.0
    %5087 = vmatprep.subr.mxu0 0.0
    %5088 = vmatpush1.msra.mxu0 0.0
    %5089 = vmatprep.subr.mxu0 0.0
    %5090 = vmatpush1.msra.mxu0 0.0
    %5091 = vmatprep.subr.mxu0 0.0
    %5092 = vmatpush1.msra.mxu0 0.0
    %5093 = vmatprep.subr.mxu0 %v5057
    %5094 = vmatpush1.msra.mxu0 %v5056
    %5095 = vmatprep.subr.mxu0 %v5055
    %5096 = vmatpush1.msra.mxu0 %v5054
    %5097 = vmatprep.subr.mxu0 %v5053
    %5098 = vmatpush1.msra.mxu0 %v5052
    %5099 = vmatprep.subr.mxu0 0.0
    %5100 = vmatpush2.msra.mxu0 0.0
    %5101 = vmatprep.subr.mxu0 0.0
    %5102 = vmatpush2.msra.mxu0 0.0
    %5103 = vmatprep.subr.mxu0 0.0
    %5104 = vmatpush2.msra.mxu0 0.0
    %5105 = vmatprep.subr.mxu0 0.0
    %5106 = vmatpush2.msra.mxu0 0.0
    %5107 = vmatprep.subr.mxu0 0.0
    %5108 = vmatpush2.msra.mxu0 0.0
    %5109 = vmatprep.subr.mxu0 0.0
    %5110 = vmatpush2.msra.mxu0 0.0
    %5111 = vmatprep.subr.mxu0 0.0
    %5112 = vmatpush2.msra.mxu0 0.0
    %5113 = vmatprep.subr.mxu0 0.0
    %5114 = vmatpush2.msra.mxu0 0.0
    %5115 = vmatprep.subr.mxu0 0.0
    %5116 = vmatpush2.msra.mxu0 0.0
    %5117 = vmatprep.subr.mxu0 0.0
    %5118 = vmatpush2.msra.mxu0 0.0
    %5119 = vmatprep.subr.mxu0 0.0
    %5120 = vmatpush2.msra.mxu0 0.0
    %5121 = vmatprep.subr.mxu0 0.0
    %5122 = vmatpush2.msra.mxu0 0.0
    %5123 = vmatprep.subr.mxu0 0.0
    %5124 = vmatpush2.msra.mxu0 0.0
    %5125 = vmatprep.subr.mxu0 0.0
    %5126 = vmatpush2.msra.mxu0 0.0
    %5127 = vmatprep.subr.mxu0 0.0
    %5128 = vmatpush2.msra.mxu0 0.0
    %5129 = vmatprep.subr.mxu0 0.0
    %5130 = vmatpush2.msra.mxu0 0.0
    %5131 = vmatprep.mubr.f32.mxu0 0.0
    %5132 = vmatmul.mubr.f32.gmra.mxu0 %v5065
    %v5133 = vpop.f32.mrf.mxu0
    %v5134 = vadd.f32 0.0, %v5133
    %v5135 = vpop.f32.mrf.mxu0
    %v5136 = vadd.f32 0.0, %v5135
    %5137 = vdwg.mxu0
    %v5138 = vadd.f32 %v5011, %v5134
    %v5139 = vadd.f32 %v5013, %v5136
    %v5140 = vld [vmem:[%s6] sm:$0xff]
    %5142 = vset.pattern.permute.xlu0 0
    %5143 = vperm.xlu0 %5142, %v5140
    %v5144 = vpop.permute.xlu0 %5143
    %v5146 = vadd.f32 %v5138, %v5144
    %v5147 = vadd.f32 %v5139, %v5144
    %v5148 = vmax.f32 %v5146, 0.0
    %v5149 = vmax.f32 %v5147, 0.0
    %5150 = vst [vmem:[%s3244 + $0x60] sm:$0xff] %v5148
    %5151 = vst [vmem:[%s3244 + $0x68] sm:$0xff] %v5149
    %5152 = vst [vmem:[%s3244 + $0x70] sm:$0xff] %v2858
    %5153 = vst [vmem:[%s3244 + $0x78] sm:$0xff] %v2859
    %v5154 = vld [vmem:[%s3244] sm:$0xff]
    %v5155 = vld [vmem:[%s3244 + $0x8] sm:$0xff]
    %v5156 = vld [vmem:[%s3244 + $0x10] sm:$0xff]
    %v5157 = vld [vmem:[%s3244 + $0x18] sm:$0xff]
    %v5158 = vld [vmem:[%s3244 + $0x20] sm:$0xff]
    %v5159 = vld [vmem:[%s3244 + $0x28] sm:$0xff]
    %v5160 = vld [vmem:[%s3244 + $0x30] sm:$0xff]
    %v5161 = vld [vmem:[%s3244 + $0x38] sm:$0xff]
    %v5162 = vld [vmem:[%s3244 + $0x40] sm:$0xff]
    %v5163 = vld [vmem:[%s3244 + $0x48] sm:$0xff]
    %v5164 = vld [vmem:[%s3244 + $0x50] sm:$0xff]
    %v5165 = vld [vmem:[%s3244 + $0x58] sm:$0xff]
    %v5166 = vld [vmem:[%s3244 + $0x60] sm:$0xff]
    %v5167 = vld [vmem:[%s3244 + $0x68] sm:$0xff]
    %v5168 = vld [vmem:[%s3244 + $0x70] sm:$0xff]
    %v5169 = vld [vmem:[%s3244 + $0x78] sm:$0xff]
    %5170 = vmatprep.subr.mxu0 0.0
    %5171 = vmatpush1.msra.mxu0 0.0
    %5172 = vmatprep.subr.mxu0 0.0
    %5173 = vmatpush1.msra.mxu0 0.0
    %5174 = vmatprep.subr.mxu0 0.0
    %5175 = vmatpush1.msra.mxu0 0.0
    %5176 = vmatprep.subr.mxu0 0.0
    %5177 = vmatpush1.msra.mxu0 0.0
    %5178 = vmatprep.subr.mxu0 0.0
    %5179 = vmatpush1.msra.mxu0 0.0
    %5180 = vmatprep.subr.mxu0 0.0
    %5181 = vmatpush1.msra.mxu0 0.0
    %5182 = vmatprep.subr.mxu0 0.0
    %5183 = vmatpush1.msra.mxu0 0.0
    %5184 = vmatprep.subr.mxu0 0.0
    %5185 = vmatpush1.msra.mxu0 0.0
    %5186 = vmatprep.subr.mxu0 %v5169
    %5187 = vmatpush1.msra.mxu0 %v5168
    %5188 = vmatprep.subr.mxu0 %v5167
    %5189 = vmatpush1.msra.mxu0 %v5166
    %5190 = vmatprep.subr.mxu0 %v5165
    %5191 = vmatpush1.msra.mxu0 %v5164
    %5192 = vmatprep.subr.mxu0 %v5163
    %5193 = vmatpush1.msra.mxu0 %v5162
    %5194 = vmatprep.subr.mxu0 %v5161
    %5195 = vmatpush1.msra.mxu0 %v5160
    %5196 = vmatprep.subr.mxu0 %v5159
    %5197 = vmatpush1.msra.mxu0 %v5158
    %5198 = vmatprep.subr.mxu0 %v5157
    %5199 = vmatpush1.msra.mxu0 %v5156
    %5200 = vmatprep.subr.mxu0 %v5155
    %5201 = vmatpush1.msra.mxu0 %v5154
    %5202 = vmatprep.subr.mxu0 0.0
    %5203 = vmatpush2.msra.mxu0 0.0
    %5204 = vmatprep.subr.mxu0 0.0
    %5205 = vmatpush2.msra.mxu0 0.0
    %5206 = vmatprep.subr.mxu0 0.0
    %5207 = vmatpush2.msra.mxu0 0.0
    %5208 = vmatprep.subr.mxu0 0.0
    %5209 = vmatpush2.msra.mxu0 0.0
    %5210 = vmatprep.subr.mxu0 0.0
    %5211 = vmatpush2.msra.mxu0 0.0
    %5212 = vmatprep.subr.mxu0 0.0
    %5213 = vmatpush2.msra.mxu0 0.0
    %5214 = vmatprep.subr.mxu0 0.0
    %5215 = vmatpush2.msra.mxu0 0.0
    %5216 = vmatprep.subr.mxu0 0.0
    %5217 = vmatpush2.msra.mxu0 0.0
    %5218 = vmatprep.subr.mxu0 0.0
    %5219 = vmatpush2.msra.mxu0 0.0
    %5220 = vmatprep.subr.mxu0 0.0
    %5221 = vmatpush2.msra.mxu0 0.0
    %5222 = vmatprep.subr.mxu0 0.0
    %5223 = vmatpush2.msra.mxu0 0.0
    %5224 = vmatprep.subr.mxu0 0.0
    %5225 = vmatpush2.msra.mxu0 0.0
    %5226 = vmatprep.subr.mxu0 0.0
    %5227 = vmatpush2.msra.mxu0 0.0
    %5228 = vmatprep.subr.mxu0 0.0
    %5229 = vmatpush2.msra.mxu0 0.0
    %5230 = vmatprep.subr.mxu0 0.0
    %5231 = vmatpush2.msra.mxu0 0.0
    %5232 = vmatprep.subr.mxu0 0.0
    %5233 = vmatpush2.msra.mxu0 0.0
    %5234 = vmatprep.mubr.f32.mxu0 0.0
    %5235 = vmatmul.mubr.f32.gmra.mxu0 %v2636
    %v5236 = vpop.f32.mrf.mxu0
    %v5237 = vadd.f32 %v2617, %v5236
    %v5238 = vpop.f32.mrf.mxu0
    %v5239 = vadd.f32 %v2617, %v5238
    %5240 = vmatprep.mubr.f32.mxu0 0.0
    %5241 = vmatmul.mubr.f32.gmra.mxu0 %v2639
    %v5242 = vpop.f32.mrf.mxu0
    %v5243 = vadd.f32 %v2622, %v5242
    %v5244 = vpop.f32.mrf.mxu0
    %v5245 = vadd.f32 %v2622, %v5244
    %5246 = vmatprep.mubr.f32.mxu0 0.0
    %5247 = vmatmul.mubr.f32.gmra.mxu0 %v2642
    %v5248 = vpop.f32.mrf.mxu0
    %v5249 = vadd.f32 %v2627, %v5248
    %v5250 = vpop.f32.mrf.mxu0
    %v5251 = vadd.f32 %v2627, %v5250
    %5252 = vmatprep.mubr.f32.mxu0 0.0
    %5253 = vmatmul.mubr.f32.gmra.mxu0 %v2645
    %v5254 = vpop.f32.mrf.mxu0
    %v5255 = vadd.f32 %v2632, %v5254
    %v5256 = vpop.f32.mrf.mxu0
    %v5257 = vadd.f32 %v2632, %v5256
    %5258 = vdwg.mxu0
    %v5259 = vadd.f32 %v5237, %v2761
    %v5260 = vadd.f32 %v5239, %v2762
    %v5261 = vadd.f32 %v5243, %v2763
    %v5262 = vadd.f32 %v5245, %v2764
    %v5263 = vadd.f32 %v5249, %v2765
    %v5264 = vadd.f32 %v5251, %v2766
    %v5265 = vadd.f32 %v5255, %v2767
    %v5266 = vadd.f32 %v5257, %v2768
    %v5267 = vmax.f32 %v5259, 0.0
    %v5268 = vmax.f32 %v5260, 0.0
    %v5269 = vmax.f32 %v5261, 0.0
    %v5270 = vmax.f32 %v5262, 0.0
    %v5271 = vmax.f32 %v5263, 0.0
    %v5272 = vmax.f32 %v5264, 0.0
    %v5273 = vmax.f32 %v5265, 0.0
    %v5274 = vmax.f32 %v5266, 0.0
    %s5275 = scalar_lea.vmem [#allocation10], 64
    %5276 = vst [vmem:[%s5275] sm:$0xff] %v5267
    %5277 = vst [vmem:[%s5275 + $0x8] sm:$0xff] %v5268
    %5278 = vst [vmem:[%s5275 + $0x10] sm:$0xff] %v5269
    %5279 = vst [vmem:[%s5275 + $0x18] sm:$0xff] %v5270
    %5280 = vst [vmem:[%s5275 + $0x20] sm:$0xff] %v5271
    %5281 = vst [vmem:[%s5275 + $0x28] sm:$0xff] %v5272
    %5282 = vst [vmem:[%s5275 + $0x30] sm:$0xff] %v5273
    %5283 = vst [vmem:[%s5275 + $0x38] sm:$0xff] %v5274
    // Predicated region
    $region50: #{tpu_custom_call.1} parent=1 // pred_check
      _
    $region51: #{tpu_custom_call.1} parent=1 // pred_check_branch
      %5285 = sbr.rel (0) target = $region53
    $region52: #{tpu_custom_call.1} parent=1 // pred_region
      %s5287 = ssub.s32 2048, 2048
      %5288 = vsyncadd [#allocation6], %s5287
      %s5289 = sshll.u32 [#allocation10], 4
      %s5290 = int_to_ptr.vmem [resolvable:$true] %s5289
      %5295 = dma.vmem_to_hbm [thread:$0]  %s5290, 2048, %s9, [#allocation6], 256, 256, 16
    $region53: #{tpu_custom_call.1} parent=1 // pred_fallthru
      _
    // Predicated region
    $region54: #{tpu_custom_call.1} parent=1 // pred_check
      _
    $region55: #{tpu_custom_call.1} parent=1 // pred_check_branch
      %5297 = sbr.rel (0) target = $region57
    $region56: #{tpu_custom_call.1} parent=1 // pred_region
      %5298 = dma.done [#allocation6], 2048
    $region57: #{tpu_custom_call.1} parent=1 // pred_fallthru
      _
    %5299 = vsyncpa [#allocation5], 1
    %5300 = vsyncpa [#allocation8], 1
    %5301 = vsyncpa [#allocation6], 1

</llo_original>
